<compile_context>
chip_gen: v7x
topology: tpu7x:2x2x1
jax: 0.10.0
libtpu: 0.0.40
codegen_flags: <defaults>
</compile_context>

<pallas_src>
import functools

import jax
import jax.numpy as jnp
import numpy as np
from jax import lax
from jax.experimental import pallas as pl
from jax.experimental.pallas import tpu as pltpu

EPS = 1e-5  # PyTorch BatchNorm default


@functools.lru_cache(maxsize=None)
def _vmem_limit_bytes():
    cap = 64 * 1024 * 1024
    try:
        cap = int(getattr(pltpu.get_tpu_info(), "vmem_capacity_bytes", cap))
    except Exception:
        pass
    # Leave headroom for Mosaic internal scratch; ~48 MiB on 64 MiB parts (v7x),
    # up to 96 MiB on 128 MiB parts (v5e / v6e).
    return int(min(cap - 16 * 1024 * 1024, 96 * 1024 * 1024))


def _compiler_params(dims):
    return pltpu.CompilerParams(dimension_semantics=dims,
                                vmem_limit_bytes=_vmem_limit_bytes())


def _pick_tile(m, target):
    """Largest divisor of m that is <= target and (multiple of 8 or == m)."""
    for d in range(min(m, target), 0, -1):
        if m % d == 0 and (d % 8 == 0 or d == m):
            return d
    return m


# ---------------------------------------------------------------------------
# Data-movement glue (plain JAX): zero-pad input, flatten H*W rows (row stride
# aligned to 8 sublanes), build masks and geometry for the row-shift conv.
# ---------------------------------------------------------------------------
def _prepare_conv(x, k, stride, pad, dtype=jnp.bfloat16):
    """x: (N, D, H, W, C) NDHWC.  Returns bf16 padded flattened rows, masks, geometry."""
    N, D, H, W, C = x.shape
    Dp, Hp, Wp = D + 2 * pad, H + 2 * pad, W + 2 * pad
    Wp_a = ((Wp + 7) // 8) * 8          # sublane-aligned row stride
    Do = (D + 2 * pad - k) // stride + 1
    Ho = (H + 2 * pad - k) // stride + 1
    Wo = (W + 2 * pad - k) // stride + 1
    Ho_d = Hp - k + 1                   # dense (stride-1) output height
    Lext = Ho_d * Wp_a                  # extended output rows per output depth slice
    extra = Wp_a                        # >= k-1 zero rows so every tap window is in range
    Rpad = Hp * Wp_a + extra

    xp = jnp.pad(x, ((0, 0), (pad, pad), (pad, pad), (pad, pad + (Wp_a - Wp)), (0, 0)))
    rows = xp.reshape(N, Dp, Hp * Wp_a, C)
    rows = jnp.pad(rows, ((0, 0), (0, 0), (0, extra), (0, 0))).astype(dtype)

    # which extended-output rows are real outputs (drop wrap garbage / stride skips)
    yy = np.arange(Ho_d)[:, None]
    xx = np.arange(Wp_a)[None, :]
    valid = ((yy % stride == 0) & (yy // stride < Ho) &
             (xx % stride == 0) & (xx // stride < Wo))
    valid_mask = jnp.asarray(valid.reshape(Lext, 1), dtype=jnp.float32)

    # which padded-input positions are real (non-pad) voxels, per padded depth plane
    dd = np.arange(Dp)[:, None]
    rr = np.arange(Rpad)[None, :]
    yr, xr = rr // Wp_a, rr % Wp_a
    real = ((dd >= pad) & (dd < pad + D) & (rr < Hp * Wp_a) &
            (yr >= pad) & (yr < pad + H) & (xr >= pad) & (xr < pad + W))
    plane_mask = jnp.asarray(real[..., None], dtype=jnp.float32)   # (Dp, Rpad, 1)

    geom = dict(Dp=Dp, Wp=Wp_a, Do=Do, Ho=Ho, Wo=Wo, Ho_d=Ho_d, Lext=Lext, Rpad=Rpad)
    return rows, valid_mask, plane_mask, geom


def _crop_extended(out_ext, N, Do, Ho, Wo, Ho_d, Wp, stride, C):
    """(N, Do, Lext, C) extended rows -> (N, Do, Ho, Wo, C) valid outputs."""
    r = out_ext.reshape(N, Do, Ho_d, Wp, C)
    return r[:, :, : (Ho - 1) * stride + 1 : stride,
             : (Wo - 1) * stride + 1 : stride, :]


# ---------------------------------------------------------------------------
# Kernel 1: direct k*k*k conv as ONE folded bf16 matmul per (n, z) grid step,
# with fused batch statistics and optional fused input affine + ReLU (= BN of
# the previous conv, pad ring restored by a mask).
# ---------------------------------------------------------------------------
def _conv_fold_kernel(x_ref, w_ref, sc_ref, sh_ref, pm_ref, vm_ref,
                      o_ref, sum_ref, ssq_ref, xt_ref, *,
                      k, stride, Wp, Lext, Cin, fuse_in):
    """
    x_ref  : (Dp, Rpad, Cin) bf16 — whole padded depth slab (resident across z)
    w_ref  : (k*k*k*Cin, Cout) bf16 — folded weights (resident)
    sc/sh  : (1, Cin) f32 — fused BN+ReLU of previous layer (only if fuse_in)
    pm_ref : (Dp, Rpad, 1) f32 — 1 on real voxels (restores zero pad ring)
    vm_ref : (Lext, 1) f32 — 1 on rows that are real conv outputs (for stats)
    o_ref  : (Lext, Cout); sum/ssq: (1, Cout) masked partial BN statistics
    xt_ref : (Lext, k*k*k*Cin) bf16 scratch — folded matmul operand
    """
    z = pl.program_id(1)
    taps = [(dy, dx) for dy in range(k) for dx in range(k)]
    for dz in range(k):
        d = z * stride + dz
        plane = x_ref[d].astype(jnp.float32)                       # (Rpad, Cin)
        if fuse_in:
            plane = jnp.maximum(plane * sc_ref[...] + sh_ref[...], 0.0) * pm_ref[d]
        for t, (dy, dx) in enumerate(taps):
            start = dy * Wp + dx
            col = (dz * len(taps) + t) * Cin
            xt_ref[:, col:col + Cin] = plane[start:start + Lext, :].astype(jnp.bfloat16)
    acc = jnp.dot(xt_ref[...], w_ref[...], preferred_element_type=jnp.float32)
    o_ref[...] = acc.astype(o_ref.dtype)
    y = acc * vm_ref[...]                                           # mask non-output rows
    sum_ref[...] = jnp.sum(y, axis=0, keepdims=True)
    ssq_ref[...] = jnp.sum(y * y, axis=0, keepdims=True)


def direct_conv3d(rows, w_fold, in_scale, in_shift, plane_mask, valid_mask, geom, *,
                  stride, k, fuse_in, out_dtype):
    """rows: (N, Dp, Rpad, Cin) bf16; w_fold: (k*k*k*Cin, Cout) bf16."""
    N, Dp, Rpad, Cin = rows.shape
    Ktot, Cout = w_fold.shape
    Do, Lext, Wp = geom["Do"], geom["Lext"], geom["Wp"]

    kernel = functools.partial(_conv_fold_kernel, k=k, stride=stride, Wp=Wp,
                               Lext=Lext, Cin=Cin, fuse_in=fuse_in)
    return pl.pallas_call(
        kernel,
        out_shape=(
            jax.ShapeDtypeStruct((N, Do, Lext, Cout), out_dtype),
            jax.ShapeDtypeStruct((N, Do, 1, Cout), jnp.float32),
            jax.ShapeDtypeStruct((N, Do, 1, Cout), jnp.float32),
        ),
        grid=(N, Do),
        in_specs=[
            # whole padded depth slab of sample n; z-independent => DMA'd once, revisited
            pl.BlockSpec((None, Dp, Rpad, Cin), lambda n, z: (n, 0, 0, 0)),
            # folded weights, resident
            pl.BlockSpec((Ktot, Cout), lambda n, z: (0, 0)),
            pl.BlockSpec((1, Cin), lambda n, z: (0, 0)),
            pl.BlockSpec((1, Cin), lambda n, z: (0, 0)),
            pl.BlockSpec((Dp, Rpad, 1), lambda n, z: (0, 0, 0)),
            pl.BlockSpec((Lext, 1), lambda n, z: (0, 0)),
        ],
        out_specs=(
            pl.BlockSpec((None, None, Lext, Cout), lambda n, z: (n, z, 0, 0)),
            pl.BlockSpec((None, None, 1, Cout), lambda n, z: (n, z, 0, 0)),
            pl.BlockSpec((None, None, 1, Cout), lambda n, z: (n, z, 0, 0)),
        ),
        scratch_shapes=[pltpu.VMEM((Lext, Ktot), jnp.bfloat16)],
        compiler_params=_compiler_params(("parallel", "arbitrary")),
    )(rows, w_fold, in_scale, in_shift, plane_mask, valid_mask)


# ---------------------------------------------------------------------------
# Kernel 2: bf16 GEMM (1x1x1 residual conv) + fused batch statistics.
# ---------------------------------------------------------------------------
def _gemm_stats_kernel(x_ref, w_ref, o_ref, sum_ref, ssq_ref):
    y = jnp.dot(x_ref[...], w_ref[...], preferred_element_type=jnp.float32)
    o_ref[...] = y
    sum_ref[...] = jnp.sum(y, axis=0, keepdims=True)
    ssq_ref[...] = jnp.sum(y * y, axis=0, keepdims=True)


def gemm_with_stats(x, w, tm_target=512):
    M, K = x.shape
    Co = w.shape[1]
    tm = _pick_tile(M, tm_target)
    G = M // tm
    return pl.pallas_call(
        _gemm_stats_kernel,
        out_shape=(
            jax.ShapeDtypeStruct((M, Co), jnp.float32),
            jax.ShapeDtypeStruct((G, 1, Co), jnp.float32),
            jax.ShapeDtypeStruct((G, 1, Co), jnp.float32),
        ),
        grid=(G,),
        in_specs=[
            pl.BlockSpec((tm, K), lambda i: (i, 0)),
            pl.BlockSpec((K, Co), lambda i: (0, 0)),
        ],
        out_specs=(
            pl.BlockSpec((tm, Co), lambda i: (i, 0)),
            pl.BlockSpec((None, 1, Co), lambda i: (i, 0, 0)),
            pl.BlockSpec((None, 1, Co), lambda i: (i, 0, 0)),
        ),
        compiler_params=_compiler_params(("parallel",)),
    )(x, w)


# ---------------------------------------------------------------------------
# Kernel 3: fused BN2(out2) + BN_res(res) + add + ReLU, lane-dense layout.
# ---------------------------------------------------------------------------
def _bn_add_relu_kernel(y_ref, r_ref, a2_ref, b2_ref, ar_ref, br_ref, o_ref):
    o_ref[...] = jnp.maximum(
        y_ref[...] * a2_ref[...] + b2_ref[...]
        + r_ref[...] * ar_ref[...] + br_ref[...], 0.0)


def fused_bn_add_relu(y, r, a2, b2, ar, br, lane_target=1024, row_target=256):
    """y, r: (M, C) raw conv outputs (f32); a*, b*: per-channel scale/shift (C,).
    Re-tiles the last dim to a large multiple of 128 (lane-dense stores).
    Tile defaults sized to stay comfortable on v7x's 64 MiB VMEM."""
    M, C = y.shape
    f = 1
    for cand in range(min(M, max(1, lane_target // C)), 0, -1):
        if M % cand == 0 and (C * cand) % 128 == 0:
            f = cand
            break
    # f == 1 fallback is still correct, just lane-sparse.
    LW = C * f
    Mr = M // f
    yf = y.reshape(Mr, LW)
    rf = r.reshape(Mr, LW)
    a2f = jnp.tile(a2.reshape(1, C), (1, f))
    b2f = jnp.tile(b2.reshape(1, C), (1, f))
    arf = jnp.tile(ar.reshape(1, C), (1, f))
    brf = jnp.tile(br.reshape(1, C), (1, f))

    tr = _pick_tile(Mr, row_target)
    G = Mr // tr
    out = pl.pallas_call(
        _bn_add_relu_kernel,
        out_shape=jax.ShapeDtypeStruct((Mr, LW), jnp.float32),
        grid=(G,),
        in_specs=[
            pl.BlockSpec((tr, LW), lambda i: (i, 0)),
            pl.BlockSpec((tr, LW), lambda i: (i, 0)),
            pl.BlockSpec((1, LW), lambda i: (0, 0)),
            pl.BlockSpec((1, LW), lambda i: (0, 0)),
            pl.BlockSpec((1, LW), lambda i: (0, 0)),
            pl.BlockSpec((1, LW), lambda i: (0, 0)),
        ],
        out_specs=pl.BlockSpec((tr, LW), lambda i: (i, 0)),
        compiler_params=_compiler_params(("parallel",)),
    )(yf, rf, a2f, b2f, arf, brf)
    return out.reshape(M, C)


# ---------------------------------------------------------------------------
# ResidualBlock3D forward (Pallas)
# ---------------------------------------------------------------------------
def residual_block3d_forward(x_ncdhw, params, kernel_size, stride, padding):
    f32, bf16 = jnp.float32, jnp.bfloat16
    k, s, p = kernel_size, stride, padding
    x = jnp.transpose(x_ncdhw, (0, 2, 3, 4, 1)).astype(bf16)       # NDHWC, bf16 inside
    N, D, H, W, Cin = x.shape
    Cout = params["w1"].shape[0]

    def _finalize_stats(sums, sumsqs, count):
        m = jnp.sum(sums, axis=tuple(range(sums.ndim - 1))) / count
        v = jnp.maximum(
            jnp.sum(sumsqs, axis=tuple(range(sumsqs.ndim - 1))) / count - m * m, 0.0)
        return m, v

    # ---- conv1 (k, s, p): folded direct conv, fused batch stats -------------
    # (conv biases dropped: a per-channel constant cancels under batch-stats BN)
    rows1, vmask1, pmask1, g1 = _prepare_conv(x, k, s, p, dtype=bf16)
    w1 = jnp.transpose(params["w1"], (2, 3, 4, 1, 0)).reshape(k * k * k * Cin, Cout)
    w1 = w1.astype(bf16)
    id_sc = jnp.ones((1, Cin), f32)
    id_sh = jnp.zeros((1, Cin), f32)
    out1_ext, s1, q1 = direct_conv3d(rows1, w1, id_sc, id_sh, pmask1, vmask1, g1,
                                     stride=s, k=k, fuse_in=False, out_dtype=bf16)
    Do1, Ho1, Wo1 = g1["Do"], g1["Ho"], g1["Wo"]
    m1, v1 = _finalize_stats(s1, q1, float(N * Do1 * Ho1 * Wo1))
    sc1 = params["g1"] * lax.rsqrt(v1 + EPS)
    sh1 = params["be1"] - m1 * sc1

    # ---- conv2 (k, 1, p): BN1 + ReLU fused into its input path --------------
    out1_c = _crop_extended(out1_ext, N, Do1, Ho1, Wo1, g1["Ho_d"], g1["Wp"], s, Cout)
    rows2, vmask2, pmask2, g2 = _prepare_conv(out1_c, k, 1, p, dtype=bf16)
    w2 = jnp.transpose(params["w2"], (2, 3, 4, 1, 0)).reshape(k * k * k * Cout, Cout)
    w2 = w2.astype(bf16)
    out2_ext, s2, q2 = direct_conv3d(rows2, w2,
                                     sc1.reshape(1, Cout).astype(f32),
                                     sh1.reshape(1, Cout).astype(f32),
                                     pmask2, vmask2, g2, stride=1, k=k, fuse_in=True,
                                     out_dtype=f32)
    Do2, Ho2, Wo2 = g2["Do"], g2["Ho"], g2["Wo"]
    m2, v2 = _finalize_stats(s2, q2, float(N * Do2 * Ho2 * Wo2))
    sc2 = params["g2"] * lax.rsqrt(v2 + EPS)
    sh2 = params["be2"] - m2 * sc2

    # ---- residual branch: 1x1x1 conv (stride s) as bf16 GEMM, fused stats ---
    xs = x[:, ::s, ::s, ::s, :]                 # 1x1 conv needs only the strided rows
    Dr, Hr, Wr = xs.shape[1], xs.shape[2], xs.shape[3]
    Mres = N * Dr * Hr * Wr
    w_res = jnp.transpose(params["w_res"].reshape(Cout, Cin), (1, 0)).astype(bf16)
    res_raw, sr, qr = gemm_with_stats(xs.reshape(Mres, Cin), w_res)
    mr, vr = _finalize_stats(sr, qr, float(Mres))
    scr = params["g_res"] * lax.rsqrt(vr + EPS)
    shr = params["be_res"] - mr * scr

    # ---- fused BN2 + BN_res + add + ReLU ------------------------------------
    assert (Dr, Hr, Wr) == (Do2, Ho2, Wo2), "main/residual branch shape mismatch"
    out2_c = _crop_extended(out2_ext, N, Do2, Ho2, Wo2, g2["Ho_d"], g2["Wp"], 1, Cout)
    M = N * Do2 * Ho2 * Wo2
    y = fused_bn_add_relu(out2_c.reshape(M, Cout), res_raw, sc2, sh2, scr, shr)
    y = y.reshape(N, Do2, Ho2, Wo2, Cout)
    return jnp.transpose(y, (0, 4, 1, 2, 3)).astype(x_ncdhw.dtype)   # back to NCDHW


# ---------------------------------------------------------------------------
# Pure-JAX f32 reference (correctness check only; keeps the conv biases — they
# cancel exactly under batch-statistics BatchNorm).
# ---------------------------------------------------------------------------
def _ref_forward(x, params, k, s, p):
    def conv(inp, w, b, stride, pad):
        y = lax.conv_general_dilated(
            inp, w, (stride,) * 3, [(pad, pad)] * 3,
            dimension_numbers=("NCDHW", "OIDHW", "NCDHW"),
            precision=lax.Precision.HIGHEST,
        )
        return y + b.reshape(1, -1, 1, 1, 1)

    def bn(y, g, be):
        m = y.mean(axis=(0, 2, 3, 4), keepdims=True)
        v = ((y - m) ** 2).mean(axis=(0, 2, 3, 4), keepdims=True)
        return (y - m) / jnp.sqrt(v + EPS) * g.reshape(1, -1, 1, 1, 1) + be.reshape(
            1, -1, 1, 1, 1)

    res = bn(conv(x, params["w_res"], params["b_res"], s, 0),
             params["g_res"], params["be_res"])
    o = jnp.maximum(bn(conv(x, params["w1"], params["b1"], s, p),
                       params["g1"], params["be1"]), 0.0)
    o = bn(conv(o, params["w2"], params["b2"], 1, p), params["g2"], params["be2"])
    return jnp.maximum(o + res, 0.0)


# ---------------------------------------------------------------------------
if __name__ == "__main__":
    N, Cin, Cout = 2, 4, 8
    D = H = W = 8
    K, S, P = 3, 1, 1  # kernel_size, stride, padding

    key = jax.random.PRNGKey(0)
    ks = jax.random.split(key, 13)
    f32 = jnp.float32

    def bf16_round(a):
        # Pre-round tensor data to bf16 so the bf16 kernels and the f32 reference see
        # identical inputs; remaining differences are pure implementation error.
        return a.astype(jnp.bfloat16).astype(f32)

    params = {
        "w1":     bf16_round(0.1 * jax.random.normal(ks[0], (Cout, Cin, K, K, K), f32)),
        "b1":     0.1 * jax.random.normal(ks[1], (Cout,), f32),
        "g1":     1.0 + 0.1 * jax.random.normal(ks[2], (Cout,), f32),
        "be1":    0.1 * jax.random.normal(ks[3], (Cout,), f32),
        "w2":     bf16_round(0.1 * jax.random.normal(ks[4], (Cout, Cout, K, K, K), f32)),
        "b2":     0.1 * jax.random.normal(ks[5], (Cout,), f32),
        "g2":     1.0 + 0.1 * jax.random.normal(ks[6], (Cout,), f32),
        "be2":    0.1 * jax.random.normal(ks[7], (Cout,), f32),
        "w_res":  bf16_round(0.1 * jax.random.normal(ks[8], (Cout, Cin, 1, 1, 1), f32)),
        "b_res":  0.1 * jax.random.normal(ks[9], (Cout,), f32),
        "g_res":  1.0 + 0.1 * jax.random.normal(ks[10], (Cout,), f32),
        "be_res": 0.1 * jax.random.normal(ks[11], (Cout,), f32),
    }
    x = bf16_round(jax.random.normal(ks[12], (N, Cin, D, H, W), f32))

    fwd = jax.jit(residual_block3d_forward, static_argnums=(2, 3, 4))
    out = jax.block_until_ready(fwd(x, params, K, S, P))
    ref = jax.block_until_ready(_ref_forward(x, params, K, S, P))

    assert out.shape == (N, Cout, D, H, W), out.shape
    # bf16 MXU path vs f32 HIGHEST reference: tolerance covers the bf16 rounding of the
    # intermediate activation between conv1 and conv2.
    np.testing.assert_allclose(np.asarray(out), np.asarray(ref), rtol=2e-2, atol=2e-2)
    print("KERNEL_OK")
</pallas_src>

<mosaic_0001>
module attributes {stable_mosaic.version = 11 : i64} {
  func.func @_gemm_stats_kernel(%arg0: i32, %arg1: memref<512x4xbf16, #tpu.memory_space<vmem>>, %arg2: memref<4x8xbf16, #tpu.memory_space<vmem>>, %arg3: memref<512x8xf32, #tpu.memory_space<vmem>>, %arg4: memref<1x1x8xf32, #tpu.memory_space<vmem>>, %arg5: memref<1x1x8xf32, #tpu.memory_space<vmem>>) attributes {dimension_semantics = [#tpu.dimension_semantics<parallel>], iteration_bounds = array<i64: 2>, scalar_prefetch = 0 : i64, scratch_operands = 0 : i64, tpu.core_type = #tpu.core_type<tc>, window_params = [{transform_indices = @transform_0, window_bounds = array<i64: 512, 4>}, {pipeline_mode = #tpu.pipeline_mode<synchronous>, transform_indices = @transform_1, window_bounds = array<i64: 4, 8>}, {transform_indices = @transform_2, window_bounds = array<i64: 512, 8>}, {transform_indices = @transform_3, window_bounds = array<i64: 1, 1, 8>}, {transform_indices = @transform_4, window_bounds = array<i64: 1, 1, 8>}]} {
    %c0 = arith.constant 0 : index
    %c0_0 = arith.constant 0 : index
    %0 = vector.load %arg1[%c0, %c0_0] : memref<512x4xbf16, #tpu.memory_space<vmem>>, vector<512x4xbf16>
    %c0_1 = arith.constant 0 : index
    %c0_2 = arith.constant 0 : index
    %1 = vector.load %arg2[%c0_1, %c0_2] : memref<4x8xbf16, #tpu.memory_space<vmem>>, vector<4x8xbf16>
    %cst = arith.constant dense<0.000000e+00> : vector<512x8xf32>
    %2 = tpu.matmul %0, %1, %cst {dimension_numbers = #tpu.dot_dimension_numbers<[1], [0], [0], [1], [0, 0, 1, 1], [], []>} : vector<512x4xbf16>, vector<4x8xbf16>, vector<512x8xf32> -> vector<512x8xf32>
    %c0_3 = arith.constant 0 : index
    %c0_4 = arith.constant 0 : index
    %3 = vector.load %arg3[%c0_3, %c0_4] : memref<512x8xf32, #tpu.memory_space<vmem>>, vector<512x8xf32>
    tpu.vector_store %arg3[%c0_3, %c0_4], %2 {strides = array<i32>} : memref<512x8xf32, #tpu.memory_space<vmem>>, vector<512x8xf32>,
    %cst_5 = arith.constant dense<0.000000e+00> : vector<8xf32>
    %4 = vector.multi_reduction <add>, %2, %cst_5 [0] : vector<512x8xf32> to vector<8xf32>
    %5 = vector.shape_cast %4 : vector<8xf32> to vector<1x8xf32>
    %c0_6 = arith.constant 0 : index
    %c0_7 = arith.constant 0 : index
    %c0_8 = arith.constant 0 : index
    %6 = vector.load %arg4[%c0_6, %c0_7, %c0_8] : memref<1x1x8xf32, #tpu.memory_space<vmem>>, vector<1x1x8xf32>
    %7 = vector.shape_cast %6 : vector<1x1x8xf32> to vector<1x8xf32>
    %8 = vector.shape_cast %5 : vector<1x8xf32> to vector<1x1x8xf32>
    tpu.vector_store %arg4[%c0_6, %c0_7, %c0_8], %8 {strides = array<i32>} : memref<1x1x8xf32, #tpu.memory_space<vmem>>, vector<1x1x8xf32>,
    %9 = arith.mulf %2, %2 : vector<512x8xf32>
    %cst_9 = arith.constant dense<0.000000e+00> : vector<8xf32>
    %10 = vector.multi_reduction <add>, %9, %cst_9 [0] : vector<512x8xf32> to vector<8xf32>
    %11 = vector.shape_cast %10 : vector<8xf32> to vector<1x8xf32>
    %c0_10 = arith.constant 0 : index
    %c0_11 = arith.constant 0 : index
    %c0_12 = arith.constant 0 : index
    %12 = vector.load %arg5[%c0_10, %c0_11, %c0_12] : memref<1x1x8xf32, #tpu.memory_space<vmem>>, vector<1x1x8xf32>
    %13 = vector.shape_cast %12 : vector<1x1x8xf32> to vector<1x8xf32>
    %14 = vector.shape_cast %11 : vector<1x8xf32> to vector<1x1x8xf32>
    tpu.vector_store %arg5[%c0_10, %c0_11, %c0_12], %14 {strides = array<i32>} : memref<1x1x8xf32, #tpu.memory_space<vmem>>, vector<1x1x8xf32>,
    return
  }
  func.func @transform_0(%arg0: i32) -> (i32, i32) {
    %c0_i32 = arith.constant 0 : i32
    %c0_i32_0 = arith.constant 0 : i32
    return %arg0, %c0_i32 : i32, i32
  }
  func.func @transform_1(%arg0: i32) -> (i32, i32) {
    %c0_i32 = arith.constant 0 : i32
    %c0_i32_0 = arith.constant 0 : i32
    %c0_i32_1 = arith.constant 0 : i32
    return %c0_i32, %c0_i32_0 : i32, i32
  }
  func.func @transform_2(%arg0: i32) -> (i32, i32) {
    %c0_i32 = arith.constant 0 : i32
    %c0_i32_0 = arith.constant 0 : i32
    return %arg0, %c0_i32 : i32, i32
  }
  func.func @transform_3(%arg0: i32) -> (i32, i32, i32) {
    %c0_i32 = arith.constant 0 : i32
    %c0_i32_0 = arith.constant 0 : i32
    %c0_i32_1 = arith.constant 0 : i32
    return %arg0, %c0_i32, %c0_i32_0 : i32, i32, i32
  }
  func.func @transform_4(%arg0: i32) -> (i32, i32, i32) {
    %c0_i32 = arith.constant 0 : i32
    %c0_i32_0 = arith.constant 0 : i32
    %c0_i32_1 = arith.constant 0 : i32
    return %arg0, %c0_i32, %c0_i32_0 : i32, i32, i32
  }
}

module attributes {stable_mosaic.version = 11 : i64} {
  func.func @_conv_fold_kernel(%arg0: i32, %arg1: i32, %arg2: memref<1x10x176x4xbf16, #tpu.memory_space<vmem>>, %arg3: memref<108x8xbf16, #tpu.memory_space<vmem>>, %arg4: memref<1x4xf32, #tpu.memory_space<vmem>>, %arg5: memref<1x4xf32, #tpu.memory_space<vmem>>, %arg6: memref<10x176x1xf32, #tpu.memory_space<vmem>>, %arg7: memref<128x1xf32, #tpu.memory_space<vmem>>, %arg8: memref<1x1x128x8xbf16, #tpu.memory_space<vmem>>, %arg9: memref<1x1x1x8xf32, #tpu.memory_space<vmem>>, %arg10: memref<1x1x1x8xf32, #tpu.memory_space<vmem>>, %arg11: memref<128x108xbf16, #tpu.memory_space<vmem>>) attributes {dimension_semantics = [#tpu.dimension_semantics<parallel>, #tpu.dimension_semantics<arbitrary>], iteration_bounds = array<i64: 2, 8>, scalar_prefetch = 0 : i64, scratch_operands = 1 : i64, tpu.core_type = #tpu.core_type<tc>, window_params = [{transform_indices = @transform_0, window_bounds = array<i64: 1, 10, 176, 4>}, {pipeline_mode = #tpu.pipeline_mode<synchronous>, transform_indices = @transform_1, window_bounds = array<i64: 108, 8>}, {pipeline_mode = #tpu.pipeline_mode<synchronous>, transform_indices = @transform_2, window_bounds = array<i64: 1, 4>}, {pipeline_mode = #tpu.pipeline_mode<synchronous>, transform_indices = @transform_3, window_bounds = array<i64: 1, 4>}, {pipeline_mode = #tpu.pipeline_mode<synchronous>, transform_indices = @transform_4, window_bounds = array<i64: 10, 176, 1>}, {pipeline_mode = #tpu.pipeline_mode<synchronous>, transform_indices = @transform_5, window_bounds = array<i64: 128, 1>}, {transform_indices = @transform_6, window_bounds = array<i64: 1, 1, 128, 8>}, {transform_indices = @transform_7, window_bounds = array<i64: 1, 1, 1, 8>}, {transform_indices = @transform_8, window_bounds = array<i64: 1, 1, 1, 8>}]} {
    %c1_i32 = arith.constant 1 : i32
    %0 = arith.muli %arg1, %c1_i32 : i32
    %c0_i32 = arith.constant 0 : i32
    %1 = arith.addi %0, %c0_i32 : i32
    %c0 = arith.constant 0 : index
    %2 = arith.index_cast %1 : i32 to index
    %c0_0 = arith.constant 0 : index
    %c0_1 = arith.constant 0 : index
    %3 = vector.load %arg2[%c0, %2, %c0_0, %c0_1] : memref<1x10x176x4xbf16, #tpu.memory_space<vmem>>, vector<1x1x176x4xbf16>
    %4 = vector.shape_cast %3 : vector<1x1x176x4xbf16> to vector<176x4xbf16>
    %5 = arith.extf %4 : vector<176x4xbf16> to vector<176x4xf32>
    %6 = vector.extract_strided_slice %5 {offsets = [0, 0], sizes = [128, 4], strides = [1, 1]} : vector<176x4xf32> to vector<128x4xf32>
    %7 = arith.truncf %6 : vector<128x4xf32> to vector<128x4xbf16>
    %c0_2 = arith.constant 0 : index
    %c0_3 = arith.constant 0 : index
    %8 = vector.load %arg11[%c0_2, %c0_3] : memref<128x108xbf16, #tpu.memory_space<vmem>>, vector<128x4xbf16>
    tpu.vector_store %arg11[%c0_2, %c0_3], %7 {strides = array<i32>} : memref<128x108xbf16, #tpu.memory_space<vmem>>, vector<128x4xbf16>,
    %9 = vector.extract_strided_slice %5 {offsets = [1, 0], sizes = [128, 4], strides = [1, 1]} : vector<176x4xf32> to vector<128x4xf32>
    %10 = arith.truncf %9 : vector<128x4xf32> to vector<128x4xbf16>
    %c0_4 = arith.constant 0 : index
    %c4 = arith.constant 4 : index
    %11 = vector.load %arg11[%c0_4, %c4] : memref<128x108xbf16, #tpu.memory_space<vmem>>, vector<128x4xbf16>
    tpu.vector_store %arg11[%c0_4, %c4], %10 {strides = array<i32>} : memref<128x108xbf16, #tpu.memory_space<vmem>>, vector<128x4xbf16>,
    %12 = vector.extract_strided_slice %5 {offsets = [2, 0], sizes = [128, 4], strides = [1, 1]} : vector<176x4xf32> to vector<128x4xf32>
    %13 = arith.truncf %12 : vector<128x4xf32> to vector<128x4xbf16>
    %c0_5 = arith.constant 0 : index
    %c8 = arith.constant 8 : index
    %14 = vector.load %arg11[%c0_5, %c8] : memref<128x108xbf16, #tpu.memory_space<vmem>>, vector<128x4xbf16>
    tpu.vector_store %arg11[%c0_5, %c8], %13 {strides = array<i32>} : memref<128x108xbf16, #tpu.memory_space<vmem>>, vector<128x4xbf16>,
    %15 = vector.extract_strided_slice %5 {offsets = [16, 0], sizes = [128, 4], strides = [1, 1]} : vector<176x4xf32> to vector<128x4xf32>
    %16 = arith.truncf %15 : vector<128x4xf32> to vector<128x4xbf16>
    %c0_6 = arith.constant 0 : index
    %c12 = arith.constant 12 : index
    %17 = vector.load %arg11[%c0_6, %c12] : memref<128x108xbf16, #tpu.memory_space<vmem>>, vector<128x4xbf16>
    tpu.vector_store %arg11[%c0_6, %c12], %16 {strides = array<i32>} : memref<128x108xbf16, #tpu.memory_space<vmem>>, vector<128x4xbf16>,
    %18 = vector.extract_strided_slice %5 {offsets = [17, 0], sizes = [128, 4], strides = [1, 1]} : vector<176x4xf32> to vector<128x4xf32>
    %19 = arith.truncf %18 : vector<128x4xf32> to vector<128x4xbf16>
    %c0_7 = arith.constant 0 : index
    %c16 = arith.constant 16 : index
    %20 = vector.load %arg11[%c0_7, %c16] : memref<128x108xbf16, #tpu.memory_space<vmem>>, vector<128x4xbf16>
    tpu.vector_store %arg11[%c0_7, %c16], %19 {strides = array<i32>} : memref<128x108xbf16, #tpu.memory_space<vmem>>, vector<128x4xbf16>,
    %21 = vector.extract_strided_slice %5 {offsets = [18, 0], sizes = [128, 4], strides = [1, 1]} : vector<176x4xf32> to vector<128x4xf32>
    %22 = arith.truncf %21 : vector<128x4xf32> to vector<128x4xbf16>
    %c0_8 = arith.constant 0 : index
    %c20 = arith.constant 20 : index
    %23 = vector.load %arg11[%c0_8, %c20] : memref<128x108xbf16, #tpu.memory_space<vmem>>, vector<128x4xbf16>
    tpu.vector_store %arg11[%c0_8, %c20], %22 {strides = array<i32>} : memref<128x108xbf16, #tpu.memory_space<vmem>>, vector<128x4xbf16>,
    %24 = vector.extract_strided_slice %5 {offsets = [32, 0], sizes = [128, 4], strides = [1, 1]} : vector<176x4xf32> to vector<128x4xf32>
    %25 = arith.truncf %24 : vector<128x4xf32> to vector<128x4xbf16>
    %c0_9 = arith.constant 0 : index
    %c24 = arith.constant 24 : index
    %26 = vector.load %arg11[%c0_9, %c24] : memref<128x108xbf16, #tpu.memory_space<vmem>>, vector<128x4xbf16>
    tpu.vector_store %arg11[%c0_9, %c24], %25 {strides = array<i32>} : memref<128x108xbf16, #tpu.memory_space<vmem>>, vector<128x4xbf16>,
    %27 = vector.extract_strided_slice %5 {offsets = [33, 0], sizes = [128, 4], strides = [1, 1]} : vector<176x4xf32> to vector<128x4xf32>
    %28 = arith.truncf %27 : vector<128x4xf32> to vector<128x4xbf16>
    %c0_10 = arith.constant 0 : index
    %c28 = arith.constant 28 : index
    %29 = vector.load %arg11[%c0_10, %c28] : memref<128x108xbf16, #tpu.memory_space<vmem>>, vector<128x4xbf16>
    tpu.vector_store %arg11[%c0_10, %c28], %28 {strides = array<i32>} : memref<128x108xbf16, #tpu.memory_space<vmem>>, vector<128x4xbf16>,
    %30 = vector.extract_strided_slice %5 {offsets = [34, 0], sizes = [128, 4], strides = [1, 1]} : vector<176x4xf32> to vector<128x4xf32>
    %31 = arith.truncf %30 : vector<128x4xf32> to vector<128x4xbf16>
    %c0_11 = arith.constant 0 : index
    %c32 = arith.constant 32 : index
    %32 = vector.load %arg11[%c0_11, %c32] : memref<128x108xbf16, #tpu.memory_space<vmem>>, vector<128x4xbf16>
    tpu.vector_store %arg11[%c0_11, %c32], %31 {strides = array<i32>} : memref<128x108xbf16, #tpu.memory_space<vmem>>, vector<128x4xbf16>,
    %c1_i32_12 = arith.constant 1 : i32
    %33 = arith.muli %arg1, %c1_i32_12 : i32
    %c1_i32_13 = arith.constant 1 : i32
    %34 = arith.addi %33, %c1_i32_13 : i32
    %c0_14 = arith.constant 0 : index
    %35 = arith.index_cast %34 : i32 to index
    %c0_15 = arith.constant 0 : index
    %c0_16 = arith.constant 0 : index
    %36 = vector.load %arg2[%c0_14, %35, %c0_15, %c0_16] : memref<1x10x176x4xbf16, #tpu.memory_space<vmem>>, vector<1x1x176x4xbf16>
    %37 = vector.shape_cast %36 : vector<1x1x176x4xbf16> to vector<176x4xbf16>
    %38 = arith.extf %37 : vector<176x4xbf16> to vector<176x4xf32>
    %39 = vector.extract_strided_slice %38 {offsets = [0, 0], sizes = [128, 4], strides = [1, 1]} : vector<176x4xf32> to vector<128x4xf32>
    %40 = arith.truncf %39 : vector<128x4xf32> to vector<128x4xbf16>
    %c0_17 = arith.constant 0 : index
    %c36 = arith.constant 36 : index
    %41 = vector.load %arg11[%c0_17, %c36] : memref<128x108xbf16, #tpu.memory_space<vmem>>, vector<128x4xbf16>
    tpu.vector_store %arg11[%c0_17, %c36], %40 {strides = array<i32>} : memref<128x108xbf16, #tpu.memory_space<vmem>>, vector<128x4xbf16>,
    %42 = vector.extract_strided_slice %38 {offsets = [1, 0], sizes = [128, 4], strides = [1, 1]} : vector<176x4xf32> to vector<128x4xf32>
    %43 = arith.truncf %42 : vector<128x4xf32> to vector<128x4xbf16>
    %c0_18 = arith.constant 0 : index
    %c40 = arith.constant 40 : index
    %44 = vector.load %arg11[%c0_18, %c40] : memref<128x108xbf16, #tpu.memory_space<vmem>>, vector<128x4xbf16>
    tpu.vector_store %arg11[%c0_18, %c40], %43 {strides = array<i32>} : memref<128x108xbf16, #tpu.memory_space<vmem>>, vector<128x4xbf16>,
    %45 = vector.extract_strided_slice %38 {offsets = [2, 0], sizes = [128, 4], strides = [1, 1]} : vector<176x4xf32> to vector<128x4xf32>
    %46 = arith.truncf %45 : vector<128x4xf32> to vector<128x4xbf16>
    %c0_19 = arith.constant 0 : index
    %c44 = arith.constant 44 : index
    %47 = vector.load %arg11[%c0_19, %c44] : memref<128x108xbf16, #tpu.memory_space<vmem>>, vector<128x4xbf16>
    tpu.vector_store %arg11[%c0_19, %c44], %46 {strides = array<i32>} : memref<128x108xbf16, #tpu.memory_space<vmem>>, vector<128x4xbf16>,
    %48 = vector.extract_strided_slice %38 {offsets = [16, 0], sizes = [128, 4], strides = [1, 1]} : vector<176x4xf32> to vector<128x4xf32>
    %49 = arith.truncf %48 : vector<128x4xf32> to vector<128x4xbf16>
    %c0_20 = arith.constant 0 : index
    %c48 = arith.constant 48 : index
    %50 = vector.load %arg11[%c0_20, %c48] : memref<128x108xbf16, #tpu.memory_space<vmem>>, vector<128x4xbf16>
    tpu.vector_store %arg11[%c0_20, %c48], %49 {strides = array<i32>} : memref<128x108xbf16, #tpu.memory_space<vmem>>, vector<128x4xbf16>,
    %51 = vector.extract_strided_slice %38 {offsets = [17, 0], sizes = [128, 4], strides = [1, 1]} : vector<176x4xf32> to vector<128x4xf32>
    %52 = arith.truncf %51 : vector<128x4xf32> to vector<128x4xbf16>
    %c0_21 = arith.constant 0 : index
    %c52 = arith.constant 52 : index
    %53 = vector.load %arg11[%c0_21, %c52] : memref<128x108xbf16, #tpu.memory_space<vmem>>, vector<128x4xbf16>
    tpu.vector_store %arg11[%c0_21, %c52], %52 {strides = array<i32>} : memref<128x108xbf16, #tpu.memory_space<vmem>>, vector<128x4xbf16>,
    %54 = vector.extract_strided_slice %38 {offsets = [18, 0], sizes = [128, 4], strides = [1, 1]} : vector<176x4xf32> to vector<128x4xf32>
    %55 = arith.truncf %54 : vector<128x4xf32> to vector<128x4xbf16>
    %c0_22 = arith.constant 0 : index
    %c56 = arith.constant 56 : index
    %56 = vector.load %arg11[%c0_22, %c56] : memref<128x108xbf16, #tpu.memory_space<vmem>>, vector<128x4xbf16>
    tpu.vector_store %arg11[%c0_22, %c56], %55 {strides = array<i32>} : memref<128x108xbf16, #tpu.memory_space<vmem>>, vector<128x4xbf16>,
    %57 = vector.extract_strided_slice %38 {offsets = [32, 0], sizes = [128, 4], strides = [1, 1]} : vector<176x4xf32> to vector<128x4xf32>
    %58 = arith.truncf %57 : vector<128x4xf32> to vector<128x4xbf16>
    %c0_23 = arith.constant 0 : index
    %c60 = arith.constant 60 : index
    %59 = vector.load %arg11[%c0_23, %c60] : memref<128x108xbf16, #tpu.memory_space<vmem>>, vector<128x4xbf16>
    tpu.vector_store %arg11[%c0_23, %c60], %58 {strides = array<i32>} : memref<128x108xbf16, #tpu.memory_space<vmem>>, vector<128x4xbf16>,
    %60 = vector.extract_strided_slice %38 {offsets = [33, 0], sizes = [128, 4], strides = [1, 1]} : vector<176x4xf32> to vector<128x4xf32>
    %61 = arith.truncf %60 : vector<128x4xf32> to vector<128x4xbf16>
    %c0_24 = arith.constant 0 : index
    %c64 = arith.constant 64 : index
    %62 = vector.load %arg11[%c0_24, %c64] : memref<128x108xbf16, #tpu.memory_space<vmem>>, vector<128x4xbf16>
    tpu.vector_store %arg11[%c0_24, %c64], %61 {strides = array<i32>} : memref<128x108xbf16, #tpu.memory_space<vmem>>, vector<128x4xbf16>,
    %63 = vector.extract_strided_slice %38 {offsets = [34, 0], sizes = [128, 4], strides = [1, 1]} : vector<176x4xf32> to vector<128x4xf32>
    %64 = arith.truncf %63 : vector<128x4xf32> to vector<128x4xbf16>
    %c0_25 = arith.constant 0 : index
    %c68 = arith.constant 68 : index
    %65 = vector.load %arg11[%c0_25, %c68] : memref<128x108xbf16, #tpu.memory_space<vmem>>, vector<128x4xbf16>
    tpu.vector_store %arg11[%c0_25, %c68], %64 {strides = array<i32>} : memref<128x108xbf16, #tpu.memory_space<vmem>>, vector<128x4xbf16>,
    %c1_i32_26 = arith.constant 1 : i32
    %66 = arith.muli %arg1, %c1_i32_26 : i32
    %c2_i32 = arith.constant 2 : i32
    %67 = arith.addi %66, %c2_i32 : i32
    %c0_27 = arith.constant 0 : index
    %68 = arith.index_cast %67 : i32 to index
    %c0_28 = arith.constant 0 : index
    %c0_29 = arith.constant 0 : index
    %69 = vector.load %arg2[%c0_27, %68, %c0_28, %c0_29] : memref<1x10x176x4xbf16, #tpu.memory_space<vmem>>, vector<1x1x176x4xbf16>
    %70 = vector.shape_cast %69 : vector<1x1x176x4xbf16> to vector<176x4xbf16>
    %71 = arith.extf %70 : vector<176x4xbf16> to vector<176x4xf32>
    %72 = vector.extract_strided_slice %71 {offsets = [0, 0], sizes = [128, 4], strides = [1, 1]} : vector<176x4xf32> to vector<128x4xf32>
    %73 = arith.truncf %72 : vector<128x4xf32> to vector<128x4xbf16>
    %c0_30 = arith.constant 0 : index
    %c72 = arith.constant 72 : index
    %74 = vector.load %arg11[%c0_30, %c72] : memref<128x108xbf16, #tpu.memory_space<vmem>>, vector<128x4xbf16>
    tpu.vector_store %arg11[%c0_30, %c72], %73 {strides = array<i32>} : memref<128x108xbf16, #tpu.memory_space<vmem>>, vector<128x4xbf16>,
    %75 = vector.extract_strided_slice %71 {offsets = [1, 0], sizes = [128, 4], strides = [1, 1]} : vector<176x4xf32> to vector<128x4xf32>
    %76 = arith.truncf %75 : vector<128x4xf32> to vector<128x4xbf16>
    %c0_31 = arith.constant 0 : index
    %c76 = arith.constant 76 : index
    %77 = vector.load %arg11[%c0_31, %c76] : memref<128x108xbf16, #tpu.memory_space<vmem>>, vector<128x4xbf16>
    tpu.vector_store %arg11[%c0_31, %c76], %76 {strides = array<i32>} : memref<128x108xbf16, #tpu.memory_space<vmem>>, vector<128x4xbf16>,
    %78 = vector.extract_strided_slice %71 {offsets = [2, 0], sizes = [128, 4], strides = [1, 1]} : vector<176x4xf32> to vector<128x4xf32>
    %79 = arith.truncf %78 : vector<128x4xf32> to vector<128x4xbf16>
    %c0_32 = arith.constant 0 : index
    %c80 = arith.constant 80 : index
    %80 = vector.load %arg11[%c0_32, %c80] : memref<128x108xbf16, #tpu.memory_space<vmem>>, vector<128x4xbf16>
    tpu.vector_store %arg11[%c0_32, %c80], %79 {strides = array<i32>} : memref<128x108xbf16, #tpu.memory_space<vmem>>, vector<128x4xbf16>,
    %81 = vector.extract_strided_slice %71 {offsets = [16, 0], sizes = [128, 4], strides = [1, 1]} : vector<176x4xf32> to vector<128x4xf32>
    %82 = arith.truncf %81 : vector<128x4xf32> to vector<128x4xbf16>
    %c0_33 = arith.constant 0 : index
    %c84 = arith.constant 84 : index
    %83 = vector.load %arg11[%c0_33, %c84] : memref<128x108xbf16, #tpu.memory_space<vmem>>, vector<128x4xbf16>
    tpu.vector_store %arg11[%c0_33, %c84], %82 {strides = array<i32>} : memref<128x108xbf16, #tpu.memory_space<vmem>>, vector<128x4xbf16>,
    %84 = vector.extract_strided_slice %71 {offsets = [17, 0], sizes = [128, 4], strides = [1, 1]} : vector<176x4xf32> to vector<128x4xf32>
    %85 = arith.truncf %84 : vector<128x4xf32> to vector<128x4xbf16>
    %c0_34 = arith.constant 0 : index
    %c88 = arith.constant 88 : index
    %86 = vector.load %arg11[%c0_34, %c88] : memref<128x108xbf16, #tpu.memory_space<vmem>>, vector<128x4xbf16>
    tpu.vector_store %arg11[%c0_34, %c88], %85 {strides = array<i32>} : memref<128x108xbf16, #tpu.memory_space<vmem>>, vector<128x4xbf16>,
    %87 = vector.extract_strided_slice %71 {offsets = [18, 0], sizes = [128, 4], strides = [1, 1]} : vector<176x4xf32> to vector<128x4xf32>
    %88 = arith.truncf %87 : vector<128x4xf32> to vector<128x4xbf16>
    %c0_35 = arith.constant 0 : index
    %c92 = arith.constant 92 : index
    %89 = vector.load %arg11[%c0_35, %c92] : memref<128x108xbf16, #tpu.memory_space<vmem>>, vector<128x4xbf16>
    tpu.vector_store %arg11[%c0_35, %c92], %88 {strides = array<i32>} : memref<128x108xbf16, #tpu.memory_space<vmem>>, vector<128x4xbf16>,
    %90 = vector.extract_strided_slice %71 {offsets = [32, 0], sizes = [128, 4], strides = [1, 1]} : vector<176x4xf32> to vector<128x4xf32>
    %91 = arith.truncf %90 : vector<128x4xf32> to vector<128x4xbf16>
    %c0_36 = arith.constant 0 : index
    %c96 = arith.constant 96 : index
    %92 = vector.load %arg11[%c0_36, %c96] : memref<128x108xbf16, #tpu.memory_space<vmem>>, vector<128x4xbf16>
    tpu.vector_store %arg11[%c0_36, %c96], %91 {strides = array<i32>} : memref<128x108xbf16, #tpu.memory_space<vmem>>, vector<128x4xbf16>,
    %93 = vector.extract_strided_slice %71 {offsets = [33, 0], sizes = [128, 4], strides = [1, 1]} : vector<176x4xf32> to vector<128x4xf32>
    %94 = arith.truncf %93 : vector<128x4xf32> to vector<128x4xbf16>
    %c0_37 = arith.constant 0 : index
    %c100 = arith.constant 100 : index
    %95 = vector.load %arg11[%c0_37, %c100] : memref<128x108xbf16, #tpu.memory_space<vmem>>, vector<128x4xbf16>
    tpu.vector_store %arg11[%c0_37, %c100], %94 {strides = array<i32>} : memref<128x108xbf16, #tpu.memory_space<vmem>>, vector<128x4xbf16>,
    %96 = vector.extract_strided_slice %71 {offsets = [34, 0], sizes = [128, 4], strides = [1, 1]} : vector<176x4xf32> to vector<128x4xf32>
    %97 = arith.truncf %96 : vector<128x4xf32> to vector<128x4xbf16>
    %c0_38 = arith.constant 0 : index
    %c104 = arith.constant 104 : index
    %98 = vector.load %arg11[%c0_38, %c104] : memref<128x108xbf16, #tpu.memory_space<vmem>>, vector<128x4xbf16>
    tpu.vector_store %arg11[%c0_38, %c104], %97 {strides = array<i32>} : memref<128x108xbf16, #tpu.memory_space<vmem>>, vector<128x4xbf16>,
    %c0_39 = arith.constant 0 : index
    %c0_40 = arith.constant 0 : index
    %99 = vector.load %arg11[%c0_39, %c0_40] : memref<128x108xbf16, #tpu.memory_space<vmem>>, vector<128x108xbf16>
    %c0_41 = arith.constant 0 : index
    %c0_42 = arith.constant 0 : index
    %100 = vector.load %arg3[%c0_41, %c0_42] : memref<108x8xbf16, #tpu.memory_space<vmem>>, vector<108x8xbf16>
    %cst = arith.constant dense<0.000000e+00> : vector<128x8xf32>
    %101 = tpu.matmul %99, %100, %cst {dimension_numbers = #tpu.dot_dimension_numbers<[1], [0], [0], [1], [0, 0, 1, 1], [], []>} : vector<128x108xbf16>, vector<108x8xbf16>, vector<128x8xf32> -> vector<128x8xf32>
    %102 = arith.truncf %101 : vector<128x8xf32> to vector<128x8xbf16>
    %c0_43 = arith.constant 0 : index
    %c0_44 = arith.constant 0 : index
    %c0_45 = arith.constant 0 : index
    %c0_46 = arith.constant 0 : index
    %103 = vector.load %arg8[%c0_43, %c0_44, %c0_45, %c0_46] : memref<1x1x128x8xbf16, #tpu.memory_space<vmem>>, vector<1x1x128x8xbf16>
    %104 = vector.shape_cast %103 : vector<1x1x128x8xbf16> to vector<128x8xbf16>
    %105 = vector.shape_cast %102 : vector<128x8xbf16> to vector<1x1x128x8xbf16>
    tpu.vector_store %arg8[%c0_43, %c0_44, %c0_45, %c0_46], %105 {strides = array<i32>} : memref<1x1x128x8xbf16, #tpu.memory_space<vmem>>, vector<1x1x128x8xbf16>,
    %c0_47 = arith.constant 0 : index
    %c0_48 = arith.constant 0 : index
    %106 = vector.load %arg7[%c0_47, %c0_48] : memref<128x1xf32, #tpu.memory_space<vmem>>, vector<128x1xf32>
    %107 = vector.broadcast %106 : vector<128x1xf32> to vector<128x8xf32>
    %108 = arith.mulf %101, %107 : vector<128x8xf32>
    %cst_49 = arith.constant dense<0.000000e+00> : vector<8xf32>
    %109 = vector.multi_reduction <add>, %108, %cst_49 [0] : vector<128x8xf32> to vector<8xf32>
    %110 = vector.shape_cast %109 : vector<8xf32> to vector<1x8xf32>
    %c0_50 = arith.constant 0 : index
    %c0_51 = arith.constant 0 : index
    %c0_52 = arith.constant 0 : index
    %c0_53 = arith.constant 0 : index
    %111 = vector.load %arg9[%c0_50, %c0_51, %c0_52, %c0_53] : memref<1x1x1x8xf32, #tpu.memory_space<vmem>>, vector<1x1x1x8xf32>
    %112 = vector.shape_cast %111 : vector<1x1x1x8xf32> to vector<1x8xf32>
    %113 = vector.shape_cast %110 : vector<1x8xf32> to vector<1x1x1x8xf32>
    tpu.vector_store %arg9[%c0_50, %c0_51, %c0_52, %c0_53], %113 {strides = array<i32>} : memref<1x1x1x8xf32, #tpu.memory_space<vmem>>, vector<1x1x1x8xf32>,
    %114 = arith.mulf %108, %108 : vector<128x8xf32>
    %cst_54 = arith.constant dense<0.000000e+00> : vector<8xf32>
    %115 = vector.multi_reduction <add>, %114, %cst_54 [0] : vector<128x8xf32> to vector<8xf32>
    %116 = vector.shape_cast %115 : vector<8xf32> to vector<1x8xf32>
    %c0_55 = arith.constant 0 : index
    %c0_56 = arith.constant 0 : index
    %c0_57 = arith.constant 0 : index
    %c0_58 = arith.constant 0 : index
    %117 = vector.load %arg10[%c0_55, %c0_56, %c0_57, %c0_58] : memref<1x1x1x8xf32, #tpu.memory_space<vmem>>, vector<1x1x1x8xf32>
    %118 = vector.shape_cast %117 : vector<1x1x1x8xf32> to vector<1x8xf32>
    %119 = vector.shape_cast %116 : vector<1x8xf32> to vector<1x1x1x8xf32>
    tpu.vector_store %arg10[%c0_55, %c0_56, %c0_57, %c0_58], %119 {strides = array<i32>} : memref<1x1x1x8xf32, #tpu.memory_space<vmem>>, vector<1x1x1x8xf32>,
    return
  }
  func.func @transform_0(%arg0: i32, %arg1: i32) -> (i32, i32, i32, i32) {
    %c0_i32 = arith.constant 0 : i32
    %c0_i32_0 = arith.constant 0 : i32
    %c0_i32_1 = arith.constant 0 : i32
    %c0_i32_2 = arith.constant 0 : i32
    return %arg0, %c0_i32, %c0_i32_0, %c0_i32_1 : i32, i32, i32, i32
  }
  func.func @transform_1(%arg0: i32, %arg1: i32) -> (i32, i32) {
    %c0_i32 = arith.constant 0 : i32
    %c0_i32_0 = arith.constant 0 : i32
    %c0_i32_1 = arith.constant 0 : i32
    return %c0_i32, %c0_i32_0 : i32, i32
  }
  func.func @transform_2(%arg0: i32, %arg1: i32) -> (i32, i32) {
    %c0_i32 = arith.constant 0 : i32
    %c0_i32_0 = arith.constant 0 : i32
    %c0_i32_1 = arith.constant 0 : i32
    return %c0_i32, %c0_i32_0 : i32, i32
  }
  func.func @transform_3(%arg0: i32, %arg1: i32) -> (i32, i32) {
    %c0_i32 = arith.constant 0 : i32
    %c0_i32_0 = arith.constant 0 : i32
    %c0_i32_1 = arith.constant 0 : i32
    return %c0_i32, %c0_i32_0 : i32, i32
  }
  func.func @transform_4(%arg0: i32, %arg1: i32) -> (i32, i32, i32) {
    %c0_i32 = arith.constant 0 : i32
    %c0_i32_0 = arith.constant 0 : i32
    %c0_i32_1 = arith.constant 0 : i32
    %c0_i32_2 = arith.constant 0 : i32
    return %c0_i32, %c0_i32_0, %c0_i32_1 : i32, i32, i32
  }
  func.func @transform_5(%arg0: i32, %arg1: i32) -> (i32, i32) {
    %c0_i32 = arith.constant 0 : i32
    %c0_i32_0 = arith.constant 0 : i32
    %c0_i32_1 = arith.constant 0 : i32
    return %c0_i32, %c0_i32_0 : i32, i32
  }
  func.func @transform_6(%arg0: i32, %arg1: i32) -> (i32, i32, i32, i32) {
    %c0_i32 = arith.constant 0 : i32
    %c0_i32_0 = arith.constant 0 : i32
    %c0_i32_1 = arith.constant 0 : i32
    return %arg0, %arg1, %c0_i32, %c0_i32_0 : i32, i32, i32, i32
  }
  func.func @transform_7(%arg0: i32, %arg1: i32) -> (i32, i32, i32, i32) {
    %c0_i32 = arith.constant 0 : i32
    %c0_i32_0 = arith.constant 0 : i32
    %c0_i32_1 = arith.constant 0 : i32
    return %arg0, %arg1, %c0_i32, %c0_i32_0 : i32, i32, i32, i32
  }
  func.func @transform_8(%arg0: i32, %arg1: i32) -> (i32, i32, i32, i32) {
    %c0_i32 = arith.constant 0 : i32
    %c0_i32_0 = arith.constant 0 : i32
    %c0_i32_1 = arith.constant 0 : i32
    return %arg0, %arg1, %c0_i32, %c0_i32_0 : i32, i32, i32, i32
  }
}

module attributes {stable_mosaic.version = 11 : i64} {
  func.func @_conv_fold_kernel(%arg0: i32, %arg1: i32, %arg2: memref<1x10x176x8xbf16, #tpu.memory_space<vmem>>, %arg3: memref<216x8xbf16, #tpu.memory_space<vmem>>, %arg4: memref<1x8xf32, #tpu.memory_space<vmem>>, %arg5: memref<1x8xf32, #tpu.memory_space<vmem>>, %arg6: memref<10x176x1xf32, #tpu.memory_space<vmem>>, %arg7: memref<128x1xf32, #tpu.memory_space<vmem>>, %arg8: memref<1x1x128x8xf32, #tpu.memory_space<vmem>>, %arg9: memref<1x1x1x8xf32, #tpu.memory_space<vmem>>, %arg10: memref<1x1x1x8xf32, #tpu.memory_space<vmem>>, %arg11: memref<128x216xbf16, #tpu.memory_space<vmem>>) attributes {dimension_semantics = [#tpu.dimension_semantics<parallel>, #tpu.dimension_semantics<arbitrary>], iteration_bounds = array<i64: 2, 8>, scalar_prefetch = 0 : i64, scratch_operands = 1 : i64, tpu.core_type = #tpu.core_type<tc>, window_params = [{transform_indices = @transform_0, window_bounds = array<i64: 1, 10, 176, 8>}, {pipeline_mode = #tpu.pipeline_mode<synchronous>, transform_indices = @transform_1, window_bounds = array<i64: 216, 8>}, {pipeline_mode = #tpu.pipeline_mode<synchronous>, transform_indices = @transform_2, window_bounds = array<i64: 1, 8>}, {pipeline_mode = #tpu.pipeline_mode<synchronous>, transform_indices = @transform_3, window_bounds = array<i64: 1, 8>}, {pipeline_mode = #tpu.pipeline_mode<synchronous>, transform_indices = @transform_4, window_bounds = array<i64: 10, 176, 1>}, {pipeline_mode = #tpu.pipeline_mode<synchronous>, transform_indices = @transform_5, window_bounds = array<i64: 128, 1>}, {transform_indices = @transform_6, window_bounds = array<i64: 1, 1, 128, 8>}, {transform_indices = @transform_7, window_bounds = array<i64: 1, 1, 1, 8>}, {transform_indices = @transform_8, window_bounds = array<i64: 1, 1, 1, 8>}]} {
    %c1_i32 = arith.constant 1 : i32
    %0 = arith.muli %arg1, %c1_i32 : i32
    %c0_i32 = arith.constant 0 : i32
    %1 = arith.addi %0, %c0_i32 : i32
    %c0 = arith.constant 0 : index
    %2 = arith.index_cast %1 : i32 to index
    %c0_0 = arith.constant 0 : index
    %c0_1 = arith.constant 0 : index
    %3 = vector.load %arg2[%c0, %2, %c0_0, %c0_1] : memref<1x10x176x8xbf16, #tpu.memory_space<vmem>>, vector<1x1x176x8xbf16>
    %4 = vector.shape_cast %3 : vector<1x1x176x8xbf16> to vector<176x8xbf16>
    %5 = arith.extf %4 : vector<176x8xbf16> to vector<176x8xf32>
    %c0_2 = arith.constant 0 : index
    %c0_3 = arith.constant 0 : index
    %6 = vector.load %arg4[%c0_2, %c0_3] : memref<1x8xf32, #tpu.memory_space<vmem>>, vector<1x8xf32>
    %7 = vector.broadcast %6 : vector<1x8xf32> to vector<176x8xf32>
    %8 = arith.mulf %5, %7 : vector<176x8xf32>
    %c0_4 = arith.constant 0 : index
    %c0_5 = arith.constant 0 : index
    %9 = vector.load %arg5[%c0_4, %c0_5] : memref<1x8xf32, #tpu.memory_space<vmem>>, vector<1x8xf32>
    %10 = vector.broadcast %9 : vector<1x8xf32> to vector<176x8xf32>
    %11 = arith.addf %8, %10 : vector<176x8xf32>
    %cst = arith.constant 0.000000e+00 : f32
    %12 = vector.broadcast %cst : f32 to vector<176x8xf32>
    %13 = arith.maximumf %11, %12 : vector<176x8xf32>
    %14 = arith.index_cast %1 : i32 to index
    %c0_6 = arith.constant 0 : index
    %c0_7 = arith.constant 0 : index
    %15 = vector.load %arg6[%14, %c0_6, %c0_7] : memref<10x176x1xf32, #tpu.memory_space<vmem>>, vector<1x176x1xf32>
    %16 = vector.shape_cast %15 : vector<1x176x1xf32> to vector<176x1xf32>
    %17 = vector.broadcast %16 : vector<176x1xf32> to vector<176x8xf32>
    %18 = arith.mulf %13, %17 : vector<176x8xf32>
    %19 = vector.extract_strided_slice %18 {offsets = [0, 0], sizes = [128, 8], strides = [1, 1]} : vector<176x8xf32> to vector<128x8xf32>
    %20 = arith.truncf %19 : vector<128x8xf32> to vector<128x8xbf16>
    %c0_8 = arith.constant 0 : index
    %c0_9 = arith.constant 0 : index
    %21 = vector.load %arg11[%c0_8, %c0_9] : memref<128x216xbf16, #tpu.memory_space<vmem>>, vector<128x8xbf16>
    tpu.vector_store %arg11[%c0_8, %c0_9], %20 {strides = array<i32>} : memref<128x216xbf16, #tpu.memory_space<vmem>>, vector<128x8xbf16>,
    %22 = vector.extract_strided_slice %18 {offsets = [1, 0], sizes = [128, 8], strides = [1, 1]} : vector<176x8xf32> to vector<128x8xf32>
    %23 = arith.truncf %22 : vector<128x8xf32> to vector<128x8xbf16>
    %c0_10 = arith.constant 0 : index
    %c8 = arith.constant 8 : index
    %24 = vector.load %arg11[%c0_10, %c8] : memref<128x216xbf16, #tpu.memory_space<vmem>>, vector<128x8xbf16>
    tpu.vector_store %arg11[%c0_10, %c8], %23 {strides = array<i32>} : memref<128x216xbf16, #tpu.memory_space<vmem>>, vector<128x8xbf16>,
    %25 = vector.extract_strided_slice %18 {offsets = [2, 0], sizes = [128, 8], strides = [1, 1]} : vector<176x8xf32> to vector<128x8xf32>
    %26 = arith.truncf %25 : vector<128x8xf32> to vector<128x8xbf16>
    %c0_11 = arith.constant 0 : index
    %c16 = arith.constant 16 : index
    %27 = vector.load %arg11[%c0_11, %c16] : memref<128x216xbf16, #tpu.memory_space<vmem>>, vector<128x8xbf16>
    tpu.vector_store %arg11[%c0_11, %c16], %26 {strides = array<i32>} : memref<128x216xbf16, #tpu.memory_space<vmem>>, vector<128x8xbf16>,
    %28 = vector.extract_strided_slice %18 {offsets = [16, 0], sizes = [128, 8], strides = [1, 1]} : vector<176x8xf32> to vector<128x8xf32>
    %29 = arith.truncf %28 : vector<128x8xf32> to vector<128x8xbf16>
    %c0_12 = arith.constant 0 : index
    %c24 = arith.constant 24 : index
    %30 = vector.load %arg11[%c0_12, %c24] : memref<128x216xbf16, #tpu.memory_space<vmem>>, vector<128x8xbf16>
    tpu.vector_store %arg11[%c0_12, %c24], %29 {strides = array<i32>} : memref<128x216xbf16, #tpu.memory_space<vmem>>, vector<128x8xbf16>,
    %31 = vector.extract_strided_slice %18 {offsets = [17, 0], sizes = [128, 8], strides = [1, 1]} : vector<176x8xf32> to vector<128x8xf32>
    %32 = arith.truncf %31 : vector<128x8xf32> to vector<128x8xbf16>
    %c0_13 = arith.constant 0 : index
    %c32 = arith.constant 32 : index
    %33 = vector.load %arg11[%c0_13, %c32] : memref<128x216xbf16, #tpu.memory_space<vmem>>, vector<128x8xbf16>
    tpu.vector_store %arg11[%c0_13, %c32], %32 {strides = array<i32>} : memref<128x216xbf16, #tpu.memory_space<vmem>>, vector<128x8xbf16>,
    %34 = vector.extract_strided_slice %18 {offsets = [18, 0], sizes = [128, 8], strides = [1, 1]} : vector<176x8xf32> to vector<128x8xf32>
    %35 = arith.truncf %34 : vector<128x8xf32> to vector<128x8xbf16>
    %c0_14 = arith.constant 0 : index
    %c40 = arith.constant 40 : index
    %36 = vector.load %arg11[%c0_14, %c40] : memref<128x216xbf16, #tpu.memory_space<vmem>>, vector<128x8xbf16>
    tpu.vector_store %arg11[%c0_14, %c40], %35 {strides = array<i32>} : memref<128x216xbf16, #tpu.memory_space<vmem>>, vector<128x8xbf16>,
    %37 = vector.extract_strided_slice %18 {offsets = [32, 0], sizes = [128, 8], strides = [1, 1]} : vector<176x8xf32> to vector<128x8xf32>
    %38 = arith.truncf %37 : vector<128x8xf32> to vector<128x8xbf16>
    %c0_15 = arith.constant 0 : index
    %c48 = arith.constant 48 : index
    %39 = vector.load %arg11[%c0_15, %c48] : memref<128x216xbf16, #tpu.memory_space<vmem>>, vector<128x8xbf16>
    tpu.vector_store %arg11[%c0_15, %c48], %38 {strides = array<i32>} : memref<128x216xbf16, #tpu.memory_space<vmem>>, vector<128x8xbf16>,
    %40 = vector.extract_strided_slice %18 {offsets = [33, 0], sizes = [128, 8], strides = [1, 1]} : vector<176x8xf32> to vector<128x8xf32>
    %41 = arith.truncf %40 : vector<128x8xf32> to vector<128x8xbf16>
    %c0_16 = arith.constant 0 : index
    %c56 = arith.constant 56 : index
    %42 = vector.load %arg11[%c0_16, %c56] : memref<128x216xbf16, #tpu.memory_space<vmem>>, vector<128x8xbf16>
    tpu.vector_store %arg11[%c0_16, %c56], %41 {strides = array<i32>} : memref<128x216xbf16, #tpu.memory_space<vmem>>, vector<128x8xbf16>,
    %43 = vector.extract_strided_slice %18 {offsets = [34, 0], sizes = [128, 8], strides = [1, 1]} : vector<176x8xf32> to vector<128x8xf32>
    %44 = arith.truncf %43 : vector<128x8xf32> to vector<128x8xbf16>
    %c0_17 = arith.constant 0 : index
    %c64 = arith.constant 64 : index
    %45 = vector.load %arg11[%c0_17, %c64] : memref<128x216xbf16, #tpu.memory_space<vmem>>, vector<128x8xbf16>
    tpu.vector_store %arg11[%c0_17, %c64], %44 {strides = array<i32>} : memref<128x216xbf16, #tpu.memory_space<vmem>>, vector<128x8xbf16>,
    %c1_i32_18 = arith.constant 1 : i32
    %46 = arith.muli %arg1, %c1_i32_18 : i32
    %c1_i32_19 = arith.constant 1 : i32
    %47 = arith.addi %46, %c1_i32_19 : i32
    %c0_20 = arith.constant 0 : index
    %48 = arith.index_cast %47 : i32 to index
    %c0_21 = arith.constant 0 : index
    %c0_22 = arith.constant 0 : index
    %49 = vector.load %arg2[%c0_20, %48, %c0_21, %c0_22] : memref<1x10x176x8xbf16, #tpu.memory_space<vmem>>, vector<1x1x176x8xbf16>
    %50 = vector.shape_cast %49 : vector<1x1x176x8xbf16> to vector<176x8xbf16>
    %51 = arith.extf %50 : vector<176x8xbf16> to vector<176x8xf32>
    %c0_23 = arith.constant 0 : index
    %c0_24 = arith.constant 0 : index
    %52 = vector.load %arg4[%c0_23, %c0_24] : memref<1x8xf32, #tpu.memory_space<vmem>>, vector<1x8xf32>
    %53 = vector.broadcast %52 : vector<1x8xf32> to vector<176x8xf32>
    %54 = arith.mulf %51, %53 : vector<176x8xf32>
    %c0_25 = arith.constant 0 : index
    %c0_26 = arith.constant 0 : index
    %55 = vector.load %arg5[%c0_25, %c0_26] : memref<1x8xf32, #tpu.memory_space<vmem>>, vector<1x8xf32>
    %56 = vector.broadcast %55 : vector<1x8xf32> to vector<176x8xf32>
    %57 = arith.addf %54, %56 : vector<176x8xf32>
    %cst_27 = arith.constant 0.000000e+00 : f32
    %58 = vector.broadcast %cst_27 : f32 to vector<176x8xf32>
    %59 = arith.maximumf %57, %58 : vector<176x8xf32>
    %60 = arith.index_cast %47 : i32 to index
    %c0_28 = arith.constant 0 : index
    %c0_29 = arith.constant 0 : index
    %61 = vector.load %arg6[%60, %c0_28, %c0_29] : memref<10x176x1xf32, #tpu.memory_space<vmem>>, vector<1x176x1xf32>
    %62 = vector.shape_cast %61 : vector<1x176x1xf32> to vector<176x1xf32>
    %63 = vector.broadcast %62 : vector<176x1xf32> to vector<176x8xf32>
    %64 = arith.mulf %59, %63 : vector<176x8xf32>
    %65 = vector.extract_strided_slice %64 {offsets = [0, 0], sizes = [128, 8], strides = [1, 1]} : vector<176x8xf32> to vector<128x8xf32>
    %66 = arith.truncf %65 : vector<128x8xf32> to vector<128x8xbf16>
    %c0_30 = arith.constant 0 : index
    %c72 = arith.constant 72 : index
    %67 = vector.load %arg11[%c0_30, %c72] : memref<128x216xbf16, #tpu.memory_space<vmem>>, vector<128x8xbf16>
    tpu.vector_store %arg11[%c0_30, %c72], %66 {strides = array<i32>} : memref<128x216xbf16, #tpu.memory_space<vmem>>, vector<128x8xbf16>,
    %68 = vector.extract_strided_slice %64 {offsets = [1, 0], sizes = [128, 8], strides = [1, 1]} : vector<176x8xf32> to vector<128x8xf32>
    %69 = arith.truncf %68 : vector<128x8xf32> to vector<128x8xbf16>
    %c0_31 = arith.constant 0 : index
    %c80 = arith.constant 80 : index
    %70 = vector.load %arg11[%c0_31, %c80] : memref<128x216xbf16, #tpu.memory_space<vmem>>, vector<128x8xbf16>
    tpu.vector_store %arg11[%c0_31, %c80], %69 {strides = array<i32>} : memref<128x216xbf16, #tpu.memory_space<vmem>>, vector<128x8xbf16>,
    %71 = vector.extract_strided_slice %64 {offsets = [2, 0], sizes = [128, 8], strides = [1, 1]} : vector<176x8xf32> to vector<128x8xf32>
    %72 = arith.truncf %71 : vector<128x8xf32> to vector<128x8xbf16>
    %c0_32 = arith.constant 0 : index
    %c88 = arith.constant 88 : index
    %73 = vector.load %arg11[%c0_32, %c88] : memref<128x216xbf16, #tpu.memory_space<vmem>>, vector<128x8xbf16>
    tpu.vector_store %arg11[%c0_32, %c88], %72 {strides = array<i32>} : memref<128x216xbf16, #tpu.memory_space<vmem>>, vector<128x8xbf16>,
    %74 = vector.extract_strided_slice %64 {offsets = [16, 0], sizes = [128, 8], strides = [1, 1]} : vector<176x8xf32> to vector<128x8xf32>
    %75 = arith.truncf %74 : vector<128x8xf32> to vector<128x8xbf16>
    %c0_33 = arith.constant 0 : index
    %c96 = arith.constant 96 : index
    %76 = vector.load %arg11[%c0_33, %c96] : memref<128x216xbf16, #tpu.memory_space<vmem>>, vector<128x8xbf16>
    tpu.vector_store %arg11[%c0_33, %c96], %75 {strides = array<i32>} : memref<128x216xbf16, #tpu.memory_space<vmem>>, vector<128x8xbf16>,
    %77 = vector.extract_strided_slice %64 {offsets = [17, 0], sizes = [128, 8], strides = [1, 1]} : vector<176x8xf32> to vector<128x8xf32>
    %78 = arith.truncf %77 : vector<128x8xf32> to vector<128x8xbf16>
    %c0_34 = arith.constant 0 : index
    %c104 = arith.constant 104 : index
    %79 = vector.load %arg11[%c0_34, %c104] : memref<128x216xbf16, #tpu.memory_space<vmem>>, vector<128x8xbf16>
    tpu.vector_store %arg11[%c0_34, %c104], %78 {strides = array<i32>} : memref<128x216xbf16, #tpu.memory_space<vmem>>, vector<128x8xbf16>,
    %80 = vector.extract_strided_slice %64 {offsets = [18, 0], sizes = [128, 8], strides = [1, 1]} : vector<176x8xf32> to vector<128x8xf32>
    %81 = arith.truncf %80 : vector<128x8xf32> to vector<128x8xbf16>
    %c0_35 = arith.constant 0 : index
    %c112 = arith.constant 112 : index
    %82 = vector.load %arg11[%c0_35, %c112] : memref<128x216xbf16, #tpu.memory_space<vmem>>, vector<128x8xbf16>
    tpu.vector_store %arg11[%c0_35, %c112], %81 {strides = array<i32>} : memref<128x216xbf16, #tpu.memory_space<vmem>>, vector<128x8xbf16>,
    %83 = vector.extract_strided_slice %64 {offsets = [32, 0], sizes = [128, 8], strides = [1, 1]} : vector<176x8xf32> to vector<128x8xf32>
    %84 = arith.truncf %83 : vector<128x8xf32> to vector<128x8xbf16>
    %c0_36 = arith.constant 0 : index
    %c120 = arith.constant 120 : index
    %85 = vector.load %arg11[%c0_36, %c120] : memref<128x216xbf16, #tpu.memory_space<vmem>>, vector<128x8xbf16>
    tpu.vector_store %arg11[%c0_36, %c120], %84 {strides = array<i32>} : memref<128x216xbf16, #tpu.memory_space<vmem>>, vector<128x8xbf16>,
    %86 = vector.extract_strided_slice %64 {offsets = [33, 0], sizes = [128, 8], strides = [1, 1]} : vector<176x8xf32> to vector<128x8xf32>
    %87 = arith.truncf %86 : vector<128x8xf32> to vector<128x8xbf16>
    %c0_37 = arith.constant 0 : index
    %c128 = arith.constant 128 : index
    %88 = vector.load %arg11[%c0_37, %c128] : memref<128x216xbf16, #tpu.memory_space<vmem>>, vector<128x8xbf16>
    tpu.vector_store %arg11[%c0_37, %c128], %87 {strides = array<i32>} : memref<128x216xbf16, #tpu.memory_space<vmem>>, vector<128x8xbf16>,
    %89 = vector.extract_strided_slice %64 {offsets = [34, 0], sizes = [128, 8], strides = [1, 1]} : vector<176x8xf32> to vector<128x8xf32>
    %90 = arith.truncf %89 : vector<128x8xf32> to vector<128x8xbf16>
    %c0_38 = arith.constant 0 : index
    %c136 = arith.constant 136 : index
    %91 = vector.load %arg11[%c0_38, %c136] : memref<128x216xbf16, #tpu.memory_space<vmem>>, vector<128x8xbf16>
    tpu.vector_store %arg11[%c0_38, %c136], %90 {strides = array<i32>} : memref<128x216xbf16, #tpu.memory_space<vmem>>, vector<128x8xbf16>,
    %c1_i32_39 = arith.constant 1 : i32
    %92 = arith.muli %arg1, %c1_i32_39 : i32
    %c2_i32 = arith.constant 2 : i32
    %93 = arith.addi %92, %c2_i32 : i32
    %c0_40 = arith.constant 0 : index
    %94 = arith.index_cast %93 : i32 to index
    %c0_41 = arith.constant 0 : index
    %c0_42 = arith.constant 0 : index
    %95 = vector.load %arg2[%c0_40, %94, %c0_41, %c0_42] : memref<1x10x176x8xbf16, #tpu.memory_space<vmem>>, vector<1x1x176x8xbf16>
    %96 = vector.shape_cast %95 : vector<1x1x176x8xbf16> to vector<176x8xbf16>
    %97 = arith.extf %96 : vector<176x8xbf16> to vector<176x8xf32>
    %c0_43 = arith.constant 0 : index
    %c0_44 = arith.constant 0 : index
    %98 = vector.load %arg4[%c0_43, %c0_44] : memref<1x8xf32, #tpu.memory_space<vmem>>, vector<1x8xf32>
    %99 = vector.broadcast %98 : vector<1x8xf32> to vector<176x8xf32>
    %100 = arith.mulf %97, %99 : vector<176x8xf32>
    %c0_45 = arith.constant 0 : index
    %c0_46 = arith.constant 0 : index
    %101 = vector.load %arg5[%c0_45, %c0_46] : memref<1x8xf32, #tpu.memory_space<vmem>>, vector<1x8xf32>
    %102 = vector.broadcast %101 : vector<1x8xf32> to vector<176x8xf32>
    %103 = arith.addf %100, %102 : vector<176x8xf32>
    %cst_47 = arith.constant 0.000000e+00 : f32
    %104 = vector.broadcast %cst_47 : f32 to vector<176x8xf32>
    %105 = arith.maximumf %103, %104 : vector<176x8xf32>
    %106 = arith.index_cast %93 : i32 to index
    %c0_48 = arith.constant 0 : index
    %c0_49 = arith.constant 0 : index
    %107 = vector.load %arg6[%106, %c0_48, %c0_49] : memref<10x176x1xf32, #tpu.memory_space<vmem>>, vector<1x176x1xf32>
    %108 = vector.shape_cast %107 : vector<1x176x1xf32> to vector<176x1xf32>
    %109 = vector.broadcast %108 : vector<176x1xf32> to vector<176x8xf32>
    %110 = arith.mulf %105, %109 : vector<176x8xf32>
    %111 = vector.extract_strided_slice %110 {offsets = [0, 0], sizes = [128, 8], strides = [1, 1]} : vector<176x8xf32> to vector<128x8xf32>
    %112 = arith.truncf %111 : vector<128x8xf32> to vector<128x8xbf16>
    %c0_50 = arith.constant 0 : index
    %c144 = arith.constant 144 : index
    %113 = vector.load %arg11[%c0_50, %c144] : memref<128x216xbf16, #tpu.memory_space<vmem>>, vector<128x8xbf16>
    tpu.vector_store %arg11[%c0_50, %c144], %112 {strides = array<i32>} : memref<128x216xbf16, #tpu.memory_space<vmem>>, vector<128x8xbf16>,
    %114 = vector.extract_strided_slice %110 {offsets = [1, 0], sizes = [128, 8], strides = [1, 1]} : vector<176x8xf32> to vector<128x8xf32>
    %115 = arith.truncf %114 : vector<128x8xf32> to vector<128x8xbf16>
    %c0_51 = arith.constant 0 : index
    %c152 = arith.constant 152 : index
    %116 = vector.load %arg11[%c0_51, %c152] : memref<128x216xbf16, #tpu.memory_space<vmem>>, vector<128x8xbf16>
    tpu.vector_store %arg11[%c0_51, %c152], %115 {strides = array<i32>} : memref<128x216xbf16, #tpu.memory_space<vmem>>, vector<128x8xbf16>,
    %117 = vector.extract_strided_slice %110 {offsets = [2, 0], sizes = [128, 8], strides = [1, 1]} : vector<176x8xf32> to vector<128x8xf32>
    %118 = arith.truncf %117 : vector<128x8xf32> to vector<128x8xbf16>
    %c0_52 = arith.constant 0 : index
    %c160 = arith.constant 160 : index
    %119 = vector.load %arg11[%c0_52, %c160] : memref<128x216xbf16, #tpu.memory_space<vmem>>, vector<128x8xbf16>
    tpu.vector_store %arg11[%c0_52, %c160], %118 {strides = array<i32>} : memref<128x216xbf16, #tpu.memory_space<vmem>>, vector<128x8xbf16>,
    %120 = vector.extract_strided_slice %110 {offsets = [16, 0], sizes = [128, 8], strides = [1, 1]} : vector<176x8xf32> to vector<128x8xf32>
    %121 = arith.truncf %120 : vector<128x8xf32> to vector<128x8xbf16>
    %c0_53 = arith.constant 0 : index
    %c168 = arith.constant 168 : index
    %122 = vector.load %arg11[%c0_53, %c168] : memref<128x216xbf16, #tpu.memory_space<vmem>>, vector<128x8xbf16>
    tpu.vector_store %arg11[%c0_53, %c168], %121 {strides = array<i32>} : memref<128x216xbf16, #tpu.memory_space<vmem>>, vector<128x8xbf16>,
    %123 = vector.extract_strided_slice %110 {offsets = [17, 0], sizes = [128, 8], strides = [1, 1]} : vector<176x8xf32> to vector<128x8xf32>
    %124 = arith.truncf %123 : vector<128x8xf32> to vector<128x8xbf16>
    %c0_54 = arith.constant 0 : index
    %c176 = arith.constant 176 : index
    %125 = vector.load %arg11[%c0_54, %c176] : memref<128x216xbf16, #tpu.memory_space<vmem>>, vector<128x8xbf16>
    tpu.vector_store %arg11[%c0_54, %c176], %124 {strides = array<i32>} : memref<128x216xbf16, #tpu.memory_space<vmem>>, vector<128x8xbf16>,
    %126 = vector.extract_strided_slice %110 {offsets = [18, 0], sizes = [128, 8], strides = [1, 1]} : vector<176x8xf32> to vector<128x8xf32>
    %127 = arith.truncf %126 : vector<128x8xf32> to vector<128x8xbf16>
    %c0_55 = arith.constant 0 : index
    %c184 = arith.constant 184 : index
    %128 = vector.load %arg11[%c0_55, %c184] : memref<128x216xbf16, #tpu.memory_space<vmem>>, vector<128x8xbf16>
    tpu.vector_store %arg11[%c0_55, %c184], %127 {strides = array<i32>} : memref<128x216xbf16, #tpu.memory_space<vmem>>, vector<128x8xbf16>,
    %129 = vector.extract_strided_slice %110 {offsets = [32, 0], sizes = [128, 8], strides = [1, 1]} : vector<176x8xf32> to vector<128x8xf32>
    %130 = arith.truncf %129 : vector<128x8xf32> to vector<128x8xbf16>
    %c0_56 = arith.constant 0 : index
    %c192 = arith.constant 192 : index
    %131 = vector.load %arg11[%c0_56, %c192] : memref<128x216xbf16, #tpu.memory_space<vmem>>, vector<128x8xbf16>
    tpu.vector_store %arg11[%c0_56, %c192], %130 {strides = array<i32>} : memref<128x216xbf16, #tpu.memory_space<vmem>>, vector<128x8xbf16>,
    %132 = vector.extract_strided_slice %110 {offsets = [33, 0], sizes = [128, 8], strides = [1, 1]} : vector<176x8xf32> to vector<128x8xf32>
    %133 = arith.truncf %132 : vector<128x8xf32> to vector<128x8xbf16>
    %c0_57 = arith.constant 0 : index
    %c200 = arith.constant 200 : index
    %134 = vector.load %arg11[%c0_57, %c200] : memref<128x216xbf16, #tpu.memory_space<vmem>>, vector<128x8xbf16>
    tpu.vector_store %arg11[%c0_57, %c200], %133 {strides = array<i32>} : memref<128x216xbf16, #tpu.memory_space<vmem>>, vector<128x8xbf16>,
    %135 = vector.extract_strided_slice %110 {offsets = [34, 0], sizes = [128, 8], strides = [1, 1]} : vector<176x8xf32> to vector<128x8xf32>
    %136 = arith.truncf %135 : vector<128x8xf32> to vector<128x8xbf16>
    %c0_58 = arith.constant 0 : index
    %c208 = arith.constant 208 : index
    %137 = vector.load %arg11[%c0_58, %c208] : memref<128x216xbf16, #tpu.memory_space<vmem>>, vector<128x8xbf16>
    tpu.vector_store %arg11[%c0_58, %c208], %136 {strides = array<i32>} : memref<128x216xbf16, #tpu.memory_space<vmem>>, vector<128x8xbf16>,
    %c0_59 = arith.constant 0 : index
    %c0_60 = arith.constant 0 : index
    %138 = vector.load %arg11[%c0_59, %c0_60] : memref<128x216xbf16, #tpu.memory_space<vmem>>, vector<128x216xbf16>
    %c0_61 = arith.constant 0 : index
    %c0_62 = arith.constant 0 : index
    %139 = vector.load %arg3[%c0_61, %c0_62] : memref<216x8xbf16, #tpu.memory_space<vmem>>, vector<216x8xbf16>
    %cst_63 = arith.constant dense<0.000000e+00> : vector<128x8xf32>
    %140 = tpu.matmul %138, %139, %cst_63 {dimension_numbers = #tpu.dot_dimension_numbers<[1], [0], [0], [1], [0, 0, 1, 1], [], []>} : vector<128x216xbf16>, vector<216x8xbf16>, vector<128x8xf32> -> vector<128x8xf32>
    %c0_64 = arith.constant 0 : index
    %c0_65 = arith.constant 0 : index
    %c0_66 = arith.constant 0 : index
    %c0_67 = arith.constant 0 : index
    %141 = vector.load %arg8[%c0_64, %c0_65, %c0_66, %c0_67] : memref<1x1x128x8xf32, #tpu.memory_space<vmem>>, vector<1x1x128x8xf32>
    %142 = vector.shape_cast %141 : vector<1x1x128x8xf32> to vector<128x8xf32>
    %143 = vector.shape_cast %140 : vector<128x8xf32> to vector<1x1x128x8xf32>
    tpu.vector_store %arg8[%c0_64, %c0_65, %c0_66, %c0_67], %143 {strides = array<i32>} : memref<1x1x128x8xf32, #tpu.memory_space<vmem>>, vector<1x1x128x8xf32>,
    %c0_68 = arith.constant 0 : index
    %c0_69 = arith.constant 0 : index
    %144 = vector.load %arg7[%c0_68, %c0_69] : memref<128x1xf32, #tpu.memory_space<vmem>>, vector<128x1xf32>
    %145 = vector.broadcast %144 : vector<128x1xf32> to vector<128x8xf32>
    %146 = arith.mulf %140, %145 : vector<128x8xf32>
    %cst_70 = arith.constant dense<0.000000e+00> : vector<8xf32>
    %147 = vector.multi_reduction <add>, %146, %cst_70 [0] : vector<128x8xf32> to vector<8xf32>
    %148 = vector.shape_cast %147 : vector<8xf32> to vector<1x8xf32>
    %c0_71 = arith.constant 0 : index
    %c0_72 = arith.constant 0 : index
    %c0_73 = arith.constant 0 : index
    %c0_74 = arith.constant 0 : index
    %149 = vector.load %arg9[%c0_71, %c0_72, %c0_73, %c0_74] : memref<1x1x1x8xf32, #tpu.memory_space<vmem>>, vector<1x1x1x8xf32>
    %150 = vector.shape_cast %149 : vector<1x1x1x8xf32> to vector<1x8xf32>
    %151 = vector.shape_cast %148 : vector<1x8xf32> to vector<1x1x1x8xf32>
    tpu.vector_store %arg9[%c0_71, %c0_72, %c0_73, %c0_74], %151 {strides = array<i32>} : memref<1x1x1x8xf32, #tpu.memory_space<vmem>>, vector<1x1x1x8xf32>,
    %152 = arith.mulf %146, %146 : vector<128x8xf32>
    %cst_75 = arith.constant dense<0.000000e+00> : vector<8xf32>
    %153 = vector.multi_reduction <add>, %152, %cst_75 [0] : vector<128x8xf32> to vector<8xf32>
    %154 = vector.shape_cast %153 : vector<8xf32> to vector<1x8xf32>
    %c0_76 = arith.constant 0 : index
    %c0_77 = arith.constant 0 : index
    %c0_78 = arith.constant 0 : index
    %c0_79 = arith.constant 0 : index
    %155 = vector.load %arg10[%c0_76, %c0_77, %c0_78, %c0_79] : memref<1x1x1x8xf32, #tpu.memory_space<vmem>>, vector<1x1x1x8xf32>
    %156 = vector.shape_cast %155 : vector<1x1x1x8xf32> to vector<1x8xf32>
    %157 = vector.shape_cast %154 : vector<1x8xf32> to vector<1x1x1x8xf32>
    tpu.vector_store %arg10[%c0_76, %c0_77, %c0_78, %c0_79], %157 {strides = array<i32>} : memref<1x1x1x8xf32, #tpu.memory_space<vmem>>, vector<1x1x1x8xf32>,
    return
  }
  func.func @transform_0(%arg0: i32, %arg1: i32) -> (i32, i32, i32, i32) {
    %c0_i32 = arith.constant 0 : i32
    %c0_i32_0 = arith.constant 0 : i32
    %c0_i32_1 = arith.constant 0 : i32
    %c0_i32_2 = arith.constant 0 : i32
    return %arg0, %c0_i32, %c0_i32_0, %c0_i32_1 : i32, i32, i32, i32
  }
  func.func @transform_1(%arg0: i32, %arg1: i32) -> (i32, i32) {
    %c0_i32 = arith.constant 0 : i32
    %c0_i32_0 = arith.constant 0 : i32
    %c0_i32_1 = arith.constant 0 : i32
    return %c0_i32, %c0_i32_0 : i32, i32
  }
  func.func @transform_2(%arg0: i32, %arg1: i32) -> (i32, i32) {
    %c0_i32 = arith.constant 0 : i32
    %c0_i32_0 = arith.constant 0 : i32
    %c0_i32_1 = arith.constant 0 : i32
    return %c0_i32, %c0_i32_0 : i32, i32
  }
  func.func @transform_3(%arg0: i32, %arg1: i32) -> (i32, i32) {
    %c0_i32 = arith.constant 0 : i32
    %c0_i32_0 = arith.constant 0 : i32
    %c0_i32_1 = arith.constant 0 : i32
    return %c0_i32, %c0_i32_0 : i32, i32
  }
  func.func @transform_4(%arg0: i32, %arg1: i32) -> (i32, i32, i32) {
    %c0_i32 = arith.constant 0 : i32
    %c0_i32_0 = arith.constant 0 : i32
    %c0_i32_1 = arith.constant 0 : i32
    %c0_i32_2 = arith.constant 0 : i32
    return %c0_i32, %c0_i32_0, %c0_i32_1 : i32, i32, i32
  }
  func.func @transform_5(%arg0: i32, %arg1: i32) -> (i32, i32) {
    %c0_i32 = arith.constant 0 : i32
    %c0_i32_0 = arith.constant 0 : i32
    %c0_i32_1 = arith.constant 0 : i32
    return %c0_i32, %c0_i32_0 : i32, i32
  }
  func.func @transform_6(%arg0: i32, %arg1: i32) -> (i32, i32, i32, i32) {
    %c0_i32 = arith.constant 0 : i32
    %c0_i32_0 = arith.constant 0 : i32
    %c0_i32_1 = arith.constant 0 : i32
    return %arg0, %arg1, %c0_i32, %c0_i32_0 : i32, i32, i32, i32
  }
  func.func @transform_7(%arg0: i32, %arg1: i32) -> (i32, i32, i32, i32) {
    %c0_i32 = arith.constant 0 : i32
    %c0_i32_0 = arith.constant 0 : i32
    %c0_i32_1 = arith.constant 0 : i32
    return %arg0, %arg1, %c0_i32, %c0_i32_0 : i32, i32, i32, i32
  }
  func.func @transform_8(%arg0: i32, %arg1: i32) -> (i32, i32, i32, i32) {
    %c0_i32 = arith.constant 0 : i32
    %c0_i32_0 = arith.constant 0 : i32
    %c0_i32_1 = arith.constant 0 : i32
    return %arg0, %arg1, %c0_i32, %c0_i32_0 : i32, i32, i32, i32
  }
}

module attributes {stable_mosaic.version = 11 : i64} {
  func.func @_bn_add_relu_kernel(%arg0: i32, %arg1: memref<8x1024xf32, #tpu.memory_space<vmem>>, %arg2: memref<8x1024xf32, #tpu.memory_space<vmem>>, %arg3: memref<1x1024xf32, #tpu.memory_space<vmem>>, %arg4: memref<1x1024xf32, #tpu.memory_space<vmem>>, %arg5: memref<1x1024xf32, #tpu.memory_space<vmem>>, %arg6: memref<1x1024xf32, #tpu.memory_space<vmem>>, %arg7: memref<8x1024xf32, #tpu.memory_space<vmem>>) attributes {dimension_semantics = [#tpu.dimension_semantics<parallel>], iteration_bounds = array<i64: 1>, scalar_prefetch = 0 : i64, scratch_operands = 0 : i64, tpu.core_type = #tpu.core_type<tc>, window_params = [{transform_indices = @transform_0, window_bounds = array<i64: 8, 1024>}, {transform_indices = @transform_1, window_bounds = array<i64: 8, 1024>}, {pipeline_mode = #tpu.pipeline_mode<synchronous>, transform_indices = @transform_2, window_bounds = array<i64: 1, 1024>}, {pipeline_mode = #tpu.pipeline_mode<synchronous>, transform_indices = @transform_3, window_bounds = array<i64: 1, 1024>}, {pipeline_mode = #tpu.pipeline_mode<synchronous>, transform_indices = @transform_4, window_bounds = array<i64: 1, 1024>}, {pipeline_mode = #tpu.pipeline_mode<synchronous>, transform_indices = @transform_5, window_bounds = array<i64: 1, 1024>}, {transform_indices = @transform_6, window_bounds = array<i64: 8, 1024>}]} {
    %c0 = arith.constant 0 : index
    %c0_0 = arith.constant 0 : index
    %0 = vector.load %arg1[%c0, %c0_0] : memref<8x1024xf32, #tpu.memory_space<vmem>>, vector<8x1024xf32>
    %c0_1 = arith.constant 0 : index
    %c0_2 = arith.constant 0 : index
    %1 = vector.load %arg3[%c0_1, %c0_2] : memref<1x1024xf32, #tpu.memory_space<vmem>>, vector<1x1024xf32>
    %2 = vector.broadcast %1 : vector<1x1024xf32> to vector<8x1024xf32>
    %3 = arith.mulf %0, %2 : vector<8x1024xf32>
    %c0_3 = arith.constant 0 : index
    %c0_4 = arith.constant 0 : index
    %4 = vector.load %arg4[%c0_3, %c0_4] : memref<1x1024xf32, #tpu.memory_space<vmem>>, vector<1x1024xf32>
    %5 = vector.broadcast %4 : vector<1x1024xf32> to vector<8x1024xf32>
    %6 = arith.addf %3, %5 : vector<8x1024xf32>
    %c0_5 = arith.constant 0 : index
    %c0_6 = arith.constant 0 : index
    %7 = vector.load %arg2[%c0_5, %c0_6] : memref<8x1024xf32, #tpu.memory_space<vmem>>, vector<8x1024xf32>
    %c0_7 = arith.constant 0 : index
    %c0_8 = arith.constant 0 : index
    %8 = vector.load %arg5[%c0_7, %c0_8] : memref<1x1024xf32, #tpu.memory_space<vmem>>, vector<1x1024xf32>
    %9 = vector.broadcast %8 : vector<1x1024xf32> to vector<8x1024xf32>
    %10 = arith.mulf %7, %9 : vector<8x1024xf32>
    %11 = arith.addf %6, %10 : vector<8x1024xf32>
    %c0_9 = arith.constant 0 : index
    %c0_10 = arith.constant 0 : index
    %12 = vector.load %arg6[%c0_9, %c0_10] : memref<1x1024xf32, #tpu.memory_space<vmem>>, vector<1x1024xf32>
    %13 = vector.broadcast %12 : vector<1x1024xf32> to vector<8x1024xf32>
    %14 = arith.addf %11, %13 : vector<8x1024xf32>
    %cst = arith.constant 0.000000e+00 : f32
    %15 = vector.broadcast %cst : f32 to vector<8x1024xf32>
    %16 = arith.maximumf %14, %15 : vector<8x1024xf32>
    %c0_11 = arith.constant 0 : index
    %c0_12 = arith.constant 0 : index
    %17 = vector.load %arg7[%c0_11, %c0_12] : memref<8x1024xf32, #tpu.memory_space<vmem>>, vector<8x1024xf32>
    tpu.vector_store %arg7[%c0_11, %c0_12], %16 {strides = array<i32>} : memref<8x1024xf32, #tpu.memory_space<vmem>>, vector<8x1024xf32>,
    return
  }
  func.func @transform_0(%arg0: i32) -> (i32, i32) {
    %c0_i32 = arith.constant 0 : i32
    %c0_i32_0 = arith.constant 0 : i32
    return %arg0, %c0_i32 : i32, i32
  }
  func.func @transform_1(%arg0: i32) -> (i32, i32) {
    %c0_i32 = arith.constant 0 : i32
    %c0_i32_0 = arith.constant 0 : i32
    return %arg0, %c0_i32 : i32, i32
  }
  func.func @transform_2(%arg0: i32) -> (i32, i32) {
    %c0_i32 = arith.constant 0 : i32
    %c0_i32_0 = arith.constant 0 : i32
    %c0_i32_1 = arith.constant 0 : i32
    return %c0_i32, %c0_i32_0 : i32, i32
  }
  func.func @transform_3(%arg0: i32) -> (i32, i32) {
    %c0_i32 = arith.constant 0 : i32
    %c0_i32_0 = arith.constant 0 : i32
    %c0_i32_1 = arith.constant 0 : i32
    return %c0_i32, %c0_i32_0 : i32, i32
  }
  func.func @transform_4(%arg0: i32) -> (i32, i32) {
    %c0_i32 = arith.constant 0 : i32
    %c0_i32_0 = arith.constant 0 : i32
    %c0_i32_1 = arith.constant 0 : i32
    return %c0_i32, %c0_i32_0 : i32, i32
  }
  func.func @transform_5(%arg0: i32) -> (i32, i32) {
    %c0_i32 = arith.constant 0 : i32
    %c0_i32_0 = arith.constant 0 : i32
    %c0_i32_1 = arith.constant 0 : i32
    return %c0_i32, %c0_i32_0 : i32, i32
  }
  func.func @transform_6(%arg0: i32) -> (i32, i32) {
    %c0_i32 = arith.constant 0 : i32
    %c0_i32_0 = arith.constant 0 : i32
    return %arg0, %c0_i32 : i32, i32
  }
}

</mosaic_0001>

<llo_original>
// kernel: residual_block3d_forward.6
$region0: #{residual_block3d_forward.6}
  #allocation0 [shape = 'u32[]', space=smem, size = 0x4, offset = 0x4, fixed_abs, tag = 'smem constant byte address 0x4 - core index']
  #allocation1 [shape = 'u32[144,128]{1,0:T(1,128)}', space=vmem, size = 0x12000, scoped, tag = 'internal scratch']
  %s0 = inlined_call_operand.vmem [shape: bf16[1024,4], index: 0, kind: input, shape index: {}]
  %s1 = inlined_call_operand.vmem [shape: bf16[4,8], index: 1, kind: input, shape index: {}]
  %s2 = inlined_call_operand.vmem [shape: f32[1024,8], index: 2, kind: output, shape index: {0}]
  %s3 = inlined_call_operand.vmem [shape: f32[2,1,8], index: 3, kind: output, shape index: {1}]
  %s4 = inlined_call_operand.vmem [shape: f32[2,1,8], index: 4, kind: output, shape index: {2}]
  %5 = xla_tuple %s2, %s3, %s4
  %s6 = sld [smem:[#allocation0]]
  $region57: #{residual_block3d_forward.6} parent=0
    _
  %s8 = ssub.s32 1, %s6
  %s9 = scalar_select 0, %s8, %s6
  loop: start=0, step=1, limit=4
  $region2: #{residual_block3d_forward.6} parent=0 // loop_pre_header
    _
  $region3: #{residual_block3d_forward.6} parent=0 // loop_header
    %s11 = sphi 0, %s15
    %p12 = scmp.ge.s32.totalorder %s11, 4
    %s21 = sphi 0, %s23
    %s24 = sphi 0, %s21
    %s25 = sphi 0, %s24
    %s41 = sphi 0, %s25
    %s45 = sphi 0, %s45
    %s47 = sphi 0, %s45
    %s48 = sphi 0, %s47
    %s62 = sphi 0, %s48
    %s68 = sphi 0, %s70
    %s71 = sphi 0, %s68
    %s72 = sphi 0, %s71
    %s88 = sphi 0, %s72
    %s94 = sphi 0, %s96
    %s97 = sphi 0, %s94
    %s98 = sphi 0, %s97
    %s114 = sphi 0, %s98
    %s120 = sphi 0, %s122
    %s123 = sphi 0, %s120
    %s124 = sphi 0, %s123
    %s140 = sphi 0, %s124
  $region4: #{residual_block3d_forward.6} parent=0 // loop_header_branch
    %14 = sbr.rel (%p12) target = $region8
  $region5: #{residual_block3d_forward.6} parent=0 // loop_body
    %s16 = ssub.s32 %s11, 1
    %s17 = ssub.s32 %s11, 2
    %s18 = sadd.s32 %s11, 1
    %s19 = ssub.s32 %s11, %s18
    %p20 = scmp.eq.s32.totalorder %s19, 0
    %s22 = sadd.s32 %s21, 1
    %s23 = scalar_select %p20, %s21, %s22
    %p26 = pneg %p20
    %p27 = scmp.eq.s32.totalorder %s11, 1
    %p28 = por %p26, %p27
    %p29 = scmp.ne.s32.totalorder %s21, %s24
    %p30 = scmp.eq.s32.totalorder %s11, 0
    %p31 = por %p29, %p30
    %p32 = scmp.ne.s32.totalorder %s21, %s24
    %p33 = scmp.eq.s32.totalorder %s16, 1
    %p34 = por %p32, %p33
    %p35 = scmp.ne.s32.totalorder %s24, %s25
    %p36 = scmp.eq.s32.totalorder %s16, 0
    %p37 = por %p35, %p36
    %p38 = scmp.ne.s32.totalorder %s24, %s25
    %p39 = scmp.eq.s32.totalorder %s17, 1
    %p40 = por %p38, %p39
    %p42 = scmp.ne.s32.totalorder %s25, %s41
    %p43 = scmp.eq.s32.totalorder %s17, 0
    %p44 = por %p42, %p43
    %s46 = sadd.s32 %s45, 1
    %p49 = scmp.eq.s32.totalorder %s11, 1
    %p50 = scmp.ne.s32.totalorder %s45, %s47
    %p51 = scmp.eq.s32.totalorder %s11, 0
    %p52 = por %p50, %p51
    %p53 = scmp.ne.s32.totalorder %s45, %s47
    %p54 = scmp.eq.s32.totalorder %s16, 1
    %p55 = por %p53, %p54
    %p56 = scmp.ne.s32.totalorder %s47, %s48
    %p57 = scmp.eq.s32.totalorder %s16, 0
    %p58 = por %p56, %p57
    %p59 = scmp.ne.s32.totalorder %s47, %s48
    %p60 = scmp.eq.s32.totalorder %s17, 1
    %p61 = por %p59, %p60
    %p63 = scmp.ne.s32.totalorder %s48, %s62
    %p64 = scmp.eq.s32.totalorder %s17, 0
    %p65 = por %p63, %p64
    %s66 = ssub.s32 %s11, %s18
    %p67 = scmp.eq.s32.totalorder %s66, 0
    %s69 = sadd.s32 %s68, 1
    %s70 = scalar_select %p67, %s68, %s69
    %p73 = pneg %p67
    %p74 = scmp.eq.s32.totalorder %s11, 1
    %p75 = por %p73, %p74
    %p76 = scmp.ne.s32.totalorder %s68, %s71
    %p77 = scmp.eq.s32.totalorder %s11, 0
    %p78 = por %p76, %p77
    %p79 = scmp.ne.s32.totalorder %s68, %s71
    %p80 = scmp.eq.s32.totalorder %s16, 1
    %p81 = por %p79, %p80
    %p82 = scmp.ne.s32.totalorder %s71, %s72
    %p83 = scmp.eq.s32.totalorder %s16, 0
    %p84 = por %p82, %p83
    %p85 = scmp.ne.s32.totalorder %s71, %s72
    %p86 = scmp.eq.s32.totalorder %s17, 1
    %p87 = por %p85, %p86
    %p89 = scmp.ne.s32.totalorder %s72, %s88
    %p90 = scmp.eq.s32.totalorder %s17, 0
    %p91 = por %p89, %p90
    %s92 = ssub.s32 %s11, %s18
    %p93 = scmp.eq.s32.totalorder %s92, 0
    %s95 = sadd.s32 %s94, 1
    %s96 = scalar_select %p93, %s94, %s95
    %p99 = pneg %p93
    %p100 = scmp.eq.s32.totalorder %s11, 1
    %p101 = por %p99, %p100
    %p102 = scmp.ne.s32.totalorder %s94, %s97
    %p103 = scmp.eq.s32.totalorder %s11, 0
    %p104 = por %p102, %p103
    %p105 = scmp.ne.s32.totalorder %s94, %s97
    %p106 = scmp.eq.s32.totalorder %s16, 1
    %p107 = por %p105, %p106
    %p108 = scmp.ne.s32.totalorder %s97, %s98
    %p109 = scmp.eq.s32.totalorder %s16, 0
    %p110 = por %p108, %p109
    %p111 = scmp.ne.s32.totalorder %s97, %s98
    %p112 = scmp.eq.s32.totalorder %s17, 1
    %p113 = por %p111, %p112
    %p115 = scmp.ne.s32.totalorder %s98, %s114
    %p116 = scmp.eq.s32.totalorder %s17, 0
    %p117 = por %p115, %p116
    %s118 = ssub.s32 %s11, %s18
    %p119 = scmp.eq.s32.totalorder %s118, 0
    %s121 = sadd.s32 %s120, 1
    %s122 = scalar_select %p119, %s120, %s121
    %p125 = pneg %p119
    %p126 = scmp.eq.s32.totalorder %s11, 1
    %p127 = por %p125, %p126
    %p128 = scmp.ne.s32.totalorder %s120, %s123
    %p129 = scmp.eq.s32.totalorder %s11, 0
    %p130 = por %p128, %p129
    %p131 = scmp.ne.s32.totalorder %s120, %s123
    %p132 = scmp.eq.s32.totalorder %s16, 1
    %p133 = por %p131, %p132
    %p134 = scmp.ne.s32.totalorder %s123, %s124
    %p135 = scmp.eq.s32.totalorder %s16, 0
    %p136 = por %p134, %p135
    %p137 = scmp.ne.s32.totalorder %s123, %s124
    %p138 = scmp.eq.s32.totalorder %s17, 1
    %p139 = por %p137, %p138
    %p141 = scmp.ne.s32.totalorder %s124, %s140
    %p142 = scmp.eq.s32.totalorder %s17, 0
    %p143 = por %p141, %p142
    %p144 = scmp.le.s32.totalorder 1, %s11
    %p145 = scmp.lt.s32.totalorder %s11, 3
    %p146 = pnand %p144, %p145
    %p147 = pneg %p146
    // Predicated region
    $region9: #{residual_block3d_forward.6} parent=5 // pred_check
      _
    $region10: #{residual_block3d_forward.6} parent=5 // pred_check_branch
      %149 = sbr.rel (%p146) target = $region12
    $region11: #{residual_block3d_forward.6} parent=5 // pred_region
      %s150 = ssub.s32 %s11, 1
      // Predicated region
      $region13: #{residual_block3d_forward.6} parent=11 // pred_check
        %p151 = pneg %p58
      $region14: #{residual_block3d_forward.6} parent=11 // pred_check_branch
        %153 = sbr.rel (%p151) target = $region16
      $region15: #{residual_block3d_forward.6} parent=11 // pred_region
        _
      $region16: #{residual_block3d_forward.6} parent=11 // pred_fallthru
        _
    $region12: #{residual_block3d_forward.6} parent=5 // pred_fallthru
      _
    %p154 = scmp.lt.s32.totalorder %s11, 2
    // Predicated region
    $region17: #{residual_block3d_forward.6} parent=5 // pred_check
      %p155 = pneg %p154
    $region18: #{residual_block3d_forward.6} parent=5 // pred_check_branch
      %157 = sbr.rel (%p155) target = $region20
    $region19: #{residual_block3d_forward.6} parent=5 // pred_region
      // Predicated region
      $region21: #{residual_block3d_forward.6} parent=19 // pred_check
        %p158 = pneg %p31
      $region22: #{residual_block3d_forward.6} parent=19 // pred_check_branch
        %160 = sbr.rel (%p158) target = $region24
      $region23: #{residual_block3d_forward.6} parent=19 // pred_region
        %s161 = smul.u32 64, %s11
        %p162 = scmp.lt.s32.totalorder %s161, 127
        %s163 = scalar_select %p162, %s161, 127
        %s164 = smul.addr %s163, 4
        %s165 = scalar_lea.vmem %s0, %s164
        %s166 = smul.u32 64, %s11
      $region24: #{residual_block3d_forward.6} parent=19 // pred_fallthru
        _
    $region20: #{residual_block3d_forward.6} parent=5 // pred_fallthru
      _
    %p167 = scmp.le.s32.totalorder 1, %s11
    %p168 = scmp.lt.s32.totalorder %s11, 3
    %p169 = pnand %p167, %p168
    %p170 = pneg %p169
    // Predicated region
    $region25: #{residual_block3d_forward.6} parent=5 // pred_check
      _
    $region26: #{residual_block3d_forward.6} parent=5 // pred_check_branch
      %172 = sbr.rel (%p169) target = $region28
    $region27: #{residual_block3d_forward.6} parent=5 // pred_region
      %s173 = ssub.s32 %s11, 1
      %s174 = smul.u32 64, %s16
      %p175 = scmp.lt.s32.totalorder %s174, 127
      %s176 = scalar_select %p175, %s174, 127
      %s177 = smul.addr %s176, 4
      %s178 = scalar_lea.vmem %s0, %s177
      %p179 = pneg %p37
      %p180 = pneg %p34
      %p181 = pneg %p58
      %p182 = pneg %p55
      %p183 = pneg %p84
      %p184 = pneg %p81
      %s185 = smul.u32 64, %s16
      %p186 = scmp.lt.s32.totalorder %s185, 127
      %s187 = scalar_select %p186, %s185, 127
      %s188 = smul.addr %s187, 8
      %s189 = scalar_lea.vmem %s2, %s188
      %p190 = pneg %p110
      %p191 = pneg %p107
      %p192 = scmp.lt.s32.totalorder %s16, 1
      %s193 = scalar_select %p192, %s16, 1
      %s194 = scalar_lea.vmem %s3, %s193
      %p195 = pneg %p136
      %p196 = pneg %p133
      %p197 = scmp.lt.s32.totalorder %s16, 1
      %s198 = scalar_select %p197, %s16, 1
      %s199 = scalar_lea.vmem %s4, %s198
      %s200 = smul.u32 64, %s16
      %p201 = scmp.lt.s32.totalorder %s200, 127
      %s202 = scalar_select %p201, %s200, 127
      %s203 = smul.addr %s202, 4
      %s204 = scalar_lea.vmem %s0, %s203
      %s205 = smul.u32 64, %s16
      %s206 = smul.u32 64, %s16
      %p207 = scmp.lt.s32.totalorder %s206, 127
      %s208 = scalar_select %p207, %s206, 127
      %s209 = smul.addr %s208, 8
      %s210 = scalar_lea.vmem %s2, %s209
      %s211 = smul.u32 64, %s16
      %p212 = scmp.lt.s32.totalorder %s16, 1
      %s213 = scalar_select %p212, %s16, 1
      %s214 = scalar_lea.vmem %s3, %s213
      %p215 = scmp.lt.s32.totalorder %s16, 1
      %s216 = scalar_select %p215, %s16, 1
      %s217 = scalar_lea.vmem %s4, %s216
      %v219 = vld [vmem:[%s204] sm:$0xf]
      %v220 = vld [vmem:[%s204 + $0x4] sm:$0xf]
      %v221 = vld [vmem:[%s204 + $0x8] sm:$0xf]
      %v222 = vld [vmem:[%s204 + $0xc] sm:$0xf]
      %v223 = vld [vmem:[%s204 + $0x10] sm:$0xf]
      %v224 = vld [vmem:[%s204 + $0x14] sm:$0xf]
      %v225 = vld [vmem:[%s204 + $0x18] sm:$0xf]
      %v226 = vld [vmem:[%s204 + $0x1c] sm:$0xf]
      %v227 = vld [vmem:[%s204 + $0x20] sm:$0xf]
      %v228 = vld [vmem:[%s204 + $0x24] sm:$0xf]
      %v229 = vld [vmem:[%s204 + $0x28] sm:$0xf]
      %v230 = vld [vmem:[%s204 + $0x2c] sm:$0xf]
      %v231 = vld [vmem:[%s204 + $0x30] sm:$0xf]
      %v232 = vld [vmem:[%s204 + $0x34] sm:$0xf]
      %v233 = vld [vmem:[%s204 + $0x38] sm:$0xf]
      %v234 = vld [vmem:[%s204 + $0x3c] sm:$0xf]
      %v235 = vld [vmem:[%s204 + $0x40] sm:$0xf]
      %v236 = vld [vmem:[%s204 + $0x44] sm:$0xf]
      %v237 = vld [vmem:[%s204 + $0x48] sm:$0xf]
      %v238 = vld [vmem:[%s204 + $0x4c] sm:$0xf]
      %v239 = vld [vmem:[%s204 + $0x50] sm:$0xf]
      %v240 = vld [vmem:[%s204 + $0x54] sm:$0xf]
      %v241 = vld [vmem:[%s204 + $0x58] sm:$0xf]
      %v242 = vld [vmem:[%s204 + $0x5c] sm:$0xf]
      %v243 = vld [vmem:[%s204 + $0x60] sm:$0xf]
      %v244 = vld [vmem:[%s204 + $0x64] sm:$0xf]
      %v245 = vld [vmem:[%s204 + $0x68] sm:$0xf]
      %v246 = vld [vmem:[%s204 + $0x6c] sm:$0xf]
      %v247 = vld [vmem:[%s204 + $0x70] sm:$0xf]
      %v248 = vld [vmem:[%s204 + $0x74] sm:$0xf]
      %v249 = vld [vmem:[%s204 + $0x78] sm:$0xf]
      %v250 = vld [vmem:[%s204 + $0x7c] sm:$0xf]
      %v251 = vld [vmem:[%s204 + $0x80] sm:$0xf]
      %v252 = vld [vmem:[%s204 + $0x84] sm:$0xf]
      %v253 = vld [vmem:[%s204 + $0x88] sm:$0xf]
      %v254 = vld [vmem:[%s204 + $0x8c] sm:$0xf]
      %v255 = vld [vmem:[%s204 + $0x90] sm:$0xf]
      %v256 = vld [vmem:[%s204 + $0x94] sm:$0xf]
      %v257 = vld [vmem:[%s204 + $0x98] sm:$0xf]
      %v258 = vld [vmem:[%s204 + $0x9c] sm:$0xf]
      %v259 = vld [vmem:[%s204 + $0xa0] sm:$0xf]
      %v260 = vld [vmem:[%s204 + $0xa4] sm:$0xf]
      %v261 = vld [vmem:[%s204 + $0xa8] sm:$0xf]
      %v262 = vld [vmem:[%s204 + $0xac] sm:$0xf]
      %v263 = vld [vmem:[%s204 + $0xb0] sm:$0xf]
      %v264 = vld [vmem:[%s204 + $0xb4] sm:$0xf]
      %v265 = vld [vmem:[%s204 + $0xb8] sm:$0xf]
      %v266 = vld [vmem:[%s204 + $0xbc] sm:$0xf]
      %v267 = vld [vmem:[%s204 + $0xc0] sm:$0xf]
      %v268 = vld [vmem:[%s204 + $0xc4] sm:$0xf]
      %v269 = vld [vmem:[%s204 + $0xc8] sm:$0xf]
      %v270 = vld [vmem:[%s204 + $0xcc] sm:$0xf]
      %v271 = vld [vmem:[%s204 + $0xd0] sm:$0xf]
      %v272 = vld [vmem:[%s204 + $0xd4] sm:$0xf]
      %v273 = vld [vmem:[%s204 + $0xd8] sm:$0xf]
      %v274 = vld [vmem:[%s204 + $0xdc] sm:$0xf]
      %v275 = vld [vmem:[%s204 + $0xe0] sm:$0xf]
      %v276 = vld [vmem:[%s204 + $0xe4] sm:$0xf]
      %v277 = vld [vmem:[%s204 + $0xe8] sm:$0xf]
      %v278 = vld [vmem:[%s204 + $0xec] sm:$0xf]
      %v279 = vld [vmem:[%s204 + $0xf0] sm:$0xf]
      %v280 = vld [vmem:[%s204 + $0xf4] sm:$0xf]
      %v281 = vld [vmem:[%s204 + $0xf8] sm:$0xf]
      %v282 = vld [vmem:[%s204 + $0xfc] sm:$0xf]
      %v283 = vld [vmem:[%s1] sm:$0x3]
      %v348 = vunpack.c.l.b16 %v219
      %v349 = vunpack.c.l.b16 %v220
      %v350 = vunpack.c.l.b16 %v221
      %v351 = vunpack.c.l.b16 %v222
      %v352 = vunpack.c.l.b16 %v223
      %v353 = vunpack.c.l.b16 %v224
      %v354 = vunpack.c.l.b16 %v225
      %v355 = vunpack.c.l.b16 %v226
      %v356 = vunpack.c.l.b16 %v227
      %v357 = vunpack.c.l.b16 %v228
      %v358 = vunpack.c.l.b16 %v229
      %v359 = vunpack.c.l.b16 %v230
      %v360 = vunpack.c.l.b16 %v231
      %v361 = vunpack.c.l.b16 %v232
      %v362 = vunpack.c.l.b16 %v233
      %v363 = vunpack.c.l.b16 %v234
      %v364 = vunpack.c.l.b16 %v235
      %v365 = vunpack.c.l.b16 %v236
      %v366 = vunpack.c.l.b16 %v237
      %v367 = vunpack.c.l.b16 %v238
      %v368 = vunpack.c.l.b16 %v239
      %v369 = vunpack.c.l.b16 %v240
      %v370 = vunpack.c.l.b16 %v241
      %v371 = vunpack.c.l.b16 %v242
      %v372 = vunpack.c.l.b16 %v243
      %v373 = vunpack.c.l.b16 %v244
      %v374 = vunpack.c.l.b16 %v245
      %v375 = vunpack.c.l.b16 %v246
      %v376 = vunpack.c.l.b16 %v247
      %v377 = vunpack.c.l.b16 %v248
      %v378 = vunpack.c.l.b16 %v249
      %v379 = vunpack.c.l.b16 %v250
      %v380 = vunpack.c.l.b16 %v251
      %v381 = vunpack.c.l.b16 %v252
      %v382 = vunpack.c.l.b16 %v253
      %v383 = vunpack.c.l.b16 %v254
      %v384 = vunpack.c.l.b16 %v255
      %v385 = vunpack.c.l.b16 %v256
      %v386 = vunpack.c.l.b16 %v257
      %v387 = vunpack.c.l.b16 %v258
      %v388 = vunpack.c.l.b16 %v259
      %v389 = vunpack.c.l.b16 %v260
      %v390 = vunpack.c.l.b16 %v261
      %v391 = vunpack.c.l.b16 %v262
      %v392 = vunpack.c.l.b16 %v263
      %v393 = vunpack.c.l.b16 %v264
      %v394 = vunpack.c.l.b16 %v265
      %v395 = vunpack.c.l.b16 %v266
      %v396 = vunpack.c.l.b16 %v267
      %v397 = vunpack.c.l.b16 %v268
      %v398 = vunpack.c.l.b16 %v269
      %v399 = vunpack.c.l.b16 %v270
      %v400 = vunpack.c.l.b16 %v271
      %v401 = vunpack.c.l.b16 %v272
      %v402 = vunpack.c.l.b16 %v273
      %v403 = vunpack.c.l.b16 %v274
      %v404 = vunpack.c.l.b16 %v275
      %v405 = vunpack.c.l.b16 %v276
      %v406 = vunpack.c.l.b16 %v277
      %v407 = vunpack.c.l.b16 %v278
      %v408 = vunpack.c.l.b16 %v279
      %v409 = vunpack.c.l.b16 %v280
      %v410 = vunpack.c.l.b16 %v281
      %v411 = vunpack.c.l.b16 %v282
      %v412 = vpack.c.b16 %v349, %v348
      %v413 = vpack.c.b16 %v351, %v350
      %v414 = vpack.c.b16 %v353, %v352
      %v415 = vpack.c.b16 %v355, %v354
      %v416 = vpack.c.b16 %v357, %v356
      %v417 = vpack.c.b16 %v359, %v358
      %v418 = vpack.c.b16 %v361, %v360
      %v419 = vpack.c.b16 %v363, %v362
      %v420 = vpack.c.b16 %v365, %v364
      %v421 = vpack.c.b16 %v367, %v366
      %v422 = vpack.c.b16 %v369, %v368
      %v423 = vpack.c.b16 %v371, %v370
      %v424 = vpack.c.b16 %v373, %v372
      %v425 = vpack.c.b16 %v375, %v374
      %v426 = vpack.c.b16 %v377, %v376
      %v427 = vpack.c.b16 %v379, %v378
      %v428 = vpack.c.b16 %v381, %v380
      %v429 = vpack.c.b16 %v383, %v382
      %v430 = vpack.c.b16 %v385, %v384
      %v431 = vpack.c.b16 %v387, %v386
      %v432 = vpack.c.b16 %v389, %v388
      %v433 = vpack.c.b16 %v391, %v390
      %v434 = vpack.c.b16 %v393, %v392
      %v435 = vpack.c.b16 %v395, %v394
      %v436 = vpack.c.b16 %v397, %v396
      %v437 = vpack.c.b16 %v399, %v398
      %v438 = vpack.c.b16 %v401, %v400
      %v439 = vpack.c.b16 %v403, %v402
      %v440 = vpack.c.b16 %v405, %v404
      %v441 = vpack.c.b16 %v407, %v406
      %v442 = vpack.c.b16 %v409, %v408
      %v443 = vpack.c.b16 %v411, %v410
      %vm444 = vcmask 31744
      %v446 = vsel %vm444, %v412, 0
      %v449 = vsel %vm444, %v413, 0
      %v452 = vsel %vm444, %v414, 0
      %v455 = vsel %vm444, %v415, 0
      %v458 = vsel %vm444, %v416, 0
      %v461 = vsel %vm444, %v417, 0
      %v464 = vsel %vm444, %v418, 0
      %v467 = vsel %vm444, %v419, 0
      %v470 = vsel %vm444, %v420, 0
      %v473 = vsel %vm444, %v421, 0
      %v476 = vsel %vm444, %v422, 0
      %v479 = vsel %vm444, %v423, 0
      %v482 = vsel %vm444, %v424, 0
      %v485 = vsel %vm444, %v425, 0
      %v488 = vsel %vm444, %v426, 0
      %v491 = vsel %vm444, %v427, 0
      %v494 = vsel %vm444, %v428, 0
      %v497 = vsel %vm444, %v429, 0
      %v500 = vsel %vm444, %v430, 0
      %v503 = vsel %vm444, %v431, 0
      %v506 = vsel %vm444, %v432, 0
      %v509 = vsel %vm444, %v433, 0
      %v512 = vsel %vm444, %v434, 0
      %v515 = vsel %vm444, %v435, 0
      %v518 = vsel %vm444, %v436, 0
      %v521 = vsel %vm444, %v437, 0
      %v524 = vsel %vm444, %v438, 0
      %v527 = vsel %vm444, %v439, 0
      %v530 = vsel %vm444, %v440, 0
      %v533 = vsel %vm444, %v441, 0
      %v536 = vsel %vm444, %v442, 0
      %v539 = vsel %vm444, %v443, 0
      %vm541 = vcmask 1041408
      %v543 = vsel %vm541, %v283, 0
      %545 = vmatprep.subr.bf16.mxu0 0
      %546 = vmatpush1.bf16.msra.mxu0 %v543
      %547 = vmatprep.subr.bf16.mxu0 0
      %548 = vmatpush1.bf16.msra.mxu0 0
      %549 = vmatprep.subr.bf16.mxu0 0
      %550 = vmatpush1.bf16.msra.mxu0 0
      %551 = vmatprep.subr.bf16.mxu0 0
      %552 = vmatpush1.bf16.msra.mxu0 0
      %553 = vmatprep.subr.bf16.mxu0 0
      %554 = vmatpush1.bf16.msra.mxu0 0
      %555 = vmatprep.subr.bf16.mxu0 0
      %556 = vmatpush1.bf16.msra.mxu0 0
      %557 = vmatprep.subr.bf16.mxu0 0
      %558 = vmatpush1.bf16.msra.mxu0 0
      %559 = vmatprep.subr.bf16.mxu0 0
      %560 = vmatpush1.bf16.msra.mxu0 0
      %561 = vmatprep.subr.bf16.mxu0 0
      %562 = vmatpush1.bf16.msra.mxu0 0
      %563 = vmatprep.subr.bf16.mxu0 0
      %564 = vmatpush1.bf16.msra.mxu0 0
      %565 = vmatprep.subr.bf16.mxu0 0
      %566 = vmatpush1.bf16.msra.mxu0 0
      %567 = vmatprep.subr.bf16.mxu0 0
      %568 = vmatpush1.bf16.msra.mxu0 0
      %569 = vmatprep.subr.bf16.mxu0 0
      %570 = vmatpush1.bf16.msra.mxu0 0
      %571 = vmatprep.subr.bf16.mxu0 0
      %572 = vmatpush1.bf16.msra.mxu0 0
      %573 = vmatprep.subr.bf16.mxu0 0
      %574 = vmatpush1.bf16.msra.mxu0 0
      %575 = vmatprep.subr.bf16.mxu0 0
      %576 = vmatpush1.bf16.msra.mxu0 0
      %577 = vmatprep.mubr.bf16.mxu0 0
      %578 = vmatmul.mubr.bf16.gmra.mrb[0].mxu0 %v446
      %v579 = vpop.f32.mrb[0].mxu0
      %v580 = vadd.f32 0.0, %v579
      %v581 = vpop.f32.mrb[0].mxu0
      %v582 = vpop.f32.mrb[0].mxu0
      %v583 = vadd.f32 0.0, %v582
      %v584 = vpop.f32.mrb[0].mxu0
      %585 = vmatprep.mubr.bf16.mxu0 0
      %586 = vmatmul.mubr.bf16.gmra.mrb[0].mxu0 %v449
      %v587 = vpop.f32.mrb[0].mxu0
      %v588 = vadd.f32 0.0, %v587
      %v589 = vpop.f32.mrb[0].mxu0
      %v590 = vpop.f32.mrb[0].mxu0
      %v591 = vadd.f32 0.0, %v590
      %v592 = vpop.f32.mrb[0].mxu0
      %593 = vmatprep.mubr.bf16.mxu0 0
      %594 = vmatmul.mubr.bf16.gmra.mrb[0].mxu0 %v452
      %v595 = vpop.f32.mrb[0].mxu0
      %v596 = vadd.f32 0.0, %v595
      %v597 = vpop.f32.mrb[0].mxu0
      %v598 = vpop.f32.mrb[0].mxu0
      %v599 = vadd.f32 0.0, %v598
      %v600 = vpop.f32.mrb[0].mxu0
      %601 = vmatprep.mubr.bf16.mxu0 0
      %602 = vmatmul.mubr.bf16.gmra.mrb[0].mxu0 %v455
      %v603 = vpop.f32.mrb[0].mxu0
      %v604 = vadd.f32 0.0, %v603
      %v605 = vpop.f32.mrb[0].mxu0
      %v606 = vpop.f32.mrb[0].mxu0
      %v607 = vadd.f32 0.0, %v606
      %v608 = vpop.f32.mrb[0].mxu0
      %609 = vmatprep.mubr.bf16.mxu0 0
      %610 = vmatmul.mubr.bf16.gmra.mrb[0].mxu0 %v458
      %v611 = vpop.f32.mrb[0].mxu0
      %v612 = vadd.f32 0.0, %v611
      %v613 = vpop.f32.mrb[0].mxu0
      %v614 = vpop.f32.mrb[0].mxu0
      %v615 = vadd.f32 0.0, %v614
      %v616 = vpop.f32.mrb[0].mxu0
      %617 = vmatprep.mubr.bf16.mxu0 0
      %618 = vmatmul.mubr.bf16.gmra.mrb[0].mxu0 %v461
      %v619 = vpop.f32.mrb[0].mxu0
      %v620 = vadd.f32 0.0, %v619
      %v621 = vpop.f32.mrb[0].mxu0
      %v622 = vpop.f32.mrb[0].mxu0
      %v623 = vadd.f32 0.0, %v622
      %v624 = vpop.f32.mrb[0].mxu0
      %625 = vmatprep.mubr.bf16.mxu0 0
      %626 = vmatmul.mubr.bf16.gmra.mrb[0].mxu0 %v464
      %v627 = vpop.f32.mrb[0].mxu0
      %v628 = vadd.f32 0.0, %v627
      %v629 = vpop.f32.mrb[0].mxu0
      %v630 = vpop.f32.mrb[0].mxu0
      %v631 = vadd.f32 0.0, %v630
      %v632 = vpop.f32.mrb[0].mxu0
      %633 = vmatprep.mubr.bf16.mxu0 0
      %634 = vmatmul.mubr.bf16.gmra.mrb[0].mxu0 %v467
      %v635 = vpop.f32.mrb[0].mxu0
      %v636 = vadd.f32 0.0, %v635
      %v637 = vpop.f32.mrb[0].mxu0
      %v638 = vpop.f32.mrb[0].mxu0
      %v639 = vadd.f32 0.0, %v638
      %v640 = vpop.f32.mrb[0].mxu0
      %641 = vmatprep.mubr.bf16.mxu0 0
      %642 = vmatmul.mubr.bf16.gmra.mrb[0].mxu0 %v470
      %v643 = vpop.f32.mrb[0].mxu0
      %v644 = vadd.f32 0.0, %v643
      %v645 = vpop.f32.mrb[0].mxu0
      %v646 = vpop.f32.mrb[0].mxu0
      %v647 = vadd.f32 0.0, %v646
      %v648 = vpop.f32.mrb[0].mxu0
      %649 = vmatprep.mubr.bf16.mxu0 0
      %650 = vmatmul.mubr.bf16.gmra.mrb[0].mxu0 %v473
      %v651 = vpop.f32.mrb[0].mxu0
      %v652 = vadd.f32 0.0, %v651
      %v653 = vpop.f32.mrb[0].mxu0
      %v654 = vpop.f32.mrb[0].mxu0
      %v655 = vadd.f32 0.0, %v654
      %v656 = vpop.f32.mrb[0].mxu0
      %657 = vmatprep.mubr.bf16.mxu0 0
      %658 = vmatmul.mubr.bf16.gmra.mrb[0].mxu0 %v476
      %v659 = vpop.f32.mrb[0].mxu0
      %v660 = vadd.f32 0.0, %v659
      %v661 = vpop.f32.mrb[0].mxu0
      %v662 = vpop.f32.mrb[0].mxu0
      %v663 = vadd.f32 0.0, %v662
      %v664 = vpop.f32.mrb[0].mxu0
      %665 = vmatprep.mubr.bf16.mxu0 0
      %666 = vmatmul.mubr.bf16.gmra.mrb[0].mxu0 %v479
      %v667 = vpop.f32.mrb[0].mxu0
      %v668 = vadd.f32 0.0, %v667
      %v669 = vpop.f32.mrb[0].mxu0
      %v670 = vpop.f32.mrb[0].mxu0
      %v671 = vadd.f32 0.0, %v670
      %v672 = vpop.f32.mrb[0].mxu0
      %673 = vmatprep.mubr.bf16.mxu0 0
      %674 = vmatmul.mubr.bf16.gmra.mrb[0].mxu0 %v482
      %v675 = vpop.f32.mrb[0].mxu0
      %v676 = vadd.f32 0.0, %v675
      %v677 = vpop.f32.mrb[0].mxu0
      %v678 = vpop.f32.mrb[0].mxu0
      %v679 = vadd.f32 0.0, %v678
      %v680 = vpop.f32.mrb[0].mxu0
      %681 = vmatprep.mubr.bf16.mxu0 0
      %682 = vmatmul.mubr.bf16.gmra.mrb[0].mxu0 %v485
      %v683 = vpop.f32.mrb[0].mxu0
      %v684 = vadd.f32 0.0, %v683
      %v685 = vpop.f32.mrb[0].mxu0
      %v686 = vpop.f32.mrb[0].mxu0
      %v687 = vadd.f32 0.0, %v686
      %v688 = vpop.f32.mrb[0].mxu0
      %689 = vmatprep.mubr.bf16.mxu0 0
      %690 = vmatmul.mubr.bf16.gmra.mrb[0].mxu0 %v488
      %v691 = vpop.f32.mrb[0].mxu0
      %v692 = vadd.f32 0.0, %v691
      %v693 = vpop.f32.mrb[0].mxu0
      %v694 = vpop.f32.mrb[0].mxu0
      %v695 = vadd.f32 0.0, %v694
      %v696 = vpop.f32.mrb[0].mxu0
      %697 = vmatprep.mubr.bf16.mxu0 0
      %698 = vmatmul.mubr.bf16.gmra.mrb[0].mxu0 %v491
      %v699 = vpop.f32.mrb[0].mxu0
      %v700 = vadd.f32 0.0, %v699
      %v701 = vpop.f32.mrb[0].mxu0
      %v702 = vpop.f32.mrb[0].mxu0
      %v703 = vadd.f32 0.0, %v702
      %v704 = vpop.f32.mrb[0].mxu0
      %705 = vmatprep.mubr.bf16.mxu0 0
      %706 = vmatmul.mubr.bf16.gmra.mrb[0].mxu0 %v494
      %v707 = vpop.f32.mrb[0].mxu0
      %v708 = vadd.f32 0.0, %v707
      %v709 = vpop.f32.mrb[0].mxu0
      %v710 = vpop.f32.mrb[0].mxu0
      %v711 = vadd.f32 0.0, %v710
      %v712 = vpop.f32.mrb[0].mxu0
      %713 = vmatprep.mubr.bf16.mxu0 0
      %714 = vmatmul.mubr.bf16.gmra.mrb[0].mxu0 %v497
      %v715 = vpop.f32.mrb[0].mxu0
      %v716 = vadd.f32 0.0, %v715
      %v717 = vpop.f32.mrb[0].mxu0
      %v718 = vpop.f32.mrb[0].mxu0
      %v719 = vadd.f32 0.0, %v718
      %v720 = vpop.f32.mrb[0].mxu0
      %721 = vmatprep.mubr.bf16.mxu0 0
      %722 = vmatmul.mubr.bf16.gmra.mrb[0].mxu0 %v500
      %v723 = vpop.f32.mrb[0].mxu0
      %v724 = vadd.f32 0.0, %v723
      %v725 = vpop.f32.mrb[0].mxu0
      %v726 = vpop.f32.mrb[0].mxu0
      %v727 = vadd.f32 0.0, %v726
      %v728 = vpop.f32.mrb[0].mxu0
      %729 = vmatprep.mubr.bf16.mxu0 0
      %730 = vmatmul.mubr.bf16.gmra.mrb[0].mxu0 %v503
      %v731 = vpop.f32.mrb[0].mxu0
      %v732 = vadd.f32 0.0, %v731
      %v733 = vpop.f32.mrb[0].mxu0
      %v734 = vpop.f32.mrb[0].mxu0
      %v735 = vadd.f32 0.0, %v734
      %v736 = vpop.f32.mrb[0].mxu0
      %737 = vmatprep.mubr.bf16.mxu0 0
      %738 = vmatmul.mubr.bf16.gmra.mrb[0].mxu0 %v506
      %v739 = vpop.f32.mrb[0].mxu0
      %v740 = vadd.f32 0.0, %v739
      %v741 = vpop.f32.mrb[0].mxu0
      %v742 = vpop.f32.mrb[0].mxu0
      %v743 = vadd.f32 0.0, %v742
      %v744 = vpop.f32.mrb[0].mxu0
      %745 = vmatprep.mubr.bf16.mxu0 0
      %746 = vmatmul.mubr.bf16.gmra.mrb[0].mxu0 %v509
      %v747 = vpop.f32.mrb[0].mxu0
      %v748 = vadd.f32 0.0, %v747
      %v749 = vpop.f32.mrb[0].mxu0
      %v750 = vpop.f32.mrb[0].mxu0
      %v751 = vadd.f32 0.0, %v750
      %v752 = vpop.f32.mrb[0].mxu0
      %753 = vmatprep.mubr.bf16.mxu0 0
      %754 = vmatmul.mubr.bf16.gmra.mrb[0].mxu0 %v512
      %v755 = vpop.f32.mrb[0].mxu0
      %v756 = vadd.f32 0.0, %v755
      %v757 = vpop.f32.mrb[0].mxu0
      %v758 = vpop.f32.mrb[0].mxu0
      %v759 = vadd.f32 0.0, %v758
      %v760 = vpop.f32.mrb[0].mxu0
      %761 = vmatprep.mubr.bf16.mxu0 0
      %762 = vmatmul.mubr.bf16.gmra.mrb[0].mxu0 %v515
      %v763 = vpop.f32.mrb[0].mxu0
      %v764 = vadd.f32 0.0, %v763
      %v765 = vpop.f32.mrb[0].mxu0
      %v766 = vpop.f32.mrb[0].mxu0
      %v767 = vadd.f32 0.0, %v766
      %v768 = vpop.f32.mrb[0].mxu0
      %769 = vmatprep.mubr.bf16.mxu0 0
      %770 = vmatmul.mubr.bf16.gmra.mrb[0].mxu0 %v518
      %v771 = vpop.f32.mrb[0].mxu0
      %v772 = vadd.f32 0.0, %v771
      %v773 = vpop.f32.mrb[0].mxu0
      %v774 = vpop.f32.mrb[0].mxu0
      %v775 = vadd.f32 0.0, %v774
      %v776 = vpop.f32.mrb[0].mxu0
      %777 = vmatprep.mubr.bf16.mxu0 0
      %778 = vmatmul.mubr.bf16.gmra.mrb[0].mxu0 %v521
      %v779 = vpop.f32.mrb[0].mxu0
      %v780 = vadd.f32 0.0, %v779
      %v781 = vpop.f32.mrb[0].mxu0
      %v782 = vpop.f32.mrb[0].mxu0
      %v783 = vadd.f32 0.0, %v782
      %v784 = vpop.f32.mrb[0].mxu0
      %785 = vmatprep.mubr.bf16.mxu0 0
      %786 = vmatmul.mubr.bf16.gmra.mrb[0].mxu0 %v524
      %v787 = vpop.f32.mrb[0].mxu0
      %v788 = vadd.f32 0.0, %v787
      %v789 = vpop.f32.mrb[0].mxu0
      %v790 = vpop.f32.mrb[0].mxu0
      %v791 = vadd.f32 0.0, %v790
      %v792 = vpop.f32.mrb[0].mxu0
      %793 = vmatprep.mubr.bf16.mxu0 0
      %794 = vmatmul.mubr.bf16.gmra.mrb[0].mxu0 %v527
      %v795 = vpop.f32.mrb[0].mxu0
      %v796 = vadd.f32 0.0, %v795
      %v797 = vpop.f32.mrb[0].mxu0
      %v798 = vpop.f32.mrb[0].mxu0
      %v799 = vadd.f32 0.0, %v798
      %v800 = vpop.f32.mrb[0].mxu0
      %801 = vmatprep.mubr.bf16.mxu0 0
      %802 = vmatmul.mubr.bf16.gmra.mrb[0].mxu0 %v530
      %v803 = vpop.f32.mrb[0].mxu0
      %v804 = vadd.f32 0.0, %v803
      %v805 = vpop.f32.mrb[0].mxu0
      %v806 = vpop.f32.mrb[0].mxu0
      %v807 = vadd.f32 0.0, %v806
      %v808 = vpop.f32.mrb[0].mxu0
      %809 = vmatprep.mubr.bf16.mxu0 0
      %810 = vmatmul.mubr.bf16.gmra.mrb[0].mxu0 %v533
      %v811 = vpop.f32.mrb[0].mxu0
      %v812 = vadd.f32 0.0, %v811
      %v813 = vpop.f32.mrb[0].mxu0
      %v814 = vpop.f32.mrb[0].mxu0
      %v815 = vadd.f32 0.0, %v814
      %v816 = vpop.f32.mrb[0].mxu0
      %817 = vmatprep.mubr.bf16.mxu0 0
      %818 = vmatmul.mubr.bf16.gmra.mrb[0].mxu0 %v536
      %v819 = vpop.f32.mrb[0].mxu0
      %v820 = vadd.f32 0.0, %v819
      %v821 = vpop.f32.mrb[0].mxu0
      %v822 = vpop.f32.mrb[0].mxu0
      %v823 = vadd.f32 0.0, %v822
      %v824 = vpop.f32.mrb[0].mxu0
      %825 = vmatprep.mubr.bf16.mxu0 0
      %826 = vmatmul.mubr.bf16.gmra.mrb[0].mxu0 %v539
      %v827 = vpop.f32.mrb[0].mxu0
      %v828 = vadd.f32 0.0, %v827
      %v829 = vpop.f32.mrb[0].mxu0
      %v830 = vpop.f32.mrb[0].mxu0
      %v831 = vadd.f32 0.0, %v830
      %v832 = vpop.f32.mrb[0].mxu0
      %833 = vdwg.mxu0
      %vm834 = vcmask 64512
      %835 = vst.msk [vmem:[%s210] sm:$0xff] %vm834, %v580
      %836 = vst.msk [vmem:[%s210 + $0x8] sm:$0xff] %vm834, %v583
      %837 = vst.msk [vmem:[%s210 + $0x10] sm:$0xff] %vm834, %v588
      %838 = vst.msk [vmem:[%s210 + $0x18] sm:$0xff] %vm834, %v591
      %839 = vst.msk [vmem:[%s210 + $0x20] sm:$0xff] %vm834, %v596
      %840 = vst.msk [vmem:[%s210 + $0x28] sm:$0xff] %vm834, %v599
      %841 = vst.msk [vmem:[%s210 + $0x30] sm:$0xff] %vm834, %v604
      %842 = vst.msk [vmem:[%s210 + $0x38] sm:$0xff] %vm834, %v607
      %843 = vst.msk [vmem:[%s210 + $0x40] sm:$0xff] %vm834, %v612
      %844 = vst.msk [vmem:[%s210 + $0x48] sm:$0xff] %vm834, %v615
      %845 = vst.msk [vmem:[%s210 + $0x50] sm:$0xff] %vm834, %v620
      %846 = vst.msk [vmem:[%s210 + $0x58] sm:$0xff] %vm834, %v623
      %847 = vst.msk [vmem:[%s210 + $0x60] sm:$0xff] %vm834, %v628
      %848 = vst.msk [vmem:[%s210 + $0x68] sm:$0xff] %vm834, %v631
      %849 = vst.msk [vmem:[%s210 + $0x70] sm:$0xff] %vm834, %v636
      %850 = vst.msk [vmem:[%s210 + $0x78] sm:$0xff] %vm834, %v639
      %851 = vst.msk [vmem:[%s210 + $0x80] sm:$0xff] %vm834, %v644
      %852 = vst.msk [vmem:[%s210 + $0x88] sm:$0xff] %vm834, %v647
      %853 = vst.msk [vmem:[%s210 + $0x90] sm:$0xff] %vm834, %v652
      %854 = vst.msk [vmem:[%s210 + $0x98] sm:$0xff] %vm834, %v655
      %855 = vst.msk [vmem:[%s210 + $0xa0] sm:$0xff] %vm834, %v660
      %856 = vst.msk [vmem:[%s210 + $0xa8] sm:$0xff] %vm834, %v663
      %857 = vst.msk [vmem:[%s210 + $0xb0] sm:$0xff] %vm834, %v668
      %858 = vst.msk [vmem:[%s210 + $0xb8] sm:$0xff] %vm834, %v671
      %859 = vst.msk [vmem:[%s210 + $0xc0] sm:$0xff] %vm834, %v676
      %860 = vst.msk [vmem:[%s210 + $0xc8] sm:$0xff] %vm834, %v679
      %861 = vst.msk [vmem:[%s210 + $0xd0] sm:$0xff] %vm834, %v684
      %862 = vst.msk [vmem:[%s210 + $0xd8] sm:$0xff] %vm834, %v687
      %863 = vst.msk [vmem:[%s210 + $0xe0] sm:$0xff] %vm834, %v692
      %864 = vst.msk [vmem:[%s210 + $0xe8] sm:$0xff] %vm834, %v695
      %865 = vst.msk [vmem:[%s210 + $0xf0] sm:$0xff] %vm834, %v700
      %866 = vst.msk [vmem:[%s210 + $0xf8] sm:$0xff] %vm834, %v703
      %867 = vst.msk [vmem:[%s210 + $0x100] sm:$0xff] %vm834, %v708
      %868 = vst.msk [vmem:[%s210 + $0x108] sm:$0xff] %vm834, %v711
      %869 = vst.msk [vmem:[%s210 + $0x110] sm:$0xff] %vm834, %v716
      %870 = vst.msk [vmem:[%s210 + $0x118] sm:$0xff] %vm834, %v719
      %871 = vst.msk [vmem:[%s210 + $0x120] sm:$0xff] %vm834, %v724
      %872 = vst.msk [vmem:[%s210 + $0x128] sm:$0xff] %vm834, %v727
      %873 = vst.msk [vmem:[%s210 + $0x130] sm:$0xff] %vm834, %v732
      %874 = vst.msk [vmem:[%s210 + $0x138] sm:$0xff] %vm834, %v735
      %875 = vst.msk [vmem:[%s210 + $0x140] sm:$0xff] %vm834, %v740
      %876 = vst.msk [vmem:[%s210 + $0x148] sm:$0xff] %vm834, %v743
      %877 = vst.msk [vmem:[%s210 + $0x150] sm:$0xff] %vm834, %v748
      %878 = vst.msk [vmem:[%s210 + $0x158] sm:$0xff] %vm834, %v751
      %879 = vst.msk [vmem:[%s210 + $0x160] sm:$0xff] %vm834, %v756
      %880 = vst.msk [vmem:[%s210 + $0x168] sm:$0xff] %vm834, %v759
      %881 = vst.msk [vmem:[%s210 + $0x170] sm:$0xff] %vm834, %v764
      %882 = vst.msk [vmem:[%s210 + $0x178] sm:$0xff] %vm834, %v767
      %883 = vst.msk [vmem:[%s210 + $0x180] sm:$0xff] %vm834, %v772
      %884 = vst.msk [vmem:[%s210 + $0x188] sm:$0xff] %vm834, %v775
      %885 = vst.msk [vmem:[%s210 + $0x190] sm:$0xff] %vm834, %v780
      %886 = vst.msk [vmem:[%s210 + $0x198] sm:$0xff] %vm834, %v783
      %887 = vst.msk [vmem:[%s210 + $0x1a0] sm:$0xff] %vm834, %v788
      %888 = vst.msk [vmem:[%s210 + $0x1a8] sm:$0xff] %vm834, %v791
      %889 = vst.msk [vmem:[%s210 + $0x1b0] sm:$0xff] %vm834, %v796
      %890 = vst.msk [vmem:[%s210 + $0x1b8] sm:$0xff] %vm834, %v799
      %891 = vst.msk [vmem:[%s210 + $0x1c0] sm:$0xff] %vm834, %v804
      %892 = vst.msk [vmem:[%s210 + $0x1c8] sm:$0xff] %vm834, %v807
      %893 = vst.msk [vmem:[%s210 + $0x1d0] sm:$0xff] %vm834, %v812
      %894 = vst.msk [vmem:[%s210 + $0x1d8] sm:$0xff] %vm834, %v815
      %895 = vst.msk [vmem:[%s210 + $0x1e0] sm:$0xff] %vm834, %v820
      %896 = vst.msk [vmem:[%s210 + $0x1e8] sm:$0xff] %vm834, %v823
      %897 = vst.msk [vmem:[%s210 + $0x1f0] sm:$0xff] %vm834, %v828
      %898 = vst.msk [vmem:[%s210 + $0x1f8] sm:$0xff] %vm834, %v831
      %v899 = vsel %vm834, %v580, 0.0
      %v900 = vsel %vm834, %v583, 0.0
      %v901 = vadd.f32 %v899, %v900
      %v902 = vsel %vm834, %v588, 0.0
      %v903 = vadd.f32 %v901, %v902
      %v904 = vsel %vm834, %v591, 0.0
      %v905 = vadd.f32 %v903, %v904
      %v906 = vsel %vm834, %v596, 0.0
      %v907 = vadd.f32 %v905, %v906
      %v908 = vsel %vm834, %v599, 0.0
      %v909 = vadd.f32 %v907, %v908
      %v910 = vsel %vm834, %v604, 0.0
      %v911 = vadd.f32 %v909, %v910
      %v912 = vsel %vm834, %v607, 0.0
      %v913 = vadd.f32 %v911, %v912
      %v914 = vsel %vm834, %v612, 0.0
      %v915 = vadd.f32 %v913, %v914
      %v916 = vsel %vm834, %v615, 0.0
      %v917 = vadd.f32 %v915, %v916
      %v918 = vsel %vm834, %v620, 0.0
      %v919 = vadd.f32 %v917, %v918
      %v920 = vsel %vm834, %v623, 0.0
      %v921 = vadd.f32 %v919, %v920
      %v922 = vsel %vm834, %v628, 0.0
      %v923 = vadd.f32 %v921, %v922
      %v924 = vsel %vm834, %v631, 0.0
      %v925 = vadd.f32 %v923, %v924
      %v926 = vsel %vm834, %v636, 0.0
      %v927 = vadd.f32 %v925, %v926
      %v928 = vsel %vm834, %v639, 0.0
      %v929 = vadd.f32 %v927, %v928
      %v930 = vsel %vm834, %v644, 0.0
      %v931 = vadd.f32 %v929, %v930
      %v932 = vsel %vm834, %v647, 0.0
      %v933 = vadd.f32 %v931, %v932
      %v934 = vsel %vm834, %v652, 0.0
      %v935 = vadd.f32 %v933, %v934
      %v936 = vsel %vm834, %v655, 0.0
      %v937 = vadd.f32 %v935, %v936
      %v938 = vsel %vm834, %v660, 0.0
      %v939 = vadd.f32 %v937, %v938
      %v940 = vsel %vm834, %v663, 0.0
      %v941 = vadd.f32 %v939, %v940
      %v942 = vsel %vm834, %v668, 0.0
      %v943 = vadd.f32 %v941, %v942
      %v944 = vsel %vm834, %v671, 0.0
      %v945 = vadd.f32 %v943, %v944
      %v946 = vsel %vm834, %v676, 0.0
      %v947 = vadd.f32 %v945, %v946
      %v948 = vsel %vm834, %v679, 0.0
      %v949 = vadd.f32 %v947, %v948
      %v950 = vsel %vm834, %v684, 0.0
      %v951 = vadd.f32 %v949, %v950
      %v952 = vsel %vm834, %v687, 0.0
      %v953 = vadd.f32 %v951, %v952
      %v954 = vsel %vm834, %v692, 0.0
      %v955 = vadd.f32 %v953, %v954
      %v956 = vsel %vm834, %v695, 0.0
      %v957 = vadd.f32 %v955, %v956
      %v958 = vsel %vm834, %v700, 0.0
      %v959 = vadd.f32 %v957, %v958
      %v960 = vsel %vm834, %v703, 0.0
      %v961 = vadd.f32 %v959, %v960
      %v962 = vsel %vm834, %v708, 0.0
      %v963 = vadd.f32 %v961, %v962
      %v964 = vsel %vm834, %v711, 0.0
      %v965 = vadd.f32 %v963, %v964
      %v966 = vsel %vm834, %v716, 0.0
      %v967 = vadd.f32 %v965, %v966
      %v968 = vsel %vm834, %v719, 0.0
      %v969 = vadd.f32 %v967, %v968
      %v970 = vsel %vm834, %v724, 0.0
      %v971 = vadd.f32 %v969, %v970
      %v972 = vsel %vm834, %v727, 0.0
      %v973 = vadd.f32 %v971, %v972
      %v974 = vsel %vm834, %v732, 0.0
      %v975 = vadd.f32 %v973, %v974
      %v976 = vsel %vm834, %v735, 0.0
      %v977 = vadd.f32 %v975, %v976
      %v978 = vsel %vm834, %v740, 0.0
      %v979 = vadd.f32 %v977, %v978
      %v980 = vsel %vm834, %v743, 0.0
      %v981 = vadd.f32 %v979, %v980
      %v982 = vsel %vm834, %v748, 0.0
      %v983 = vadd.f32 %v981, %v982
      %v984 = vsel %vm834, %v751, 0.0
      %v985 = vadd.f32 %v983, %v984
      %v986 = vsel %vm834, %v756, 0.0
      %v987 = vadd.f32 %v985, %v986
      %v988 = vsel %vm834, %v759, 0.0
      %v989 = vadd.f32 %v987, %v988
      %v990 = vsel %vm834, %v764, 0.0
      %v991 = vadd.f32 %v989, %v990
      %v992 = vsel %vm834, %v767, 0.0
      %v993 = vadd.f32 %v991, %v992
      %v994 = vsel %vm834, %v772, 0.0
      %v995 = vadd.f32 %v993, %v994
      %v996 = vsel %vm834, %v775, 0.0
      %v997 = vadd.f32 %v995, %v996
      %v998 = vsel %vm834, %v780, 0.0
      %v999 = vadd.f32 %v997, %v998
      %v1000 = vsel %vm834, %v783, 0.0
      %v1001 = vadd.f32 %v999, %v1000
      %v1002 = vsel %vm834, %v788, 0.0
      %v1003 = vadd.f32 %v1001, %v1002
      %v1004 = vsel %vm834, %v791, 0.0
      %v1005 = vadd.f32 %v1003, %v1004
      %v1006 = vsel %vm834, %v796, 0.0
      %v1007 = vadd.f32 %v1005, %v1006
      %v1008 = vsel %vm834, %v799, 0.0
      %v1009 = vadd.f32 %v1007, %v1008
      %v1010 = vsel %vm834, %v804, 0.0
      %v1011 = vadd.f32 %v1009, %v1010
      %v1012 = vsel %vm834, %v807, 0.0
      %v1013 = vadd.f32 %v1011, %v1012
      %v1014 = vsel %vm834, %v812, 0.0
      %v1015 = vadd.f32 %v1013, %v1014
      %v1016 = vsel %vm834, %v815, 0.0
      %v1017 = vadd.f32 %v1015, %v1016
      %v1018 = vsel %vm834, %v820, 0.0
      %v1019 = vadd.f32 %v1017, %v1018
      %v1020 = vsel %vm834, %v823, 0.0
      %v1021 = vadd.f32 %v1019, %v1020
      %v1022 = vsel %vm834, %v828, 0.0
      %v1023 = vadd.f32 %v1021, %v1022
      %v1024 = vsel %vm834, %v831, 0.0
      %v1025 = vadd.f32 %v1023, %v1024
      %v1026 = vrot.slane %v1025, 4
      %v1027 = vadd.f32 %v1025, %v1026
      %v1028 = vrot.slane %v1027, 2
      %v1029 = vadd.f32 %v1027, %v1028
      %v1030 = vrot.slane %v1029, 1
      %v1031 = vadd.f32 %v1029, %v1030
      %vm1032 = vcmask 57344
      %1033 = vst.msk [vmem:[%s214] sm:$0x1] %vm1032, %v1031
      %v1034 = vmul.f32 %v580, %v580
      %v1035 = vmul.f32 %v583, %v583
      %v1036 = vmul.f32 %v588, %v588
      %v1037 = vmul.f32 %v591, %v591
      %v1038 = vmul.f32 %v596, %v596
      %v1039 = vmul.f32 %v599, %v599
      %v1040 = vmul.f32 %v604, %v604
      %v1041 = vmul.f32 %v607, %v607
      %v1042 = vmul.f32 %v612, %v612
      %v1043 = vmul.f32 %v615, %v615
      %v1044 = vmul.f32 %v620, %v620
      %v1045 = vmul.f32 %v623, %v623
      %v1046 = vmul.f32 %v628, %v628
      %v1047 = vmul.f32 %v631, %v631
      %v1048 = vmul.f32 %v636, %v636
      %v1049 = vmul.f32 %v639, %v639
      %v1050 = vmul.f32 %v644, %v644
      %v1051 = vmul.f32 %v647, %v647
      %v1052 = vmul.f32 %v652, %v652
      %v1053 = vmul.f32 %v655, %v655
      %v1054 = vmul.f32 %v660, %v660
      %v1055 = vmul.f32 %v663, %v663
      %v1056 = vmul.f32 %v668, %v668
      %v1057 = vmul.f32 %v671, %v671
      %v1058 = vmul.f32 %v676, %v676
      %v1059 = vmul.f32 %v679, %v679
      %v1060 = vmul.f32 %v684, %v684
      %v1061 = vmul.f32 %v687, %v687
      %v1062 = vmul.f32 %v692, %v692
      %v1063 = vmul.f32 %v695, %v695
      %v1064 = vmul.f32 %v700, %v700
      %v1065 = vmul.f32 %v703, %v703
      %v1066 = vmul.f32 %v708, %v708
      %v1067 = vmul.f32 %v711, %v711
      %v1068 = vmul.f32 %v716, %v716
      %v1069 = vmul.f32 %v719, %v719
      %v1070 = vmul.f32 %v724, %v724
      %v1071 = vmul.f32 %v727, %v727
      %v1072 = vmul.f32 %v732, %v732
      %v1073 = vmul.f32 %v735, %v735
      %v1074 = vmul.f32 %v740, %v740
      %v1075 = vmul.f32 %v743, %v743
      %v1076 = vmul.f32 %v748, %v748
      %v1077 = vmul.f32 %v751, %v751
      %v1078 = vmul.f32 %v756, %v756
      %v1079 = vmul.f32 %v759, %v759
      %v1080 = vmul.f32 %v764, %v764
      %v1081 = vmul.f32 %v767, %v767
      %v1082 = vmul.f32 %v772, %v772
      %v1083 = vmul.f32 %v775, %v775
      %v1084 = vmul.f32 %v780, %v780
      %v1085 = vmul.f32 %v783, %v783
      %v1086 = vmul.f32 %v788, %v788
      %v1087 = vmul.f32 %v791, %v791
      %v1088 = vmul.f32 %v796, %v796
      %v1089 = vmul.f32 %v799, %v799
      %v1090 = vmul.f32 %v804, %v804
      %v1091 = vmul.f32 %v807, %v807
      %v1092 = vmul.f32 %v812, %v812
      %v1093 = vmul.f32 %v815, %v815
      %v1094 = vmul.f32 %v820, %v820
      %v1095 = vmul.f32 %v823, %v823
      %v1096 = vmul.f32 %v828, %v828
      %v1097 = vmul.f32 %v831, %v831
      %v1098 = vsel %vm834, %v1034, 0.0
      %v1099 = vsel %vm834, %v1035, 0.0
      %v1100 = vadd.f32 %v1098, %v1099
      %v1101 = vsel %vm834, %v1036, 0.0
      %v1102 = vadd.f32 %v1100, %v1101
      %v1103 = vsel %vm834, %v1037, 0.0
      %v1104 = vadd.f32 %v1102, %v1103
      %v1105 = vsel %vm834, %v1038, 0.0
      %v1106 = vadd.f32 %v1104, %v1105
      %v1107 = vsel %vm834, %v1039, 0.0
      %v1108 = vadd.f32 %v1106, %v1107
      %v1109 = vsel %vm834, %v1040, 0.0
      %v1110 = vadd.f32 %v1108, %v1109
      %v1111 = vsel %vm834, %v1041, 0.0
      %v1112 = vadd.f32 %v1110, %v1111
      %v1113 = vsel %vm834, %v1042, 0.0
      %v1114 = vadd.f32 %v1112, %v1113
      %v1115 = vsel %vm834, %v1043, 0.0
      %v1116 = vadd.f32 %v1114, %v1115
      %v1117 = vsel %vm834, %v1044, 0.0
      %v1118 = vadd.f32 %v1116, %v1117
      %v1119 = vsel %vm834, %v1045, 0.0
      %v1120 = vadd.f32 %v1118, %v1119
      %v1121 = vsel %vm834, %v1046, 0.0
      %v1122 = vadd.f32 %v1120, %v1121
      %v1123 = vsel %vm834, %v1047, 0.0
      %v1124 = vadd.f32 %v1122, %v1123
      %v1125 = vsel %vm834, %v1048, 0.0
      %v1126 = vadd.f32 %v1124, %v1125
      %v1127 = vsel %vm834, %v1049, 0.0
      %v1128 = vadd.f32 %v1126, %v1127
      %v1129 = vsel %vm834, %v1050, 0.0
      %v1130 = vadd.f32 %v1128, %v1129
      %v1131 = vsel %vm834, %v1051, 0.0
      %v1132 = vadd.f32 %v1130, %v1131
      %v1133 = vsel %vm834, %v1052, 0.0
      %v1134 = vadd.f32 %v1132, %v1133
      %v1135 = vsel %vm834, %v1053, 0.0
      %v1136 = vadd.f32 %v1134, %v1135
      %v1137 = vsel %vm834, %v1054, 0.0
      %v1138 = vadd.f32 %v1136, %v1137
      %v1139 = vsel %vm834, %v1055, 0.0
      %v1140 = vadd.f32 %v1138, %v1139
      %v1141 = vsel %vm834, %v1056, 0.0
      %v1142 = vadd.f32 %v1140, %v1141
      %v1143 = vsel %vm834, %v1057, 0.0
      %v1144 = vadd.f32 %v1142, %v1143
      %v1145 = vsel %vm834, %v1058, 0.0
      %v1146 = vadd.f32 %v1144, %v1145
      %v1147 = vsel %vm834, %v1059, 0.0
      %v1148 = vadd.f32 %v1146, %v1147
      %v1149 = vsel %vm834, %v1060, 0.0
      %v1150 = vadd.f32 %v1148, %v1149
      %v1151 = vsel %vm834, %v1061, 0.0
      %v1152 = vadd.f32 %v1150, %v1151
      %v1153 = vsel %vm834, %v1062, 0.0
      %v1154 = vadd.f32 %v1152, %v1153
      %v1155 = vsel %vm834, %v1063, 0.0
      %v1156 = vadd.f32 %v1154, %v1155
      %v1157 = vsel %vm834, %v1064, 0.0
      %v1158 = vadd.f32 %v1156, %v1157
      %v1159 = vsel %vm834, %v1065, 0.0
      %v1160 = vadd.f32 %v1158, %v1159
      %v1161 = vsel %vm834, %v1066, 0.0
      %v1162 = vadd.f32 %v1160, %v1161
      %v1163 = vsel %vm834, %v1067, 0.0
      %v1164 = vadd.f32 %v1162, %v1163
      %v1165 = vsel %vm834, %v1068, 0.0
      %v1166 = vadd.f32 %v1164, %v1165
      %v1167 = vsel %vm834, %v1069, 0.0
      %v1168 = vadd.f32 %v1166, %v1167
      %v1169 = vsel %vm834, %v1070, 0.0
      %v1170 = vadd.f32 %v1168, %v1169
      %v1171 = vsel %vm834, %v1071, 0.0
      %v1172 = vadd.f32 %v1170, %v1171
      %v1173 = vsel %vm834, %v1072, 0.0
      %v1174 = vadd.f32 %v1172, %v1173
      %v1175 = vsel %vm834, %v1073, 0.0
      %v1176 = vadd.f32 %v1174, %v1175
      %v1177 = vsel %vm834, %v1074, 0.0
      %v1178 = vadd.f32 %v1176, %v1177
      %v1179 = vsel %vm834, %v1075, 0.0
      %v1180 = vadd.f32 %v1178, %v1179
      %v1181 = vsel %vm834, %v1076, 0.0
      %v1182 = vadd.f32 %v1180, %v1181
      %v1183 = vsel %vm834, %v1077, 0.0
      %v1184 = vadd.f32 %v1182, %v1183
      %v1185 = vsel %vm834, %v1078, 0.0
      %v1186 = vadd.f32 %v1184, %v1185
      %v1187 = vsel %vm834, %v1079, 0.0
      %v1188 = vadd.f32 %v1186, %v1187
      %v1189 = vsel %vm834, %v1080, 0.0
      %v1190 = vadd.f32 %v1188, %v1189
      %v1191 = vsel %vm834, %v1081, 0.0
      %v1192 = vadd.f32 %v1190, %v1191
      %v1193 = vsel %vm834, %v1082, 0.0
      %v1194 = vadd.f32 %v1192, %v1193
      %v1195 = vsel %vm834, %v1083, 0.0
      %v1196 = vadd.f32 %v1194, %v1195
      %v1197 = vsel %vm834, %v1084, 0.0
      %v1198 = vadd.f32 %v1196, %v1197
      %v1199 = vsel %vm834, %v1085, 0.0
      %v1200 = vadd.f32 %v1198, %v1199
      %v1201 = vsel %vm834, %v1086, 0.0
      %v1202 = vadd.f32 %v1200, %v1201
      %v1203 = vsel %vm834, %v1087, 0.0
      %v1204 = vadd.f32 %v1202, %v1203
      %v1205 = vsel %vm834, %v1088, 0.0
      %v1206 = vadd.f32 %v1204, %v1205
      %v1207 = vsel %vm834, %v1089, 0.0
      %v1208 = vadd.f32 %v1206, %v1207
      %v1209 = vsel %vm834, %v1090, 0.0
      %v1210 = vadd.f32 %v1208, %v1209
      %v1211 = vsel %vm834, %v1091, 0.0
      %v1212 = vadd.f32 %v1210, %v1211
      %v1213 = vsel %vm834, %v1092, 0.0
      %v1214 = vadd.f32 %v1212, %v1213
      %v1215 = vsel %vm834, %v1093, 0.0
      %v1216 = vadd.f32 %v1214, %v1215
      %v1217 = vsel %vm834, %v1094, 0.0
      %v1218 = vadd.f32 %v1216, %v1217
      %v1219 = vsel %vm834, %v1095, 0.0
      %v1220 = vadd.f32 %v1218, %v1219
      %v1221 = vsel %vm834, %v1096, 0.0
      %v1222 = vadd.f32 %v1220, %v1221
      %v1223 = vsel %vm834, %v1097, 0.0
      %v1224 = vadd.f32 %v1222, %v1223
      %v1225 = vrot.slane %v1224, 4
      %v1226 = vadd.f32 %v1224, %v1225
      %v1227 = vrot.slane %v1226, 2
      %v1228 = vadd.f32 %v1226, %v1227
      %v1229 = vrot.slane %v1228, 1
      %v1230 = vadd.f32 %v1228, %v1229
      %1231 = vst.msk [vmem:[%s217] sm:$0x1] %vm1032, %v1230
      %s1232 = smul.u32 64, %s16
      %p1233 = scmp.lt.s32.totalorder %s1232, 127
      %s1234 = scalar_select %p1233, %s1232, 127
      %s1235 = smul.addr %s1234, 8
      %s1236 = scalar_lea.vmem %s2, %s1235
      %p1237 = scmp.lt.s32.totalorder %s16, 1
      %s1238 = scalar_select %p1237, %s16, 1
      %s1239 = scalar_lea.vmem %s3, %s1238
      %p1240 = scmp.lt.s32.totalorder %s16, 1
      %s1241 = scalar_select %p1240, %s16, 1
      %s1242 = scalar_lea.vmem %s4, %s1241
      // Predicated region
      $region29: #{residual_block3d_forward.6} parent=27 // pred_check
        %p1243 = pneg %p81
      $region30: #{residual_block3d_forward.6} parent=27 // pred_check_branch
        %1245 = sbr.rel (%p1243) target = $region32
      $region31: #{residual_block3d_forward.6} parent=27 // pred_region
        %s1246 = smul.u32 64, %s16
      $region32: #{residual_block3d_forward.6} parent=27 // pred_fallthru
        _
      // Predicated region
      $region33: #{residual_block3d_forward.6} parent=27 // pred_check
        %p1247 = pneg %p107
      $region34: #{residual_block3d_forward.6} parent=27 // pred_check_branch
        %1249 = sbr.rel (%p1247) target = $region36
      $region35: #{residual_block3d_forward.6} parent=27 // pred_region
        _
      $region36: #{residual_block3d_forward.6} parent=27 // pred_fallthru
        _
      // Predicated region
      $region37: #{residual_block3d_forward.6} parent=27 // pred_check
        %p1250 = pneg %p133
      $region38: #{residual_block3d_forward.6} parent=27 // pred_check_branch
        %1252 = sbr.rel (%p1250) target = $region40
      $region39: #{residual_block3d_forward.6} parent=27 // pred_region
        _
      $region40: #{residual_block3d_forward.6} parent=27 // pred_fallthru
        _
    $region28: #{residual_block3d_forward.6} parent=5 // pred_fallthru
      _
    %p1253 = scmp.le.s32.totalorder 2, %s11
    // Predicated region
    $region41: #{residual_block3d_forward.6} parent=5 // pred_check
      %p1254 = pneg %p1253
    $region42: #{residual_block3d_forward.6} parent=5 // pred_check_branch
      %1256 = sbr.rel (%p1254) target = $region44
    $region43: #{residual_block3d_forward.6} parent=5 // pred_region
      %s1257 = ssub.s32 %s11, 2
      // Predicated region
      $region45: #{residual_block3d_forward.6} parent=43 // pred_check
        %p1258 = pneg %p87
      $region46: #{residual_block3d_forward.6} parent=43 // pred_check_branch
        %1260 = sbr.rel (%p1258) target = $region48
      $region47: #{residual_block3d_forward.6} parent=43 // pred_region
        %s1261 = smul.u32 64, %s17
        %p1262 = scmp.lt.s32.totalorder %s1261, 127
        %s1263 = scalar_select %p1262, %s1261, 127
        %s1264 = smul.addr %s1263, 8
        %s1265 = scalar_lea.vmem %s2, %s1264
      $region48: #{residual_block3d_forward.6} parent=43 // pred_fallthru
        _
      // Predicated region
      $region49: #{residual_block3d_forward.6} parent=43 // pred_check
        %p1266 = pneg %p113
      $region50: #{residual_block3d_forward.6} parent=43 // pred_check_branch
        %1268 = sbr.rel (%p1266) target = $region52
      $region51: #{residual_block3d_forward.6} parent=43 // pred_region
        %p1269 = scmp.lt.s32.totalorder %s17, 1
        %s1270 = scalar_select %p1269, %s17, 1
        %s1271 = scalar_lea.vmem %s3, %s1270
      $region52: #{residual_block3d_forward.6} parent=43 // pred_fallthru
        _
      // Predicated region
      $region53: #{residual_block3d_forward.6} parent=43 // pred_check
        %p1272 = pneg %p139
      $region54: #{residual_block3d_forward.6} parent=43 // pred_check_branch
        %1274 = sbr.rel (%p1272) target = $region56
      $region55: #{residual_block3d_forward.6} parent=43 // pred_region
        %p1275 = scmp.lt.s32.totalorder %s17, 1
        %s1276 = scalar_select %p1275, %s17, 1
        %s1277 = scalar_lea.vmem %s4, %s1276
      $region56: #{residual_block3d_forward.6} parent=43 // pred_fallthru
        _
    $region44: #{residual_block3d_forward.6} parent=5 // pred_fallthru
      _
  $region6: #{residual_block3d_forward.6} parent=0 // loop_footer
    %s15 = sadd.s32 1, %s11
  $region7: #{residual_block3d_forward.6} parent=0 // loop_footer_branch
    %10 = sbr.rel target = $region3
  $region8: #{residual_block3d_forward.6} parent=0 // loop_exit
    _

// kernel: residual_block3d_forward.4
$region0: #{residual_block3d_forward.4}
  #allocation0 [shape = 'u32[]', space=smem, size = 0x4, offset = 0x4, fixed_abs, tag = 'smem constant byte address 0x4 - core index']
  #allocation1 [shape = 'u32[144,128]{1,0:T(1,128)}', space=vmem, size = 0x12000, scoped, tag = 'internal scratch']
  #allocation2 [shape = 'bf16[128,108]{1,0:T(16,128)(2,1)}', space=vmem, size = 0x8000, scoped, tag = 'scratch operand']
  %s0 = inlined_call_operand.vmem [shape: bf16[2,10,176,4], index: 0, kind: input, shape index: {}]
  %s1 = inlined_call_operand.vmem [shape: bf16[108,8], index: 1, kind: input, shape index: {}]
  %s2 = inlined_call_operand.vmem [shape: f32[1,4], index: 2, kind: input, shape index: {}]
  %s3 = inlined_call_operand.vmem [shape: f32[1,4], index: 3, kind: input, shape index: {}]
  %s4 = inlined_call_operand.vmem [shape: f32[10,176,1], index: 4, kind: input, shape index: {}]
  %s5 = inlined_call_operand.vmem [shape: f32[128,1], index: 5, kind: input, shape index: {}]
  %s6 = inlined_call_operand.vmem [shape: bf16[2,8,128,8], index: 6, kind: output, shape index: {0}]
  %s7 = inlined_call_operand.vmem [shape: f32[2,8,1,8], index: 7, kind: output, shape index: {1}]
  %s8 = inlined_call_operand.vmem [shape: f32[2,8,1,8], index: 8, kind: output, shape index: {2}]
  %9 = xla_tuple %s6, %s7, %s8
  %s10 = sld [smem:[#allocation0]]
  $region73: #{residual_block3d_forward.4} parent=0
    _
  %s12 = ssub.s32 1, %s10
  %s13 = scalar_select 0, %s12, %s10
  loop: start=0, step=1, limit=18
  $region2: #{residual_block3d_forward.4} parent=0 // loop_pre_header
    _
  $region3: #{residual_block3d_forward.4} parent=0 // loop_header
    %s15 = sphi 0, %s19
    %p16 = scmp.ge.s32.totalorder %s15, 18
    %s22 = sphi 0, %s34
    %s23 = sphi 0, %s30
    %s24 = sphi 0, %s22
    %s25 = sphi 0, %s23
    %s26 = sphi 0, %s24
    %s27 = sphi 0, %s25
    %s37 = sphi 0, %s39
    %s40 = sphi 0, %s37
    %s41 = sphi 0, %s40
    %s57 = sphi 0, %s41
    %s61 = sphi 0, %s61
    %s63 = sphi 0, %s61
    %s64 = sphi 0, %s63
    %s78 = sphi 0, %s64
    %s82 = sphi 0, %s82
    %s84 = sphi 0, %s82
    %s85 = sphi 0, %s84
    %s99 = sphi 0, %s85
    %s103 = sphi 0, %s103
    %s105 = sphi 0, %s103
    %s106 = sphi 0, %s105
    %s120 = sphi 0, %s106
    %s124 = sphi 0, %s124
    %s126 = sphi 0, %s124
    %s127 = sphi 0, %s126
    %s141 = sphi 0, %s127
    %s145 = sphi 0, %s145
    %s147 = sphi 0, %s145
    %s148 = sphi 0, %s147
    %s162 = sphi 0, %s148
    %s170 = sphi 0, %s172
    %s173 = sphi 0, %s170
    %s174 = sphi 0, %s173
    %s190 = sphi 0, %s174
    %s198 = sphi 0, %s200
    %s201 = sphi 0, %s198
    %s202 = sphi 0, %s201
    %s218 = sphi 0, %s202
    %s226 = sphi 0, %s228
    %s229 = sphi 0, %s226
    %s230 = sphi 0, %s229
    %s246 = sphi 0, %s230
  $region4: #{residual_block3d_forward.4} parent=0 // loop_header_branch
    %18 = sbr.rel (%p16) target = $region8
  $region5: #{residual_block3d_forward.4} parent=0 // loop_body
    %s20 = ssub.s32 %s15, 1
    %s21 = ssub.s32 %s15, 2
    %s28 = sadd.s32 1, %s23
    %p29 = scmp.ge.s32.totalorder %s28, 8
    %s30 = scalar_select %p29, 0, %s28
    %s31 = sadd.s32 1, %s22
    %s32 = scalar_select %p29, %s31, %s22
    %p33 = scmp.ge.s32.totalorder %s32, 2
    %s34 = scalar_select %p33, 0, %s32
    %s35 = ssub.s32 %s22, %s34
    %p36 = scmp.eq.s32.totalorder %s35, 0
    %s38 = sadd.s32 %s37, 1
    %s39 = scalar_select %p36, %s37, %s38
    %p42 = pneg %p36
    %p43 = scmp.eq.s32.totalorder %s15, 15
    %p44 = por %p42, %p43
    %p45 = scmp.ne.s32.totalorder %s37, %s40
    %p46 = scmp.eq.s32.totalorder %s15, 0
    %p47 = por %p45, %p46
    %p48 = scmp.ne.s32.totalorder %s37, %s40
    %p49 = scmp.eq.s32.totalorder %s20, 15
    %p50 = por %p48, %p49
    %p51 = scmp.ne.s32.totalorder %s40, %s41
    %p52 = scmp.eq.s32.totalorder %s20, 0
    %p53 = por %p51, %p52
    %p54 = scmp.ne.s32.totalorder %s40, %s41
    %p55 = scmp.eq.s32.totalorder %s21, 15
    %p56 = por %p54, %p55
    %p58 = scmp.ne.s32.totalorder %s41, %s57
    %p59 = scmp.eq.s32.totalorder %s21, 0
    %p60 = por %p58, %p59
    %s62 = sadd.s32 %s61, 1
    %p65 = scmp.eq.s32.totalorder %s15, 15
    %p66 = scmp.ne.s32.totalorder %s61, %s63
    %p67 = scmp.eq.s32.totalorder %s15, 0
    %p68 = por %p66, %p67
    %p69 = scmp.ne.s32.totalorder %s61, %s63
    %p70 = scmp.eq.s32.totalorder %s20, 15
    %p71 = por %p69, %p70
    %p72 = scmp.ne.s32.totalorder %s63, %s64
    %p73 = scmp.eq.s32.totalorder %s20, 0
    %p74 = por %p72, %p73
    %p75 = scmp.ne.s32.totalorder %s63, %s64
    %p76 = scmp.eq.s32.totalorder %s21, 15
    %p77 = por %p75, %p76
    %p79 = scmp.ne.s32.totalorder %s64, %s78
    %p80 = scmp.eq.s32.totalorder %s21, 0
    %p81 = por %p79, %p80
    %s83 = sadd.s32 %s82, 1
    %p86 = scmp.eq.s32.totalorder %s15, 15
    %p87 = scmp.ne.s32.totalorder %s82, %s84
    %p88 = scmp.eq.s32.totalorder %s15, 0
    %p89 = por %p87, %p88
    %p90 = scmp.ne.s32.totalorder %s82, %s84
    %p91 = scmp.eq.s32.totalorder %s20, 15
    %p92 = por %p90, %p91
    %p93 = scmp.ne.s32.totalorder %s84, %s85
    %p94 = scmp.eq.s32.totalorder %s20, 0
    %p95 = por %p93, %p94
    %p96 = scmp.ne.s32.totalorder %s84, %s85
    %p97 = scmp.eq.s32.totalorder %s21, 15
    %p98 = por %p96, %p97
    %p100 = scmp.ne.s32.totalorder %s85, %s99
    %p101 = scmp.eq.s32.totalorder %s21, 0
    %p102 = por %p100, %p101
    %s104 = sadd.s32 %s103, 1
    %p107 = scmp.eq.s32.totalorder %s15, 15
    %p108 = scmp.ne.s32.totalorder %s103, %s105
    %p109 = scmp.eq.s32.totalorder %s15, 0
    %p110 = por %p108, %p109
    %p111 = scmp.ne.s32.totalorder %s103, %s105
    %p112 = scmp.eq.s32.totalorder %s20, 15
    %p113 = por %p111, %p112
    %p114 = scmp.ne.s32.totalorder %s105, %s106
    %p115 = scmp.eq.s32.totalorder %s20, 0
    %p116 = por %p114, %p115
    %p117 = scmp.ne.s32.totalorder %s105, %s106
    %p118 = scmp.eq.s32.totalorder %s21, 15
    %p119 = por %p117, %p118
    %p121 = scmp.ne.s32.totalorder %s106, %s120
    %p122 = scmp.eq.s32.totalorder %s21, 0
    %p123 = por %p121, %p122
    %s125 = sadd.s32 %s124, 1
    %p128 = scmp.eq.s32.totalorder %s15, 15
    %p129 = scmp.ne.s32.totalorder %s124, %s126
    %p130 = scmp.eq.s32.totalorder %s15, 0
    %p131 = por %p129, %p130
    %p132 = scmp.ne.s32.totalorder %s124, %s126
    %p133 = scmp.eq.s32.totalorder %s20, 15
    %p134 = por %p132, %p133
    %p135 = scmp.ne.s32.totalorder %s126, %s127
    %p136 = scmp.eq.s32.totalorder %s20, 0
    %p137 = por %p135, %p136
    %p138 = scmp.ne.s32.totalorder %s126, %s127
    %p139 = scmp.eq.s32.totalorder %s21, 15
    %p140 = por %p138, %p139
    %p142 = scmp.ne.s32.totalorder %s127, %s141
    %p143 = scmp.eq.s32.totalorder %s21, 0
    %p144 = por %p142, %p143
    %s146 = sadd.s32 %s145, 1
    %p149 = scmp.eq.s32.totalorder %s15, 15
    %p150 = scmp.ne.s32.totalorder %s145, %s147
    %p151 = scmp.eq.s32.totalorder %s15, 0
    %p152 = por %p150, %p151
    %p153 = scmp.ne.s32.totalorder %s145, %s147
    %p154 = scmp.eq.s32.totalorder %s20, 15
    %p155 = por %p153, %p154
    %p156 = scmp.ne.s32.totalorder %s147, %s148
    %p157 = scmp.eq.s32.totalorder %s20, 0
    %p158 = por %p156, %p157
    %p159 = scmp.ne.s32.totalorder %s147, %s148
    %p160 = scmp.eq.s32.totalorder %s21, 15
    %p161 = por %p159, %p160
    %p163 = scmp.ne.s32.totalorder %s148, %s162
    %p164 = scmp.eq.s32.totalorder %s21, 0
    %p165 = por %p163, %p164
    %s166 = ssub.s32 %s22, %s34
    %s167 = ssub.s32 %s23, %s30
    %s168 = sor.u32 %s166, %s167
    %p169 = scmp.eq.s32.totalorder %s168, 0
    %s171 = sadd.s32 %s170, 1
    %s172 = scalar_select %p169, %s170, %s171
    %p175 = pneg %p169
    %p176 = scmp.eq.s32.totalorder %s15, 15
    %p177 = por %p175, %p176
    %p178 = scmp.ne.s32.totalorder %s170, %s173
    %p179 = scmp.eq.s32.totalorder %s15, 0
    %p180 = por %p178, %p179
    %p181 = scmp.ne.s32.totalorder %s170, %s173
    %p182 = scmp.eq.s32.totalorder %s20, 15
    %p183 = por %p181, %p182
    %p184 = scmp.ne.s32.totalorder %s173, %s174
    %p185 = scmp.eq.s32.totalorder %s20, 0
    %p186 = por %p184, %p185
    %p187 = scmp.ne.s32.totalorder %s173, %s174
    %p188 = scmp.eq.s32.totalorder %s21, 15
    %p189 = por %p187, %p188
    %p191 = scmp.ne.s32.totalorder %s174, %s190
    %p192 = scmp.eq.s32.totalorder %s21, 0
    %p193 = por %p191, %p192
    %s194 = ssub.s32 %s22, %s34
    %s195 = ssub.s32 %s23, %s30
    %s196 = sor.u32 %s194, %s195
    %p197 = scmp.eq.s32.totalorder %s196, 0
    %s199 = sadd.s32 %s198, 1
    %s200 = scalar_select %p197, %s198, %s199
    %p203 = pneg %p197
    %p204 = scmp.eq.s32.totalorder %s15, 15
    %p205 = por %p203, %p204
    %p206 = scmp.ne.s32.totalorder %s198, %s201
    %p207 = scmp.eq.s32.totalorder %s15, 0
    %p208 = por %p206, %p207
    %p209 = scmp.ne.s32.totalorder %s198, %s201
    %p210 = scmp.eq.s32.totalorder %s20, 15
    %p211 = por %p209, %p210
    %p212 = scmp.ne.s32.totalorder %s201, %s202
    %p213 = scmp.eq.s32.totalorder %s20, 0
    %p214 = por %p212, %p213
    %p215 = scmp.ne.s32.totalorder %s201, %s202
    %p216 = scmp.eq.s32.totalorder %s21, 15
    %p217 = por %p215, %p216
    %p219 = scmp.ne.s32.totalorder %s202, %s218
    %p220 = scmp.eq.s32.totalorder %s21, 0
    %p221 = por %p219, %p220
    %s222 = ssub.s32 %s22, %s34
    %s223 = ssub.s32 %s23, %s30
    %s224 = sor.u32 %s222, %s223
    %p225 = scmp.eq.s32.totalorder %s224, 0
    %s227 = sadd.s32 %s226, 1
    %s228 = scalar_select %p225, %s226, %s227
    %p231 = pneg %p225
    %p232 = scmp.eq.s32.totalorder %s15, 15
    %p233 = por %p231, %p232
    %p234 = scmp.ne.s32.totalorder %s226, %s229
    %p235 = scmp.eq.s32.totalorder %s15, 0
    %p236 = por %p234, %p235
    %p237 = scmp.ne.s32.totalorder %s226, %s229
    %p238 = scmp.eq.s32.totalorder %s20, 15
    %p239 = por %p237, %p238
    %p240 = scmp.ne.s32.totalorder %s229, %s230
    %p241 = scmp.eq.s32.totalorder %s20, 0
    %p242 = por %p240, %p241
    %p243 = scmp.ne.s32.totalorder %s229, %s230
    %p244 = scmp.eq.s32.totalorder %s21, 15
    %p245 = por %p243, %p244
    %p247 = scmp.ne.s32.totalorder %s230, %s246
    %p248 = scmp.eq.s32.totalorder %s21, 0
    %p249 = por %p247, %p248
    %p250 = scmp.le.s32.totalorder 1, %s15
    %p251 = scmp.lt.s32.totalorder %s15, 17
    %p252 = pnand %p250, %p251
    %p253 = pneg %p252
    // Predicated region
    $region9: #{residual_block3d_forward.4} parent=5 // pred_check
      _
    $region10: #{residual_block3d_forward.4} parent=5 // pred_check_branch
      %255 = sbr.rel (%p252) target = $region12
    $region11: #{residual_block3d_forward.4} parent=5 // pred_region
      %s256 = ssub.s32 %s15, 1
      // Predicated region
      $region13: #{residual_block3d_forward.4} parent=11 // pred_check
        %p257 = pneg %p74
      $region14: #{residual_block3d_forward.4} parent=11 // pred_check_branch
        %259 = sbr.rel (%p257) target = $region16
      $region15: #{residual_block3d_forward.4} parent=11 // pred_region
        _
      $region16: #{residual_block3d_forward.4} parent=11 // pred_fallthru
        _
      // Predicated region
      $region17: #{residual_block3d_forward.4} parent=11 // pred_check
        %p260 = pneg %p95
      $region18: #{residual_block3d_forward.4} parent=11 // pred_check_branch
        %262 = sbr.rel (%p260) target = $region20
      $region19: #{residual_block3d_forward.4} parent=11 // pred_region
        _
      $region20: #{residual_block3d_forward.4} parent=11 // pred_fallthru
        _
      // Predicated region
      $region21: #{residual_block3d_forward.4} parent=11 // pred_check
        %p263 = pneg %p116
      $region22: #{residual_block3d_forward.4} parent=11 // pred_check_branch
        %265 = sbr.rel (%p263) target = $region24
      $region23: #{residual_block3d_forward.4} parent=11 // pred_region
        _
      $region24: #{residual_block3d_forward.4} parent=11 // pred_fallthru
        _
      // Predicated region
      $region25: #{residual_block3d_forward.4} parent=11 // pred_check
        %p266 = pneg %p137
      $region26: #{residual_block3d_forward.4} parent=11 // pred_check_branch
        %268 = sbr.rel (%p266) target = $region28
      $region27: #{residual_block3d_forward.4} parent=11 // pred_region
        _
      $region28: #{residual_block3d_forward.4} parent=11 // pred_fallthru
        _
      // Predicated region
      $region29: #{residual_block3d_forward.4} parent=11 // pred_check
        %p269 = pneg %p158
      $region30: #{residual_block3d_forward.4} parent=11 // pred_check_branch
        %271 = sbr.rel (%p269) target = $region32
      $region31: #{residual_block3d_forward.4} parent=11 // pred_region
        _
      $region32: #{residual_block3d_forward.4} parent=11 // pred_fallthru
        _
    $region12: #{residual_block3d_forward.4} parent=5 // pred_fallthru
      _
    %p272 = scmp.lt.s32.totalorder %s15, 16
    // Predicated region
    $region33: #{residual_block3d_forward.4} parent=5 // pred_check
      %p273 = pneg %p272
    $region34: #{residual_block3d_forward.4} parent=5 // pred_check_branch
      %275 = sbr.rel (%p273) target = $region36
    $region35: #{residual_block3d_forward.4} parent=5 // pred_region
      // Predicated region
      $region37: #{residual_block3d_forward.4} parent=35 // pred_check
        %p276 = pneg %p47
      $region38: #{residual_block3d_forward.4} parent=35 // pred_check_branch
        %278 = sbr.rel (%p276) target = $region40
      $region39: #{residual_block3d_forward.4} parent=35 // pred_region
        %p279 = scmp.lt.s32.totalorder %s22, 1
        %s280 = scalar_select %p279, %s22, 1
        %s281 = smul.addr %s280, 220
        %s282 = smul.addr %s281, 4
        %s283 = scalar_lea.vmem %s0, %s282
      $region40: #{residual_block3d_forward.4} parent=35 // pred_fallthru
        _
    $region36: #{residual_block3d_forward.4} parent=5 // pred_fallthru
      _
    %p284 = scmp.le.s32.totalorder 1, %s15
    %p285 = scmp.lt.s32.totalorder %s15, 17
    %p286 = pnand %p284, %p285
    %p287 = pneg %p286
    // Predicated region
    $region41: #{residual_block3d_forward.4} parent=5 // pred_check
      _
    $region42: #{residual_block3d_forward.4} parent=5 // pred_check_branch
      %289 = sbr.rel (%p286) target = $region44
    $region43: #{residual_block3d_forward.4} parent=5 // pred_region
      %s290 = ssub.s32 %s15, 1
      %p291 = scmp.lt.s32.totalorder %s24, 1
      %s292 = scalar_select %p291, %s24, 1
      %s293 = smul.addr %s292, 220
      %s294 = smul.addr %s293, 4
      %s295 = scalar_lea.vmem %s0, %s294
      %p296 = pneg %p53
      %p297 = pneg %p50
      %p298 = pneg %p74
      %p299 = pneg %p71
      %p300 = pneg %p95
      %p301 = pneg %p92
      %p302 = pneg %p116
      %p303 = pneg %p113
      %p304 = pneg %p137
      %p305 = pneg %p134
      %p306 = pneg %p158
      %p307 = pneg %p155
      %p308 = pneg %p186
      %p309 = pneg %p183
      %p310 = scmp.lt.s32.totalorder %s24, 1
      %s311 = scalar_select %p310, %s24, 1
      %p312 = scmp.lt.s32.totalorder %s25, 7
      %s313 = scalar_select %p312, %s25, 7
      %s314 = smul.addr %s313, 16
      %s315 = smul.addr %s311, 128
      %s316 = sadd.s32 %s314, %s315
      %s317 = smul.addr %s316, 4
      %s318 = scalar_lea.vmem %s6, %s317
      %p319 = pneg %p214
      %p320 = pneg %p211
      %p321 = scmp.lt.s32.totalorder %s24, 1
      %s322 = scalar_select %p321, %s24, 1
      %p323 = scmp.lt.s32.totalorder %s25, 7
      %s324 = scalar_select %p323, %s25, 7
      %s325 = smul.addr %s322, 8
      %s326 = sadd.s32 %s324, %s325
      %s327 = scalar_lea.vmem %s7, %s326
      %p328 = pneg %p242
      %p329 = pneg %p239
      %p330 = scmp.lt.s32.totalorder %s24, 1
      %s331 = scalar_select %p330, %s24, 1
      %p332 = scmp.lt.s32.totalorder %s25, 7
      %s333 = scalar_select %p332, %s25, 7
      %s334 = smul.addr %s331, 8
      %s335 = sadd.s32 %s333, %s334
      %s336 = scalar_lea.vmem %s8, %s335
      %p337 = scmp.lt.s32.totalorder %s24, 1
      %s338 = scalar_select %p337, %s24, 1
      %s339 = smul.addr %s338, 220
      %s340 = smul.addr %s339, 4
      %s341 = scalar_lea.vmem %s0, %s340
      %p342 = scmp.lt.s32.totalorder %s24, 1
      %s343 = scalar_select %p342, %s24, 1
      %p344 = scmp.lt.s32.totalorder %s25, 7
      %s345 = scalar_select %p344, %s25, 7
      %s346 = smul.addr %s345, 16
      %s347 = smul.addr %s343, 128
      %s348 = sadd.s32 %s346, %s347
      %s349 = smul.addr %s348, 4
      %s350 = scalar_lea.vmem %s6, %s349
      %p351 = scmp.lt.s32.totalorder %s24, 1
      %s352 = scalar_select %p351, %s24, 1
      %p353 = scmp.lt.s32.totalorder %s25, 7
      %s354 = scalar_select %p353, %s25, 7
      %s355 = smul.addr %s352, 8
      %s356 = sadd.s32 %s354, %s355
      %s357 = scalar_lea.vmem %s7, %s356
      %p358 = scmp.lt.s32.totalorder %s24, 1
      %s359 = scalar_select %p358, %s24, 1
      %p360 = scmp.lt.s32.totalorder %s25, 7
      %s361 = scalar_select %p360, %s25, 7
      %s362 = smul.addr %s359, 8
      %s363 = sadd.s32 %s361, %s362
      %s364 = scalar_lea.vmem %s8, %s363
      %s366 = smul.u32 %s25, 22
      %s367 = smul.addr %s366, 4
      %s368 = scalar_lea.vmem %s341, %s367
      %v369 = vld [vmem:[%s368] sm:$0xf]
      %v370 = vld [vmem:[%s368 + $0x4] sm:$0xf]
      %v371 = vld [vmem:[%s368 + $0x8] sm:$0xf]
      %v372 = vld [vmem:[%s368 + $0xc] sm:$0xf]
      %v373 = vld [vmem:[%s368 + $0x10] sm:$0xf]
      %v374 = vld [vmem:[%s368 + $0x14] sm:$0xf]
      %v375 = vld [vmem:[%s368 + $0x18] sm:$0xf]
      %v376 = vld [vmem:[%s368 + $0x1c] sm:$0xf]
      %v377 = vld [vmem:[%s368 + $0x20] sm:$0xf]
      %v378 = vld [vmem:[%s368 + $0x24] sm:$0xf]
      %v379 = vld [vmem:[%s368 + $0x28] sm:$0xf]
      %v380 = vld [vmem:[%s368 + $0x2c] sm:$0xf]
      %v381 = vld [vmem:[%s368 + $0x30] sm:$0xf]
      %v382 = vld [vmem:[%s368 + $0x34] sm:$0xf]
      %v383 = vld [vmem:[%s368 + $0x38] sm:$0xf]
      %v384 = vld [vmem:[%s368 + $0x3c] sm:$0xf]
      %v385 = vld [vmem:[%s368 + $0x40] sm:$0xf]
      %v386 = vld [vmem:[%s368 + $0x44] sm:$0xf]
      %v387 = vld [vmem:[%s368 + $0x48] sm:$0xf]
      %v388 = vld [vmem:[%s368 + $0x4c] sm:$0xf]
      %v389 = vld [vmem:[%s368 + $0x50] sm:$0xf]
      %v390 = vunpack.c.l.bf16 %v369
      %v391 = vunpack.c.l.bf16 %v370
      %v392 = vunpack.c.l.bf16 %v371
      %v393 = vunpack.c.l.bf16 %v372
      %v394 = vunpack.c.l.bf16 %v373
      %v395 = vunpack.c.l.bf16 %v374
      %v396 = vunpack.c.l.bf16 %v375
      %v397 = vunpack.c.l.bf16 %v376
      %v398 = vunpack.c.l.bf16 %v377
      %v399 = vunpack.c.l.bf16 %v378
      %v400 = vunpack.c.l.bf16 %v379
      %v401 = vunpack.c.l.bf16 %v380
      %v402 = vunpack.c.l.bf16 %v381
      %v403 = vunpack.c.l.bf16 %v382
      %v404 = vunpack.c.l.bf16 %v383
      %v405 = vunpack.c.l.bf16 %v384
      %v406 = vunpack.c.l.bf16 %v385
      %v407 = vunpack.c.l.bf16 %v386
      %v408 = vunpack.c.l.bf16 %v387
      %v409 = vunpack.c.l.bf16 %v388
      %v410 = vunpack.c.l.bf16 %v389
      %v411 = vpack.c.bf16 %v391, %v390
      %v412 = vpack.c.bf16 %v393, %v392
      %v413 = vpack.c.bf16 %v395, %v394
      %v414 = vpack.c.bf16 %v397, %v396
      %v415 = vpack.c.bf16 %v399, %v398
      %v416 = vpack.c.bf16 %v401, %v400
      %v417 = vpack.c.bf16 %v403, %v402
      %v418 = vpack.c.bf16 %v405, %v404
      %vm419 = vcmask 31744
      %420 = vst.msk [vmem:[#allocation2] sm:$0xff] %vm419, %v411
      %421 = vst.msk [vmem:[#allocation2 + $0x8] sm:$0xff] %vm419, %v412
      %422 = vst.msk [vmem:[#allocation2 + $0x10] sm:$0xff] %vm419, %v413
      %423 = vst.msk [vmem:[#allocation2 + $0x18] sm:$0xff] %vm419, %v414
      %424 = vst.msk [vmem:[#allocation2 + $0x20] sm:$0xff] %vm419, %v415
      %425 = vst.msk [vmem:[#allocation2 + $0x28] sm:$0xff] %vm419, %v416
      %426 = vst.msk [vmem:[#allocation2 + $0x30] sm:$0xff] %vm419, %v417
      %427 = vst.msk [vmem:[#allocation2 + $0x38] sm:$0xff] %vm419, %v418
      %v428 = vpack.c.bf16 %v406, %v406
      %vm429 = vsmask.f32 7424
      %v431 = vshrl.u32 %v411, 16
      %v433 = vshll.u32 %v411, 16
      %v435 = vrot.slane %v433, 1
      %v436 = vor.u32 %v431, %v435
      %v438 = vshll.u32 %v412, 16
      %v440 = vrot.slane %v438, 1
      %v441 = vsel %vm429, %v436, %v440
      %v442 = vshrl.u32 %v412, 16
      %v444 = vor.u32 %v442, %v440
      %v446 = vshll.u32 %v413, 16
      %v448 = vrot.slane %v446, 1
      %v449 = vsel %vm429, %v444, %v448
      %v450 = vshrl.u32 %v413, 16
      %v452 = vor.u32 %v450, %v448
      %v454 = vshll.u32 %v414, 16
      %v456 = vrot.slane %v454, 1
      %v457 = vsel %vm429, %v452, %v456
      %v458 = vshrl.u32 %v414, 16
      %v460 = vor.u32 %v458, %v456
      %v462 = vshll.u32 %v415, 16
      %v464 = vrot.slane %v462, 1
      %v465 = vsel %vm429, %v460, %v464
      %v466 = vshrl.u32 %v415, 16
      %v468 = vor.u32 %v466, %v464
      %v470 = vshll.u32 %v416, 16
      %v472 = vrot.slane %v470, 1
      %v473 = vsel %vm429, %v468, %v472
      %v474 = vshrl.u32 %v416, 16
      %v476 = vor.u32 %v474, %v472
      %v478 = vshll.u32 %v417, 16
      %v480 = vrot.slane %v478, 1
      %v481 = vsel %vm429, %v476, %v480
      %v482 = vshrl.u32 %v417, 16
      %v484 = vor.u32 %v482, %v480
      %v486 = vshll.u32 %v418, 16
      %v488 = vrot.slane %v486, 1
      %v489 = vsel %vm429, %v484, %v488
      %v490 = vshrl.u32 %v418, 16
      %v492 = vor.u32 %v490, %v488
      %v494 = vshll.u32 %v428, 16
      %v496 = vrot.slane %v494, 1
      %v497 = vsel %vm429, %v492, %v496
      %498 = vrot.lane.b32.xlu0 %v441, 4
      %v499 = vpop.permute.xlu0 %498
      %500 = vrot.lane.b32.xlu0 %v449, 4
      %v501 = vpop.permute.xlu0 %500
      %502 = vrot.lane.b32.xlu0 %v457, 4
      %v503 = vpop.permute.xlu0 %502
      %504 = vrot.lane.b32.xlu0 %v465, 4
      %v505 = vpop.permute.xlu0 %504
      %506 = vrot.lane.b32.xlu0 %v473, 4
      %v507 = vpop.permute.xlu0 %506
      %508 = vrot.lane.b32.xlu0 %v481, 4
      %v509 = vpop.permute.xlu0 %508
      %510 = vrot.lane.b32.xlu0 %v489, 4
      %v511 = vpop.permute.xlu0 %510
      %512 = vrot.lane.b32.xlu0 %v497, 4
      %v513 = vpop.permute.xlu0 %512
      %vm522 = vcmask 64544
      %523 = vst.msk [vmem:[#allocation2] sm:$0xff] %vm522, %v499
      %524 = vst.msk [vmem:[#allocation2 + $0x8] sm:$0xff] %vm522, %v501
      %525 = vst.msk [vmem:[#allocation2 + $0x10] sm:$0xff] %vm522, %v503
      %526 = vst.msk [vmem:[#allocation2 + $0x18] sm:$0xff] %vm522, %v505
      %527 = vst.msk [vmem:[#allocation2 + $0x20] sm:$0xff] %vm522, %v507
      %528 = vst.msk [vmem:[#allocation2 + $0x28] sm:$0xff] %vm522, %v509
      %529 = vst.msk [vmem:[#allocation2 + $0x30] sm:$0xff] %vm522, %v511
      %530 = vst.msk [vmem:[#allocation2 + $0x38] sm:$0xff] %vm522, %v513
      %vm540 = vcmask 1046528
      %v541 = vrot.slane %v411, 1
      %v542 = vrot.slane %v412, 1
      %v543 = vsel %vm540, %v541, %v542
      %v544 = vrot.slane %v413, 1
      %v545 = vsel %vm540, %v542, %v544
      %v546 = vrot.slane %v414, 1
      %v547 = vsel %vm540, %v544, %v546
      %v548 = vrot.slane %v415, 1
      %v549 = vsel %vm540, %v546, %v548
      %v550 = vrot.slane %v416, 1
      %v551 = vsel %vm540, %v548, %v550
      %v552 = vrot.slane %v417, 1
      %v553 = vsel %vm540, %v550, %v552
      %v554 = vrot.slane %v418, 1
      %v555 = vsel %vm540, %v552, %v554
      %v556 = vrot.slane %v428, 1
      %v557 = vsel %vm540, %v554, %v556
      %558 = vrot.lane.b32.xlu0 %v543, 8
      %v559 = vpop.permute.xlu0 %558
      %560 = vrot.lane.b32.xlu0 %v545, 8
      %v561 = vpop.permute.xlu0 %560
      %562 = vrot.lane.b32.xlu0 %v547, 8
      %v563 = vpop.permute.xlu0 %562
      %564 = vrot.lane.b32.xlu0 %v549, 8
      %v565 = vpop.permute.xlu0 %564
      %566 = vrot.lane.b32.xlu0 %v551, 8
      %v567 = vpop.permute.xlu0 %566
      %568 = vrot.lane.b32.xlu0 %v553, 8
      %v569 = vpop.permute.xlu0 %568
      %570 = vrot.lane.b32.xlu0 %v555, 8
      %v571 = vpop.permute.xlu0 %570
      %572 = vrot.lane.b32.xlu0 %v557, 8
      %v573 = vpop.permute.xlu0 %572
      %vm582 = vcmask 97344
      %583 = vst.msk [vmem:[#allocation2] sm:$0xff] %vm582, %v559
      %584 = vst.msk [vmem:[#allocation2 + $0x8] sm:$0xff] %vm582, %v561
      %585 = vst.msk [vmem:[#allocation2 + $0x10] sm:$0xff] %vm582, %v563
      %586 = vst.msk [vmem:[#allocation2 + $0x18] sm:$0xff] %vm582, %v565
      %587 = vst.msk [vmem:[#allocation2 + $0x20] sm:$0xff] %vm582, %v567
      %588 = vst.msk [vmem:[#allocation2 + $0x28] sm:$0xff] %vm582, %v569
      %589 = vst.msk [vmem:[#allocation2 + $0x30] sm:$0xff] %vm582, %v571
      %590 = vst.msk [vmem:[#allocation2 + $0x38] sm:$0xff] %vm582, %v573
      %v591 = vpack.c.bf16 %v407, %v406
      %593 = vrot.lane.b32.xlu0 %v412, 12
      %v594 = vpop.permute.xlu0 %593
      %595 = vrot.lane.b32.xlu0 %v413, 12
      %v596 = vpop.permute.xlu0 %595
      %597 = vrot.lane.b32.xlu0 %v414, 12
      %v598 = vpop.permute.xlu0 %597
      %599 = vrot.lane.b32.xlu0 %v415, 12
      %v600 = vpop.permute.xlu0 %599
      %601 = vrot.lane.b32.xlu0 %v416, 12
      %v602 = vpop.permute.xlu0 %601
      %603 = vrot.lane.b32.xlu0 %v417, 12
      %v604 = vpop.permute.xlu0 %603
      %605 = vrot.lane.b32.xlu0 %v418, 12
      %v606 = vpop.permute.xlu0 %605
      %607 = vrot.lane.b32.xlu0 %v591, 12
      %v608 = vpop.permute.xlu0 %607
      %vm617 = vcmask 130144
      %618 = vst.msk [vmem:[#allocation2] sm:$0xff] %vm617, %v594
      %619 = vst.msk [vmem:[#allocation2 + $0x8] sm:$0xff] %vm617, %v596
      %620 = vst.msk [vmem:[#allocation2 + $0x10] sm:$0xff] %vm617, %v598
      %621 = vst.msk [vmem:[#allocation2 + $0x18] sm:$0xff] %vm617, %v600
      %622 = vst.msk [vmem:[#allocation2 + $0x20] sm:$0xff] %vm617, %v602
      %623 = vst.msk [vmem:[#allocation2 + $0x28] sm:$0xff] %vm617, %v604
      %624 = vst.msk [vmem:[#allocation2 + $0x30] sm:$0xff] %vm617, %v606
      %625 = vst.msk [vmem:[#allocation2 + $0x38] sm:$0xff] %vm617, %v608
      %v626 = vpack.c.bf16 %v408, %v408
      %v628 = vshll.u32 %v591, 16
      %v630 = vrot.slane %v628, 1
      %v631 = vsel %vm429, %v492, %v630
      %v632 = vshrl.u32 %v591, 16
      %v634 = vor.u32 %v632, %v630
      %v636 = vshll.u32 %v626, 16
      %v638 = vrot.slane %v636, 1
      %v639 = vsel %vm429, %v634, %v638
      %640 = vrot.lane.b32.xlu0 %v449, 16
      %v641 = vpop.permute.xlu0 %640
      %642 = vrot.lane.b32.xlu0 %v457, 16
      %v643 = vpop.permute.xlu0 %642
      %644 = vrot.lane.b32.xlu0 %v465, 16
      %v645 = vpop.permute.xlu0 %644
      %646 = vrot.lane.b32.xlu0 %v473, 16
      %v647 = vpop.permute.xlu0 %646
      %648 = vrot.lane.b32.xlu0 %v481, 16
      %v649 = vpop.permute.xlu0 %648
      %650 = vrot.lane.b32.xlu0 %v489, 16
      %v651 = vpop.permute.xlu0 %650
      %652 = vrot.lane.b32.xlu0 %v631, 16
      %v653 = vpop.permute.xlu0 %652
      %654 = vrot.lane.b32.xlu0 %v639, 16
      %v655 = vpop.permute.xlu0 %654
      %vm664 = vcmask 162944
      %665 = vst.msk [vmem:[#allocation2] sm:$0xff] %vm664, %v641
      %666 = vst.msk [vmem:[#allocation2 + $0x8] sm:$0xff] %vm664, %v643
      %667 = vst.msk [vmem:[#allocation2 + $0x10] sm:$0xff] %vm664, %v645
      %668 = vst.msk [vmem:[#allocation2 + $0x18] sm:$0xff] %vm664, %v647
      %669 = vst.msk [vmem:[#allocation2 + $0x20] sm:$0xff] %vm664, %v649
      %670 = vst.msk [vmem:[#allocation2 + $0x28] sm:$0xff] %vm664, %v651
      %671 = vst.msk [vmem:[#allocation2 + $0x30] sm:$0xff] %vm664, %v653
      %672 = vst.msk [vmem:[#allocation2 + $0x38] sm:$0xff] %vm664, %v655
      %v674 = vrot.slane %v591, 1
      %v675 = vsel %vm540, %v554, %v674
      %v676 = vrot.slane %v626, 1
      %v677 = vsel %vm540, %v674, %v676
      %678 = vrot.lane.b32.xlu0 %v545, 20
      %v679 = vpop.permute.xlu0 %678
      %680 = vrot.lane.b32.xlu0 %v547, 20
      %v681 = vpop.permute.xlu0 %680
      %682 = vrot.lane.b32.xlu0 %v549, 20
      %v683 = vpop.permute.xlu0 %682
      %684 = vrot.lane.b32.xlu0 %v551, 20
      %v685 = vpop.permute.xlu0 %684
      %686 = vrot.lane.b32.xlu0 %v553, 20
      %v687 = vpop.permute.xlu0 %686
      %688 = vrot.lane.b32.xlu0 %v555, 20
      %v689 = vpop.permute.xlu0 %688
      %690 = vrot.lane.b32.xlu0 %v675, 20
      %v691 = vpop.permute.xlu0 %690
      %692 = vrot.lane.b32.xlu0 %v677, 20
      %v693 = vpop.permute.xlu0 %692
      %vm702 = vcmask 195744
      %703 = vst.msk [vmem:[#allocation2] sm:$0xff] %vm702, %v679
      %704 = vst.msk [vmem:[#allocation2 + $0x8] sm:$0xff] %vm702, %v681
      %705 = vst.msk [vmem:[#allocation2 + $0x10] sm:$0xff] %vm702, %v683
      %706 = vst.msk [vmem:[#allocation2 + $0x18] sm:$0xff] %vm702, %v685
      %707 = vst.msk [vmem:[#allocation2 + $0x20] sm:$0xff] %vm702, %v687
      %708 = vst.msk [vmem:[#allocation2 + $0x28] sm:$0xff] %vm702, %v689
      %709 = vst.msk [vmem:[#allocation2 + $0x30] sm:$0xff] %vm702, %v691
      %710 = vst.msk [vmem:[#allocation2 + $0x38] sm:$0xff] %vm702, %v693
      %v711 = vpack.c.bf16 %v409, %v408
      %713 = vrot.lane.b32.xlu0 %v413, 24
      %v714 = vpop.permute.xlu0 %713
      %715 = vrot.lane.b32.xlu0 %v414, 24
      %v716 = vpop.permute.xlu0 %715
      %717 = vrot.lane.b32.xlu0 %v415, 24
      %v718 = vpop.permute.xlu0 %717
      %719 = vrot.lane.b32.xlu0 %v416, 24
      %v720 = vpop.permute.xlu0 %719
      %721 = vrot.lane.b32.xlu0 %v417, 24
      %v722 = vpop.permute.xlu0 %721
      %723 = vrot.lane.b32.xlu0 %v418, 24
      %v724 = vpop.permute.xlu0 %723
      %725 = vrot.lane.b32.xlu0 %v591, 24
      %v726 = vpop.permute.xlu0 %725
      %727 = vrot.lane.b32.xlu0 %v711, 24
      %v728 = vpop.permute.xlu0 %727
      %vm737 = vcmask 228544
      %738 = vst.msk [vmem:[#allocation2] sm:$0xff] %vm737, %v714
      %739 = vst.msk [vmem:[#allocation2 + $0x8] sm:$0xff] %vm737, %v716
      %740 = vst.msk [vmem:[#allocation2 + $0x10] sm:$0xff] %vm737, %v718
      %741 = vst.msk [vmem:[#allocation2 + $0x18] sm:$0xff] %vm737, %v720
      %742 = vst.msk [vmem:[#allocation2 + $0x20] sm:$0xff] %vm737, %v722
      %743 = vst.msk [vmem:[#allocation2 + $0x28] sm:$0xff] %vm737, %v724
      %744 = vst.msk [vmem:[#allocation2 + $0x30] sm:$0xff] %vm737, %v726
      %745 = vst.msk [vmem:[#allocation2 + $0x38] sm:$0xff] %vm737, %v728
      %v746 = vpack.c.bf16 %v410, %v410
      %v748 = vshll.u32 %v711, 16
      %v750 = vrot.slane %v748, 1
      %v751 = vsel %vm429, %v634, %v750
      %v752 = vshrl.u32 %v711, 16
      %v754 = vor.u32 %v752, %v750
      %v756 = vshll.u32 %v746, 16
      %v758 = vrot.slane %v756, 1
      %v759 = vsel %vm429, %v754, %v758
      %760 = vrot.lane.b32.xlu0 %v457, 28
      %v761 = vpop.permute.xlu0 %760
      %762 = vrot.lane.b32.xlu0 %v465, 28
      %v763 = vpop.permute.xlu0 %762
      %764 = vrot.lane.b32.xlu0 %v473, 28
      %v765 = vpop.permute.xlu0 %764
      %766 = vrot.lane.b32.xlu0 %v481, 28
      %v767 = vpop.permute.xlu0 %766
      %768 = vrot.lane.b32.xlu0 %v489, 28
      %v769 = vpop.permute.xlu0 %768
      %770 = vrot.lane.b32.xlu0 %v631, 28
      %v771 = vpop.permute.xlu0 %770
      %772 = vrot.lane.b32.xlu0 %v751, 28
      %v773 = vpop.permute.xlu0 %772
      %774 = vrot.lane.b32.xlu0 %v759, 28
      %v775 = vpop.permute.xlu0 %774
      %vm784 = vcmask 261344
      %785 = vst.msk [vmem:[#allocation2] sm:$0xff] %vm784, %v761
      %786 = vst.msk [vmem:[#allocation2 + $0x8] sm:$0xff] %vm784, %v763
      %787 = vst.msk [vmem:[#allocation2 + $0x10] sm:$0xff] %vm784, %v765
      %788 = vst.msk [vmem:[#allocation2 + $0x18] sm:$0xff] %vm784, %v767
      %789 = vst.msk [vmem:[#allocation2 + $0x20] sm:$0xff] %vm784, %v769
      %790 = vst.msk [vmem:[#allocation2 + $0x28] sm:$0xff] %vm784, %v771
      %791 = vst.msk [vmem:[#allocation2 + $0x30] sm:$0xff] %vm784, %v773
      %792 = vst.msk [vmem:[#allocation2 + $0x38] sm:$0xff] %vm784, %v775
      %v794 = vrot.slane %v711, 1
      %v795 = vsel %vm540, %v674, %v794
      %v796 = vrot.slane %v746, 1
      %v797 = vsel %vm540, %v794, %v796
      %798 = vrot.lane.b32.xlu0 %v547, 32
      %v799 = vpop.permute.xlu0 %798
      %800 = vrot.lane.b32.xlu0 %v549, 32
      %v801 = vpop.permute.xlu0 %800
      %802 = vrot.lane.b32.xlu0 %v551, 32
      %v803 = vpop.permute.xlu0 %802
      %804 = vrot.lane.b32.xlu0 %v553, 32
      %v805 = vpop.permute.xlu0 %804
      %806 = vrot.lane.b32.xlu0 %v555, 32
      %v807 = vpop.permute.xlu0 %806
      %808 = vrot.lane.b32.xlu0 %v675, 32
      %v809 = vpop.permute.xlu0 %808
      %810 = vrot.lane.b32.xlu0 %v795, 32
      %v811 = vpop.permute.xlu0 %810
      %812 = vrot.lane.b32.xlu0 %v797, 32
      %v813 = vpop.permute.xlu0 %812
      %vm822 = vcmask 294144
      %823 = vst.msk [vmem:[#allocation2] sm:$0xff] %vm822, %v799
      %824 = vst.msk [vmem:[#allocation2 + $0x8] sm:$0xff] %vm822, %v801
      %825 = vst.msk [vmem:[#allocation2 + $0x10] sm:$0xff] %vm822, %v803
      %826 = vst.msk [vmem:[#allocation2 + $0x18] sm:$0xff] %vm822, %v805
      %827 = vst.msk [vmem:[#allocation2 + $0x20] sm:$0xff] %vm822, %v807
      %828 = vst.msk [vmem:[#allocation2 + $0x28] sm:$0xff] %vm822, %v809
      %829 = vst.msk [vmem:[#allocation2 + $0x30] sm:$0xff] %vm822, %v811
      %830 = vst.msk [vmem:[#allocation2 + $0x38] sm:$0xff] %vm822, %v813
      %s831 = sadd.s32 %s25, 1
      %s832 = smul.u32 %s831, 22
      %s833 = smul.addr %s832, 4
      %s834 = scalar_lea.vmem %s341, %s833
      %v835 = vld [vmem:[%s834] sm:$0xf]
      %v836 = vld [vmem:[%s834 + $0x4] sm:$0xf]
      %v837 = vld [vmem:[%s834 + $0x8] sm:$0xf]
      %v838 = vld [vmem:[%s834 + $0xc] sm:$0xf]
      %v839 = vld [vmem:[%s834 + $0x10] sm:$0xf]
      %v840 = vld [vmem:[%s834 + $0x14] sm:$0xf]
      %v841 = vld [vmem:[%s834 + $0x18] sm:$0xf]
      %v842 = vld [vmem:[%s834 + $0x1c] sm:$0xf]
      %v843 = vld [vmem:[%s834 + $0x20] sm:$0xf]
      %v844 = vld [vmem:[%s834 + $0x24] sm:$0xf]
      %v845 = vld [vmem:[%s834 + $0x28] sm:$0xf]
      %v846 = vld [vmem:[%s834 + $0x2c] sm:$0xf]
      %v847 = vld [vmem:[%s834 + $0x30] sm:$0xf]
      %v848 = vld [vmem:[%s834 + $0x34] sm:$0xf]
      %v849 = vld [vmem:[%s834 + $0x38] sm:$0xf]
      %v850 = vld [vmem:[%s834 + $0x3c] sm:$0xf]
      %v851 = vld [vmem:[%s834 + $0x40] sm:$0xf]
      %v852 = vld [vmem:[%s834 + $0x44] sm:$0xf]
      %v853 = vld [vmem:[%s834 + $0x48] sm:$0xf]
      %v854 = vld [vmem:[%s834 + $0x4c] sm:$0xf]
      %v855 = vld [vmem:[%s834 + $0x50] sm:$0xf]
      %v856 = vunpack.c.l.bf16 %v835
      %v857 = vunpack.c.l.bf16 %v836
      %v858 = vunpack.c.l.bf16 %v837
      %v859 = vunpack.c.l.bf16 %v838
      %v860 = vunpack.c.l.bf16 %v839
      %v861 = vunpack.c.l.bf16 %v840
      %v862 = vunpack.c.l.bf16 %v841
      %v863 = vunpack.c.l.bf16 %v842
      %v864 = vunpack.c.l.bf16 %v843
      %v865 = vunpack.c.l.bf16 %v844
      %v866 = vunpack.c.l.bf16 %v845
      %v867 = vunpack.c.l.bf16 %v846
      %v868 = vunpack.c.l.bf16 %v847
      %v869 = vunpack.c.l.bf16 %v848
      %v870 = vunpack.c.l.bf16 %v849
      %v871 = vunpack.c.l.bf16 %v850
      %v872 = vunpack.c.l.bf16 %v851
      %v873 = vunpack.c.l.bf16 %v852
      %v874 = vunpack.c.l.bf16 %v853
      %v875 = vunpack.c.l.bf16 %v854
      %v876 = vunpack.c.l.bf16 %v855
      %v877 = vpack.c.bf16 %v857, %v856
      %v878 = vpack.c.bf16 %v859, %v858
      %v879 = vpack.c.bf16 %v861, %v860
      %v880 = vpack.c.bf16 %v863, %v862
      %v881 = vpack.c.bf16 %v865, %v864
      %v882 = vpack.c.bf16 %v867, %v866
      %v883 = vpack.c.bf16 %v869, %v868
      %v884 = vpack.c.bf16 %v871, %v870
      %893 = vrot.lane.b32.xlu0 %v877, 36
      %v894 = vpop.permute.xlu0 %893
      %895 = vrot.lane.b32.xlu0 %v878, 36
      %v896 = vpop.permute.xlu0 %895
      %897 = vrot.lane.b32.xlu0 %v879, 36
      %v898 = vpop.permute.xlu0 %897
      %899 = vrot.lane.b32.xlu0 %v880, 36
      %v900 = vpop.permute.xlu0 %899
      %901 = vrot.lane.b32.xlu0 %v881, 36
      %v902 = vpop.permute.xlu0 %901
      %903 = vrot.lane.b32.xlu0 %v882, 36
      %v904 = vpop.permute.xlu0 %903
      %905 = vrot.lane.b32.xlu0 %v883, 36
      %v906 = vpop.permute.xlu0 %905
      %907 = vrot.lane.b32.xlu0 %v884, 36
      %v908 = vpop.permute.xlu0 %907
      %vm917 = vcmask 326944
      %918 = vst.msk [vmem:[#allocation2] sm:$0xff] %vm917, %v894
      %919 = vst.msk [vmem:[#allocation2 + $0x8] sm:$0xff] %vm917, %v896
      %920 = vst.msk [vmem:[#allocation2 + $0x10] sm:$0xff] %vm917, %v898
      %921 = vst.msk [vmem:[#allocation2 + $0x18] sm:$0xff] %vm917, %v900
      %922 = vst.msk [vmem:[#allocation2 + $0x20] sm:$0xff] %vm917, %v902
      %923 = vst.msk [vmem:[#allocation2 + $0x28] sm:$0xff] %vm917, %v904
      %924 = vst.msk [vmem:[#allocation2 + $0x30] sm:$0xff] %vm917, %v906
      %925 = vst.msk [vmem:[#allocation2 + $0x38] sm:$0xff] %vm917, %v908
      %v926 = vpack.c.bf16 %v872, %v872
      %v928 = vshrl.u32 %v877, 16
      %v930 = vshll.u32 %v877, 16
      %v932 = vrot.slane %v930, 1
      %v933 = vor.u32 %v928, %v932
      %v935 = vshll.u32 %v878, 16
      %v937 = vrot.slane %v935, 1
      %v938 = vsel %vm429, %v933, %v937
      %v939 = vshrl.u32 %v878, 16
      %v941 = vor.u32 %v939, %v937
      %v943 = vshll.u32 %v879, 16
      %v945 = vrot.slane %v943, 1
      %v946 = vsel %vm429, %v941, %v945
      %v947 = vshrl.u32 %v879, 16
      %v949 = vor.u32 %v947, %v945
      %v951 = vshll.u32 %v880, 16
      %v953 = vrot.slane %v951, 1
      %v954 = vsel %vm429, %v949, %v953
      %v955 = vshrl.u32 %v880, 16
      %v957 = vor.u32 %v955, %v953
      %v959 = vshll.u32 %v881, 16
      %v961 = vrot.slane %v959, 1
      %v962 = vsel %vm429, %v957, %v961
      %v963 = vshrl.u32 %v881, 16
      %v965 = vor.u32 %v963, %v961
      %v967 = vshll.u32 %v882, 16
      %v969 = vrot.slane %v967, 1
      %v970 = vsel %vm429, %v965, %v969
      %v971 = vshrl.u32 %v882, 16
      %v973 = vor.u32 %v971, %v969
      %v975 = vshll.u32 %v883, 16
      %v977 = vrot.slane %v975, 1
      %v978 = vsel %vm429, %v973, %v977
      %v979 = vshrl.u32 %v883, 16
      %v981 = vor.u32 %v979, %v977
      %v983 = vshll.u32 %v884, 16
      %v985 = vrot.slane %v983, 1
      %v986 = vsel %vm429, %v981, %v985
      %v987 = vshrl.u32 %v884, 16
      %v989 = vor.u32 %v987, %v985
      %v991 = vshll.u32 %v926, 16
      %v993 = vrot.slane %v991, 1
      %v994 = vsel %vm429, %v989, %v993
      %995 = vrot.lane.b32.xlu0 %v938, 40
      %v996 = vpop.permute.xlu0 %995
      %997 = vrot.lane.b32.xlu0 %v946, 40
      %v998 = vpop.permute.xlu0 %997
      %999 = vrot.lane.b32.xlu0 %v954, 40
      %v1000 = vpop.permute.xlu0 %999
      %1001 = vrot.lane.b32.xlu0 %v962, 40
      %v1002 = vpop.permute.xlu0 %1001
      %1003 = vrot.lane.b32.xlu0 %v970, 40
      %v1004 = vpop.permute.xlu0 %1003
      %1005 = vrot.lane.b32.xlu0 %v978, 40
      %v1006 = vpop.permute.xlu0 %1005
      %1007 = vrot.lane.b32.xlu0 %v986, 40
      %v1008 = vpop.permute.xlu0 %1007
      %1009 = vrot.lane.b32.xlu0 %v994, 40
      %v1010 = vpop.permute.xlu0 %1009
      %vm1019 = vcmask 359744
      %1020 = vst.msk [vmem:[#allocation2] sm:$0xff] %vm1019, %v996
      %1021 = vst.msk [vmem:[#allocation2 + $0x8] sm:$0xff] %vm1019, %v998
      %1022 = vst.msk [vmem:[#allocation2 + $0x10] sm:$0xff] %vm1019, %v1000
      %1023 = vst.msk [vmem:[#allocation2 + $0x18] sm:$0xff] %vm1019, %v1002
      %1024 = vst.msk [vmem:[#allocation2 + $0x20] sm:$0xff] %vm1019, %v1004
      %1025 = vst.msk [vmem:[#allocation2 + $0x28] sm:$0xff] %vm1019, %v1006
      %1026 = vst.msk [vmem:[#allocation2 + $0x30] sm:$0xff] %vm1019, %v1008
      %1027 = vst.msk [vmem:[#allocation2 + $0x38] sm:$0xff] %vm1019, %v1010
      %v1029 = vrot.slane %v877, 1
      %v1030 = vrot.slane %v878, 1
      %v1031 = vsel %vm540, %v1029, %v1030
      %v1032 = vrot.slane %v879, 1
      %v1033 = vsel %vm540, %v1030, %v1032
      %v1034 = vrot.slane %v880, 1
      %v1035 = vsel %vm540, %v1032, %v1034
      %v1036 = vrot.slane %v881, 1
      %v1037 = vsel %vm540, %v1034, %v1036
      %v1038 = vrot.slane %v882, 1
      %v1039 = vsel %vm540, %v1036, %v1038
      %v1040 = vrot.slane %v883, 1
      %v1041 = vsel %vm540, %v1038, %v1040
      %v1042 = vrot.slane %v884, 1
      %v1043 = vsel %vm540, %v1040, %v1042
      %v1044 = vrot.slane %v926, 1
      %v1045 = vsel %vm540, %v1042, %v1044
      %1046 = vrot.lane.b32.xlu0 %v1031, 44
      %v1047 = vpop.permute.xlu0 %1046
      %1048 = vrot.lane.b32.xlu0 %v1033, 44
      %v1049 = vpop.permute.xlu0 %1048
      %1050 = vrot.lane.b32.xlu0 %v1035, 44
      %v1051 = vpop.permute.xlu0 %1050
      %1052 = vrot.lane.b32.xlu0 %v1037, 44
      %v1053 = vpop.permute.xlu0 %1052
      %1054 = vrot.lane.b32.xlu0 %v1039, 44
      %v1055 = vpop.permute.xlu0 %1054
      %1056 = vrot.lane.b32.xlu0 %v1041, 44
      %v1057 = vpop.permute.xlu0 %1056
      %1058 = vrot.lane.b32.xlu0 %v1043, 44
      %v1059 = vpop.permute.xlu0 %1058
      %1060 = vrot.lane.b32.xlu0 %v1045, 44
      %v1061 = vpop.permute.xlu0 %1060
      %vm1070 = vcmask 392544
      %1071 = vst.msk [vmem:[#allocation2] sm:$0xff] %vm1070, %v1047
      %1072 = vst.msk [vmem:[#allocation2 + $0x8] sm:$0xff] %vm1070, %v1049
      %1073 = vst.msk [vmem:[#allocation2 + $0x10] sm:$0xff] %vm1070, %v1051
      %1074 = vst.msk [vmem:[#allocation2 + $0x18] sm:$0xff] %vm1070, %v1053
      %1075 = vst.msk [vmem:[#allocation2 + $0x20] sm:$0xff] %vm1070, %v1055
      %1076 = vst.msk [vmem:[#allocation2 + $0x28] sm:$0xff] %vm1070, %v1057
      %1077 = vst.msk [vmem:[#allocation2 + $0x30] sm:$0xff] %vm1070, %v1059
      %1078 = vst.msk [vmem:[#allocation2 + $0x38] sm:$0xff] %vm1070, %v1061
      %v1079 = vpack.c.bf16 %v873, %v872
      %1081 = vrot.lane.b32.xlu0 %v878, 48
      %v1082 = vpop.permute.xlu0 %1081
      %1083 = vrot.lane.b32.xlu0 %v879, 48
      %v1084 = vpop.permute.xlu0 %1083
      %1085 = vrot.lane.b32.xlu0 %v880, 48
      %v1086 = vpop.permute.xlu0 %1085
      %1087 = vrot.lane.b32.xlu0 %v881, 48
      %v1088 = vpop.permute.xlu0 %1087
      %1089 = vrot.lane.b32.xlu0 %v882, 48
      %v1090 = vpop.permute.xlu0 %1089
      %1091 = vrot.lane.b32.xlu0 %v883, 48
      %v1092 = vpop.permute.xlu0 %1091
      %1093 = vrot.lane.b32.xlu0 %v884, 48
      %v1094 = vpop.permute.xlu0 %1093
      %1095 = vrot.lane.b32.xlu0 %v1079, 48
      %v1096 = vpop.permute.xlu0 %1095
      %vm1105 = vcmask 425344
      %1106 = vst.msk [vmem:[#allocation2] sm:$0xff] %vm1105, %v1082
      %1107 = vst.msk [vmem:[#allocation2 + $0x8] sm:$0xff] %vm1105, %v1084
      %1108 = vst.msk [vmem:[#allocation2 + $0x10] sm:$0xff] %vm1105, %v1086
      %1109 = vst.msk [vmem:[#allocation2 + $0x18] sm:$0xff] %vm1105, %v1088
      %1110 = vst.msk [vmem:[#allocation2 + $0x20] sm:$0xff] %vm1105, %v1090
      %1111 = vst.msk [vmem:[#allocation2 + $0x28] sm:$0xff] %vm1105, %v1092
      %1112 = vst.msk [vmem:[#allocation2 + $0x30] sm:$0xff] %vm1105, %v1094
      %1113 = vst.msk [vmem:[#allocation2 + $0x38] sm:$0xff] %vm1105, %v1096
      %v1114 = vpack.c.bf16 %v874, %v874
      %v1116 = vshll.u32 %v1079, 16
      %v1118 = vrot.slane %v1116, 1
      %v1119 = vsel %vm429, %v989, %v1118
      %v1120 = vshrl.u32 %v1079, 16
      %v1122 = vor.u32 %v1120, %v1118
      %v1124 = vshll.u32 %v1114, 16
      %v1126 = vrot.slane %v1124, 1
      %v1127 = vsel %vm429, %v1122, %v1126
      %1128 = vrot.lane.b32.xlu0 %v946, 52
      %v1129 = vpop.permute.xlu0 %1128
      %1130 = vrot.lane.b32.xlu0 %v954, 52
      %v1131 = vpop.permute.xlu0 %1130
      %1132 = vrot.lane.b32.xlu0 %v962, 52
      %v1133 = vpop.permute.xlu0 %1132
      %1134 = vrot.lane.b32.xlu0 %v970, 52
      %v1135 = vpop.permute.xlu0 %1134
      %1136 = vrot.lane.b32.xlu0 %v978, 52
      %v1137 = vpop.permute.xlu0 %1136
      %1138 = vrot.lane.b32.xlu0 %v986, 52
      %v1139 = vpop.permute.xlu0 %1138
      %1140 = vrot.lane.b32.xlu0 %v1119, 52
      %v1141 = vpop.permute.xlu0 %1140
      %1142 = vrot.lane.b32.xlu0 %v1127, 52
      %v1143 = vpop.permute.xlu0 %1142
      %vm1152 = vcmask 458144
      %1153 = vst.msk [vmem:[#allocation2] sm:$0xff] %vm1152, %v1129
      %1154 = vst.msk [vmem:[#allocation2 + $0x8] sm:$0xff] %vm1152, %v1131
      %1155 = vst.msk [vmem:[#allocation2 + $0x10] sm:$0xff] %vm1152, %v1133
      %1156 = vst.msk [vmem:[#allocation2 + $0x18] sm:$0xff] %vm1152, %v1135
      %1157 = vst.msk [vmem:[#allocation2 + $0x20] sm:$0xff] %vm1152, %v1137
      %1158 = vst.msk [vmem:[#allocation2 + $0x28] sm:$0xff] %vm1152, %v1139
      %1159 = vst.msk [vmem:[#allocation2 + $0x30] sm:$0xff] %vm1152, %v1141
      %1160 = vst.msk [vmem:[#allocation2 + $0x38] sm:$0xff] %vm1152, %v1143
      %v1162 = vrot.slane %v1079, 1
      %v1163 = vsel %vm540, %v1042, %v1162
      %v1164 = vrot.slane %v1114, 1
      %v1165 = vsel %vm540, %v1162, %v1164
      %1166 = vrot.lane.b32.xlu0 %v1033, 56
      %v1167 = vpop.permute.xlu0 %1166
      %1168 = vrot.lane.b32.xlu0 %v1035, 56
      %v1169 = vpop.permute.xlu0 %1168
      %1170 = vrot.lane.b32.xlu0 %v1037, 56
      %v1171 = vpop.permute.xlu0 %1170
      %1172 = vrot.lane.b32.xlu0 %v1039, 56
      %v1173 = vpop.permute.xlu0 %1172
      %1174 = vrot.lane.b32.xlu0 %v1041, 56
      %v1175 = vpop.permute.xlu0 %1174
      %1176 = vrot.lane.b32.xlu0 %v1043, 56
      %v1177 = vpop.permute.xlu0 %1176
      %1178 = vrot.lane.b32.xlu0 %v1163, 56
      %v1179 = vpop.permute.xlu0 %1178
      %1180 = vrot.lane.b32.xlu0 %v1165, 56
      %v1181 = vpop.permute.xlu0 %1180
      %vm1190 = vcmask 490944
      %1191 = vst.msk [vmem:[#allocation2] sm:$0xff] %vm1190, %v1167
      %1192 = vst.msk [vmem:[#allocation2 + $0x8] sm:$0xff] %vm1190, %v1169
      %1193 = vst.msk [vmem:[#allocation2 + $0x10] sm:$0xff] %vm1190, %v1171
      %1194 = vst.msk [vmem:[#allocation2 + $0x18] sm:$0xff] %vm1190, %v1173
      %1195 = vst.msk [vmem:[#allocation2 + $0x20] sm:$0xff] %vm1190, %v1175
      %1196 = vst.msk [vmem:[#allocation2 + $0x28] sm:$0xff] %vm1190, %v1177
      %1197 = vst.msk [vmem:[#allocation2 + $0x30] sm:$0xff] %vm1190, %v1179
      %1198 = vst.msk [vmem:[#allocation2 + $0x38] sm:$0xff] %vm1190, %v1181
      %v1199 = vpack.c.bf16 %v875, %v874
      %1201 = vrot.lane.b32.xlu0 %v879, 60
      %v1202 = vpop.permute.xlu0 %1201
      %1203 = vrot.lane.b32.xlu0 %v880, 60
      %v1204 = vpop.permute.xlu0 %1203
      %1205 = vrot.lane.b32.xlu0 %v881, 60
      %v1206 = vpop.permute.xlu0 %1205
      %1207 = vrot.lane.b32.xlu0 %v882, 60
      %v1208 = vpop.permute.xlu0 %1207
      %1209 = vrot.lane.b32.xlu0 %v883, 60
      %v1210 = vpop.permute.xlu0 %1209
      %1211 = vrot.lane.b32.xlu0 %v884, 60
      %v1212 = vpop.permute.xlu0 %1211
      %1213 = vrot.lane.b32.xlu0 %v1079, 60
      %v1214 = vpop.permute.xlu0 %1213
      %1215 = vrot.lane.b32.xlu0 %v1199, 60
      %v1216 = vpop.permute.xlu0 %1215
      %vm1225 = vcmask 523744
      %1226 = vst.msk [vmem:[#allocation2] sm:$0xff] %vm1225, %v1202
      %1227 = vst.msk [vmem:[#allocation2 + $0x8] sm:$0xff] %vm1225, %v1204
      %1228 = vst.msk [vmem:[#allocation2 + $0x10] sm:$0xff] %vm1225, %v1206
      %1229 = vst.msk [vmem:[#allocation2 + $0x18] sm:$0xff] %vm1225, %v1208
      %1230 = vst.msk [vmem:[#allocation2 + $0x20] sm:$0xff] %vm1225, %v1210
      %1231 = vst.msk [vmem:[#allocation2 + $0x28] sm:$0xff] %vm1225, %v1212
      %1232 = vst.msk [vmem:[#allocation2 + $0x30] sm:$0xff] %vm1225, %v1214
      %1233 = vst.msk [vmem:[#allocation2 + $0x38] sm:$0xff] %vm1225, %v1216
      %v1234 = vpack.c.bf16 %v876, %v876
      %v1236 = vshll.u32 %v1199, 16
      %v1238 = vrot.slane %v1236, 1
      %v1239 = vsel %vm429, %v1122, %v1238
      %v1240 = vshrl.u32 %v1199, 16
      %v1242 = vor.u32 %v1240, %v1238
      %v1244 = vshll.u32 %v1234, 16
      %v1246 = vrot.slane %v1244, 1
      %v1247 = vsel %vm429, %v1242, %v1246
      %1248 = vrot.lane.b32.xlu0 %v954, 64
      %v1249 = vpop.permute.xlu0 %1248
      %1250 = vrot.lane.b32.xlu0 %v962, 64
      %v1251 = vpop.permute.xlu0 %1250
      %1252 = vrot.lane.b32.xlu0 %v970, 64
      %v1253 = vpop.permute.xlu0 %1252
      %1254 = vrot.lane.b32.xlu0 %v978, 64
      %v1255 = vpop.permute.xlu0 %1254
      %1256 = vrot.lane.b32.xlu0 %v986, 64
      %v1257 = vpop.permute.xlu0 %1256
      %1258 = vrot.lane.b32.xlu0 %v1119, 64
      %v1259 = vpop.permute.xlu0 %1258
      %1260 = vrot.lane.b32.xlu0 %v1239, 64
      %v1261 = vpop.permute.xlu0 %1260
      %1262 = vrot.lane.b32.xlu0 %v1247, 64
      %v1263 = vpop.permute.xlu0 %1262
      %vm1272 = vcmask 556544
      %1273 = vst.msk [vmem:[#allocation2] sm:$0xff] %vm1272, %v1249
      %1274 = vst.msk [vmem:[#allocation2 + $0x8] sm:$0xff] %vm1272, %v1251
      %1275 = vst.msk [vmem:[#allocation2 + $0x10] sm:$0xff] %vm1272, %v1253
      %1276 = vst.msk [vmem:[#allocation2 + $0x18] sm:$0xff] %vm1272, %v1255
      %1277 = vst.msk [vmem:[#allocation2 + $0x20] sm:$0xff] %vm1272, %v1257
      %1278 = vst.msk [vmem:[#allocation2 + $0x28] sm:$0xff] %vm1272, %v1259
      %1279 = vst.msk [vmem:[#allocation2 + $0x30] sm:$0xff] %vm1272, %v1261
      %1280 = vst.msk [vmem:[#allocation2 + $0x38] sm:$0xff] %vm1272, %v1263
      %v1282 = vrot.slane %v1199, 1
      %v1283 = vsel %vm540, %v1162, %v1282
      %v1284 = vrot.slane %v1234, 1
      %v1285 = vsel %vm540, %v1282, %v1284
      %1286 = vrot.lane.b32.xlu0 %v1035, 68
      %v1287 = vpop.permute.xlu0 %1286
      %1288 = vrot.lane.b32.xlu0 %v1037, 68
      %v1289 = vpop.permute.xlu0 %1288
      %1290 = vrot.lane.b32.xlu0 %v1039, 68
      %v1291 = vpop.permute.xlu0 %1290
      %1292 = vrot.lane.b32.xlu0 %v1041, 68
      %v1293 = vpop.permute.xlu0 %1292
      %1294 = vrot.lane.b32.xlu0 %v1043, 68
      %v1295 = vpop.permute.xlu0 %1294
      %1296 = vrot.lane.b32.xlu0 %v1163, 68
      %v1297 = vpop.permute.xlu0 %1296
      %1298 = vrot.lane.b32.xlu0 %v1283, 68
      %v1299 = vpop.permute.xlu0 %1298
      %1300 = vrot.lane.b32.xlu0 %v1285, 68
      %v1301 = vpop.permute.xlu0 %1300
      %vm1310 = vcmask 589344
      %1311 = vst.msk [vmem:[#allocation2] sm:$0xff] %vm1310, %v1287
      %1312 = vst.msk [vmem:[#allocation2 + $0x8] sm:$0xff] %vm1310, %v1289
      %1313 = vst.msk [vmem:[#allocation2 + $0x10] sm:$0xff] %vm1310, %v1291
      %1314 = vst.msk [vmem:[#allocation2 + $0x18] sm:$0xff] %vm1310, %v1293
      %1315 = vst.msk [vmem:[#allocation2 + $0x20] sm:$0xff] %vm1310, %v1295
      %1316 = vst.msk [vmem:[#allocation2 + $0x28] sm:$0xff] %vm1310, %v1297
      %1317 = vst.msk [vmem:[#allocation2 + $0x30] sm:$0xff] %vm1310, %v1299
      %1318 = vst.msk [vmem:[#allocation2 + $0x38] sm:$0xff] %vm1310, %v1301
      %s1319 = sadd.s32 %s25, 2
      %s1320 = smul.u32 %s1319, 22
      %s1321 = smul.addr %s1320, 4
      %s1322 = scalar_lea.vmem %s341, %s1321
      %v1323 = vld [vmem:[%s1322] sm:$0xf]
      %v1324 = vld [vmem:[%s1322 + $0x4] sm:$0xf]
      %v1325 = vld [vmem:[%s1322 + $0x8] sm:$0xf]
      %v1326 = vld [vmem:[%s1322 + $0xc] sm:$0xf]
      %v1327 = vld [vmem:[%s1322 + $0x10] sm:$0xf]
      %v1328 = vld [vmem:[%s1322 + $0x14] sm:$0xf]
      %v1329 = vld [vmem:[%s1322 + $0x18] sm:$0xf]
      %v1330 = vld [vmem:[%s1322 + $0x1c] sm:$0xf]
      %v1331 = vld [vmem:[%s1322 + $0x20] sm:$0xf]
      %v1332 = vld [vmem:[%s1322 + $0x24] sm:$0xf]
      %v1333 = vld [vmem:[%s1322 + $0x28] sm:$0xf]
      %v1334 = vld [vmem:[%s1322 + $0x2c] sm:$0xf]
      %v1335 = vld [vmem:[%s1322 + $0x30] sm:$0xf]
      %v1336 = vld [vmem:[%s1322 + $0x34] sm:$0xf]
      %v1337 = vld [vmem:[%s1322 + $0x38] sm:$0xf]
      %v1338 = vld [vmem:[%s1322 + $0x3c] sm:$0xf]
      %v1339 = vld [vmem:[%s1322 + $0x40] sm:$0xf]
      %v1340 = vld [vmem:[%s1322 + $0x44] sm:$0xf]
      %v1341 = vld [vmem:[%s1322 + $0x48] sm:$0xf]
      %v1342 = vld [vmem:[%s1322 + $0x4c] sm:$0xf]
      %v1343 = vld [vmem:[%s1322 + $0x50] sm:$0xf]
      %v1344 = vunpack.c.l.bf16 %v1323
      %v1345 = vunpack.c.l.bf16 %v1324
      %v1346 = vunpack.c.l.bf16 %v1325
      %v1347 = vunpack.c.l.bf16 %v1326
      %v1348 = vunpack.c.l.bf16 %v1327
      %v1349 = vunpack.c.l.bf16 %v1328
      %v1350 = vunpack.c.l.bf16 %v1329
      %v1351 = vunpack.c.l.bf16 %v1330
      %v1352 = vunpack.c.l.bf16 %v1331
      %v1353 = vunpack.c.l.bf16 %v1332
      %v1354 = vunpack.c.l.bf16 %v1333
      %v1355 = vunpack.c.l.bf16 %v1334
      %v1356 = vunpack.c.l.bf16 %v1335
      %v1357 = vunpack.c.l.bf16 %v1336
      %v1358 = vunpack.c.l.bf16 %v1337
      %v1359 = vunpack.c.l.bf16 %v1338
      %v1360 = vunpack.c.l.bf16 %v1339
      %v1361 = vunpack.c.l.bf16 %v1340
      %v1362 = vunpack.c.l.bf16 %v1341
      %v1363 = vunpack.c.l.bf16 %v1342
      %v1364 = vunpack.c.l.bf16 %v1343
      %v1365 = vpack.c.bf16 %v1345, %v1344
      %v1366 = vpack.c.bf16 %v1347, %v1346
      %v1367 = vpack.c.bf16 %v1349, %v1348
      %v1368 = vpack.c.bf16 %v1351, %v1350
      %v1369 = vpack.c.bf16 %v1353, %v1352
      %v1370 = vpack.c.bf16 %v1355, %v1354
      %v1371 = vpack.c.bf16 %v1357, %v1356
      %v1372 = vpack.c.bf16 %v1359, %v1358
      %1381 = vrot.lane.b32.xlu0 %v1365, 72
      %v1382 = vpop.permute.xlu0 %1381
      %1383 = vrot.lane.b32.xlu0 %v1366, 72
      %v1384 = vpop.permute.xlu0 %1383
      %1385 = vrot.lane.b32.xlu0 %v1367, 72
      %v1386 = vpop.permute.xlu0 %1385
      %1387 = vrot.lane.b32.xlu0 %v1368, 72
      %v1388 = vpop.permute.xlu0 %1387
      %1389 = vrot.lane.b32.xlu0 %v1369, 72
      %v1390 = vpop.permute.xlu0 %1389
      %1391 = vrot.lane.b32.xlu0 %v1370, 72
      %v1392 = vpop.permute.xlu0 %1391
      %1393 = vrot.lane.b32.xlu0 %v1371, 72
      %v1394 = vpop.permute.xlu0 %1393
      %1395 = vrot.lane.b32.xlu0 %v1372, 72
      %v1396 = vpop.permute.xlu0 %1395
      %vm1405 = vcmask 622144
      %1406 = vst.msk [vmem:[#allocation2] sm:$0xff] %vm1405, %v1382
      %1407 = vst.msk [vmem:[#allocation2 + $0x8] sm:$0xff] %vm1405, %v1384
      %1408 = vst.msk [vmem:[#allocation2 + $0x10] sm:$0xff] %vm1405, %v1386
      %1409 = vst.msk [vmem:[#allocation2 + $0x18] sm:$0xff] %vm1405, %v1388
      %1410 = vst.msk [vmem:[#allocation2 + $0x20] sm:$0xff] %vm1405, %v1390
      %1411 = vst.msk [vmem:[#allocation2 + $0x28] sm:$0xff] %vm1405, %v1392
      %1412 = vst.msk [vmem:[#allocation2 + $0x30] sm:$0xff] %vm1405, %v1394
      %1413 = vst.msk [vmem:[#allocation2 + $0x38] sm:$0xff] %vm1405, %v1396
      %v1414 = vpack.c.bf16 %v1360, %v1360
      %v1416 = vshrl.u32 %v1365, 16
      %v1418 = vshll.u32 %v1365, 16
      %v1420 = vrot.slane %v1418, 1
      %v1421 = vor.u32 %v1416, %v1420
      %v1423 = vshll.u32 %v1366, 16
      %v1425 = vrot.slane %v1423, 1
      %v1426 = vsel %vm429, %v1421, %v1425
      %v1427 = vshrl.u32 %v1366, 16
      %v1429 = vor.u32 %v1427, %v1425
      %v1431 = vshll.u32 %v1367, 16
      %v1433 = vrot.slane %v1431, 1
      %v1434 = vsel %vm429, %v1429, %v1433
      %v1435 = vshrl.u32 %v1367, 16
      %v1437 = vor.u32 %v1435, %v1433
      %v1439 = vshll.u32 %v1368, 16
      %v1441 = vrot.slane %v1439, 1
      %v1442 = vsel %vm429, %v1437, %v1441
      %v1443 = vshrl.u32 %v1368, 16
      %v1445 = vor.u32 %v1443, %v1441
      %v1447 = vshll.u32 %v1369, 16
      %v1449 = vrot.slane %v1447, 1
      %v1450 = vsel %vm429, %v1445, %v1449
      %v1451 = vshrl.u32 %v1369, 16
      %v1453 = vor.u32 %v1451, %v1449
      %v1455 = vshll.u32 %v1370, 16
      %v1457 = vrot.slane %v1455, 1
      %v1458 = vsel %vm429, %v1453, %v1457
      %v1459 = vshrl.u32 %v1370, 16
      %v1461 = vor.u32 %v1459, %v1457
      %v1463 = vshll.u32 %v1371, 16
      %v1465 = vrot.slane %v1463, 1
      %v1466 = vsel %vm429, %v1461, %v1465
      %v1467 = vshrl.u32 %v1371, 16
      %v1469 = vor.u32 %v1467, %v1465
      %v1471 = vshll.u32 %v1372, 16
      %v1473 = vrot.slane %v1471, 1
      %v1474 = vsel %vm429, %v1469, %v1473
      %v1475 = vshrl.u32 %v1372, 16
      %v1477 = vor.u32 %v1475, %v1473
      %v1479 = vshll.u32 %v1414, 16
      %v1481 = vrot.slane %v1479, 1
      %v1482 = vsel %vm429, %v1477, %v1481
      %1483 = vrot.lane.b32.xlu0 %v1426, 76
      %v1484 = vpop.permute.xlu0 %1483
      %1485 = vrot.lane.b32.xlu0 %v1434, 76
      %v1486 = vpop.permute.xlu0 %1485
      %1487 = vrot.lane.b32.xlu0 %v1442, 76
      %v1488 = vpop.permute.xlu0 %1487
      %1489 = vrot.lane.b32.xlu0 %v1450, 76
      %v1490 = vpop.permute.xlu0 %1489
      %1491 = vrot.lane.b32.xlu0 %v1458, 76
      %v1492 = vpop.permute.xlu0 %1491
      %1493 = vrot.lane.b32.xlu0 %v1466, 76
      %v1494 = vpop.permute.xlu0 %1493
      %1495 = vrot.lane.b32.xlu0 %v1474, 76
      %v1496 = vpop.permute.xlu0 %1495
      %1497 = vrot.lane.b32.xlu0 %v1482, 76
      %v1498 = vpop.permute.xlu0 %1497
      %vm1507 = vcmask 654944
      %1508 = vst.msk [vmem:[#allocation2] sm:$0xff] %vm1507, %v1484
      %1509 = vst.msk [vmem:[#allocation2 + $0x8] sm:$0xff] %vm1507, %v1486
      %1510 = vst.msk [vmem:[#allocation2 + $0x10] sm:$0xff] %vm1507, %v1488
      %1511 = vst.msk [vmem:[#allocation2 + $0x18] sm:$0xff] %vm1507, %v1490
      %1512 = vst.msk [vmem:[#allocation2 + $0x20] sm:$0xff] %vm1507, %v1492
      %1513 = vst.msk [vmem:[#allocation2 + $0x28] sm:$0xff] %vm1507, %v1494
      %1514 = vst.msk [vmem:[#allocation2 + $0x30] sm:$0xff] %vm1507, %v1496
      %1515 = vst.msk [vmem:[#allocation2 + $0x38] sm:$0xff] %vm1507, %v1498
      %v1517 = vrot.slane %v1365, 1
      %v1518 = vrot.slane %v1366, 1
      %v1519 = vsel %vm540, %v1517, %v1518
      %v1520 = vrot.slane %v1367, 1
      %v1521 = vsel %vm540, %v1518, %v1520
      %v1522 = vrot.slane %v1368, 1
      %v1523 = vsel %vm540, %v1520, %v1522
      %v1524 = vrot.slane %v1369, 1
      %v1525 = vsel %vm540, %v1522, %v1524
      %v1526 = vrot.slane %v1370, 1
      %v1527 = vsel %vm540, %v1524, %v1526
      %v1528 = vrot.slane %v1371, 1
      %v1529 = vsel %vm540, %v1526, %v1528
      %v1530 = vrot.slane %v1372, 1
      %v1531 = vsel %vm540, %v1528, %v1530
      %v1532 = vrot.slane %v1414, 1
      %v1533 = vsel %vm540, %v1530, %v1532
      %1534 = vrot.lane.b32.xlu0 %v1519, 80
      %v1535 = vpop.permute.xlu0 %1534
      %1536 = vrot.lane.b32.xlu0 %v1521, 80
      %v1537 = vpop.permute.xlu0 %1536
      %1538 = vrot.lane.b32.xlu0 %v1523, 80
      %v1539 = vpop.permute.xlu0 %1538
      %1540 = vrot.lane.b32.xlu0 %v1525, 80
      %v1541 = vpop.permute.xlu0 %1540
      %1542 = vrot.lane.b32.xlu0 %v1527, 80
      %v1543 = vpop.permute.xlu0 %1542
      %1544 = vrot.lane.b32.xlu0 %v1529, 80
      %v1545 = vpop.permute.xlu0 %1544
      %1546 = vrot.lane.b32.xlu0 %v1531, 80
      %v1547 = vpop.permute.xlu0 %1546
      %1548 = vrot.lane.b32.xlu0 %v1533, 80
      %v1549 = vpop.permute.xlu0 %1548
      %vm1558 = vcmask 687744
      %1559 = vst.msk [vmem:[#allocation2] sm:$0xff] %vm1558, %v1535
      %1560 = vst.msk [vmem:[#allocation2 + $0x8] sm:$0xff] %vm1558, %v1537
      %1561 = vst.msk [vmem:[#allocation2 + $0x10] sm:$0xff] %vm1558, %v1539
      %1562 = vst.msk [vmem:[#allocation2 + $0x18] sm:$0xff] %vm1558, %v1541
      %1563 = vst.msk [vmem:[#allocation2 + $0x20] sm:$0xff] %vm1558, %v1543
      %1564 = vst.msk [vmem:[#allocation2 + $0x28] sm:$0xff] %vm1558, %v1545
      %1565 = vst.msk [vmem:[#allocation2 + $0x30] sm:$0xff] %vm1558, %v1547
      %1566 = vst.msk [vmem:[#allocation2 + $0x38] sm:$0xff] %vm1558, %v1549
      %v1567 = vpack.c.bf16 %v1361, %v1360
      %1569 = vrot.lane.b32.xlu0 %v1366, 84
      %v1570 = vpop.permute.xlu0 %1569
      %1571 = vrot.lane.b32.xlu0 %v1367, 84
      %v1572 = vpop.permute.xlu0 %1571
      %1573 = vrot.lane.b32.xlu0 %v1368, 84
      %v1574 = vpop.permute.xlu0 %1573
      %1575 = vrot.lane.b32.xlu0 %v1369, 84
      %v1576 = vpop.permute.xlu0 %1575
      %1577 = vrot.lane.b32.xlu0 %v1370, 84
      %v1578 = vpop.permute.xlu0 %1577
      %1579 = vrot.lane.b32.xlu0 %v1371, 84
      %v1580 = vpop.permute.xlu0 %1579
      %1581 = vrot.lane.b32.xlu0 %v1372, 84
      %v1582 = vpop.permute.xlu0 %1581
      %1583 = vrot.lane.b32.xlu0 %v1567, 84
      %v1584 = vpop.permute.xlu0 %1583
      %vm1593 = vcmask 720544
      %1594 = vst.msk [vmem:[#allocation2] sm:$0xff] %vm1593, %v1570
      %1595 = vst.msk [vmem:[#allocation2 + $0x8] sm:$0xff] %vm1593, %v1572
      %1596 = vst.msk [vmem:[#allocation2 + $0x10] sm:$0xff] %vm1593, %v1574
      %1597 = vst.msk [vmem:[#allocation2 + $0x18] sm:$0xff] %vm1593, %v1576
      %1598 = vst.msk [vmem:[#allocation2 + $0x20] sm:$0xff] %vm1593, %v1578
      %1599 = vst.msk [vmem:[#allocation2 + $0x28] sm:$0xff] %vm1593, %v1580
      %1600 = vst.msk [vmem:[#allocation2 + $0x30] sm:$0xff] %vm1593, %v1582
      %1601 = vst.msk [vmem:[#allocation2 + $0x38] sm:$0xff] %vm1593, %v1584
      %v1602 = vpack.c.bf16 %v1362, %v1362
      %v1604 = vshll.u32 %v1567, 16
      %v1606 = vrot.slane %v1604, 1
      %v1607 = vsel %vm429, %v1477, %v1606
      %v1608 = vshrl.u32 %v1567, 16
      %v1610 = vor.u32 %v1608, %v1606
      %v1612 = vshll.u32 %v1602, 16
      %v1614 = vrot.slane %v1612, 1
      %v1615 = vsel %vm429, %v1610, %v1614
      %1616 = vrot.lane.b32.xlu0 %v1434, 88
      %v1617 = vpop.permute.xlu0 %1616
      %1618 = vrot.lane.b32.xlu0 %v1442, 88
      %v1619 = vpop.permute.xlu0 %1618
      %1620 = vrot.lane.b32.xlu0 %v1450, 88
      %v1621 = vpop.permute.xlu0 %1620
      %1622 = vrot.lane.b32.xlu0 %v1458, 88
      %v1623 = vpop.permute.xlu0 %1622
      %1624 = vrot.lane.b32.xlu0 %v1466, 88
      %v1625 = vpop.permute.xlu0 %1624
      %1626 = vrot.lane.b32.xlu0 %v1474, 88
      %v1627 = vpop.permute.xlu0 %1626
      %1628 = vrot.lane.b32.xlu0 %v1607, 88
      %v1629 = vpop.permute.xlu0 %1628
      %1630 = vrot.lane.b32.xlu0 %v1615, 88
      %v1631 = vpop.permute.xlu0 %1630
      %vm1640 = vcmask 753344
      %1641 = vst.msk [vmem:[#allocation2] sm:$0xff] %vm1640, %v1617
      %1642 = vst.msk [vmem:[#allocation2 + $0x8] sm:$0xff] %vm1640, %v1619
      %1643 = vst.msk [vmem:[#allocation2 + $0x10] sm:$0xff] %vm1640, %v1621
      %1644 = vst.msk [vmem:[#allocation2 + $0x18] sm:$0xff] %vm1640, %v1623
      %1645 = vst.msk [vmem:[#allocation2 + $0x20] sm:$0xff] %vm1640, %v1625
      %1646 = vst.msk [vmem:[#allocation2 + $0x28] sm:$0xff] %vm1640, %v1627
      %1647 = vst.msk [vmem:[#allocation2 + $0x30] sm:$0xff] %vm1640, %v1629
      %1648 = vst.msk [vmem:[#allocation2 + $0x38] sm:$0xff] %vm1640, %v1631
      %v1650 = vrot.slane %v1567, 1
      %v1651 = vsel %vm540, %v1530, %v1650
      %v1652 = vrot.slane %v1602, 1
      %v1653 = vsel %vm540, %v1650, %v1652
      %1654 = vrot.lane.b32.xlu0 %v1521, 92
      %v1655 = vpop.permute.xlu0 %1654
      %1656 = vrot.lane.b32.xlu0 %v1523, 92
      %v1657 = vpop.permute.xlu0 %1656
      %1658 = vrot.lane.b32.xlu0 %v1525, 92
      %v1659 = vpop.permute.xlu0 %1658
      %1660 = vrot.lane.b32.xlu0 %v1527, 92
      %v1661 = vpop.permute.xlu0 %1660
      %1662 = vrot.lane.b32.xlu0 %v1529, 92
      %v1663 = vpop.permute.xlu0 %1662
      %1664 = vrot.lane.b32.xlu0 %v1531, 92
      %v1665 = vpop.permute.xlu0 %1664
      %1666 = vrot.lane.b32.xlu0 %v1651, 92
      %v1667 = vpop.permute.xlu0 %1666
      %1668 = vrot.lane.b32.xlu0 %v1653, 92
      %v1669 = vpop.permute.xlu0 %1668
      %vm1678 = vcmask 786144
      %1679 = vst.msk [vmem:[#allocation2] sm:$0xff] %vm1678, %v1655
      %1680 = vst.msk [vmem:[#allocation2 + $0x8] sm:$0xff] %vm1678, %v1657
      %1681 = vst.msk [vmem:[#allocation2 + $0x10] sm:$0xff] %vm1678, %v1659
      %1682 = vst.msk [vmem:[#allocation2 + $0x18] sm:$0xff] %vm1678, %v1661
      %1683 = vst.msk [vmem:[#allocation2 + $0x20] sm:$0xff] %vm1678, %v1663
      %1684 = vst.msk [vmem:[#allocation2 + $0x28] sm:$0xff] %vm1678, %v1665
      %1685 = vst.msk [vmem:[#allocation2 + $0x30] sm:$0xff] %vm1678, %v1667
      %1686 = vst.msk [vmem:[#allocation2 + $0x38] sm:$0xff] %vm1678, %v1669
      %v1687 = vpack.c.bf16 %v1363, %v1362
      %1689 = vrot.lane.b32.xlu0 %v1367, 96
      %v1690 = vpop.permute.xlu0 %1689
      %1691 = vrot.lane.b32.xlu0 %v1368, 96
      %v1692 = vpop.permute.xlu0 %1691
      %1693 = vrot.lane.b32.xlu0 %v1369, 96
      %v1694 = vpop.permute.xlu0 %1693
      %1695 = vrot.lane.b32.xlu0 %v1370, 96
      %v1696 = vpop.permute.xlu0 %1695
      %1697 = vrot.lane.b32.xlu0 %v1371, 96
      %v1698 = vpop.permute.xlu0 %1697
      %1699 = vrot.lane.b32.xlu0 %v1372, 96
      %v1700 = vpop.permute.xlu0 %1699
      %1701 = vrot.lane.b32.xlu0 %v1567, 96
      %v1702 = vpop.permute.xlu0 %1701
      %1703 = vrot.lane.b32.xlu0 %v1687, 96
      %v1704 = vpop.permute.xlu0 %1703
      %vm1713 = vcmask 818944
      %1714 = vst.msk [vmem:[#allocation2] sm:$0xff] %vm1713, %v1690
      %1715 = vst.msk [vmem:[#allocation2 + $0x8] sm:$0xff] %vm1713, %v1692
      %1716 = vst.msk [vmem:[#allocation2 + $0x10] sm:$0xff] %vm1713, %v1694
      %1717 = vst.msk [vmem:[#allocation2 + $0x18] sm:$0xff] %vm1713, %v1696
      %1718 = vst.msk [vmem:[#allocation2 + $0x20] sm:$0xff] %vm1713, %v1698
      %1719 = vst.msk [vmem:[#allocation2 + $0x28] sm:$0xff] %vm1713, %v1700
      %1720 = vst.msk [vmem:[#allocation2 + $0x30] sm:$0xff] %vm1713, %v1702
      %1721 = vst.msk [vmem:[#allocation2 + $0x38] sm:$0xff] %vm1713, %v1704
      %v1722 = vpack.c.bf16 %v1364, %v1364
      %v1724 = vshll.u32 %v1687, 16
      %v1726 = vrot.slane %v1724, 1
      %v1727 = vsel %vm429, %v1610, %v1726
      %v1728 = vshrl.u32 %v1687, 16
      %v1730 = vor.u32 %v1728, %v1726
      %v1732 = vshll.u32 %v1722, 16
      %v1734 = vrot.slane %v1732, 1
      %v1735 = vsel %vm429, %v1730, %v1734
      %1736 = vrot.lane.b32.xlu0 %v1442, 100
      %v1737 = vpop.permute.xlu0 %1736
      %1738 = vrot.lane.b32.xlu0 %v1450, 100
      %v1739 = vpop.permute.xlu0 %1738
      %1740 = vrot.lane.b32.xlu0 %v1458, 100
      %v1741 = vpop.permute.xlu0 %1740
      %1742 = vrot.lane.b32.xlu0 %v1466, 100
      %v1743 = vpop.permute.xlu0 %1742
      %1744 = vrot.lane.b32.xlu0 %v1474, 100
      %v1745 = vpop.permute.xlu0 %1744
      %1746 = vrot.lane.b32.xlu0 %v1607, 100
      %v1747 = vpop.permute.xlu0 %1746
      %1748 = vrot.lane.b32.xlu0 %v1727, 100
      %v1749 = vpop.permute.xlu0 %1748
      %1750 = vrot.lane.b32.xlu0 %v1735, 100
      %v1751 = vpop.permute.xlu0 %1750
      %vm1760 = vcmask 851744
      %1761 = vst.msk [vmem:[#allocation2] sm:$0xff] %vm1760, %v1737
      %1762 = vst.msk [vmem:[#allocation2 + $0x8] sm:$0xff] %vm1760, %v1739
      %1763 = vst.msk [vmem:[#allocation2 + $0x10] sm:$0xff] %vm1760, %v1741
      %1764 = vst.msk [vmem:[#allocation2 + $0x18] sm:$0xff] %vm1760, %v1743
      %1765 = vst.msk [vmem:[#allocation2 + $0x20] sm:$0xff] %vm1760, %v1745
      %1766 = vst.msk [vmem:[#allocation2 + $0x28] sm:$0xff] %vm1760, %v1747
      %1767 = vst.msk [vmem:[#allocation2 + $0x30] sm:$0xff] %vm1760, %v1749
      %1768 = vst.msk [vmem:[#allocation2 + $0x38] sm:$0xff] %vm1760, %v1751
      %v1770 = vrot.slane %v1687, 1
      %v1771 = vsel %vm540, %v1650, %v1770
      %v1772 = vrot.slane %v1722, 1
      %v1773 = vsel %vm540, %v1770, %v1772
      %1774 = vrot.lane.b32.xlu0 %v1523, 104
      %v1775 = vpop.permute.xlu0 %1774
      %1776 = vrot.lane.b32.xlu0 %v1525, 104
      %v1777 = vpop.permute.xlu0 %1776
      %1778 = vrot.lane.b32.xlu0 %v1527, 104
      %v1779 = vpop.permute.xlu0 %1778
      %1780 = vrot.lane.b32.xlu0 %v1529, 104
      %v1781 = vpop.permute.xlu0 %1780
      %1782 = vrot.lane.b32.xlu0 %v1531, 104
      %v1783 = vpop.permute.xlu0 %1782
      %1784 = vrot.lane.b32.xlu0 %v1651, 104
      %v1785 = vpop.permute.xlu0 %1784
      %1786 = vrot.lane.b32.xlu0 %v1771, 104
      %v1787 = vpop.permute.xlu0 %1786
      %1788 = vrot.lane.b32.xlu0 %v1773, 104
      %v1789 = vpop.permute.xlu0 %1788
      %vm1798 = vcmask 884544
      %1799 = vst.msk [vmem:[#allocation2] sm:$0xff] %vm1798, %v1775
      %1800 = vst.msk [vmem:[#allocation2 + $0x8] sm:$0xff] %vm1798, %v1777
      %1801 = vst.msk [vmem:[#allocation2 + $0x10] sm:$0xff] %vm1798, %v1779
      %1802 = vst.msk [vmem:[#allocation2 + $0x18] sm:$0xff] %vm1798, %v1781
      %1803 = vst.msk [vmem:[#allocation2 + $0x20] sm:$0xff] %vm1798, %v1783
      %1804 = vst.msk [vmem:[#allocation2 + $0x28] sm:$0xff] %vm1798, %v1785
      %1805 = vst.msk [vmem:[#allocation2 + $0x30] sm:$0xff] %vm1798, %v1787
      %1806 = vst.msk [vmem:[#allocation2 + $0x38] sm:$0xff] %vm1798, %v1789
      %v1807 = vld [vmem:[#allocation2] sm:$0xff]
      %v1808 = vld [vmem:[#allocation2 + $0x8] sm:$0xff]
      %v1809 = vld [vmem:[#allocation2 + $0x10] sm:$0xff]
      %v1810 = vld [vmem:[#allocation2 + $0x18] sm:$0xff]
      %v1811 = vld [vmem:[#allocation2 + $0x20] sm:$0xff]
      %v1812 = vld [vmem:[#allocation2 + $0x28] sm:$0xff]
      %v1813 = vld [vmem:[#allocation2 + $0x30] sm:$0xff]
      %v1814 = vld [vmem:[#allocation2 + $0x38] sm:$0xff]
      %v1815 = vld [vmem:[%s1] sm:$0xf]
      %v1816 = vld [vmem:[%s1 + $0x4] sm:$0xf]
      %v1817 = vld [vmem:[%s1 + $0x8] sm:$0xf]
      %v1818 = vld [vmem:[%s1 + $0xc] sm:$0xf]
      %v1819 = vld [vmem:[%s1 + $0x10] sm:$0xf]
      %v1820 = vld [vmem:[%s1 + $0x14] sm:$0xf]
      %v1821 = vld [vmem:[%s1 + $0x18] sm:$0xf]
      %v1822 = vld [vmem:[%s1 + $0x1c] sm:$0xf]
      %v1823 = vld [vmem:[%s1 + $0x20] sm:$0xf]
      %v1824 = vld [vmem:[%s1 + $0x24] sm:$0xf]
      %v1825 = vld [vmem:[%s1 + $0x28] sm:$0xf]
      %v1826 = vld [vmem:[%s1 + $0x2c] sm:$0xf]
      %v1827 = vld [vmem:[%s1 + $0x30] sm:$0xf]
      %v1828 = vld [vmem:[%s1 + $0x34] sm:$0x3]
      %v1843 = vunpack.c.l.b16 %v1815
      %v1844 = vunpack.c.l.b16 %v1816
      %v1845 = vunpack.c.l.b16 %v1817
      %v1846 = vunpack.c.l.b16 %v1818
      %v1847 = vunpack.c.l.b16 %v1819
      %v1848 = vunpack.c.l.b16 %v1820
      %v1849 = vunpack.c.l.b16 %v1821
      %v1850 = vunpack.c.l.b16 %v1822
      %v1851 = vunpack.c.l.b16 %v1823
      %v1852 = vunpack.c.l.b16 %v1824
      %v1853 = vunpack.c.l.b16 %v1825
      %v1854 = vunpack.c.l.b16 %v1826
      %v1855 = vunpack.c.l.b16 %v1827
      %v1856 = vunpack.c.l.b16 %v1828
      %v1857 = vpack.c.b16 %v1844, %v1843
      %v1858 = vpack.c.b16 %v1846, %v1845
      %v1859 = vpack.c.b16 %v1848, %v1847
      %v1860 = vpack.c.b16 %v1850, %v1849
      %v1861 = vpack.c.b16 %v1852, %v1851
      %v1862 = vpack.c.b16 %v1854, %v1853
      %v1863 = vpack.c.b16 %v1856, %v1855
      %vm1870 = vcmask 883712
      %v1872 = vsel %vm1870, %v1807, 0
      %v1875 = vsel %vm1870, %v1808, 0
      %v1878 = vsel %vm1870, %v1809, 0
      %v1881 = vsel %vm1870, %v1810, 0
      %v1884 = vsel %vm1870, %v1811, 0
      %v1887 = vsel %vm1870, %v1812, 0
      %v1890 = vsel %vm1870, %v1813, 0
      %v1893 = vsel %vm1870, %v1814, 0
      %vm1895 = vcmask 1045504
      %v1897 = vsel %vm1895, %v1863, 0
      %1899 = vmatprep.subr.bf16.mxu0 0
      %1900 = vmatpush1.bf16.msra.mxu0 %v1857
      %1901 = vmatprep.subr.bf16.mxu0 0
      %1902 = vmatpush1.bf16.msra.mxu0 %v1858
      %1903 = vmatprep.subr.bf16.mxu0 0
      %1904 = vmatpush1.bf16.msra.mxu0 %v1859
      %1905 = vmatprep.subr.bf16.mxu0 0
      %1906 = vmatpush1.bf16.msra.mxu0 %v1860
      %1907 = vmatprep.subr.bf16.mxu0 0
      %1908 = vmatpush1.bf16.msra.mxu0 %v1861
      %1909 = vmatprep.subr.bf16.mxu0 0
      %1910 = vmatpush1.bf16.msra.mxu0 %v1862
      %1911 = vmatprep.subr.bf16.mxu0 0
      %1912 = vmatpush1.bf16.msra.mxu0 %v1897
      %1913 = vmatprep.subr.bf16.mxu0 0
      %1914 = vmatpush1.bf16.msra.mxu0 0
      %1915 = vmatprep.subr.bf16.mxu0 0
      %1916 = vmatpush1.bf16.msra.mxu0 0
      %1917 = vmatprep.subr.bf16.mxu0 0
      %1918 = vmatpush1.bf16.msra.mxu0 0
      %1919 = vmatprep.subr.bf16.mxu0 0
      %1920 = vmatpush1.bf16.msra.mxu0 0
      %1921 = vmatprep.subr.bf16.mxu0 0
      %1922 = vmatpush1.bf16.msra.mxu0 0
      %1923 = vmatprep.subr.bf16.mxu0 0
      %1924 = vmatpush1.bf16.msra.mxu0 0
      %1925 = vmatprep.subr.bf16.mxu0 0
      %1926 = vmatpush1.bf16.msra.mxu0 0
      %1927 = vmatprep.subr.bf16.mxu0 0
      %1928 = vmatpush1.bf16.msra.mxu0 0
      %1929 = vmatprep.subr.bf16.mxu0 0
      %1930 = vmatpush1.bf16.msra.mxu0 0
      %1931 = vmatprep.mubr.bf16.mxu0 0
      %1932 = vmatmul.mubr.bf16.gmra.mrb[0].mxu0 %v1872
      %v1933 = vpop.f32.mrb[0].mxu0
      %v1934 = vadd.f32 0.0, %v1933
      %v1935 = vpop.f32.mrb[0].mxu0
      %v1936 = vpop.f32.mrb[0].mxu0
      %v1937 = vadd.f32 0.0, %v1936
      %v1938 = vpop.f32.mrb[0].mxu0
      %1939 = vmatprep.mubr.bf16.mxu0 0
      %1940 = vmatmul.mubr.bf16.gmra.mrb[0].mxu0 %v1875
      %v1941 = vpop.f32.mrb[0].mxu0
      %v1942 = vadd.f32 0.0, %v1941
      %v1943 = vpop.f32.mrb[0].mxu0
      %v1944 = vpop.f32.mrb[0].mxu0
      %v1945 = vadd.f32 0.0, %v1944
      %v1946 = vpop.f32.mrb[0].mxu0
      %1947 = vmatprep.mubr.bf16.mxu0 0
      %1948 = vmatmul.mubr.bf16.gmra.mrb[0].mxu0 %v1878
      %v1949 = vpop.f32.mrb[0].mxu0
      %v1950 = vadd.f32 0.0, %v1949
      %v1951 = vpop.f32.mrb[0].mxu0
      %v1952 = vpop.f32.mrb[0].mxu0
      %v1953 = vadd.f32 0.0, %v1952
      %v1954 = vpop.f32.mrb[0].mxu0
      %1955 = vmatprep.mubr.bf16.mxu0 0
      %1956 = vmatmul.mubr.bf16.gmra.mrb[0].mxu0 %v1881
      %v1957 = vpop.f32.mrb[0].mxu0
      %v1958 = vadd.f32 0.0, %v1957
      %v1959 = vpop.f32.mrb[0].mxu0
      %v1960 = vpop.f32.mrb[0].mxu0
      %v1961 = vadd.f32 0.0, %v1960
      %v1962 = vpop.f32.mrb[0].mxu0
      %1963 = vmatprep.mubr.bf16.mxu0 0
      %1964 = vmatmul.mubr.bf16.gmra.mrb[0].mxu0 %v1884
      %v1965 = vpop.f32.mrb[0].mxu0
      %v1966 = vadd.f32 0.0, %v1965
      %v1967 = vpop.f32.mrb[0].mxu0
      %v1968 = vpop.f32.mrb[0].mxu0
      %v1969 = vadd.f32 0.0, %v1968
      %v1970 = vpop.f32.mrb[0].mxu0
      %1971 = vmatprep.mubr.bf16.mxu0 0
      %1972 = vmatmul.mubr.bf16.gmra.mrb[0].mxu0 %v1887
      %v1973 = vpop.f32.mrb[0].mxu0
      %v1974 = vadd.f32 0.0, %v1973
      %v1975 = vpop.f32.mrb[0].mxu0
      %v1976 = vpop.f32.mrb[0].mxu0
      %v1977 = vadd.f32 0.0, %v1976
      %v1978 = vpop.f32.mrb[0].mxu0
      %1979 = vmatprep.mubr.bf16.mxu0 0
      %1980 = vmatmul.mubr.bf16.gmra.mrb[0].mxu0 %v1890
      %v1981 = vpop.f32.mrb[0].mxu0
      %v1982 = vadd.f32 0.0, %v1981
      %v1983 = vpop.f32.mrb[0].mxu0
      %v1984 = vpop.f32.mrb[0].mxu0
      %v1985 = vadd.f32 0.0, %v1984
      %v1986 = vpop.f32.mrb[0].mxu0
      %1987 = vmatprep.mubr.bf16.mxu0 0
      %1988 = vmatmul.mubr.bf16.gmra.mrb[0].mxu0 %v1893
      %v1989 = vpop.f32.mrb[0].mxu0
      %v1990 = vadd.f32 0.0, %v1989
      %v1991 = vpop.f32.mrb[0].mxu0
      %v1992 = vpop.f32.mrb[0].mxu0
      %v1993 = vadd.f32 0.0, %v1992
      %v1994 = vpop.f32.mrb[0].mxu0
      %1995 = vdwg.mxu0
      %v1996 = vpack.c.bf16 %v1937, %v1934
      %v1997 = vpack.c.bf16 %v1945, %v1942
      %v1998 = vpack.c.bf16 %v1953, %v1950
      %v1999 = vpack.c.bf16 %v1961, %v1958
      %v2000 = vpack.c.bf16 %v1969, %v1966
      %v2001 = vpack.c.bf16 %v1977, %v1974
      %v2002 = vpack.c.bf16 %v1985, %v1982
      %v2003 = vpack.c.bf16 %v1993, %v1990
      %v2012 = vunpack.c.l.b16 %v1996
      %v2013 = vunpack.c.h.b16 %v1996
      %v2014 = vunpack.c.l.b16 %v1997
      %v2015 = vunpack.c.h.b16 %v1997
      %v2016 = vunpack.c.l.b16 %v1998
      %v2017 = vunpack.c.h.b16 %v1998
      %v2018 = vunpack.c.l.b16 %v1999
      %v2019 = vunpack.c.h.b16 %v1999
      %v2020 = vunpack.c.l.b16 %v2000
      %v2021 = vunpack.c.h.b16 %v2000
      %v2022 = vunpack.c.l.b16 %v2001
      %v2023 = vunpack.c.h.b16 %v2001
      %v2024 = vunpack.c.l.b16 %v2002
      %v2025 = vunpack.c.h.b16 %v2002
      %v2026 = vunpack.c.l.b16 %v2003
      %v2027 = vunpack.c.h.b16 %v2003
      %v2028 = vpack.c.b16 %v2012, %v2012
      %v2029 = vpack.c.b16 %v2013, %v2013
      %v2030 = vpack.c.b16 %v2014, %v2014
      %v2031 = vpack.c.b16 %v2015, %v2015
      %v2032 = vpack.c.b16 %v2016, %v2016
      %v2033 = vpack.c.b16 %v2017, %v2017
      %v2034 = vpack.c.b16 %v2018, %v2018
      %v2035 = vpack.c.b16 %v2019, %v2019
      %v2036 = vpack.c.b16 %v2020, %v2020
      %v2037 = vpack.c.b16 %v2021, %v2021
      %v2038 = vpack.c.b16 %v2022, %v2022
      %v2039 = vpack.c.b16 %v2023, %v2023
      %v2040 = vpack.c.b16 %v2024, %v2024
      %v2041 = vpack.c.b16 %v2025, %v2025
      %v2042 = vpack.c.b16 %v2026, %v2026
      %v2043 = vpack.c.b16 %v2027, %v2027
      %vm2060 = vcmask 60416
      %2061 = vst.msk [vmem:[%s350] sm:$0xf] %vm2060, %v2028
      %2062 = vst.msk [vmem:[%s350 + $0x4] sm:$0xf] %vm2060, %v2029
      %2063 = vst.msk [vmem:[%s350 + $0x8] sm:$0xf] %vm2060, %v2030
      %2064 = vst.msk [vmem:[%s350 + $0xc] sm:$0xf] %vm2060, %v2031
      %2065 = vst.msk [vmem:[%s350 + $0x10] sm:$0xf] %vm2060, %v2032
      %2066 = vst.msk [vmem:[%s350 + $0x14] sm:$0xf] %vm2060, %v2033
      %2067 = vst.msk [vmem:[%s350 + $0x18] sm:$0xf] %vm2060, %v2034
      %2068 = vst.msk [vmem:[%s350 + $0x1c] sm:$0xf] %vm2060, %v2035
      %2069 = vst.msk [vmem:[%s350 + $0x20] sm:$0xf] %vm2060, %v2036
      %2070 = vst.msk [vmem:[%s350 + $0x24] sm:$0xf] %vm2060, %v2037
      %2071 = vst.msk [vmem:[%s350 + $0x28] sm:$0xf] %vm2060, %v2038
      %2072 = vst.msk [vmem:[%s350 + $0x2c] sm:$0xf] %vm2060, %v2039
      %2073 = vst.msk [vmem:[%s350 + $0x30] sm:$0xf] %vm2060, %v2040
      %2074 = vst.msk [vmem:[%s350 + $0x34] sm:$0xf] %vm2060, %v2041
      %2075 = vst.msk [vmem:[%s350 + $0x38] sm:$0xf] %vm2060, %v2042
      %2076 = vst.msk [vmem:[%s350 + $0x3c] sm:$0xf] %vm2060, %v2043
      %v2077 = vld [vmem:[%s5] sm:$0xff]
      %v2078 = vld [vmem:[%s5 + $0x8] sm:$0xff]
      %v2079 = vld [vmem:[%s5 + $0x10] sm:$0xff]
      %v2080 = vld [vmem:[%s5 + $0x18] sm:$0xff]
      %v2081 = vld [vmem:[%s5 + $0x20] sm:$0xff]
      %v2082 = vld [vmem:[%s5 + $0x28] sm:$0xff]
      %v2083 = vld [vmem:[%s5 + $0x30] sm:$0xff]
      %v2084 = vld [vmem:[%s5 + $0x38] sm:$0xff]
      %v2085 = vld [vmem:[%s5 + $0x40] sm:$0xff]
      %v2086 = vld [vmem:[%s5 + $0x48] sm:$0xff]
      %v2087 = vld [vmem:[%s5 + $0x50] sm:$0xff]
      %v2088 = vld [vmem:[%s5 + $0x58] sm:$0xff]
      %v2089 = vld [vmem:[%s5 + $0x60] sm:$0xff]
      %v2090 = vld [vmem:[%s5 + $0x68] sm:$0xff]
      %v2091 = vld [vmem:[%s5 + $0x70] sm:$0xff]
      %v2092 = vld [vmem:[%s5 + $0x78] sm:$0xff]
      %2094 = vset.pattern.permute.xlu0 0
      %2095 = vperm.xlu0 %2094, %v2077
      %v2096 = vpop.permute.xlu0 %2095
      %2099 = vset.pattern.permute.xlu0 0
      %2100 = vperm.xlu0 %2099, %v2078
      %v2101 = vpop.permute.xlu0 %2100
      %2104 = vset.pattern.permute.xlu0 0
      %2105 = vperm.xlu0 %2104, %v2079
      %v2106 = vpop.permute.xlu0 %2105
      %2109 = vset.pattern.permute.xlu0 0
      %2110 = vperm.xlu0 %2109, %v2080
      %v2111 = vpop.permute.xlu0 %2110
      %2114 = vset.pattern.permute.xlu0 0
      %2115 = vperm.xlu0 %2114, %v2081
      %v2116 = vpop.permute.xlu0 %2115
      %2119 = vset.pattern.permute.xlu0 0
      %2120 = vperm.xlu0 %2119, %v2082
      %v2121 = vpop.permute.xlu0 %2120
      %2124 = vset.pattern.permute.xlu0 0
      %2125 = vperm.xlu0 %2124, %v2083
      %v2126 = vpop.permute.xlu0 %2125
      %2129 = vset.pattern.permute.xlu0 0
      %2130 = vperm.xlu0 %2129, %v2084
      %v2131 = vpop.permute.xlu0 %2130
      %2134 = vset.pattern.permute.xlu0 0
      %2135 = vperm.xlu0 %2134, %v2085
      %v2136 = vpop.permute.xlu0 %2135
      %2139 = vset.pattern.permute.xlu0 0
      %2140 = vperm.xlu0 %2139, %v2086
      %v2141 = vpop.permute.xlu0 %2140
      %2144 = vset.pattern.permute.xlu0 0
      %2145 = vperm.xlu0 %2144, %v2087
      %v2146 = vpop.permute.xlu0 %2145
      %2149 = vset.pattern.permute.xlu0 0
      %2150 = vperm.xlu0 %2149, %v2088
      %v2151 = vpop.permute.xlu0 %2150
      %2154 = vset.pattern.permute.xlu0 0
      %2155 = vperm.xlu0 %2154, %v2089
      %v2156 = vpop.permute.xlu0 %2155
      %2159 = vset.pattern.permute.xlu0 0
      %2160 = vperm.xlu0 %2159, %v2090
      %v2161 = vpop.permute.xlu0 %2160
      %2164 = vset.pattern.permute.xlu0 0
      %2165 = vperm.xlu0 %2164, %v2091
      %v2166 = vpop.permute.xlu0 %2165
      %2169 = vset.pattern.permute.xlu0 0
      %2170 = vperm.xlu0 %2169, %v2092
      %v2171 = vpop.permute.xlu0 %2170
      %v2173 = vmul.f32 %v1934, %v2096
      %v2174 = vmul.f32 %v1937, %v2101
      %v2175 = vmul.f32 %v1942, %v2106
      %v2176 = vmul.f32 %v1945, %v2111
      %v2177 = vmul.f32 %v1950, %v2116
      %v2178 = vmul.f32 %v1953, %v2121
      %v2179 = vmul.f32 %v1958, %v2126
      %v2180 = vmul.f32 %v1961, %v2131
      %v2181 = vmul.f32 %v1966, %v2136
      %v2182 = vmul.f32 %v1969, %v2141
      %v2183 = vmul.f32 %v1974, %v2146
      %v2184 = vmul.f32 %v1977, %v2151
      %v2185 = vmul.f32 %v1982, %v2156
      %v2186 = vmul.f32 %v1985, %v2161
      %v2187 = vmul.f32 %v1990, %v2166
      %v2188 = vmul.f32 %v1993, %v2171
      %vm2189 = vcmask 64512
      %v2190 = vsel %vm2189, %v2173, 0.0
      %v2191 = vsel %vm2189, %v2174, 0.0
      %v2192 = vadd.f32 %v2190, %v2191
      %v2193 = vsel %vm2189, %v2175, 0.0
      %v2194 = vadd.f32 %v2192, %v2193
      %v2195 = vsel %vm2189, %v2176, 0.0
      %v2196 = vadd.f32 %v2194, %v2195
      %v2197 = vsel %vm2189, %v2177, 0.0
      %v2198 = vadd.f32 %v2196, %v2197
      %v2199 = vsel %vm2189, %v2178, 0.0
      %v2200 = vadd.f32 %v2198, %v2199
      %v2201 = vsel %vm2189, %v2179, 0.0
      %v2202 = vadd.f32 %v2200, %v2201
      %v2203 = vsel %vm2189, %v2180, 0.0
      %v2204 = vadd.f32 %v2202, %v2203
      %v2205 = vsel %vm2189, %v2181, 0.0
      %v2206 = vadd.f32 %v2204, %v2205
      %v2207 = vsel %vm2189, %v2182, 0.0
      %v2208 = vadd.f32 %v2206, %v2207
      %v2209 = vsel %vm2189, %v2183, 0.0
      %v2210 = vadd.f32 %v2208, %v2209
      %v2211 = vsel %vm2189, %v2184, 0.0
      %v2212 = vadd.f32 %v2210, %v2211
      %v2213 = vsel %vm2189, %v2185, 0.0
      %v2214 = vadd.f32 %v2212, %v2213
      %v2215 = vsel %vm2189, %v2186, 0.0
      %v2216 = vadd.f32 %v2214, %v2215
      %v2217 = vsel %vm2189, %v2187, 0.0
      %v2218 = vadd.f32 %v2216, %v2217
      %v2219 = vsel %vm2189, %v2188, 0.0
      %v2220 = vadd.f32 %v2218, %v2219
      %v2221 = vrot.slane %v2220, 4
      %v2222 = vadd.f32 %v2220, %v2221
      %v2223 = vrot.slane %v2222, 2
      %v2224 = vadd.f32 %v2222, %v2223
      %v2225 = vrot.slane %v2224, 1
      %v2226 = vadd.f32 %v2224, %v2225
      %vm2227 = vcmask 57344
      %2228 = vst.msk [vmem:[%s357] sm:$0x1] %vm2227, %v2226
      %v2229 = vmul.f32 %v2173, %v2173
      %v2230 = vmul.f32 %v2174, %v2174
      %v2231 = vmul.f32 %v2175, %v2175
      %v2232 = vmul.f32 %v2176, %v2176
      %v2233 = vmul.f32 %v2177, %v2177
      %v2234 = vmul.f32 %v2178, %v2178
      %v2235 = vmul.f32 %v2179, %v2179
      %v2236 = vmul.f32 %v2180, %v2180
      %v2237 = vmul.f32 %v2181, %v2181
      %v2238 = vmul.f32 %v2182, %v2182
      %v2239 = vmul.f32 %v2183, %v2183
      %v2240 = vmul.f32 %v2184, %v2184
      %v2241 = vmul.f32 %v2185, %v2185
      %v2242 = vmul.f32 %v2186, %v2186
      %v2243 = vmul.f32 %v2187, %v2187
      %v2244 = vmul.f32 %v2188, %v2188
      %v2245 = vsel %vm2189, %v2229, 0.0
      %v2246 = vsel %vm2189, %v2230, 0.0
      %v2247 = vadd.f32 %v2245, %v2246
      %v2248 = vsel %vm2189, %v2231, 0.0
      %v2249 = vadd.f32 %v2247, %v2248
      %v2250 = vsel %vm2189, %v2232, 0.0
      %v2251 = vadd.f32 %v2249, %v2250
      %v2252 = vsel %vm2189, %v2233, 0.0
      %v2253 = vadd.f32 %v2251, %v2252
      %v2254 = vsel %vm2189, %v2234, 0.0
      %v2255 = vadd.f32 %v2253, %v2254
      %v2256 = vsel %vm2189, %v2235, 0.0
      %v2257 = vadd.f32 %v2255, %v2256
      %v2258 = vsel %vm2189, %v2236, 0.0
      %v2259 = vadd.f32 %v2257, %v2258
      %v2260 = vsel %vm2189, %v2237, 0.0
      %v2261 = vadd.f32 %v2259, %v2260
      %v2262 = vsel %vm2189, %v2238, 0.0
      %v2263 = vadd.f32 %v2261, %v2262
      %v2264 = vsel %vm2189, %v2239, 0.0
      %v2265 = vadd.f32 %v2263, %v2264
      %v2266 = vsel %vm2189, %v2240, 0.0
      %v2267 = vadd.f32 %v2265, %v2266
      %v2268 = vsel %vm2189, %v2241, 0.0
      %v2269 = vadd.f32 %v2267, %v2268
      %v2270 = vsel %vm2189, %v2242, 0.0
      %v2271 = vadd.f32 %v2269, %v2270
      %v2272 = vsel %vm2189, %v2243, 0.0
      %v2273 = vadd.f32 %v2271, %v2272
      %v2274 = vsel %vm2189, %v2244, 0.0
      %v2275 = vadd.f32 %v2273, %v2274
      %v2276 = vrot.slane %v2275, 4
      %v2277 = vadd.f32 %v2275, %v2276
      %v2278 = vrot.slane %v2277, 2
      %v2279 = vadd.f32 %v2277, %v2278
      %v2280 = vrot.slane %v2279, 1
      %v2281 = vadd.f32 %v2279, %v2280
      %2282 = vst.msk [vmem:[%s364] sm:$0x1] %vm2227, %v2281
      %p2283 = scmp.lt.s32.totalorder %s24, 1
      %s2284 = scalar_select %p2283, %s24, 1
      %p2285 = scmp.lt.s32.totalorder %s25, 7
      %s2286 = scalar_select %p2285, %s25, 7
      %s2287 = smul.addr %s2286, 16
      %s2288 = smul.addr %s2284, 128
      %s2289 = sadd.s32 %s2287, %s2288
      %s2290 = smul.addr %s2289, 4
      %s2291 = scalar_lea.vmem %s6, %s2290
      %p2292 = scmp.lt.s32.totalorder %s24, 1
      %s2293 = scalar_select %p2292, %s24, 1
      %p2294 = scmp.lt.s32.totalorder %s25, 7
      %s2295 = scalar_select %p2294, %s25, 7
      %s2296 = smul.addr %s2293, 8
      %s2297 = sadd.s32 %s2295, %s2296
      %s2298 = scalar_lea.vmem %s7, %s2297
      %p2299 = scmp.lt.s32.totalorder %s24, 1
      %s2300 = scalar_select %p2299, %s24, 1
      %p2301 = scmp.lt.s32.totalorder %s25, 7
      %s2302 = scalar_select %p2301, %s25, 7
      %s2303 = smul.addr %s2300, 8
      %s2304 = sadd.s32 %s2302, %s2303
      %s2305 = scalar_lea.vmem %s8, %s2304
      // Predicated region
      $region45: #{residual_block3d_forward.4} parent=43 // pred_check
        %p2306 = pneg %p183
      $region46: #{residual_block3d_forward.4} parent=43 // pred_check_branch
        %2308 = sbr.rel (%p2306) target = $region48
      $region47: #{residual_block3d_forward.4} parent=43 // pred_region
        _
      $region48: #{residual_block3d_forward.4} parent=43 // pred_fallthru
        _
      // Predicated region
      $region49: #{residual_block3d_forward.4} parent=43 // pred_check
        %p2309 = pneg %p211
      $region50: #{residual_block3d_forward.4} parent=43 // pred_check_branch
        %2311 = sbr.rel (%p2309) target = $region52
      $region51: #{residual_block3d_forward.4} parent=43 // pred_region
        _
      $region52: #{residual_block3d_forward.4} parent=43 // pred_fallthru
        _
      // Predicated region
      $region53: #{residual_block3d_forward.4} parent=43 // pred_check
        %p2312 = pneg %p239
      $region54: #{residual_block3d_forward.4} parent=43 // pred_check_branch
        %2314 = sbr.rel (%p2312) target = $region56
      $region55: #{residual_block3d_forward.4} parent=43 // pred_region
        _
      $region56: #{residual_block3d_forward.4} parent=43 // pred_fallthru
        _
    $region44: #{residual_block3d_forward.4} parent=5 // pred_fallthru
      _
    %p2315 = scmp.le.s32.totalorder 2, %s15
    // Predicated region
    $region57: #{residual_block3d_forward.4} parent=5 // pred_check
      %p2316 = pneg %p2315
    $region58: #{residual_block3d_forward.4} parent=5 // pred_check_branch
      %2318 = sbr.rel (%p2316) target = $region60
    $region59: #{residual_block3d_forward.4} parent=5 // pred_region
      %s2319 = ssub.s32 %s15, 2
      // Predicated region
      $region61: #{residual_block3d_forward.4} parent=59 // pred_check
        %p2320 = pneg %p189
      $region62: #{residual_block3d_forward.4} parent=59 // pred_check_branch
        %2322 = sbr.rel (%p2320) target = $region64
      $region63: #{residual_block3d_forward.4} parent=59 // pred_region
        %p2323 = scmp.lt.s32.totalorder %s26, 1
        %s2324 = scalar_select %p2323, %s26, 1
        %p2325 = scmp.lt.s32.totalorder %s27, 7
        %s2326 = scalar_select %p2325, %s27, 7
        %s2327 = smul.addr %s2326, 16
        %s2328 = smul.addr %s2324, 128
        %s2329 = sadd.s32 %s2327, %s2328
        %s2330 = smul.addr %s2329, 4
        %s2331 = scalar_lea.vmem %s6, %s2330
      $region64: #{residual_block3d_forward.4} parent=59 // pred_fallthru
        _
      // Predicated region
      $region65: #{residual_block3d_forward.4} parent=59 // pred_check
        %p2332 = pneg %p217
      $region66: #{residual_block3d_forward.4} parent=59 // pred_check_branch
        %2334 = sbr.rel (%p2332) target = $region68
      $region67: #{residual_block3d_forward.4} parent=59 // pred_region
        %p2335 = scmp.lt.s32.totalorder %s26, 1
        %s2336 = scalar_select %p2335, %s26, 1
        %p2337 = scmp.lt.s32.totalorder %s27, 7
        %s2338 = scalar_select %p2337, %s27, 7
        %s2339 = smul.addr %s2336, 8
        %s2340 = sadd.s32 %s2338, %s2339
        %s2341 = scalar_lea.vmem %s7, %s2340
      $region68: #{residual_block3d_forward.4} parent=59 // pred_fallthru
        _
      // Predicated region
      $region69: #{residual_block3d_forward.4} parent=59 // pred_check
        %p2342 = pneg %p245
      $region70: #{residual_block3d_forward.4} parent=59 // pred_check_branch
        %2344 = sbr.rel (%p2342) target = $region72
      $region71: #{residual_block3d_forward.4} parent=59 // pred_region
        %p2345 = scmp.lt.s32.totalorder %s26, 1
        %s2346 = scalar_select %p2345, %s26, 1
        %p2347 = scmp.lt.s32.totalorder %s27, 7
        %s2348 = scalar_select %p2347, %s27, 7
        %s2349 = smul.addr %s2346, 8
        %s2350 = sadd.s32 %s2348, %s2349
        %s2351 = scalar_lea.vmem %s8, %s2350
      $region72: #{residual_block3d_forward.4} parent=59 // pred_fallthru
        _
    $region60: #{residual_block3d_forward.4} parent=5 // pred_fallthru
      _
  $region6: #{residual_block3d_forward.4} parent=0 // loop_footer
    %s19 = sadd.s32 1, %s15
  $region7: #{residual_block3d_forward.4} parent=0 // loop_footer_branch
    %14 = sbr.rel target = $region3
  $region8: #{residual_block3d_forward.4} parent=0 // loop_exit
    _

// kernel: residual_block3d_forward.7
$region0: #{residual_block3d_forward.7}
  #allocation0 [shape = 'u32[]', space=smem, size = 0x4, offset = 0x4, fixed_abs, tag = 'smem constant byte address 0x4 - core index']
  #allocation1 [shape = 'u32[144,128]{1,0:T(1,128)}', space=vmem, size = 0x12000, scoped, tag = 'internal scratch']
  %s0 = inlined_call_operand.vmem [shape: f32[8,1024], index: 0, kind: input, shape index: {}]
  %s1 = inlined_call_operand.vmem [shape: f32[8,1024], index: 1, kind: input, shape index: {}]
  %s2 = inlined_call_operand.vmem [shape: f32[1,1024], index: 2, kind: input, shape index: {}]
  %s3 = inlined_call_operand.vmem [shape: f32[1,1024], index: 3, kind: input, shape index: {}]
  %s4 = inlined_call_operand.vmem [shape: f32[1,1024], index: 4, kind: input, shape index: {}]
  %s5 = inlined_call_operand.vmem [shape: f32[1,1024], index: 5, kind: input, shape index: {}]
  %s6 = inlined_call_operand.vmem [shape: f32[8,1024], index: 6, kind: output, shape index: {}]
  %s7 = sld [smem:[#allocation0]]
  $region34: #{residual_block3d_forward.7} parent=0
    _
  %s9 = ssub.s32 1, %s7
  %s10 = scalar_select 0, %s9, %s7
  // Predicated region
  $region2: #{residual_block3d_forward.7} parent=0 // pred_check
    _
  $region3: #{residual_block3d_forward.7} parent=0 // pred_check_branch
    %12 = sbr.rel (0) target = $region5
  $region4: #{residual_block3d_forward.7} parent=0 // pred_region
    _
  $region5: #{residual_block3d_forward.7} parent=0 // pred_fallthru
    _
  // Predicated region
  $region6: #{residual_block3d_forward.7} parent=0 // pred_check
    _
  $region7: #{residual_block3d_forward.7} parent=0 // pred_check_branch
    %14 = sbr.rel (0) target = $region9
  $region8: #{residual_block3d_forward.7} parent=0 // pred_region
    _
  $region9: #{residual_block3d_forward.7} parent=0 // pred_fallthru
    _
  // Predicated region
  $region10: #{residual_block3d_forward.7} parent=0 // pred_check
    _
  $region11: #{residual_block3d_forward.7} parent=0 // pred_check_branch
    %16 = sbr.rel (0) target = $region13
  $region12: #{residual_block3d_forward.7} parent=0 // pred_region
    _
  $region13: #{residual_block3d_forward.7} parent=0 // pred_fallthru
    _
  // Predicated region
  $region14: #{residual_block3d_forward.7} parent=0 // pred_check
    _
  $region15: #{residual_block3d_forward.7} parent=0 // pred_check_branch
    %18 = sbr.rel (0) target = $region17
  $region16: #{residual_block3d_forward.7} parent=0 // pred_region
    _
  $region17: #{residual_block3d_forward.7} parent=0 // pred_fallthru
    _
  // Predicated region
  $region18: #{residual_block3d_forward.7} parent=0 // pred_check
    _
  $region19: #{residual_block3d_forward.7} parent=0 // pred_check_branch
    %20 = sbr.rel (0) target = $region21
  $region20: #{residual_block3d_forward.7} parent=0 // pred_region
    _
  $region21: #{residual_block3d_forward.7} parent=0 // pred_fallthru
    _
  // Predicated region
  $region22: #{residual_block3d_forward.7} parent=0 // pred_check
    _
  $region23: #{residual_block3d_forward.7} parent=0 // pred_check_branch
    %22 = sbr.rel (0) target = $region25
  $region24: #{residual_block3d_forward.7} parent=0 // pred_region
    _
  $region25: #{residual_block3d_forward.7} parent=0 // pred_fallthru
    _
  %v23 = vld [vmem:[%s0] sm:$0xff]
  %v24 = vld [vmem:[%s0 + $0x8] sm:$0xff]
  %v25 = vld [vmem:[%s0 + $0x10] sm:$0xff]
  %v26 = vld [vmem:[%s0 + $0x18] sm:$0xff]
  %v27 = vld [vmem:[%s0 + $0x20] sm:$0xff]
  %v28 = vld [vmem:[%s0 + $0x28] sm:$0xff]
  %v29 = vld [vmem:[%s0 + $0x30] sm:$0xff]
  %v30 = vld [vmem:[%s0 + $0x38] sm:$0xff]
  %v31 = vld [vmem:[%s2] sm:$0xff]
  %v33 = vlaneseq
  %v34 = vshrl.u32 %v33, 7
  %v35 = vsub.s32 0, %v34
  %v36 = vrot.slane %v31, %v35
  %v37 = vlaneseq
  %v38 = vshrl.u32 %v37, 7
  %v39 = vsub.s32 1, %v38
  %v40 = vrot.slane %v31, %v39
  %v41 = vlaneseq
  %v42 = vshrl.u32 %v41, 7
  %v43 = vsub.s32 2, %v42
  %v44 = vrot.slane %v31, %v43
  %v45 = vlaneseq
  %v46 = vshrl.u32 %v45, 7
  %v47 = vsub.s32 3, %v46
  %v48 = vrot.slane %v31, %v47
  %v49 = vlaneseq
  %v50 = vshrl.u32 %v49, 7
  %v51 = vsub.s32 4, %v50
  %v52 = vrot.slane %v31, %v51
  %v53 = vlaneseq
  %v54 = vshrl.u32 %v53, 7
  %v55 = vsub.s32 5, %v54
  %v56 = vrot.slane %v31, %v55
  %v57 = vlaneseq
  %v58 = vshrl.u32 %v57, 7
  %v59 = vsub.s32 6, %v58
  %v60 = vrot.slane %v31, %v59
  %v61 = vlaneseq
  %v62 = vshrl.u32 %v61, 7
  %v63 = vsub.s32 7, %v62
  %v64 = vrot.slane %v31, %v63
  %v73 = vmul.f32 %v23, %v36
  %v74 = vmul.f32 %v24, %v40
  %v75 = vmul.f32 %v25, %v44
  %v76 = vmul.f32 %v26, %v48
  %v77 = vmul.f32 %v27, %v52
  %v78 = vmul.f32 %v28, %v56
  %v79 = vmul.f32 %v29, %v60
  %v80 = vmul.f32 %v30, %v64
  %v81 = vld [vmem:[%s3] sm:$0xff]
  %v83 = vlaneseq
  %v84 = vshrl.u32 %v83, 7
  %v85 = vsub.s32 0, %v84
  %v86 = vrot.slane %v81, %v85
  %v87 = vlaneseq
  %v88 = vshrl.u32 %v87, 7
  %v89 = vsub.s32 1, %v88
  %v90 = vrot.slane %v81, %v89
  %v91 = vlaneseq
  %v92 = vshrl.u32 %v91, 7
  %v93 = vsub.s32 2, %v92
  %v94 = vrot.slane %v81, %v93
  %v95 = vlaneseq
  %v96 = vshrl.u32 %v95, 7
  %v97 = vsub.s32 3, %v96
  %v98 = vrot.slane %v81, %v97
  %v99 = vlaneseq
  %v100 = vshrl.u32 %v99, 7
  %v101 = vsub.s32 4, %v100
  %v102 = vrot.slane %v81, %v101
  %v103 = vlaneseq
  %v104 = vshrl.u32 %v103, 7
  %v105 = vsub.s32 5, %v104
  %v106 = vrot.slane %v81, %v105
  %v107 = vlaneseq
  %v108 = vshrl.u32 %v107, 7
  %v109 = vsub.s32 6, %v108
  %v110 = vrot.slane %v81, %v109
  %v111 = vlaneseq
  %v112 = vshrl.u32 %v111, 7
  %v113 = vsub.s32 7, %v112
  %v114 = vrot.slane %v81, %v113
  %v123 = vadd.f32 %v73, %v86
  %v124 = vadd.f32 %v74, %v90
  %v125 = vadd.f32 %v75, %v94
  %v126 = vadd.f32 %v76, %v98
  %v127 = vadd.f32 %v77, %v102
  %v128 = vadd.f32 %v78, %v106
  %v129 = vadd.f32 %v79, %v110
  %v130 = vadd.f32 %v80, %v114
  %v131 = vld [vmem:[%s1] sm:$0xff]
  %v132 = vld [vmem:[%s1 + $0x8] sm:$0xff]
  %v133 = vld [vmem:[%s1 + $0x10] sm:$0xff]
  %v134 = vld [vmem:[%s1 + $0x18] sm:$0xff]
  %v135 = vld [vmem:[%s1 + $0x20] sm:$0xff]
  %v136 = vld [vmem:[%s1 + $0x28] sm:$0xff]
  %v137 = vld [vmem:[%s1 + $0x30] sm:$0xff]
  %v138 = vld [vmem:[%s1 + $0x38] sm:$0xff]
  %v139 = vld [vmem:[%s4] sm:$0xff]
  %v141 = vlaneseq
  %v142 = vshrl.u32 %v141, 7
  %v143 = vsub.s32 0, %v142
  %v144 = vrot.slane %v139, %v143
  %v145 = vlaneseq
  %v146 = vshrl.u32 %v145, 7
  %v147 = vsub.s32 1, %v146
  %v148 = vrot.slane %v139, %v147
  %v149 = vlaneseq
  %v150 = vshrl.u32 %v149, 7
  %v151 = vsub.s32 2, %v150
  %v152 = vrot.slane %v139, %v151
  %v153 = vlaneseq
  %v154 = vshrl.u32 %v153, 7
  %v155 = vsub.s32 3, %v154
  %v156 = vrot.slane %v139, %v155
  %v157 = vlaneseq
  %v158 = vshrl.u32 %v157, 7
  %v159 = vsub.s32 4, %v158
  %v160 = vrot.slane %v139, %v159
  %v161 = vlaneseq
  %v162 = vshrl.u32 %v161, 7
  %v163 = vsub.s32 5, %v162
  %v164 = vrot.slane %v139, %v163
  %v165 = vlaneseq
  %v166 = vshrl.u32 %v165, 7
  %v167 = vsub.s32 6, %v166
  %v168 = vrot.slane %v139, %v167
  %v169 = vlaneseq
  %v170 = vshrl.u32 %v169, 7
  %v171 = vsub.s32 7, %v170
  %v172 = vrot.slane %v139, %v171
  %v181 = vmul.f32 %v131, %v144
  %v182 = vmul.f32 %v132, %v148
  %v183 = vmul.f32 %v133, %v152
  %v184 = vmul.f32 %v134, %v156
  %v185 = vmul.f32 %v135, %v160
  %v186 = vmul.f32 %v136, %v164
  %v187 = vmul.f32 %v137, %v168
  %v188 = vmul.f32 %v138, %v172
  %v189 = vadd.f32 %v123, %v181
  %v190 = vadd.f32 %v124, %v182
  %v191 = vadd.f32 %v125, %v183
  %v192 = vadd.f32 %v126, %v184
  %v193 = vadd.f32 %v127, %v185
  %v194 = vadd.f32 %v128, %v186
  %v195 = vadd.f32 %v129, %v187
  %v196 = vadd.f32 %v130, %v188
  %v197 = vld [vmem:[%s5] sm:$0xff]
  %v199 = vlaneseq
  %v200 = vshrl.u32 %v199, 7
  %v201 = vsub.s32 0, %v200
  %v202 = vrot.slane %v197, %v201
  %v203 = vlaneseq
  %v204 = vshrl.u32 %v203, 7
  %v205 = vsub.s32 1, %v204
  %v206 = vrot.slane %v197, %v205
  %v207 = vlaneseq
  %v208 = vshrl.u32 %v207, 7
  %v209 = vsub.s32 2, %v208
  %v210 = vrot.slane %v197, %v209
  %v211 = vlaneseq
  %v212 = vshrl.u32 %v211, 7
  %v213 = vsub.s32 3, %v212
  %v214 = vrot.slane %v197, %v213
  %v215 = vlaneseq
  %v216 = vshrl.u32 %v215, 7
  %v217 = vsub.s32 4, %v216
  %v218 = vrot.slane %v197, %v217
  %v219 = vlaneseq
  %v220 = vshrl.u32 %v219, 7
  %v221 = vsub.s32 5, %v220
  %v222 = vrot.slane %v197, %v221
  %v223 = vlaneseq
  %v224 = vshrl.u32 %v223, 7
  %v225 = vsub.s32 6, %v224
  %v226 = vrot.slane %v197, %v225
  %v227 = vlaneseq
  %v228 = vshrl.u32 %v227, 7
  %v229 = vsub.s32 7, %v228
  %v230 = vrot.slane %v197, %v229
  %v239 = vadd.f32 %v189, %v202
  %v240 = vadd.f32 %v190, %v206
  %v241 = vadd.f32 %v191, %v210
  %v242 = vadd.f32 %v192, %v214
  %v243 = vadd.f32 %v193, %v218
  %v244 = vadd.f32 %v194, %v222
  %v245 = vadd.f32 %v195, %v226
  %v246 = vadd.f32 %v196, %v230
  %v247 = vmax.f32 %v239, 0.0
  %v248 = vmax.f32 %v240, 0.0
  %v249 = vmax.f32 %v241, 0.0
  %v250 = vmax.f32 %v242, 0.0
  %v251 = vmax.f32 %v243, 0.0
  %v252 = vmax.f32 %v244, 0.0
  %v253 = vmax.f32 %v245, 0.0
  %v254 = vmax.f32 %v246, 0.0
  %255 = vst [vmem:[%s6] sm:$0xff] %v247
  %256 = vst [vmem:[%s6 + $0x8] sm:$0xff] %v248
  %257 = vst [vmem:[%s6 + $0x10] sm:$0xff] %v249
  %258 = vst [vmem:[%s6 + $0x18] sm:$0xff] %v250
  %259 = vst [vmem:[%s6 + $0x20] sm:$0xff] %v251
  %260 = vst [vmem:[%s6 + $0x28] sm:$0xff] %v252
  %261 = vst [vmem:[%s6 + $0x30] sm:$0xff] %v253
  %262 = vst [vmem:[%s6 + $0x38] sm:$0xff] %v254
  // Predicated region
  $region26: #{residual_block3d_forward.7} parent=0 // pred_check
    _
  $region27: #{residual_block3d_forward.7} parent=0 // pred_check_branch
    %264 = sbr.rel (0) target = $region29
  $region28: #{residual_block3d_forward.7} parent=0 // pred_region
    _
  $region29: #{residual_block3d_forward.7} parent=0 // pred_fallthru
    _
  // Predicated region
  $region30: #{residual_block3d_forward.7} parent=0 // pred_check
    _
  $region31: #{residual_block3d_forward.7} parent=0 // pred_check_branch
    %266 = sbr.rel (0) target = $region33
  $region32: #{residual_block3d_forward.7} parent=0 // pred_region
    _
  $region33: #{residual_block3d_forward.7} parent=0 // pred_fallthru
    _

// kernel: residual_block3d_forward.5
$region0: #{residual_block3d_forward.5}
  #allocation0 [shape = 'u32[]', space=smem, size = 0x4, offset = 0x4, fixed_abs, tag = 'smem constant byte address 0x4 - core index']
  #allocation1 [shape = 'u32[144,128]{1,0:T(1,128)}', space=vmem, size = 0x12000, scoped, tag = 'internal scratch']
  #allocation2 [shape = 'bf16[128,216]{1,0:T(16,128)(2,1)}', space=vmem, size = 0x10000, scoped, tag = 'scratch operand']
  %s0 = inlined_call_operand.vmem [shape: bf16[2,10,176,8], index: 0, kind: input, shape index: {}]
  %s1 = inlined_call_operand.vmem [shape: bf16[216,8], index: 1, kind: input, shape index: {}]
  %s2 = inlined_call_operand.vmem [shape: f32[1,8], index: 2, kind: input, shape index: {}]
  %s3 = inlined_call_operand.vmem [shape: f32[1,8], index: 3, kind: input, shape index: {}]
  %s4 = inlined_call_operand.vmem [shape: f32[10,176,1], index: 4, kind: input, shape index: {}]
  %s5 = inlined_call_operand.vmem [shape: f32[128,1], index: 5, kind: input, shape index: {}]
  %s6 = inlined_call_operand.vmem [shape: f32[2,8,128,8], index: 6, kind: output, shape index: {0}]
  %s7 = inlined_call_operand.vmem [shape: f32[2,8,1,8], index: 7, kind: output, shape index: {1}]
  %s8 = inlined_call_operand.vmem [shape: f32[2,8,1,8], index: 8, kind: output, shape index: {2}]
  %9 = xla_tuple %s6, %s7, %s8
  %s10 = sld [smem:[#allocation0]]
  $region73: #{residual_block3d_forward.5} parent=0
    _
  %s12 = ssub.s32 1, %s10
  %s13 = scalar_select 0, %s12, %s10
  loop: start=0, step=1, limit=18
  $region2: #{residual_block3d_forward.5} parent=0 // loop_pre_header
    _
  $region3: #{residual_block3d_forward.5} parent=0 // loop_header
    %s15 = sphi 0, %s19
    %p16 = scmp.ge.s32.totalorder %s15, 18
    %s22 = sphi 0, %s34
    %s23 = sphi 0, %s30
    %s24 = sphi 0, %s22
    %s25 = sphi 0, %s23
    %s26 = sphi 0, %s24
    %s27 = sphi 0, %s25
    %s37 = sphi 0, %s39
    %s40 = sphi 0, %s37
    %s41 = sphi 0, %s40
    %s57 = sphi 0, %s41
    %s61 = sphi 0, %s61
    %s63 = sphi 0, %s61
    %s64 = sphi 0, %s63
    %s78 = sphi 0, %s64
    %s82 = sphi 0, %s82
    %s84 = sphi 0, %s82
    %s85 = sphi 0, %s84
    %s99 = sphi 0, %s85
    %s103 = sphi 0, %s103
    %s105 = sphi 0, %s103
    %s106 = sphi 0, %s105
    %s120 = sphi 0, %s106
    %s124 = sphi 0, %s124
    %s126 = sphi 0, %s124
    %s127 = sphi 0, %s126
    %s141 = sphi 0, %s127
    %s145 = sphi 0, %s145
    %s147 = sphi 0, %s145
    %s148 = sphi 0, %s147
    %s162 = sphi 0, %s148
    %s170 = sphi 0, %s172
    %s173 = sphi 0, %s170
    %s174 = sphi 0, %s173
    %s190 = sphi 0, %s174
    %s198 = sphi 0, %s200
    %s201 = sphi 0, %s198
    %s202 = sphi 0, %s201
    %s218 = sphi 0, %s202
    %s226 = sphi 0, %s228
    %s229 = sphi 0, %s226
    %s230 = sphi 0, %s229
    %s246 = sphi 0, %s230
  $region4: #{residual_block3d_forward.5} parent=0 // loop_header_branch
    %18 = sbr.rel (%p16) target = $region8
  $region5: #{residual_block3d_forward.5} parent=0 // loop_body
    %s20 = ssub.s32 %s15, 1
    %s21 = ssub.s32 %s15, 2
    %s28 = sadd.s32 1, %s23
    %p29 = scmp.ge.s32.totalorder %s28, 8
    %s30 = scalar_select %p29, 0, %s28
    %s31 = sadd.s32 1, %s22
    %s32 = scalar_select %p29, %s31, %s22
    %p33 = scmp.ge.s32.totalorder %s32, 2
    %s34 = scalar_select %p33, 0, %s32
    %s35 = ssub.s32 %s22, %s34
    %p36 = scmp.eq.s32.totalorder %s35, 0
    %s38 = sadd.s32 %s37, 1
    %s39 = scalar_select %p36, %s37, %s38
    %p42 = pneg %p36
    %p43 = scmp.eq.s32.totalorder %s15, 15
    %p44 = por %p42, %p43
    %p45 = scmp.ne.s32.totalorder %s37, %s40
    %p46 = scmp.eq.s32.totalorder %s15, 0
    %p47 = por %p45, %p46
    %p48 = scmp.ne.s32.totalorder %s37, %s40
    %p49 = scmp.eq.s32.totalorder %s20, 15
    %p50 = por %p48, %p49
    %p51 = scmp.ne.s32.totalorder %s40, %s41
    %p52 = scmp.eq.s32.totalorder %s20, 0
    %p53 = por %p51, %p52
    %p54 = scmp.ne.s32.totalorder %s40, %s41
    %p55 = scmp.eq.s32.totalorder %s21, 15
    %p56 = por %p54, %p55
    %p58 = scmp.ne.s32.totalorder %s41, %s57
    %p59 = scmp.eq.s32.totalorder %s21, 0
    %p60 = por %p58, %p59
    %s62 = sadd.s32 %s61, 1
    %p65 = scmp.eq.s32.totalorder %s15, 15
    %p66 = scmp.ne.s32.totalorder %s61, %s63
    %p67 = scmp.eq.s32.totalorder %s15, 0
    %p68 = por %p66, %p67
    %p69 = scmp.ne.s32.totalorder %s61, %s63
    %p70 = scmp.eq.s32.totalorder %s20, 15
    %p71 = por %p69, %p70
    %p72 = scmp.ne.s32.totalorder %s63, %s64
    %p73 = scmp.eq.s32.totalorder %s20, 0
    %p74 = por %p72, %p73
    %p75 = scmp.ne.s32.totalorder %s63, %s64
    %p76 = scmp.eq.s32.totalorder %s21, 15
    %p77 = por %p75, %p76
    %p79 = scmp.ne.s32.totalorder %s64, %s78
    %p80 = scmp.eq.s32.totalorder %s21, 0
    %p81 = por %p79, %p80
    %s83 = sadd.s32 %s82, 1
    %p86 = scmp.eq.s32.totalorder %s15, 15
    %p87 = scmp.ne.s32.totalorder %s82, %s84
    %p88 = scmp.eq.s32.totalorder %s15, 0
    %p89 = por %p87, %p88
    %p90 = scmp.ne.s32.totalorder %s82, %s84
    %p91 = scmp.eq.s32.totalorder %s20, 15
    %p92 = por %p90, %p91
    %p93 = scmp.ne.s32.totalorder %s84, %s85
    %p94 = scmp.eq.s32.totalorder %s20, 0
    %p95 = por %p93, %p94
    %p96 = scmp.ne.s32.totalorder %s84, %s85
    %p97 = scmp.eq.s32.totalorder %s21, 15
    %p98 = por %p96, %p97
    %p100 = scmp.ne.s32.totalorder %s85, %s99
    %p101 = scmp.eq.s32.totalorder %s21, 0
    %p102 = por %p100, %p101
    %s104 = sadd.s32 %s103, 1
    %p107 = scmp.eq.s32.totalorder %s15, 15
    %p108 = scmp.ne.s32.totalorder %s103, %s105
    %p109 = scmp.eq.s32.totalorder %s15, 0
    %p110 = por %p108, %p109
    %p111 = scmp.ne.s32.totalorder %s103, %s105
    %p112 = scmp.eq.s32.totalorder %s20, 15
    %p113 = por %p111, %p112
    %p114 = scmp.ne.s32.totalorder %s105, %s106
    %p115 = scmp.eq.s32.totalorder %s20, 0
    %p116 = por %p114, %p115
    %p117 = scmp.ne.s32.totalorder %s105, %s106
    %p118 = scmp.eq.s32.totalorder %s21, 15
    %p119 = por %p117, %p118
    %p121 = scmp.ne.s32.totalorder %s106, %s120
    %p122 = scmp.eq.s32.totalorder %s21, 0
    %p123 = por %p121, %p122
    %s125 = sadd.s32 %s124, 1
    %p128 = scmp.eq.s32.totalorder %s15, 15
    %p129 = scmp.ne.s32.totalorder %s124, %s126
    %p130 = scmp.eq.s32.totalorder %s15, 0
    %p131 = por %p129, %p130
    %p132 = scmp.ne.s32.totalorder %s124, %s126
    %p133 = scmp.eq.s32.totalorder %s20, 15
    %p134 = por %p132, %p133
    %p135 = scmp.ne.s32.totalorder %s126, %s127
    %p136 = scmp.eq.s32.totalorder %s20, 0
    %p137 = por %p135, %p136
    %p138 = scmp.ne.s32.totalorder %s126, %s127
    %p139 = scmp.eq.s32.totalorder %s21, 15
    %p140 = por %p138, %p139
    %p142 = scmp.ne.s32.totalorder %s127, %s141
    %p143 = scmp.eq.s32.totalorder %s21, 0
    %p144 = por %p142, %p143
    %s146 = sadd.s32 %s145, 1
    %p149 = scmp.eq.s32.totalorder %s15, 15
    %p150 = scmp.ne.s32.totalorder %s145, %s147
    %p151 = scmp.eq.s32.totalorder %s15, 0
    %p152 = por %p150, %p151
    %p153 = scmp.ne.s32.totalorder %s145, %s147
    %p154 = scmp.eq.s32.totalorder %s20, 15
    %p155 = por %p153, %p154
    %p156 = scmp.ne.s32.totalorder %s147, %s148
    %p157 = scmp.eq.s32.totalorder %s20, 0
    %p158 = por %p156, %p157
    %p159 = scmp.ne.s32.totalorder %s147, %s148
    %p160 = scmp.eq.s32.totalorder %s21, 15
    %p161 = por %p159, %p160
    %p163 = scmp.ne.s32.totalorder %s148, %s162
    %p164 = scmp.eq.s32.totalorder %s21, 0
    %p165 = por %p163, %p164
    %s166 = ssub.s32 %s22, %s34
    %s167 = ssub.s32 %s23, %s30
    %s168 = sor.u32 %s166, %s167
    %p169 = scmp.eq.s32.totalorder %s168, 0
    %s171 = sadd.s32 %s170, 1
    %s172 = scalar_select %p169, %s170, %s171
    %p175 = pneg %p169
    %p176 = scmp.eq.s32.totalorder %s15, 15
    %p177 = por %p175, %p176
    %p178 = scmp.ne.s32.totalorder %s170, %s173
    %p179 = scmp.eq.s32.totalorder %s15, 0
    %p180 = por %p178, %p179
    %p181 = scmp.ne.s32.totalorder %s170, %s173
    %p182 = scmp.eq.s32.totalorder %s20, 15
    %p183 = por %p181, %p182
    %p184 = scmp.ne.s32.totalorder %s173, %s174
    %p185 = scmp.eq.s32.totalorder %s20, 0
    %p186 = por %p184, %p185
    %p187 = scmp.ne.s32.totalorder %s173, %s174
    %p188 = scmp.eq.s32.totalorder %s21, 15
    %p189 = por %p187, %p188
    %p191 = scmp.ne.s32.totalorder %s174, %s190
    %p192 = scmp.eq.s32.totalorder %s21, 0
    %p193 = por %p191, %p192
    %s194 = ssub.s32 %s22, %s34
    %s195 = ssub.s32 %s23, %s30
    %s196 = sor.u32 %s194, %s195
    %p197 = scmp.eq.s32.totalorder %s196, 0
    %s199 = sadd.s32 %s198, 1
    %s200 = scalar_select %p197, %s198, %s199
    %p203 = pneg %p197
    %p204 = scmp.eq.s32.totalorder %s15, 15
    %p205 = por %p203, %p204
    %p206 = scmp.ne.s32.totalorder %s198, %s201
    %p207 = scmp.eq.s32.totalorder %s15, 0
    %p208 = por %p206, %p207
    %p209 = scmp.ne.s32.totalorder %s198, %s201
    %p210 = scmp.eq.s32.totalorder %s20, 15
    %p211 = por %p209, %p210
    %p212 = scmp.ne.s32.totalorder %s201, %s202
    %p213 = scmp.eq.s32.totalorder %s20, 0
    %p214 = por %p212, %p213
    %p215 = scmp.ne.s32.totalorder %s201, %s202
    %p216 = scmp.eq.s32.totalorder %s21, 15
    %p217 = por %p215, %p216
    %p219 = scmp.ne.s32.totalorder %s202, %s218
    %p220 = scmp.eq.s32.totalorder %s21, 0
    %p221 = por %p219, %p220
    %s222 = ssub.s32 %s22, %s34
    %s223 = ssub.s32 %s23, %s30
    %s224 = sor.u32 %s222, %s223
    %p225 = scmp.eq.s32.totalorder %s224, 0
    %s227 = sadd.s32 %s226, 1
    %s228 = scalar_select %p225, %s226, %s227
    %p231 = pneg %p225
    %p232 = scmp.eq.s32.totalorder %s15, 15
    %p233 = por %p231, %p232
    %p234 = scmp.ne.s32.totalorder %s226, %s229
    %p235 = scmp.eq.s32.totalorder %s15, 0
    %p236 = por %p234, %p235
    %p237 = scmp.ne.s32.totalorder %s226, %s229
    %p238 = scmp.eq.s32.totalorder %s20, 15
    %p239 = por %p237, %p238
    %p240 = scmp.ne.s32.totalorder %s229, %s230
    %p241 = scmp.eq.s32.totalorder %s20, 0
    %p242 = por %p240, %p241
    %p243 = scmp.ne.s32.totalorder %s229, %s230
    %p244 = scmp.eq.s32.totalorder %s21, 15
    %p245 = por %p243, %p244
    %p247 = scmp.ne.s32.totalorder %s230, %s246
    %p248 = scmp.eq.s32.totalorder %s21, 0
    %p249 = por %p247, %p248
    %p250 = scmp.le.s32.totalorder 1, %s15
    %p251 = scmp.lt.s32.totalorder %s15, 17
    %p252 = pnand %p250, %p251
    %p253 = pneg %p252
    // Predicated region
    $region9: #{residual_block3d_forward.5} parent=5 // pred_check
      _
    $region10: #{residual_block3d_forward.5} parent=5 // pred_check_branch
      %255 = sbr.rel (%p252) target = $region12
    $region11: #{residual_block3d_forward.5} parent=5 // pred_region
      %s256 = ssub.s32 %s15, 1
      // Predicated region
      $region13: #{residual_block3d_forward.5} parent=11 // pred_check
        %p257 = pneg %p74
      $region14: #{residual_block3d_forward.5} parent=11 // pred_check_branch
        %259 = sbr.rel (%p257) target = $region16
      $region15: #{residual_block3d_forward.5} parent=11 // pred_region
        _
      $region16: #{residual_block3d_forward.5} parent=11 // pred_fallthru
        _
      // Predicated region
      $region17: #{residual_block3d_forward.5} parent=11 // pred_check
        %p260 = pneg %p95
      $region18: #{residual_block3d_forward.5} parent=11 // pred_check_branch
        %262 = sbr.rel (%p260) target = $region20
      $region19: #{residual_block3d_forward.5} parent=11 // pred_region
        _
      $region20: #{residual_block3d_forward.5} parent=11 // pred_fallthru
        _
      // Predicated region
      $region21: #{residual_block3d_forward.5} parent=11 // pred_check
        %p263 = pneg %p116
      $region22: #{residual_block3d_forward.5} parent=11 // pred_check_branch
        %265 = sbr.rel (%p263) target = $region24
      $region23: #{residual_block3d_forward.5} parent=11 // pred_region
        _
      $region24: #{residual_block3d_forward.5} parent=11 // pred_fallthru
        _
      // Predicated region
      $region25: #{residual_block3d_forward.5} parent=11 // pred_check
        %p266 = pneg %p137
      $region26: #{residual_block3d_forward.5} parent=11 // pred_check_branch
        %268 = sbr.rel (%p266) target = $region28
      $region27: #{residual_block3d_forward.5} parent=11 // pred_region
        _
      $region28: #{residual_block3d_forward.5} parent=11 // pred_fallthru
        _
      // Predicated region
      $region29: #{residual_block3d_forward.5} parent=11 // pred_check
        %p269 = pneg %p158
      $region30: #{residual_block3d_forward.5} parent=11 // pred_check_branch
        %271 = sbr.rel (%p269) target = $region32
      $region31: #{residual_block3d_forward.5} parent=11 // pred_region
        _
      $region32: #{residual_block3d_forward.5} parent=11 // pred_fallthru
        _
    $region12: #{residual_block3d_forward.5} parent=5 // pred_fallthru
      _
    %p272 = scmp.lt.s32.totalorder %s15, 16
    // Predicated region
    $region33: #{residual_block3d_forward.5} parent=5 // pred_check
      %p273 = pneg %p272
    $region34: #{residual_block3d_forward.5} parent=5 // pred_check_branch
      %275 = sbr.rel (%p273) target = $region36
    $region35: #{residual_block3d_forward.5} parent=5 // pred_region
      // Predicated region
      $region37: #{residual_block3d_forward.5} parent=35 // pred_check
        %p276 = pneg %p47
      $region38: #{residual_block3d_forward.5} parent=35 // pred_check_branch
        %278 = sbr.rel (%p276) target = $region40
      $region39: #{residual_block3d_forward.5} parent=35 // pred_region
        %p279 = scmp.lt.s32.totalorder %s22, 1
        %s280 = scalar_select %p279, %s22, 1
        %s281 = smul.addr %s280, 220
        %s282 = smul.addr %s281, 4
        %s283 = scalar_lea.vmem %s0, %s282
      $region40: #{residual_block3d_forward.5} parent=35 // pred_fallthru
        _
    $region36: #{residual_block3d_forward.5} parent=5 // pred_fallthru
      _
    %p284 = scmp.le.s32.totalorder 1, %s15
    %p285 = scmp.lt.s32.totalorder %s15, 17
    %p286 = pnand %p284, %p285
    %p287 = pneg %p286
    // Predicated region
    $region41: #{residual_block3d_forward.5} parent=5 // pred_check
      _
    $region42: #{residual_block3d_forward.5} parent=5 // pred_check_branch
      %289 = sbr.rel (%p286) target = $region44
    $region43: #{residual_block3d_forward.5} parent=5 // pred_region
      %s290 = ssub.s32 %s15, 1
      %p291 = scmp.lt.s32.totalorder %s24, 1
      %s292 = scalar_select %p291, %s24, 1
      %s293 = smul.addr %s292, 220
      %s294 = smul.addr %s293, 4
      %s295 = scalar_lea.vmem %s0, %s294
      %p296 = pneg %p53
      %p297 = pneg %p50
      %p298 = pneg %p74
      %p299 = pneg %p71
      %p300 = pneg %p95
      %p301 = pneg %p92
      %p302 = pneg %p116
      %p303 = pneg %p113
      %p304 = pneg %p137
      %p305 = pneg %p134
      %p306 = pneg %p158
      %p307 = pneg %p155
      %p308 = pneg %p186
      %p309 = pneg %p183
      %p310 = scmp.lt.s32.totalorder %s24, 1
      %s311 = scalar_select %p310, %s24, 1
      %p312 = scmp.lt.s32.totalorder %s25, 7
      %s313 = scalar_select %p312, %s25, 7
      %s314 = smul.addr %s313, 16
      %s315 = smul.addr %s311, 128
      %s316 = sadd.s32 %s314, %s315
      %s317 = smul.addr %s316, 8
      %s318 = scalar_lea.vmem %s6, %s317
      %p319 = pneg %p214
      %p320 = pneg %p211
      %p321 = scmp.lt.s32.totalorder %s24, 1
      %s322 = scalar_select %p321, %s24, 1
      %p323 = scmp.lt.s32.totalorder %s25, 7
      %s324 = scalar_select %p323, %s25, 7
      %s325 = smul.addr %s322, 8
      %s326 = sadd.s32 %s324, %s325
      %s327 = scalar_lea.vmem %s7, %s326
      %p328 = pneg %p242
      %p329 = pneg %p239
      %p330 = scmp.lt.s32.totalorder %s24, 1
      %s331 = scalar_select %p330, %s24, 1
      %p332 = scmp.lt.s32.totalorder %s25, 7
      %s333 = scalar_select %p332, %s25, 7
      %s334 = smul.addr %s331, 8
      %s335 = sadd.s32 %s333, %s334
      %s336 = scalar_lea.vmem %s8, %s335
      %p337 = scmp.lt.s32.totalorder %s24, 1
      %s338 = scalar_select %p337, %s24, 1
      %s339 = smul.addr %s338, 220
      %s340 = smul.addr %s339, 4
      %s341 = scalar_lea.vmem %s0, %s340
      %p342 = scmp.lt.s32.totalorder %s24, 1
      %s343 = scalar_select %p342, %s24, 1
      %p344 = scmp.lt.s32.totalorder %s25, 7
      %s345 = scalar_select %p344, %s25, 7
      %s346 = smul.addr %s345, 16
      %s347 = smul.addr %s343, 128
      %s348 = sadd.s32 %s346, %s347
      %s349 = smul.addr %s348, 8
      %s350 = scalar_lea.vmem %s6, %s349
      %p351 = scmp.lt.s32.totalorder %s24, 1
      %s352 = scalar_select %p351, %s24, 1
      %p353 = scmp.lt.s32.totalorder %s25, 7
      %s354 = scalar_select %p353, %s25, 7
      %s355 = smul.addr %s352, 8
      %s356 = sadd.s32 %s354, %s355
      %s357 = scalar_lea.vmem %s7, %s356
      %p358 = scmp.lt.s32.totalorder %s24, 1
      %s359 = scalar_select %p358, %s24, 1
      %p360 = scmp.lt.s32.totalorder %s25, 7
      %s361 = scalar_select %p360, %s25, 7
      %s362 = smul.addr %s359, 8
      %s363 = sadd.s32 %s361, %s362
      %s364 = scalar_lea.vmem %s8, %s363
      %s366 = smul.u32 %s25, 22
      %s367 = smul.addr %s366, 4
      %s368 = scalar_lea.vmem %s341, %s367
      %v369 = vld [vmem:[%s368] sm:$0xf]
      %v370 = vld [vmem:[%s368 + $0x4] sm:$0xf]
      %v371 = vld [vmem:[%s368 + $0x8] sm:$0xf]
      %v372 = vld [vmem:[%s368 + $0xc] sm:$0xf]
      %v373 = vld [vmem:[%s368 + $0x10] sm:$0xf]
      %v374 = vld [vmem:[%s368 + $0x14] sm:$0xf]
      %v375 = vld [vmem:[%s368 + $0x18] sm:$0xf]
      %v376 = vld [vmem:[%s368 + $0x1c] sm:$0xf]
      %v377 = vld [vmem:[%s368 + $0x20] sm:$0xf]
      %v378 = vld [vmem:[%s368 + $0x24] sm:$0xf]
      %v379 = vld [vmem:[%s368 + $0x28] sm:$0xf]
      %v380 = vld [vmem:[%s368 + $0x2c] sm:$0xf]
      %v381 = vld [vmem:[%s368 + $0x30] sm:$0xf]
      %v382 = vld [vmem:[%s368 + $0x34] sm:$0xf]
      %v383 = vld [vmem:[%s368 + $0x38] sm:$0xf]
      %v384 = vld [vmem:[%s368 + $0x3c] sm:$0xf]
      %v385 = vld [vmem:[%s368 + $0x40] sm:$0xf]
      %v386 = vld [vmem:[%s368 + $0x44] sm:$0xf]
      %v387 = vld [vmem:[%s368 + $0x48] sm:$0xf]
      %v388 = vld [vmem:[%s368 + $0x4c] sm:$0xf]
      %v389 = vld [vmem:[%s368 + $0x50] sm:$0xf]
      %v390 = vunpack.c.l.bf16 %v369
      %v391 = vunpack.c.l.bf16 %v370
      %v392 = vunpack.c.l.bf16 %v371
      %v393 = vunpack.c.l.bf16 %v372
      %v394 = vunpack.c.l.bf16 %v373
      %v395 = vunpack.c.l.bf16 %v374
      %v396 = vunpack.c.l.bf16 %v375
      %v397 = vunpack.c.l.bf16 %v376
      %v398 = vunpack.c.l.bf16 %v377
      %v399 = vunpack.c.l.bf16 %v378
      %v400 = vunpack.c.l.bf16 %v379
      %v401 = vunpack.c.l.bf16 %v380
      %v402 = vunpack.c.l.bf16 %v381
      %v403 = vunpack.c.l.bf16 %v382
      %v404 = vunpack.c.l.bf16 %v383
      %v405 = vunpack.c.l.bf16 %v384
      %v406 = vunpack.c.l.bf16 %v385
      %v407 = vunpack.c.l.bf16 %v386
      %v408 = vunpack.c.l.bf16 %v387
      %v409 = vunpack.c.l.bf16 %v388
      %v410 = vunpack.c.l.bf16 %v389
      %v411 = vld [vmem:[%s2] sm:$0x1]
      %v413 = vlaneseq
      %v414 = vshrl.u32 %v413, 7
      %v415 = vsub.s32 0, %v414
      %v416 = vrot.slane %v411, %v415
      %v418 = vmul.f32 %v390, %v416
      %v419 = vmul.f32 %v391, %v416
      %v420 = vmul.f32 %v392, %v416
      %v421 = vmul.f32 %v393, %v416
      %v422 = vmul.f32 %v394, %v416
      %v423 = vmul.f32 %v395, %v416
      %v424 = vmul.f32 %v396, %v416
      %v425 = vmul.f32 %v397, %v416
      %v426 = vmul.f32 %v398, %v416
      %v427 = vmul.f32 %v399, %v416
      %v428 = vmul.f32 %v400, %v416
      %v429 = vmul.f32 %v401, %v416
      %v430 = vmul.f32 %v402, %v416
      %v431 = vmul.f32 %v403, %v416
      %v432 = vmul.f32 %v404, %v416
      %v433 = vmul.f32 %v405, %v416
      %v434 = vmul.f32 %v406, %v416
      %v435 = vmul.f32 %v407, %v416
      %v436 = vmul.f32 %v408, %v416
      %v437 = vmul.f32 %v409, %v416
      %v438 = vmul.f32 %v410, %v416
      %v439 = vld [vmem:[%s3] sm:$0x1]
      %v441 = vlaneseq
      %v442 = vshrl.u32 %v441, 7
      %v443 = vsub.s32 0, %v442
      %v444 = vrot.slane %v439, %v443
      %v446 = vadd.f32 %v418, %v444
      %v447 = vadd.f32 %v419, %v444
      %v448 = vadd.f32 %v420, %v444
      %v449 = vadd.f32 %v421, %v444
      %v450 = vadd.f32 %v422, %v444
      %v451 = vadd.f32 %v423, %v444
      %v452 = vadd.f32 %v424, %v444
      %v453 = vadd.f32 %v425, %v444
      %v454 = vadd.f32 %v426, %v444
      %v455 = vadd.f32 %v427, %v444
      %v456 = vadd.f32 %v428, %v444
      %v457 = vadd.f32 %v429, %v444
      %v458 = vadd.f32 %v430, %v444
      %v459 = vadd.f32 %v431, %v444
      %v460 = vadd.f32 %v432, %v444
      %v461 = vadd.f32 %v433, %v444
      %v462 = vadd.f32 %v434, %v444
      %v463 = vadd.f32 %v435, %v444
      %v464 = vadd.f32 %v436, %v444
      %v465 = vadd.f32 %v437, %v444
      %v466 = vadd.f32 %v438, %v444
      %v467 = vmax.f32 %v446, 0.0
      %v468 = vmax.f32 %v447, 0.0
      %v469 = vmax.f32 %v448, 0.0
      %v470 = vmax.f32 %v449, 0.0
      %v471 = vmax.f32 %v450, 0.0
      %v472 = vmax.f32 %v451, 0.0
      %v473 = vmax.f32 %v452, 0.0
      %v474 = vmax.f32 %v453, 0.0
      %v475 = vmax.f32 %v454, 0.0
      %v476 = vmax.f32 %v455, 0.0
      %v477 = vmax.f32 %v456, 0.0
      %v478 = vmax.f32 %v457, 0.0
      %v479 = vmax.f32 %v458, 0.0
      %v480 = vmax.f32 %v459, 0.0
      %v481 = vmax.f32 %v460, 0.0
      %v482 = vmax.f32 %v461, 0.0
      %v483 = vmax.f32 %v462, 0.0
      %v484 = vmax.f32 %v463, 0.0
      %v485 = vmax.f32 %v464, 0.0
      %v486 = vmax.f32 %v465, 0.0
      %v487 = vmax.f32 %v466, 0.0
      %s488 = smul.u32 %s25, 176
      %s489 = scalar_lea.vmem %s4, %s488
      %v490 = vld [vmem:[%s489] sm:$0xff]
      %v491 = vld [vmem:[%s489 + $0x8] sm:$0xff]
      %v492 = vld [vmem:[%s489 + $0x10] sm:$0xff]
      %v493 = vld [vmem:[%s489 + $0x18] sm:$0xff]
      %v494 = vld [vmem:[%s489 + $0x20] sm:$0xff]
      %v495 = vld [vmem:[%s489 + $0x28] sm:$0xff]
      %v496 = vld [vmem:[%s489 + $0x30] sm:$0xff]
      %v497 = vld [vmem:[%s489 + $0x38] sm:$0xff]
      %v498 = vld [vmem:[%s489 + $0x40] sm:$0xff]
      %v499 = vld [vmem:[%s489 + $0x48] sm:$0xff]
      %v500 = vld [vmem:[%s489 + $0x50] sm:$0xff]
      %v501 = vld [vmem:[%s489 + $0x58] sm:$0xff]
      %v502 = vld [vmem:[%s489 + $0x60] sm:$0xff]
      %v503 = vld [vmem:[%s489 + $0x68] sm:$0xff]
      %v504 = vld [vmem:[%s489 + $0x70] sm:$0xff]
      %v505 = vld [vmem:[%s489 + $0x78] sm:$0xff]
      %v506 = vld [vmem:[%s489 + $0x80] sm:$0xff]
      %v507 = vld [vmem:[%s489 + $0x88] sm:$0xff]
      %v508 = vld [vmem:[%s489 + $0x90] sm:$0xff]
      %v509 = vld [vmem:[%s489 + $0x98] sm:$0xff]
      %v510 = vld [vmem:[%s489 + $0xa0] sm:$0xff]
      %512 = vset.pattern.permute.xlu0 0
      %513 = vperm.xlu0 %512, %v490
      %v514 = vpop.permute.xlu0 %513
      %517 = vset.pattern.permute.xlu0 0
      %518 = vperm.xlu0 %517, %v491
      %v519 = vpop.permute.xlu0 %518
      %522 = vset.pattern.permute.xlu0 0
      %523 = vperm.xlu0 %522, %v492
      %v524 = vpop.permute.xlu0 %523
      %527 = vset.pattern.permute.xlu0 0
      %528 = vperm.xlu0 %527, %v493
      %v529 = vpop.permute.xlu0 %528
      %532 = vset.pattern.permute.xlu0 0
      %533 = vperm.xlu0 %532, %v494
      %v534 = vpop.permute.xlu0 %533
      %537 = vset.pattern.permute.xlu0 0
      %538 = vperm.xlu0 %537, %v495
      %v539 = vpop.permute.xlu0 %538
      %542 = vset.pattern.permute.xlu0 0
      %543 = vperm.xlu0 %542, %v496
      %v544 = vpop.permute.xlu0 %543
      %547 = vset.pattern.permute.xlu0 0
      %548 = vperm.xlu0 %547, %v497
      %v549 = vpop.permute.xlu0 %548
      %552 = vset.pattern.permute.xlu0 0
      %553 = vperm.xlu0 %552, %v498
      %v554 = vpop.permute.xlu0 %553
      %557 = vset.pattern.permute.xlu0 0
      %558 = vperm.xlu0 %557, %v499
      %v559 = vpop.permute.xlu0 %558
      %562 = vset.pattern.permute.xlu0 0
      %563 = vperm.xlu0 %562, %v500
      %v564 = vpop.permute.xlu0 %563
      %567 = vset.pattern.permute.xlu0 0
      %568 = vperm.xlu0 %567, %v501
      %v569 = vpop.permute.xlu0 %568
      %572 = vset.pattern.permute.xlu0 0
      %573 = vperm.xlu0 %572, %v502
      %v574 = vpop.permute.xlu0 %573
      %577 = vset.pattern.permute.xlu0 0
      %578 = vperm.xlu0 %577, %v503
      %v579 = vpop.permute.xlu0 %578
      %582 = vset.pattern.permute.xlu0 0
      %583 = vperm.xlu0 %582, %v504
      %v584 = vpop.permute.xlu0 %583
      %587 = vset.pattern.permute.xlu0 0
      %588 = vperm.xlu0 %587, %v505
      %v589 = vpop.permute.xlu0 %588
      %592 = vset.pattern.permute.xlu0 0
      %593 = vperm.xlu0 %592, %v506
      %v594 = vpop.permute.xlu0 %593
      %597 = vset.pattern.permute.xlu0 0
      %598 = vperm.xlu0 %597, %v507
      %v599 = vpop.permute.xlu0 %598
      %602 = vset.pattern.permute.xlu0 0
      %603 = vperm.xlu0 %602, %v508
      %v604 = vpop.permute.xlu0 %603
      %607 = vset.pattern.permute.xlu0 0
      %608 = vperm.xlu0 %607, %v509
      %v609 = vpop.permute.xlu0 %608
      %612 = vset.pattern.permute.xlu0 0
      %613 = vperm.xlu0 %612, %v510
      %v614 = vpop.permute.xlu0 %613
      %v616 = vmul.f32 %v467, %v514
      %v617 = vmul.f32 %v468, %v519
      %v618 = vmul.f32 %v469, %v524
      %v619 = vmul.f32 %v470, %v529
      %v620 = vmul.f32 %v471, %v534
      %v621 = vmul.f32 %v472, %v539
      %v622 = vmul.f32 %v473, %v544
      %v623 = vmul.f32 %v474, %v549
      %v624 = vmul.f32 %v475, %v554
      %v625 = vmul.f32 %v476, %v559
      %v626 = vmul.f32 %v477, %v564
      %v627 = vmul.f32 %v478, %v569
      %v628 = vmul.f32 %v479, %v574
      %v629 = vmul.f32 %v480, %v579
      %v630 = vmul.f32 %v481, %v584
      %v631 = vmul.f32 %v482, %v589
      %v632 = vmul.f32 %v483, %v594
      %v633 = vmul.f32 %v484, %v599
      %v634 = vmul.f32 %v485, %v604
      %v635 = vmul.f32 %v486, %v609
      %v636 = vmul.f32 %v487, %v614
      %v637 = vpack.c.bf16 %v617, %v616
      %v638 = vpack.c.bf16 %v619, %v618
      %v639 = vpack.c.bf16 %v621, %v620
      %v640 = vpack.c.bf16 %v623, %v622
      %v641 = vpack.c.bf16 %v625, %v624
      %v642 = vpack.c.bf16 %v627, %v626
      %v643 = vpack.c.bf16 %v629, %v628
      %v644 = vpack.c.bf16 %v631, %v630
      %vm645 = vcmask 64512
      %646 = vst.msk [vmem:[#allocation2] sm:$0xff] %vm645, %v637
      %647 = vst.msk [vmem:[#allocation2 + $0x10] sm:$0xff] %vm645, %v638
      %648 = vst.msk [vmem:[#allocation2 + $0x20] sm:$0xff] %vm645, %v639
      %649 = vst.msk [vmem:[#allocation2 + $0x30] sm:$0xff] %vm645, %v640
      %650 = vst.msk [vmem:[#allocation2 + $0x40] sm:$0xff] %vm645, %v641
      %651 = vst.msk [vmem:[#allocation2 + $0x50] sm:$0xff] %vm645, %v642
      %652 = vst.msk [vmem:[#allocation2 + $0x60] sm:$0xff] %vm645, %v643
      %653 = vst.msk [vmem:[#allocation2 + $0x70] sm:$0xff] %vm645, %v644
      %v654 = vpack.c.bf16 %v632, %v632
      %vm655 = vsmask.f32 7424
      %v657 = vshrl.u32 %v637, 16
      %v659 = vshll.u32 %v637, 16
      %v661 = vrot.slane %v659, 1
      %v662 = vor.u32 %v657, %v661
      %v664 = vshll.u32 %v638, 16
      %v666 = vrot.slane %v664, 1
      %v667 = vsel %vm655, %v662, %v666
      %v668 = vshrl.u32 %v638, 16
      %v670 = vor.u32 %v668, %v666
      %v672 = vshll.u32 %v639, 16
      %v674 = vrot.slane %v672, 1
      %v675 = vsel %vm655, %v670, %v674
      %v676 = vshrl.u32 %v639, 16
      %v678 = vor.u32 %v676, %v674
      %v680 = vshll.u32 %v640, 16
      %v682 = vrot.slane %v680, 1
      %v683 = vsel %vm655, %v678, %v682
      %v684 = vshrl.u32 %v640, 16
      %v686 = vor.u32 %v684, %v682
      %v688 = vshll.u32 %v641, 16
      %v690 = vrot.slane %v688, 1
      %v691 = vsel %vm655, %v686, %v690
      %v692 = vshrl.u32 %v641, 16
      %v694 = vor.u32 %v692, %v690
      %v696 = vshll.u32 %v642, 16
      %v698 = vrot.slane %v696, 1
      %v699 = vsel %vm655, %v694, %v698
      %v700 = vshrl.u32 %v642, 16
      %v702 = vor.u32 %v700, %v698
      %v704 = vshll.u32 %v643, 16
      %v706 = vrot.slane %v704, 1
      %v707 = vsel %vm655, %v702, %v706
      %v708 = vshrl.u32 %v643, 16
      %v710 = vor.u32 %v708, %v706
      %v712 = vshll.u32 %v644, 16
      %v714 = vrot.slane %v712, 1
      %v715 = vsel %vm655, %v710, %v714
      %v716 = vshrl.u32 %v644, 16
      %v718 = vor.u32 %v716, %v714
      %v720 = vshll.u32 %v654, 16
      %v722 = vrot.slane %v720, 1
      %v723 = vsel %vm655, %v718, %v722
      %724 = vrot.lane.b32.xlu0 %v667, 8
      %v725 = vpop.permute.xlu0 %724
      %726 = vrot.lane.b32.xlu0 %v675, 8
      %v727 = vpop.permute.xlu0 %726
      %728 = vrot.lane.b32.xlu0 %v683, 8
      %v729 = vpop.permute.xlu0 %728
      %730 = vrot.lane.b32.xlu0 %v691, 8
      %v731 = vpop.permute.xlu0 %730
      %732 = vrot.lane.b32.xlu0 %v699, 8
      %v733 = vpop.permute.xlu0 %732
      %734 = vrot.lane.b32.xlu0 %v707, 8
      %v735 = vpop.permute.xlu0 %734
      %736 = vrot.lane.b32.xlu0 %v715, 8
      %v737 = vpop.permute.xlu0 %736
      %738 = vrot.lane.b32.xlu0 %v723, 8
      %v739 = vpop.permute.xlu0 %738
      %vm748 = vcmask 130112
      %749 = vst.msk [vmem:[#allocation2] sm:$0xff] %vm748, %v725
      %750 = vst.msk [vmem:[#allocation2 + $0x10] sm:$0xff] %vm748, %v727
      %751 = vst.msk [vmem:[#allocation2 + $0x20] sm:$0xff] %vm748, %v729
      %752 = vst.msk [vmem:[#allocation2 + $0x30] sm:$0xff] %vm748, %v731
      %753 = vst.msk [vmem:[#allocation2 + $0x40] sm:$0xff] %vm748, %v733
      %754 = vst.msk [vmem:[#allocation2 + $0x50] sm:$0xff] %vm748, %v735
      %755 = vst.msk [vmem:[#allocation2 + $0x60] sm:$0xff] %vm748, %v737
      %756 = vst.msk [vmem:[#allocation2 + $0x70] sm:$0xff] %vm748, %v739
      %vm766 = vcmask 1046528
      %v767 = vrot.slane %v637, 1
      %v768 = vrot.slane %v638, 1
      %v769 = vsel %vm766, %v767, %v768
      %v770 = vrot.slane %v639, 1
      %v771 = vsel %vm766, %v768, %v770
      %v772 = vrot.slane %v640, 1
      %v773 = vsel %vm766, %v770, %v772
      %v774 = vrot.slane %v641, 1
      %v775 = vsel %vm766, %v772, %v774
      %v776 = vrot.slane %v642, 1
      %v777 = vsel %vm766, %v774, %v776
      %v778 = vrot.slane %v643, 1
      %v779 = vsel %vm766, %v776, %v778
      %v780 = vrot.slane %v644, 1
      %v781 = vsel %vm766, %v778, %v780
      %v782 = vrot.slane %v654, 1
      %v783 = vsel %vm766, %v780, %v782
      %784 = vrot.lane.b32.xlu0 %v769, 16
      %v785 = vpop.permute.xlu0 %784
      %786 = vrot.lane.b32.xlu0 %v771, 16
      %v787 = vpop.permute.xlu0 %786
      %788 = vrot.lane.b32.xlu0 %v773, 16
      %v789 = vpop.permute.xlu0 %788
      %790 = vrot.lane.b32.xlu0 %v775, 16
      %v791 = vpop.permute.xlu0 %790
      %792 = vrot.lane.b32.xlu0 %v777, 16
      %v793 = vpop.permute.xlu0 %792
      %794 = vrot.lane.b32.xlu0 %v779, 16
      %v795 = vpop.permute.xlu0 %794
      %796 = vrot.lane.b32.xlu0 %v781, 16
      %v797 = vpop.permute.xlu0 %796
      %798 = vrot.lane.b32.xlu0 %v783, 16
      %v799 = vpop.permute.xlu0 %798
      %vm808 = vcmask 195712
      %809 = vst.msk [vmem:[#allocation2] sm:$0xff] %vm808, %v785
      %810 = vst.msk [vmem:[#allocation2 + $0x10] sm:$0xff] %vm808, %v787
      %811 = vst.msk [vmem:[#allocation2 + $0x20] sm:$0xff] %vm808, %v789
      %812 = vst.msk [vmem:[#allocation2 + $0x30] sm:$0xff] %vm808, %v791
      %813 = vst.msk [vmem:[#allocation2 + $0x40] sm:$0xff] %vm808, %v793
      %814 = vst.msk [vmem:[#allocation2 + $0x50] sm:$0xff] %vm808, %v795
      %815 = vst.msk [vmem:[#allocation2 + $0x60] sm:$0xff] %vm808, %v797
      %816 = vst.msk [vmem:[#allocation2 + $0x70] sm:$0xff] %vm808, %v799
      %v817 = vpack.c.bf16 %v633, %v632
      %819 = vrot.lane.b32.xlu0 %v638, 24
      %v820 = vpop.permute.xlu0 %819
      %821 = vrot.lane.b32.xlu0 %v639, 24
      %v822 = vpop.permute.xlu0 %821
      %823 = vrot.lane.b32.xlu0 %v640, 24
      %v824 = vpop.permute.xlu0 %823
      %825 = vrot.lane.b32.xlu0 %v641, 24
      %v826 = vpop.permute.xlu0 %825
      %827 = vrot.lane.b32.xlu0 %v642, 24
      %v828 = vpop.permute.xlu0 %827
      %829 = vrot.lane.b32.xlu0 %v643, 24
      %v830 = vpop.permute.xlu0 %829
      %831 = vrot.lane.b32.xlu0 %v644, 24
      %v832 = vpop.permute.xlu0 %831
      %833 = vrot.lane.b32.xlu0 %v817, 24
      %v834 = vpop.permute.xlu0 %833
      %vm843 = vcmask 261312
      %844 = vst.msk [vmem:[#allocation2] sm:$0xff] %vm843, %v820
      %845 = vst.msk [vmem:[#allocation2 + $0x10] sm:$0xff] %vm843, %v822
      %846 = vst.msk [vmem:[#allocation2 + $0x20] sm:$0xff] %vm843, %v824
      %847 = vst.msk [vmem:[#allocation2 + $0x30] sm:$0xff] %vm843, %v826
      %848 = vst.msk [vmem:[#allocation2 + $0x40] sm:$0xff] %vm843, %v828
      %849 = vst.msk [vmem:[#allocation2 + $0x50] sm:$0xff] %vm843, %v830
      %850 = vst.msk [vmem:[#allocation2 + $0x60] sm:$0xff] %vm843, %v832
      %851 = vst.msk [vmem:[#allocation2 + $0x70] sm:$0xff] %vm843, %v834
      %v852 = vpack.c.bf16 %v634, %v634
      %v854 = vshll.u32 %v817, 16
      %v856 = vrot.slane %v854, 1
      %v857 = vsel %vm655, %v718, %v856
      %v858 = vshrl.u32 %v817, 16
      %v860 = vor.u32 %v858, %v856
      %v862 = vshll.u32 %v852, 16
      %v864 = vrot.slane %v862, 1
      %v865 = vsel %vm655, %v860, %v864
      %866 = vrot.lane.b32.xlu0 %v675, 32
      %v867 = vpop.permute.xlu0 %866
      %868 = vrot.lane.b32.xlu0 %v683, 32
      %v869 = vpop.permute.xlu0 %868
      %870 = vrot.lane.b32.xlu0 %v691, 32
      %v871 = vpop.permute.xlu0 %870
      %872 = vrot.lane.b32.xlu0 %v699, 32
      %v873 = vpop.permute.xlu0 %872
      %874 = vrot.lane.b32.xlu0 %v707, 32
      %v875 = vpop.permute.xlu0 %874
      %876 = vrot.lane.b32.xlu0 %v715, 32
      %v877 = vpop.permute.xlu0 %876
      %878 = vrot.lane.b32.xlu0 %v857, 32
      %v879 = vpop.permute.xlu0 %878
      %880 = vrot.lane.b32.xlu0 %v865, 32
      %v881 = vpop.permute.xlu0 %880
      %vm890 = vcmask 326912
      %891 = vst.msk [vmem:[#allocation2] sm:$0xff] %vm890, %v867
      %892 = vst.msk [vmem:[#allocation2 + $0x10] sm:$0xff] %vm890, %v869
      %893 = vst.msk [vmem:[#allocation2 + $0x20] sm:$0xff] %vm890, %v871
      %894 = vst.msk [vmem:[#allocation2 + $0x30] sm:$0xff] %vm890, %v873
      %895 = vst.msk [vmem:[#allocation2 + $0x40] sm:$0xff] %vm890, %v875
      %896 = vst.msk [vmem:[#allocation2 + $0x50] sm:$0xff] %vm890, %v877
      %897 = vst.msk [vmem:[#allocation2 + $0x60] sm:$0xff] %vm890, %v879
      %898 = vst.msk [vmem:[#allocation2 + $0x70] sm:$0xff] %vm890, %v881
      %v900 = vrot.slane %v817, 1
      %v901 = vsel %vm766, %v780, %v900
      %v902 = vrot.slane %v852, 1
      %v903 = vsel %vm766, %v900, %v902
      %904 = vrot.lane.b32.xlu0 %v771, 40
      %v905 = vpop.permute.xlu0 %904
      %906 = vrot.lane.b32.xlu0 %v773, 40
      %v907 = vpop.permute.xlu0 %906
      %908 = vrot.lane.b32.xlu0 %v775, 40
      %v909 = vpop.permute.xlu0 %908
      %910 = vrot.lane.b32.xlu0 %v777, 40
      %v911 = vpop.permute.xlu0 %910
      %912 = vrot.lane.b32.xlu0 %v779, 40
      %v913 = vpop.permute.xlu0 %912
      %914 = vrot.lane.b32.xlu0 %v781, 40
      %v915 = vpop.permute.xlu0 %914
      %916 = vrot.lane.b32.xlu0 %v901, 40
      %v917 = vpop.permute.xlu0 %916
      %918 = vrot.lane.b32.xlu0 %v903, 40
      %v919 = vpop.permute.xlu0 %918
      %vm928 = vcmask 392512
      %929 = vst.msk [vmem:[#allocation2] sm:$0xff] %vm928, %v905
      %930 = vst.msk [vmem:[#allocation2 + $0x10] sm:$0xff] %vm928, %v907
      %931 = vst.msk [vmem:[#allocation2 + $0x20] sm:$0xff] %vm928, %v909
      %932 = vst.msk [vmem:[#allocation2 + $0x30] sm:$0xff] %vm928, %v911
      %933 = vst.msk [vmem:[#allocation2 + $0x40] sm:$0xff] %vm928, %v913
      %934 = vst.msk [vmem:[#allocation2 + $0x50] sm:$0xff] %vm928, %v915
      %935 = vst.msk [vmem:[#allocation2 + $0x60] sm:$0xff] %vm928, %v917
      %936 = vst.msk [vmem:[#allocation2 + $0x70] sm:$0xff] %vm928, %v919
      %v937 = vpack.c.bf16 %v635, %v634
      %939 = vrot.lane.b32.xlu0 %v639, 48
      %v940 = vpop.permute.xlu0 %939
      %941 = vrot.lane.b32.xlu0 %v640, 48
      %v942 = vpop.permute.xlu0 %941
      %943 = vrot.lane.b32.xlu0 %v641, 48
      %v944 = vpop.permute.xlu0 %943
      %945 = vrot.lane.b32.xlu0 %v642, 48
      %v946 = vpop.permute.xlu0 %945
      %947 = vrot.lane.b32.xlu0 %v643, 48
      %v948 = vpop.permute.xlu0 %947
      %949 = vrot.lane.b32.xlu0 %v644, 48
      %v950 = vpop.permute.xlu0 %949
      %951 = vrot.lane.b32.xlu0 %v817, 48
      %v952 = vpop.permute.xlu0 %951
      %953 = vrot.lane.b32.xlu0 %v937, 48
      %v954 = vpop.permute.xlu0 %953
      %vm963 = vcmask 458112
      %964 = vst.msk [vmem:[#allocation2] sm:$0xff] %vm963, %v940
      %965 = vst.msk [vmem:[#allocation2 + $0x10] sm:$0xff] %vm963, %v942
      %966 = vst.msk [vmem:[#allocation2 + $0x20] sm:$0xff] %vm963, %v944
      %967 = vst.msk [vmem:[#allocation2 + $0x30] sm:$0xff] %vm963, %v946
      %968 = vst.msk [vmem:[#allocation2 + $0x40] sm:$0xff] %vm963, %v948
      %969 = vst.msk [vmem:[#allocation2 + $0x50] sm:$0xff] %vm963, %v950
      %970 = vst.msk [vmem:[#allocation2 + $0x60] sm:$0xff] %vm963, %v952
      %971 = vst.msk [vmem:[#allocation2 + $0x70] sm:$0xff] %vm963, %v954
      %v972 = vpack.c.bf16 %v636, %v636
      %v974 = vshll.u32 %v937, 16
      %v976 = vrot.slane %v974, 1
      %v977 = vsel %vm655, %v860, %v976
      %v978 = vshrl.u32 %v937, 16
      %v980 = vor.u32 %v978, %v976
      %v982 = vshll.u32 %v972, 16
      %v984 = vrot.slane %v982, 1
      %v985 = vsel %vm655, %v980, %v984
      %986 = vrot.lane.b32.xlu0 %v683, 56
      %v987 = vpop.permute.xlu0 %986
      %988 = vrot.lane.b32.xlu0 %v691, 56
      %v989 = vpop.permute.xlu0 %988
      %990 = vrot.lane.b32.xlu0 %v699, 56
      %v991 = vpop.permute.xlu0 %990
      %992 = vrot.lane.b32.xlu0 %v707, 56
      %v993 = vpop.permute.xlu0 %992
      %994 = vrot.lane.b32.xlu0 %v715, 56
      %v995 = vpop.permute.xlu0 %994
      %996 = vrot.lane.b32.xlu0 %v857, 56
      %v997 = vpop.permute.xlu0 %996
      %998 = vrot.lane.b32.xlu0 %v977, 56
      %v999 = vpop.permute.xlu0 %998
      %1000 = vrot.lane.b32.xlu0 %v985, 56
      %v1001 = vpop.permute.xlu0 %1000
      %vm1010 = vcmask 523712
      %1011 = vst.msk [vmem:[#allocation2] sm:$0xff] %vm1010, %v987
      %1012 = vst.msk [vmem:[#allocation2 + $0x10] sm:$0xff] %vm1010, %v989
      %1013 = vst.msk [vmem:[#allocation2 + $0x20] sm:$0xff] %vm1010, %v991
      %1014 = vst.msk [vmem:[#allocation2 + $0x30] sm:$0xff] %vm1010, %v993
      %1015 = vst.msk [vmem:[#allocation2 + $0x40] sm:$0xff] %vm1010, %v995
      %1016 = vst.msk [vmem:[#allocation2 + $0x50] sm:$0xff] %vm1010, %v997
      %1017 = vst.msk [vmem:[#allocation2 + $0x60] sm:$0xff] %vm1010, %v999
      %1018 = vst.msk [vmem:[#allocation2 + $0x70] sm:$0xff] %vm1010, %v1001
      %v1020 = vrot.slane %v937, 1
      %v1021 = vsel %vm766, %v900, %v1020
      %v1022 = vrot.slane %v972, 1
      %v1023 = vsel %vm766, %v1020, %v1022
      %1024 = vrot.lane.b32.xlu0 %v773, 64
      %v1025 = vpop.permute.xlu0 %1024
      %1026 = vrot.lane.b32.xlu0 %v775, 64
      %v1027 = vpop.permute.xlu0 %1026
      %1028 = vrot.lane.b32.xlu0 %v777, 64
      %v1029 = vpop.permute.xlu0 %1028
      %1030 = vrot.lane.b32.xlu0 %v779, 64
      %v1031 = vpop.permute.xlu0 %1030
      %1032 = vrot.lane.b32.xlu0 %v781, 64
      %v1033 = vpop.permute.xlu0 %1032
      %1034 = vrot.lane.b32.xlu0 %v901, 64
      %v1035 = vpop.permute.xlu0 %1034
      %1036 = vrot.lane.b32.xlu0 %v1021, 64
      %v1037 = vpop.permute.xlu0 %1036
      %1038 = vrot.lane.b32.xlu0 %v1023, 64
      %v1039 = vpop.permute.xlu0 %1038
      %vm1048 = vcmask 589312
      %1049 = vst.msk [vmem:[#allocation2] sm:$0xff] %vm1048, %v1025
      %1050 = vst.msk [vmem:[#allocation2 + $0x10] sm:$0xff] %vm1048, %v1027
      %1051 = vst.msk [vmem:[#allocation2 + $0x20] sm:$0xff] %vm1048, %v1029
      %1052 = vst.msk [vmem:[#allocation2 + $0x30] sm:$0xff] %vm1048, %v1031
      %1053 = vst.msk [vmem:[#allocation2 + $0x40] sm:$0xff] %vm1048, %v1033
      %1054 = vst.msk [vmem:[#allocation2 + $0x50] sm:$0xff] %vm1048, %v1035
      %1055 = vst.msk [vmem:[#allocation2 + $0x60] sm:$0xff] %vm1048, %v1037
      %1056 = vst.msk [vmem:[#allocation2 + $0x70] sm:$0xff] %vm1048, %v1039
      %s1057 = sadd.s32 %s25, 1
      %s1058 = smul.u32 %s1057, 22
      %s1059 = smul.addr %s1058, 4
      %s1060 = scalar_lea.vmem %s341, %s1059
      %v1061 = vld [vmem:[%s1060] sm:$0xf]
      %v1062 = vld [vmem:[%s1060 + $0x4] sm:$0xf]
      %v1063 = vld [vmem:[%s1060 + $0x8] sm:$0xf]
      %v1064 = vld [vmem:[%s1060 + $0xc] sm:$0xf]
      %v1065 = vld [vmem:[%s1060 + $0x10] sm:$0xf]
      %v1066 = vld [vmem:[%s1060 + $0x14] sm:$0xf]
      %v1067 = vld [vmem:[%s1060 + $0x18] sm:$0xf]
      %v1068 = vld [vmem:[%s1060 + $0x1c] sm:$0xf]
      %v1069 = vld [vmem:[%s1060 + $0x20] sm:$0xf]
      %v1070 = vld [vmem:[%s1060 + $0x24] sm:$0xf]
      %v1071 = vld [vmem:[%s1060 + $0x28] sm:$0xf]
      %v1072 = vld [vmem:[%s1060 + $0x2c] sm:$0xf]
      %v1073 = vld [vmem:[%s1060 + $0x30] sm:$0xf]
      %v1074 = vld [vmem:[%s1060 + $0x34] sm:$0xf]
      %v1075 = vld [vmem:[%s1060 + $0x38] sm:$0xf]
      %v1076 = vld [vmem:[%s1060 + $0x3c] sm:$0xf]
      %v1077 = vld [vmem:[%s1060 + $0x40] sm:$0xf]
      %v1078 = vld [vmem:[%s1060 + $0x44] sm:$0xf]
      %v1079 = vld [vmem:[%s1060 + $0x48] sm:$0xf]
      %v1080 = vld [vmem:[%s1060 + $0x4c] sm:$0xf]
      %v1081 = vld [vmem:[%s1060 + $0x50] sm:$0xf]
      %v1082 = vunpack.c.l.bf16 %v1061
      %v1083 = vunpack.c.l.bf16 %v1062
      %v1084 = vunpack.c.l.bf16 %v1063
      %v1085 = vunpack.c.l.bf16 %v1064
      %v1086 = vunpack.c.l.bf16 %v1065
      %v1087 = vunpack.c.l.bf16 %v1066
      %v1088 = vunpack.c.l.bf16 %v1067
      %v1089 = vunpack.c.l.bf16 %v1068
      %v1090 = vunpack.c.l.bf16 %v1069
      %v1091 = vunpack.c.l.bf16 %v1070
      %v1092 = vunpack.c.l.bf16 %v1071
      %v1093 = vunpack.c.l.bf16 %v1072
      %v1094 = vunpack.c.l.bf16 %v1073
      %v1095 = vunpack.c.l.bf16 %v1074
      %v1096 = vunpack.c.l.bf16 %v1075
      %v1097 = vunpack.c.l.bf16 %v1076
      %v1098 = vunpack.c.l.bf16 %v1077
      %v1099 = vunpack.c.l.bf16 %v1078
      %v1100 = vunpack.c.l.bf16 %v1079
      %v1101 = vunpack.c.l.bf16 %v1080
      %v1102 = vunpack.c.l.bf16 %v1081
      %v1103 = vld [vmem:[%s2] sm:$0x1]
      %v1105 = vlaneseq
      %v1106 = vshrl.u32 %v1105, 7
      %v1107 = vsub.s32 0, %v1106
      %v1108 = vrot.slane %v1103, %v1107
      %v1110 = vmul.f32 %v1082, %v1108
      %v1111 = vmul.f32 %v1083, %v1108
      %v1112 = vmul.f32 %v1084, %v1108
      %v1113 = vmul.f32 %v1085, %v1108
      %v1114 = vmul.f32 %v1086, %v1108
      %v1115 = vmul.f32 %v1087, %v1108
      %v1116 = vmul.f32 %v1088, %v1108
      %v1117 = vmul.f32 %v1089, %v1108
      %v1118 = vmul.f32 %v1090, %v1108
      %v1119 = vmul.f32 %v1091, %v1108
      %v1120 = vmul.f32 %v1092, %v1108
      %v1121 = vmul.f32 %v1093, %v1108
      %v1122 = vmul.f32 %v1094, %v1108
      %v1123 = vmul.f32 %v1095, %v1108
      %v1124 = vmul.f32 %v1096, %v1108
      %v1125 = vmul.f32 %v1097, %v1108
      %v1126 = vmul.f32 %v1098, %v1108
      %v1127 = vmul.f32 %v1099, %v1108
      %v1128 = vmul.f32 %v1100, %v1108
      %v1129 = vmul.f32 %v1101, %v1108
      %v1130 = vmul.f32 %v1102, %v1108
      %v1131 = vld [vmem:[%s3] sm:$0x1]
      %v1133 = vlaneseq
      %v1134 = vshrl.u32 %v1133, 7
      %v1135 = vsub.s32 0, %v1134
      %v1136 = vrot.slane %v1131, %v1135
      %v1138 = vadd.f32 %v1110, %v1136
      %v1139 = vadd.f32 %v1111, %v1136
      %v1140 = vadd.f32 %v1112, %v1136
      %v1141 = vadd.f32 %v1113, %v1136
      %v1142 = vadd.f32 %v1114, %v1136
      %v1143 = vadd.f32 %v1115, %v1136
      %v1144 = vadd.f32 %v1116, %v1136
      %v1145 = vadd.f32 %v1117, %v1136
      %v1146 = vadd.f32 %v1118, %v1136
      %v1147 = vadd.f32 %v1119, %v1136
      %v1148 = vadd.f32 %v1120, %v1136
      %v1149 = vadd.f32 %v1121, %v1136
      %v1150 = vadd.f32 %v1122, %v1136
      %v1151 = vadd.f32 %v1123, %v1136
      %v1152 = vadd.f32 %v1124, %v1136
      %v1153 = vadd.f32 %v1125, %v1136
      %v1154 = vadd.f32 %v1126, %v1136
      %v1155 = vadd.f32 %v1127, %v1136
      %v1156 = vadd.f32 %v1128, %v1136
      %v1157 = vadd.f32 %v1129, %v1136
      %v1158 = vadd.f32 %v1130, %v1136
      %v1159 = vmax.f32 %v1138, 0.0
      %v1160 = vmax.f32 %v1139, 0.0
      %v1161 = vmax.f32 %v1140, 0.0
      %v1162 = vmax.f32 %v1141, 0.0
      %v1163 = vmax.f32 %v1142, 0.0
      %v1164 = vmax.f32 %v1143, 0.0
      %v1165 = vmax.f32 %v1144, 0.0
      %v1166 = vmax.f32 %v1145, 0.0
      %v1167 = vmax.f32 %v1146, 0.0
      %v1168 = vmax.f32 %v1147, 0.0
      %v1169 = vmax.f32 %v1148, 0.0
      %v1170 = vmax.f32 %v1149, 0.0
      %v1171 = vmax.f32 %v1150, 0.0
      %v1172 = vmax.f32 %v1151, 0.0
      %v1173 = vmax.f32 %v1152, 0.0
      %v1174 = vmax.f32 %v1153, 0.0
      %v1175 = vmax.f32 %v1154, 0.0
      %v1176 = vmax.f32 %v1155, 0.0
      %v1177 = vmax.f32 %v1156, 0.0
      %v1178 = vmax.f32 %v1157, 0.0
      %v1179 = vmax.f32 %v1158, 0.0
      %s1180 = smul.u32 %s1057, 176
      %s1181 = scalar_lea.vmem %s4, %s1180
      %v1182 = vld [vmem:[%s1181] sm:$0xff]
      %v1183 = vld [vmem:[%s1181 + $0x8] sm:$0xff]
      %v1184 = vld [vmem:[%s1181 + $0x10] sm:$0xff]
      %v1185 = vld [vmem:[%s1181 + $0x18] sm:$0xff]
      %v1186 = vld [vmem:[%s1181 + $0x20] sm:$0xff]
      %v1187 = vld [vmem:[%s1181 + $0x28] sm:$0xff]
      %v1188 = vld [vmem:[%s1181 + $0x30] sm:$0xff]
      %v1189 = vld [vmem:[%s1181 + $0x38] sm:$0xff]
      %v1190 = vld [vmem:[%s1181 + $0x40] sm:$0xff]
      %v1191 = vld [vmem:[%s1181 + $0x48] sm:$0xff]
      %v1192 = vld [vmem:[%s1181 + $0x50] sm:$0xff]
      %v1193 = vld [vmem:[%s1181 + $0x58] sm:$0xff]
      %v1194 = vld [vmem:[%s1181 + $0x60] sm:$0xff]
      %v1195 = vld [vmem:[%s1181 + $0x68] sm:$0xff]
      %v1196 = vld [vmem:[%s1181 + $0x70] sm:$0xff]
      %v1197 = vld [vmem:[%s1181 + $0x78] sm:$0xff]
      %v1198 = vld [vmem:[%s1181 + $0x80] sm:$0xff]
      %v1199 = vld [vmem:[%s1181 + $0x88] sm:$0xff]
      %v1200 = vld [vmem:[%s1181 + $0x90] sm:$0xff]
      %v1201 = vld [vmem:[%s1181 + $0x98] sm:$0xff]
      %v1202 = vld [vmem:[%s1181 + $0xa0] sm:$0xff]
      %1204 = vset.pattern.permute.xlu0 0
      %1205 = vperm.xlu0 %1204, %v1182
      %v1206 = vpop.permute.xlu0 %1205
      %1209 = vset.pattern.permute.xlu0 0
      %1210 = vperm.xlu0 %1209, %v1183
      %v1211 = vpop.permute.xlu0 %1210
      %1214 = vset.pattern.permute.xlu0 0
      %1215 = vperm.xlu0 %1214, %v1184
      %v1216 = vpop.permute.xlu0 %1215
      %1219 = vset.pattern.permute.xlu0 0
      %1220 = vperm.xlu0 %1219, %v1185
      %v1221 = vpop.permute.xlu0 %1220
      %1224 = vset.pattern.permute.xlu0 0
      %1225 = vperm.xlu0 %1224, %v1186
      %v1226 = vpop.permute.xlu0 %1225
      %1229 = vset.pattern.permute.xlu0 0
      %1230 = vperm.xlu0 %1229, %v1187
      %v1231 = vpop.permute.xlu0 %1230
      %1234 = vset.pattern.permute.xlu0 0
      %1235 = vperm.xlu0 %1234, %v1188
      %v1236 = vpop.permute.xlu0 %1235
      %1239 = vset.pattern.permute.xlu0 0
      %1240 = vperm.xlu0 %1239, %v1189
      %v1241 = vpop.permute.xlu0 %1240
      %1244 = vset.pattern.permute.xlu0 0
      %1245 = vperm.xlu0 %1244, %v1190
      %v1246 = vpop.permute.xlu0 %1245
      %1249 = vset.pattern.permute.xlu0 0
      %1250 = vperm.xlu0 %1249, %v1191
      %v1251 = vpop.permute.xlu0 %1250
      %1254 = vset.pattern.permute.xlu0 0
      %1255 = vperm.xlu0 %1254, %v1192
      %v1256 = vpop.permute.xlu0 %1255
      %1259 = vset.pattern.permute.xlu0 0
      %1260 = vperm.xlu0 %1259, %v1193
      %v1261 = vpop.permute.xlu0 %1260
      %1264 = vset.pattern.permute.xlu0 0
      %1265 = vperm.xlu0 %1264, %v1194
      %v1266 = vpop.permute.xlu0 %1265
      %1269 = vset.pattern.permute.xlu0 0
      %1270 = vperm.xlu0 %1269, %v1195
      %v1271 = vpop.permute.xlu0 %1270
      %1274 = vset.pattern.permute.xlu0 0
      %1275 = vperm.xlu0 %1274, %v1196
      %v1276 = vpop.permute.xlu0 %1275
      %1279 = vset.pattern.permute.xlu0 0
      %1280 = vperm.xlu0 %1279, %v1197
      %v1281 = vpop.permute.xlu0 %1280
      %1284 = vset.pattern.permute.xlu0 0
      %1285 = vperm.xlu0 %1284, %v1198
      %v1286 = vpop.permute.xlu0 %1285
      %1289 = vset.pattern.permute.xlu0 0
      %1290 = vperm.xlu0 %1289, %v1199
      %v1291 = vpop.permute.xlu0 %1290
      %1294 = vset.pattern.permute.xlu0 0
      %1295 = vperm.xlu0 %1294, %v1200
      %v1296 = vpop.permute.xlu0 %1295
      %1299 = vset.pattern.permute.xlu0 0
      %1300 = vperm.xlu0 %1299, %v1201
      %v1301 = vpop.permute.xlu0 %1300
      %1304 = vset.pattern.permute.xlu0 0
      %1305 = vperm.xlu0 %1304, %v1202
      %v1306 = vpop.permute.xlu0 %1305
      %v1308 = vmul.f32 %v1159, %v1206
      %v1309 = vmul.f32 %v1160, %v1211
      %v1310 = vmul.f32 %v1161, %v1216
      %v1311 = vmul.f32 %v1162, %v1221
      %v1312 = vmul.f32 %v1163, %v1226
      %v1313 = vmul.f32 %v1164, %v1231
      %v1314 = vmul.f32 %v1165, %v1236
      %v1315 = vmul.f32 %v1166, %v1241
      %v1316 = vmul.f32 %v1167, %v1246
      %v1317 = vmul.f32 %v1168, %v1251
      %v1318 = vmul.f32 %v1169, %v1256
      %v1319 = vmul.f32 %v1170, %v1261
      %v1320 = vmul.f32 %v1171, %v1266
      %v1321 = vmul.f32 %v1172, %v1271
      %v1322 = vmul.f32 %v1173, %v1276
      %v1323 = vmul.f32 %v1174, %v1281
      %v1324 = vmul.f32 %v1175, %v1286
      %v1325 = vmul.f32 %v1176, %v1291
      %v1326 = vmul.f32 %v1177, %v1296
      %v1327 = vmul.f32 %v1178, %v1301
      %v1328 = vmul.f32 %v1179, %v1306
      %v1329 = vpack.c.bf16 %v1309, %v1308
      %v1330 = vpack.c.bf16 %v1311, %v1310
      %v1331 = vpack.c.bf16 %v1313, %v1312
      %v1332 = vpack.c.bf16 %v1315, %v1314
      %v1333 = vpack.c.bf16 %v1317, %v1316
      %v1334 = vpack.c.bf16 %v1319, %v1318
      %v1335 = vpack.c.bf16 %v1321, %v1320
      %v1336 = vpack.c.bf16 %v1323, %v1322
      %1345 = vrot.lane.b32.xlu0 %v1329, 72
      %v1346 = vpop.permute.xlu0 %1345
      %1347 = vrot.lane.b32.xlu0 %v1330, 72
      %v1348 = vpop.permute.xlu0 %1347
      %1349 = vrot.lane.b32.xlu0 %v1331, 72
      %v1350 = vpop.permute.xlu0 %1349
      %1351 = vrot.lane.b32.xlu0 %v1332, 72
      %v1352 = vpop.permute.xlu0 %1351
      %1353 = vrot.lane.b32.xlu0 %v1333, 72
      %v1354 = vpop.permute.xlu0 %1353
      %1355 = vrot.lane.b32.xlu0 %v1334, 72
      %v1356 = vpop.permute.xlu0 %1355
      %1357 = vrot.lane.b32.xlu0 %v1335, 72
      %v1358 = vpop.permute.xlu0 %1357
      %1359 = vrot.lane.b32.xlu0 %v1336, 72
      %v1360 = vpop.permute.xlu0 %1359
      %vm1369 = vcmask 654912
      %1370 = vst.msk [vmem:[#allocation2] sm:$0xff] %vm1369, %v1346
      %1371 = vst.msk [vmem:[#allocation2 + $0x10] sm:$0xff] %vm1369, %v1348
      %1372 = vst.msk [vmem:[#allocation2 + $0x20] sm:$0xff] %vm1369, %v1350
      %1373 = vst.msk [vmem:[#allocation2 + $0x30] sm:$0xff] %vm1369, %v1352
      %1374 = vst.msk [vmem:[#allocation2 + $0x40] sm:$0xff] %vm1369, %v1354
      %1375 = vst.msk [vmem:[#allocation2 + $0x50] sm:$0xff] %vm1369, %v1356
      %1376 = vst.msk [vmem:[#allocation2 + $0x60] sm:$0xff] %vm1369, %v1358
      %1377 = vst.msk [vmem:[#allocation2 + $0x70] sm:$0xff] %vm1369, %v1360
      %v1378 = vpack.c.bf16 %v1324, %v1324
      %v1380 = vshrl.u32 %v1329, 16
      %v1382 = vshll.u32 %v1329, 16
      %v1384 = vrot.slane %v1382, 1
      %v1385 = vor.u32 %v1380, %v1384
      %v1387 = vshll.u32 %v1330, 16
      %v1389 = vrot.slane %v1387, 1
      %v1390 = vsel %vm655, %v1385, %v1389
      %v1391 = vshrl.u32 %v1330, 16
      %v1393 = vor.u32 %v1391, %v1389
      %v1395 = vshll.u32 %v1331, 16
      %v1397 = vrot.slane %v1395, 1
      %v1398 = vsel %vm655, %v1393, %v1397
      %v1399 = vshrl.u32 %v1331, 16
      %v1401 = vor.u32 %v1399, %v1397
      %v1403 = vshll.u32 %v1332, 16
      %v1405 = vrot.slane %v1403, 1
      %v1406 = vsel %vm655, %v1401, %v1405
      %v1407 = vshrl.u32 %v1332, 16
      %v1409 = vor.u32 %v1407, %v1405
      %v1411 = vshll.u32 %v1333, 16
      %v1413 = vrot.slane %v1411, 1
      %v1414 = vsel %vm655, %v1409, %v1413
      %v1415 = vshrl.u32 %v1333, 16
      %v1417 = vor.u32 %v1415, %v1413
      %v1419 = vshll.u32 %v1334, 16
      %v1421 = vrot.slane %v1419, 1
      %v1422 = vsel %vm655, %v1417, %v1421
      %v1423 = vshrl.u32 %v1334, 16
      %v1425 = vor.u32 %v1423, %v1421
      %v1427 = vshll.u32 %v1335, 16
      %v1429 = vrot.slane %v1427, 1
      %v1430 = vsel %vm655, %v1425, %v1429
      %v1431 = vshrl.u32 %v1335, 16
      %v1433 = vor.u32 %v1431, %v1429
      %v1435 = vshll.u32 %v1336, 16
      %v1437 = vrot.slane %v1435, 1
      %v1438 = vsel %vm655, %v1433, %v1437
      %v1439 = vshrl.u32 %v1336, 16
      %v1441 = vor.u32 %v1439, %v1437
      %v1443 = vshll.u32 %v1378, 16
      %v1445 = vrot.slane %v1443, 1
      %v1446 = vsel %vm655, %v1441, %v1445
      %1447 = vrot.lane.b32.xlu0 %v1390, 80
      %v1448 = vpop.permute.xlu0 %1447
      %1449 = vrot.lane.b32.xlu0 %v1398, 80
      %v1450 = vpop.permute.xlu0 %1449
      %1451 = vrot.lane.b32.xlu0 %v1406, 80
      %v1452 = vpop.permute.xlu0 %1451
      %1453 = vrot.lane.b32.xlu0 %v1414, 80
      %v1454 = vpop.permute.xlu0 %1453
      %1455 = vrot.lane.b32.xlu0 %v1422, 80
      %v1456 = vpop.permute.xlu0 %1455
      %1457 = vrot.lane.b32.xlu0 %v1430, 80
      %v1458 = vpop.permute.xlu0 %1457
      %1459 = vrot.lane.b32.xlu0 %v1438, 80
      %v1460 = vpop.permute.xlu0 %1459
      %1461 = vrot.lane.b32.xlu0 %v1446, 80
      %v1462 = vpop.permute.xlu0 %1461
      %vm1471 = vcmask 720512
      %1472 = vst.msk [vmem:[#allocation2] sm:$0xff] %vm1471, %v1448
      %1473 = vst.msk [vmem:[#allocation2 + $0x10] sm:$0xff] %vm1471, %v1450
      %1474 = vst.msk [vmem:[#allocation2 + $0x20] sm:$0xff] %vm1471, %v1452
      %1475 = vst.msk [vmem:[#allocation2 + $0x30] sm:$0xff] %vm1471, %v1454
      %1476 = vst.msk [vmem:[#allocation2 + $0x40] sm:$0xff] %vm1471, %v1456
      %1477 = vst.msk [vmem:[#allocation2 + $0x50] sm:$0xff] %vm1471, %v1458
      %1478 = vst.msk [vmem:[#allocation2 + $0x60] sm:$0xff] %vm1471, %v1460
      %1479 = vst.msk [vmem:[#allocation2 + $0x70] sm:$0xff] %vm1471, %v1462
      %v1481 = vrot.slane %v1329, 1
      %v1482 = vrot.slane %v1330, 1
      %v1483 = vsel %vm766, %v1481, %v1482
      %v1484 = vrot.slane %v1331, 1
      %v1485 = vsel %vm766, %v1482, %v1484
      %v1486 = vrot.slane %v1332, 1
      %v1487 = vsel %vm766, %v1484, %v1486
      %v1488 = vrot.slane %v1333, 1
      %v1489 = vsel %vm766, %v1486, %v1488
      %v1490 = vrot.slane %v1334, 1
      %v1491 = vsel %vm766, %v1488, %v1490
      %v1492 = vrot.slane %v1335, 1
      %v1493 = vsel %vm766, %v1490, %v1492
      %v1494 = vrot.slane %v1336, 1
      %v1495 = vsel %vm766, %v1492, %v1494
      %v1496 = vrot.slane %v1378, 1
      %v1497 = vsel %vm766, %v1494, %v1496
      %1498 = vrot.lane.b32.xlu0 %v1483, 88
      %v1499 = vpop.permute.xlu0 %1498
      %1500 = vrot.lane.b32.xlu0 %v1485, 88
      %v1501 = vpop.permute.xlu0 %1500
      %1502 = vrot.lane.b32.xlu0 %v1487, 88
      %v1503 = vpop.permute.xlu0 %1502
      %1504 = vrot.lane.b32.xlu0 %v1489, 88
      %v1505 = vpop.permute.xlu0 %1504
      %1506 = vrot.lane.b32.xlu0 %v1491, 88
      %v1507 = vpop.permute.xlu0 %1506
      %1508 = vrot.lane.b32.xlu0 %v1493, 88
      %v1509 = vpop.permute.xlu0 %1508
      %1510 = vrot.lane.b32.xlu0 %v1495, 88
      %v1511 = vpop.permute.xlu0 %1510
      %1512 = vrot.lane.b32.xlu0 %v1497, 88
      %v1513 = vpop.permute.xlu0 %1512
      %vm1522 = vcmask 786112
      %1523 = vst.msk [vmem:[#allocation2] sm:$0xff] %vm1522, %v1499
      %1524 = vst.msk [vmem:[#allocation2 + $0x10] sm:$0xff] %vm1522, %v1501
      %1525 = vst.msk [vmem:[#allocation2 + $0x20] sm:$0xff] %vm1522, %v1503
      %1526 = vst.msk [vmem:[#allocation2 + $0x30] sm:$0xff] %vm1522, %v1505
      %1527 = vst.msk [vmem:[#allocation2 + $0x40] sm:$0xff] %vm1522, %v1507
      %1528 = vst.msk [vmem:[#allocation2 + $0x50] sm:$0xff] %vm1522, %v1509
      %1529 = vst.msk [vmem:[#allocation2 + $0x60] sm:$0xff] %vm1522, %v1511
      %1530 = vst.msk [vmem:[#allocation2 + $0x70] sm:$0xff] %vm1522, %v1513
      %v1531 = vpack.c.bf16 %v1325, %v1324
      %1533 = vrot.lane.b32.xlu0 %v1330, 96
      %v1534 = vpop.permute.xlu0 %1533
      %1535 = vrot.lane.b32.xlu0 %v1331, 96
      %v1536 = vpop.permute.xlu0 %1535
      %1537 = vrot.lane.b32.xlu0 %v1332, 96
      %v1538 = vpop.permute.xlu0 %1537
      %1539 = vrot.lane.b32.xlu0 %v1333, 96
      %v1540 = vpop.permute.xlu0 %1539
      %1541 = vrot.lane.b32.xlu0 %v1334, 96
      %v1542 = vpop.permute.xlu0 %1541
      %1543 = vrot.lane.b32.xlu0 %v1335, 96
      %v1544 = vpop.permute.xlu0 %1543
      %1545 = vrot.lane.b32.xlu0 %v1336, 96
      %v1546 = vpop.permute.xlu0 %1545
      %1547 = vrot.lane.b32.xlu0 %v1531, 96
      %v1548 = vpop.permute.xlu0 %1547
      %vm1557 = vcmask 851712
      %1558 = vst.msk [vmem:[#allocation2] sm:$0xff] %vm1557, %v1534
      %1559 = vst.msk [vmem:[#allocation2 + $0x10] sm:$0xff] %vm1557, %v1536
      %1560 = vst.msk [vmem:[#allocation2 + $0x20] sm:$0xff] %vm1557, %v1538
      %1561 = vst.msk [vmem:[#allocation2 + $0x30] sm:$0xff] %vm1557, %v1540
      %1562 = vst.msk [vmem:[#allocation2 + $0x40] sm:$0xff] %vm1557, %v1542
      %1563 = vst.msk [vmem:[#allocation2 + $0x50] sm:$0xff] %vm1557, %v1544
      %1564 = vst.msk [vmem:[#allocation2 + $0x60] sm:$0xff] %vm1557, %v1546
      %1565 = vst.msk [vmem:[#allocation2 + $0x70] sm:$0xff] %vm1557, %v1548
      %v1566 = vpack.c.bf16 %v1326, %v1326
      %v1568 = vshll.u32 %v1531, 16
      %v1570 = vrot.slane %v1568, 1
      %v1571 = vsel %vm655, %v1441, %v1570
      %v1572 = vshrl.u32 %v1531, 16
      %v1574 = vor.u32 %v1572, %v1570
      %v1576 = vshll.u32 %v1566, 16
      %v1578 = vrot.slane %v1576, 1
      %v1579 = vsel %vm655, %v1574, %v1578
      %1580 = vrot.lane.b32.xlu0 %v1398, 104
      %v1581 = vpop.permute.xlu0 %1580
      %1582 = vrot.lane.b32.xlu0 %v1406, 104
      %v1583 = vpop.permute.xlu0 %1582
      %1584 = vrot.lane.b32.xlu0 %v1414, 104
      %v1585 = vpop.permute.xlu0 %1584
      %1586 = vrot.lane.b32.xlu0 %v1422, 104
      %v1587 = vpop.permute.xlu0 %1586
      %1588 = vrot.lane.b32.xlu0 %v1430, 104
      %v1589 = vpop.permute.xlu0 %1588
      %1590 = vrot.lane.b32.xlu0 %v1438, 104
      %v1591 = vpop.permute.xlu0 %1590
      %1592 = vrot.lane.b32.xlu0 %v1571, 104
      %v1593 = vpop.permute.xlu0 %1592
      %1594 = vrot.lane.b32.xlu0 %v1579, 104
      %v1595 = vpop.permute.xlu0 %1594
      %vm1604 = vcmask 917312
      %1605 = vst.msk [vmem:[#allocation2] sm:$0xff] %vm1604, %v1581
      %1606 = vst.msk [vmem:[#allocation2 + $0x10] sm:$0xff] %vm1604, %v1583
      %1607 = vst.msk [vmem:[#allocation2 + $0x20] sm:$0xff] %vm1604, %v1585
      %1608 = vst.msk [vmem:[#allocation2 + $0x30] sm:$0xff] %vm1604, %v1587
      %1609 = vst.msk [vmem:[#allocation2 + $0x40] sm:$0xff] %vm1604, %v1589
      %1610 = vst.msk [vmem:[#allocation2 + $0x50] sm:$0xff] %vm1604, %v1591
      %1611 = vst.msk [vmem:[#allocation2 + $0x60] sm:$0xff] %vm1604, %v1593
      %1612 = vst.msk [vmem:[#allocation2 + $0x70] sm:$0xff] %vm1604, %v1595
      %v1614 = vrot.slane %v1531, 1
      %v1615 = vsel %vm766, %v1494, %v1614
      %v1616 = vrot.slane %v1566, 1
      %v1617 = vsel %vm766, %v1614, %v1616
      %1618 = vrot.lane.b32.xlu0 %v1485, 112
      %v1619 = vpop.permute.xlu0 %1618
      %1620 = vrot.lane.b32.xlu0 %v1487, 112
      %v1621 = vpop.permute.xlu0 %1620
      %1622 = vrot.lane.b32.xlu0 %v1489, 112
      %v1623 = vpop.permute.xlu0 %1622
      %1624 = vrot.lane.b32.xlu0 %v1491, 112
      %v1625 = vpop.permute.xlu0 %1624
      %1626 = vrot.lane.b32.xlu0 %v1493, 112
      %v1627 = vpop.permute.xlu0 %1626
      %1628 = vrot.lane.b32.xlu0 %v1495, 112
      %v1629 = vpop.permute.xlu0 %1628
      %1630 = vrot.lane.b32.xlu0 %v1615, 112
      %v1631 = vpop.permute.xlu0 %1630
      %1632 = vrot.lane.b32.xlu0 %v1617, 112
      %v1633 = vpop.permute.xlu0 %1632
      %vm1642 = vcmask 982912
      %1643 = vst.msk [vmem:[#allocation2] sm:$0xff] %vm1642, %v1619
      %1644 = vst.msk [vmem:[#allocation2 + $0x10] sm:$0xff] %vm1642, %v1621
      %1645 = vst.msk [vmem:[#allocation2 + $0x20] sm:$0xff] %vm1642, %v1623
      %1646 = vst.msk [vmem:[#allocation2 + $0x30] sm:$0xff] %vm1642, %v1625
      %1647 = vst.msk [vmem:[#allocation2 + $0x40] sm:$0xff] %vm1642, %v1627
      %1648 = vst.msk [vmem:[#allocation2 + $0x50] sm:$0xff] %vm1642, %v1629
      %1649 = vst.msk [vmem:[#allocation2 + $0x60] sm:$0xff] %vm1642, %v1631
      %1650 = vst.msk [vmem:[#allocation2 + $0x70] sm:$0xff] %vm1642, %v1633
      %v1651 = vpack.c.bf16 %v1327, %v1326
      %1653 = vrot.lane.b32.xlu0 %v1331, 120
      %v1654 = vpop.permute.xlu0 %1653
      %1655 = vrot.lane.b32.xlu0 %v1332, 120
      %v1656 = vpop.permute.xlu0 %1655
      %1657 = vrot.lane.b32.xlu0 %v1333, 120
      %v1658 = vpop.permute.xlu0 %1657
      %1659 = vrot.lane.b32.xlu0 %v1334, 120
      %v1660 = vpop.permute.xlu0 %1659
      %1661 = vrot.lane.b32.xlu0 %v1335, 120
      %v1662 = vpop.permute.xlu0 %1661
      %1663 = vrot.lane.b32.xlu0 %v1336, 120
      %v1664 = vpop.permute.xlu0 %1663
      %1665 = vrot.lane.b32.xlu0 %v1531, 120
      %v1666 = vpop.permute.xlu0 %1665
      %1667 = vrot.lane.b32.xlu0 %v1651, 120
      %v1668 = vpop.permute.xlu0 %1667
      %vm1677 = vcmask 1048512
      %1678 = vst.msk [vmem:[#allocation2] sm:$0xff] %vm1677, %v1654
      %1679 = vst.msk [vmem:[#allocation2 + $0x10] sm:$0xff] %vm1677, %v1656
      %1680 = vst.msk [vmem:[#allocation2 + $0x20] sm:$0xff] %vm1677, %v1658
      %1681 = vst.msk [vmem:[#allocation2 + $0x30] sm:$0xff] %vm1677, %v1660
      %1682 = vst.msk [vmem:[#allocation2 + $0x40] sm:$0xff] %vm1677, %v1662
      %1683 = vst.msk [vmem:[#allocation2 + $0x50] sm:$0xff] %vm1677, %v1664
      %1684 = vst.msk [vmem:[#allocation2 + $0x60] sm:$0xff] %vm1677, %v1666
      %1685 = vst.msk [vmem:[#allocation2 + $0x70] sm:$0xff] %vm1677, %v1668
      %v1686 = vpack.c.bf16 %v1328, %v1328
      %v1688 = vshll.u32 %v1651, 16
      %v1690 = vrot.slane %v1688, 1
      %v1691 = vsel %vm655, %v1574, %v1690
      %v1692 = vshrl.u32 %v1651, 16
      %v1694 = vor.u32 %v1692, %v1690
      %v1696 = vshll.u32 %v1686, 16
      %v1698 = vrot.slane %v1696, 1
      %v1699 = vsel %vm655, %v1694, %v1698
      %1708 = vst.msk [vmem:[#allocation2 + $0x8] sm:$0xff] %vm645, %v1406
      %1709 = vst.msk [vmem:[#allocation2 + $0x18] sm:$0xff] %vm645, %v1414
      %1710 = vst.msk [vmem:[#allocation2 + $0x28] sm:$0xff] %vm645, %v1422
      %1711 = vst.msk [vmem:[#allocation2 + $0x38] sm:$0xff] %vm645, %v1430
      %1712 = vst.msk [vmem:[#allocation2 + $0x48] sm:$0xff] %vm645, %v1438
      %1713 = vst.msk [vmem:[#allocation2 + $0x58] sm:$0xff] %vm645, %v1571
      %1714 = vst.msk [vmem:[#allocation2 + $0x68] sm:$0xff] %vm645, %v1691
      %1715 = vst.msk [vmem:[#allocation2 + $0x78] sm:$0xff] %vm645, %v1699
      %v1717 = vrot.slane %v1651, 1
      %v1718 = vsel %vm766, %v1614, %v1717
      %v1719 = vrot.slane %v1686, 1
      %v1720 = vsel %vm766, %v1717, %v1719
      %1721 = vrot.lane.b32.xlu0 %v1487, 8
      %v1722 = vpop.permute.xlu0 %1721
      %1723 = vrot.lane.b32.xlu0 %v1489, 8
      %v1724 = vpop.permute.xlu0 %1723
      %1725 = vrot.lane.b32.xlu0 %v1491, 8
      %v1726 = vpop.permute.xlu0 %1725
      %1727 = vrot.lane.b32.xlu0 %v1493, 8
      %v1728 = vpop.permute.xlu0 %1727
      %1729 = vrot.lane.b32.xlu0 %v1495, 8
      %v1730 = vpop.permute.xlu0 %1729
      %1731 = vrot.lane.b32.xlu0 %v1615, 8
      %v1732 = vpop.permute.xlu0 %1731
      %1733 = vrot.lane.b32.xlu0 %v1718, 8
      %v1734 = vpop.permute.xlu0 %1733
      %1735 = vrot.lane.b32.xlu0 %v1720, 8
      %v1736 = vpop.permute.xlu0 %1735
      %1745 = vst.msk [vmem:[#allocation2 + $0x8] sm:$0xff] %vm748, %v1722
      %1746 = vst.msk [vmem:[#allocation2 + $0x18] sm:$0xff] %vm748, %v1724
      %1747 = vst.msk [vmem:[#allocation2 + $0x28] sm:$0xff] %vm748, %v1726
      %1748 = vst.msk [vmem:[#allocation2 + $0x38] sm:$0xff] %vm748, %v1728
      %1749 = vst.msk [vmem:[#allocation2 + $0x48] sm:$0xff] %vm748, %v1730
      %1750 = vst.msk [vmem:[#allocation2 + $0x58] sm:$0xff] %vm748, %v1732
      %1751 = vst.msk [vmem:[#allocation2 + $0x68] sm:$0xff] %vm748, %v1734
      %1752 = vst.msk [vmem:[#allocation2 + $0x78] sm:$0xff] %vm748, %v1736
      %s1753 = sadd.s32 %s25, 2
      %s1754 = smul.u32 %s1753, 22
      %s1755 = smul.addr %s1754, 4
      %s1756 = scalar_lea.vmem %s341, %s1755
      %v1757 = vld [vmem:[%s1756] sm:$0xf]
      %v1758 = vld [vmem:[%s1756 + $0x4] sm:$0xf]
      %v1759 = vld [vmem:[%s1756 + $0x8] sm:$0xf]
      %v1760 = vld [vmem:[%s1756 + $0xc] sm:$0xf]
      %v1761 = vld [vmem:[%s1756 + $0x10] sm:$0xf]
      %v1762 = vld [vmem:[%s1756 + $0x14] sm:$0xf]
      %v1763 = vld [vmem:[%s1756 + $0x18] sm:$0xf]
      %v1764 = vld [vmem:[%s1756 + $0x1c] sm:$0xf]
      %v1765 = vld [vmem:[%s1756 + $0x20] sm:$0xf]
      %v1766 = vld [vmem:[%s1756 + $0x24] sm:$0xf]
      %v1767 = vld [vmem:[%s1756 + $0x28] sm:$0xf]
      %v1768 = vld [vmem:[%s1756 + $0x2c] sm:$0xf]
      %v1769 = vld [vmem:[%s1756 + $0x30] sm:$0xf]
      %v1770 = vld [vmem:[%s1756 + $0x34] sm:$0xf]
      %v1771 = vld [vmem:[%s1756 + $0x38] sm:$0xf]
      %v1772 = vld [vmem:[%s1756 + $0x3c] sm:$0xf]
      %v1773 = vld [vmem:[%s1756 + $0x40] sm:$0xf]
      %v1774 = vld [vmem:[%s1756 + $0x44] sm:$0xf]
      %v1775 = vld [vmem:[%s1756 + $0x48] sm:$0xf]
      %v1776 = vld [vmem:[%s1756 + $0x4c] sm:$0xf]
      %v1777 = vld [vmem:[%s1756 + $0x50] sm:$0xf]
      %v1778 = vunpack.c.l.bf16 %v1757
      %v1779 = vunpack.c.l.bf16 %v1758
      %v1780 = vunpack.c.l.bf16 %v1759
      %v1781 = vunpack.c.l.bf16 %v1760
      %v1782 = vunpack.c.l.bf16 %v1761
      %v1783 = vunpack.c.l.bf16 %v1762
      %v1784 = vunpack.c.l.bf16 %v1763
      %v1785 = vunpack.c.l.bf16 %v1764
      %v1786 = vunpack.c.l.bf16 %v1765
      %v1787 = vunpack.c.l.bf16 %v1766
      %v1788 = vunpack.c.l.bf16 %v1767
      %v1789 = vunpack.c.l.bf16 %v1768
      %v1790 = vunpack.c.l.bf16 %v1769
      %v1791 = vunpack.c.l.bf16 %v1770
      %v1792 = vunpack.c.l.bf16 %v1771
      %v1793 = vunpack.c.l.bf16 %v1772
      %v1794 = vunpack.c.l.bf16 %v1773
      %v1795 = vunpack.c.l.bf16 %v1774
      %v1796 = vunpack.c.l.bf16 %v1775
      %v1797 = vunpack.c.l.bf16 %v1776
      %v1798 = vunpack.c.l.bf16 %v1777
      %v1799 = vld [vmem:[%s2] sm:$0x1]
      %v1801 = vlaneseq
      %v1802 = vshrl.u32 %v1801, 7
      %v1803 = vsub.s32 0, %v1802
      %v1804 = vrot.slane %v1799, %v1803
      %v1806 = vmul.f32 %v1778, %v1804
      %v1807 = vmul.f32 %v1779, %v1804
      %v1808 = vmul.f32 %v1780, %v1804
      %v1809 = vmul.f32 %v1781, %v1804
      %v1810 = vmul.f32 %v1782, %v1804
      %v1811 = vmul.f32 %v1783, %v1804
      %v1812 = vmul.f32 %v1784, %v1804
      %v1813 = vmul.f32 %v1785, %v1804
      %v1814 = vmul.f32 %v1786, %v1804
      %v1815 = vmul.f32 %v1787, %v1804
      %v1816 = vmul.f32 %v1788, %v1804
      %v1817 = vmul.f32 %v1789, %v1804
      %v1818 = vmul.f32 %v1790, %v1804
      %v1819 = vmul.f32 %v1791, %v1804
      %v1820 = vmul.f32 %v1792, %v1804
      %v1821 = vmul.f32 %v1793, %v1804
      %v1822 = vmul.f32 %v1794, %v1804
      %v1823 = vmul.f32 %v1795, %v1804
      %v1824 = vmul.f32 %v1796, %v1804
      %v1825 = vmul.f32 %v1797, %v1804
      %v1826 = vmul.f32 %v1798, %v1804
      %v1827 = vld [vmem:[%s3] sm:$0x1]
      %v1829 = vlaneseq
      %v1830 = vshrl.u32 %v1829, 7
      %v1831 = vsub.s32 0, %v1830
      %v1832 = vrot.slane %v1827, %v1831
      %v1834 = vadd.f32 %v1806, %v1832
      %v1835 = vadd.f32 %v1807, %v1832
      %v1836 = vadd.f32 %v1808, %v1832
      %v1837 = vadd.f32 %v1809, %v1832
      %v1838 = vadd.f32 %v1810, %v1832
      %v1839 = vadd.f32 %v1811, %v1832
      %v1840 = vadd.f32 %v1812, %v1832
      %v1841 = vadd.f32 %v1813, %v1832
      %v1842 = vadd.f32 %v1814, %v1832
      %v1843 = vadd.f32 %v1815, %v1832
      %v1844 = vadd.f32 %v1816, %v1832
      %v1845 = vadd.f32 %v1817, %v1832
      %v1846 = vadd.f32 %v1818, %v1832
      %v1847 = vadd.f32 %v1819, %v1832
      %v1848 = vadd.f32 %v1820, %v1832
      %v1849 = vadd.f32 %v1821, %v1832
      %v1850 = vadd.f32 %v1822, %v1832
      %v1851 = vadd.f32 %v1823, %v1832
      %v1852 = vadd.f32 %v1824, %v1832
      %v1853 = vadd.f32 %v1825, %v1832
      %v1854 = vadd.f32 %v1826, %v1832
      %v1855 = vmax.f32 %v1834, 0.0
      %v1856 = vmax.f32 %v1835, 0.0
      %v1857 = vmax.f32 %v1836, 0.0
      %v1858 = vmax.f32 %v1837, 0.0
      %v1859 = vmax.f32 %v1838, 0.0
      %v1860 = vmax.f32 %v1839, 0.0
      %v1861 = vmax.f32 %v1840, 0.0
      %v1862 = vmax.f32 %v1841, 0.0
      %v1863 = vmax.f32 %v1842, 0.0
      %v1864 = vmax.f32 %v1843, 0.0
      %v1865 = vmax.f32 %v1844, 0.0
      %v1866 = vmax.f32 %v1845, 0.0
      %v1867 = vmax.f32 %v1846, 0.0
      %v1868 = vmax.f32 %v1847, 0.0
      %v1869 = vmax.f32 %v1848, 0.0
      %v1870 = vmax.f32 %v1849, 0.0
      %v1871 = vmax.f32 %v1850, 0.0
      %v1872 = vmax.f32 %v1851, 0.0
      %v1873 = vmax.f32 %v1852, 0.0
      %v1874 = vmax.f32 %v1853, 0.0
      %v1875 = vmax.f32 %v1854, 0.0
      %s1876 = smul.u32 %s1753, 176
      %s1877 = scalar_lea.vmem %s4, %s1876
      %v1878 = vld [vmem:[%s1877] sm:$0xff]
      %v1879 = vld [vmem:[%s1877 + $0x8] sm:$0xff]
      %v1880 = vld [vmem:[%s1877 + $0x10] sm:$0xff]
      %v1881 = vld [vmem:[%s1877 + $0x18] sm:$0xff]
      %v1882 = vld [vmem:[%s1877 + $0x20] sm:$0xff]
      %v1883 = vld [vmem:[%s1877 + $0x28] sm:$0xff]
      %v1884 = vld [vmem:[%s1877 + $0x30] sm:$0xff]
      %v1885 = vld [vmem:[%s1877 + $0x38] sm:$0xff]
      %v1886 = vld [vmem:[%s1877 + $0x40] sm:$0xff]
      %v1887 = vld [vmem:[%s1877 + $0x48] sm:$0xff]
      %v1888 = vld [vmem:[%s1877 + $0x50] sm:$0xff]
      %v1889 = vld [vmem:[%s1877 + $0x58] sm:$0xff]
      %v1890 = vld [vmem:[%s1877 + $0x60] sm:$0xff]
      %v1891 = vld [vmem:[%s1877 + $0x68] sm:$0xff]
      %v1892 = vld [vmem:[%s1877 + $0x70] sm:$0xff]
      %v1893 = vld [vmem:[%s1877 + $0x78] sm:$0xff]
      %v1894 = vld [vmem:[%s1877 + $0x80] sm:$0xff]
      %v1895 = vld [vmem:[%s1877 + $0x88] sm:$0xff]
      %v1896 = vld [vmem:[%s1877 + $0x90] sm:$0xff]
      %v1897 = vld [vmem:[%s1877 + $0x98] sm:$0xff]
      %v1898 = vld [vmem:[%s1877 + $0xa0] sm:$0xff]
      %1900 = vset.pattern.permute.xlu0 0
      %1901 = vperm.xlu0 %1900, %v1878
      %v1902 = vpop.permute.xlu0 %1901
      %1905 = vset.pattern.permute.xlu0 0
      %1906 = vperm.xlu0 %1905, %v1879
      %v1907 = vpop.permute.xlu0 %1906
      %1910 = vset.pattern.permute.xlu0 0
      %1911 = vperm.xlu0 %1910, %v1880
      %v1912 = vpop.permute.xlu0 %1911
      %1915 = vset.pattern.permute.xlu0 0
      %1916 = vperm.xlu0 %1915, %v1881
      %v1917 = vpop.permute.xlu0 %1916
      %1920 = vset.pattern.permute.xlu0 0
      %1921 = vperm.xlu0 %1920, %v1882
      %v1922 = vpop.permute.xlu0 %1921
      %1925 = vset.pattern.permute.xlu0 0
      %1926 = vperm.xlu0 %1925, %v1883
      %v1927 = vpop.permute.xlu0 %1926
      %1930 = vset.pattern.permute.xlu0 0
      %1931 = vperm.xlu0 %1930, %v1884
      %v1932 = vpop.permute.xlu0 %1931
      %1935 = vset.pattern.permute.xlu0 0
      %1936 = vperm.xlu0 %1935, %v1885
      %v1937 = vpop.permute.xlu0 %1936
      %1940 = vset.pattern.permute.xlu0 0
      %1941 = vperm.xlu0 %1940, %v1886
      %v1942 = vpop.permute.xlu0 %1941
      %1945 = vset.pattern.permute.xlu0 0
      %1946 = vperm.xlu0 %1945, %v1887
      %v1947 = vpop.permute.xlu0 %1946
      %1950 = vset.pattern.permute.xlu0 0
      %1951 = vperm.xlu0 %1950, %v1888
      %v1952 = vpop.permute.xlu0 %1951
      %1955 = vset.pattern.permute.xlu0 0
      %1956 = vperm.xlu0 %1955, %v1889
      %v1957 = vpop.permute.xlu0 %1956
      %1960 = vset.pattern.permute.xlu0 0
      %1961 = vperm.xlu0 %1960, %v1890
      %v1962 = vpop.permute.xlu0 %1961
      %1965 = vset.pattern.permute.xlu0 0
      %1966 = vperm.xlu0 %1965, %v1891
      %v1967 = vpop.permute.xlu0 %1966
      %1970 = vset.pattern.permute.xlu0 0
      %1971 = vperm.xlu0 %1970, %v1892
      %v1972 = vpop.permute.xlu0 %1971
      %1975 = vset.pattern.permute.xlu0 0
      %1976 = vperm.xlu0 %1975, %v1893
      %v1977 = vpop.permute.xlu0 %1976
      %1980 = vset.pattern.permute.xlu0 0
      %1981 = vperm.xlu0 %1980, %v1894
      %v1982 = vpop.permute.xlu0 %1981
      %1985 = vset.pattern.permute.xlu0 0
      %1986 = vperm.xlu0 %1985, %v1895
      %v1987 = vpop.permute.xlu0 %1986
      %1990 = vset.pattern.permute.xlu0 0
      %1991 = vperm.xlu0 %1990, %v1896
      %v1992 = vpop.permute.xlu0 %1991
      %1995 = vset.pattern.permute.xlu0 0
      %1996 = vperm.xlu0 %1995, %v1897
      %v1997 = vpop.permute.xlu0 %1996
      %2000 = vset.pattern.permute.xlu0 0
      %2001 = vperm.xlu0 %2000, %v1898
      %v2002 = vpop.permute.xlu0 %2001
      %v2004 = vmul.f32 %v1855, %v1902
      %v2005 = vmul.f32 %v1856, %v1907
      %v2006 = vmul.f32 %v1857, %v1912
      %v2007 = vmul.f32 %v1858, %v1917
      %v2008 = vmul.f32 %v1859, %v1922
      %v2009 = vmul.f32 %v1860, %v1927
      %v2010 = vmul.f32 %v1861, %v1932
      %v2011 = vmul.f32 %v1862, %v1937
      %v2012 = vmul.f32 %v1863, %v1942
      %v2013 = vmul.f32 %v1864, %v1947
      %v2014 = vmul.f32 %v1865, %v1952
      %v2015 = vmul.f32 %v1866, %v1957
      %v2016 = vmul.f32 %v1867, %v1962
      %v2017 = vmul.f32 %v1868, %v1967
      %v2018 = vmul.f32 %v1869, %v1972
      %v2019 = vmul.f32 %v1870, %v1977
      %v2020 = vmul.f32 %v1871, %v1982
      %v2021 = vmul.f32 %v1872, %v1987
      %v2022 = vmul.f32 %v1873, %v1992
      %v2023 = vmul.f32 %v1874, %v1997
      %v2024 = vmul.f32 %v1875, %v2002
      %v2025 = vpack.c.bf16 %v2005, %v2004
      %v2026 = vpack.c.bf16 %v2007, %v2006
      %v2027 = vpack.c.bf16 %v2009, %v2008
      %v2028 = vpack.c.bf16 %v2011, %v2010
      %v2029 = vpack.c.bf16 %v2013, %v2012
      %v2030 = vpack.c.bf16 %v2015, %v2014
      %v2031 = vpack.c.bf16 %v2017, %v2016
      %v2032 = vpack.c.bf16 %v2019, %v2018
      %2041 = vrot.lane.b32.xlu0 %v2025, 16
      %v2042 = vpop.permute.xlu0 %2041
      %2043 = vrot.lane.b32.xlu0 %v2026, 16
      %v2044 = vpop.permute.xlu0 %2043
      %2045 = vrot.lane.b32.xlu0 %v2027, 16
      %v2046 = vpop.permute.xlu0 %2045
      %2047 = vrot.lane.b32.xlu0 %v2028, 16
      %v2048 = vpop.permute.xlu0 %2047
      %2049 = vrot.lane.b32.xlu0 %v2029, 16
      %v2050 = vpop.permute.xlu0 %2049
      %2051 = vrot.lane.b32.xlu0 %v2030, 16
      %v2052 = vpop.permute.xlu0 %2051
      %2053 = vrot.lane.b32.xlu0 %v2031, 16
      %v2054 = vpop.permute.xlu0 %2053
      %2055 = vrot.lane.b32.xlu0 %v2032, 16
      %v2056 = vpop.permute.xlu0 %2055
      %2065 = vst.msk [vmem:[#allocation2 + $0x8] sm:$0xff] %vm808, %v2042
      %2066 = vst.msk [vmem:[#allocation2 + $0x18] sm:$0xff] %vm808, %v2044
      %2067 = vst.msk [vmem:[#allocation2 + $0x28] sm:$0xff] %vm808, %v2046
      %2068 = vst.msk [vmem:[#allocation2 + $0x38] sm:$0xff] %vm808, %v2048
      %2069 = vst.msk [vmem:[#allocation2 + $0x48] sm:$0xff] %vm808, %v2050
      %2070 = vst.msk [vmem:[#allocation2 + $0x58] sm:$0xff] %vm808, %v2052
      %2071 = vst.msk [vmem:[#allocation2 + $0x68] sm:$0xff] %vm808, %v2054
      %2072 = vst.msk [vmem:[#allocation2 + $0x78] sm:$0xff] %vm808, %v2056
      %v2073 = vpack.c.bf16 %v2020, %v2020
      %v2075 = vshrl.u32 %v2025, 16
      %v2077 = vshll.u32 %v2025, 16
      %v2079 = vrot.slane %v2077, 1
      %v2080 = vor.u32 %v2075, %v2079
      %v2082 = vshll.u32 %v2026, 16
      %v2084 = vrot.slane %v2082, 1
      %v2085 = vsel %vm655, %v2080, %v2084
      %v2086 = vshrl.u32 %v2026, 16
      %v2088 = vor.u32 %v2086, %v2084
      %v2090 = vshll.u32 %v2027, 16
      %v2092 = vrot.slane %v2090, 1
      %v2093 = vsel %vm655, %v2088, %v2092
      %v2094 = vshrl.u32 %v2027, 16
      %v2096 = vor.u32 %v2094, %v2092
      %v2098 = vshll.u32 %v2028, 16
      %v2100 = vrot.slane %v2098, 1
      %v2101 = vsel %vm655, %v2096, %v2100
      %v2102 = vshrl.u32 %v2028, 16
      %v2104 = vor.u32 %v2102, %v2100
      %v2106 = vshll.u32 %v2029, 16
      %v2108 = vrot.slane %v2106, 1
      %v2109 = vsel %vm655, %v2104, %v2108
      %v2110 = vshrl.u32 %v2029, 16
      %v2112 = vor.u32 %v2110, %v2108
      %v2114 = vshll.u32 %v2030, 16
      %v2116 = vrot.slane %v2114, 1
      %v2117 = vsel %vm655, %v2112, %v2116
      %v2118 = vshrl.u32 %v2030, 16
      %v2120 = vor.u32 %v2118, %v2116
      %v2122 = vshll.u32 %v2031, 16
      %v2124 = vrot.slane %v2122, 1
      %v2125 = vsel %vm655, %v2120, %v2124
      %v2126 = vshrl.u32 %v2031, 16
      %v2128 = vor.u32 %v2126, %v2124
      %v2130 = vshll.u32 %v2032, 16
      %v2132 = vrot.slane %v2130, 1
      %v2133 = vsel %vm655, %v2128, %v2132
      %v2134 = vshrl.u32 %v2032, 16
      %v2136 = vor.u32 %v2134, %v2132
      %v2138 = vshll.u32 %v2073, 16
      %v2140 = vrot.slane %v2138, 1
      %v2141 = vsel %vm655, %v2136, %v2140
      %2142 = vrot.lane.b32.xlu0 %v2085, 24
      %v2143 = vpop.permute.xlu0 %2142
      %2144 = vrot.lane.b32.xlu0 %v2093, 24
      %v2145 = vpop.permute.xlu0 %2144
      %2146 = vrot.lane.b32.xlu0 %v2101, 24
      %v2147 = vpop.permute.xlu0 %2146
      %2148 = vrot.lane.b32.xlu0 %v2109, 24
      %v2149 = vpop.permute.xlu0 %2148
      %2150 = vrot.lane.b32.xlu0 %v2117, 24
      %v2151 = vpop.permute.xlu0 %2150
      %2152 = vrot.lane.b32.xlu0 %v2125, 24
      %v2153 = vpop.permute.xlu0 %2152
      %2154 = vrot.lane.b32.xlu0 %v2133, 24
      %v2155 = vpop.permute.xlu0 %2154
      %2156 = vrot.lane.b32.xlu0 %v2141, 24
      %v2157 = vpop.permute.xlu0 %2156
      %2166 = vst.msk [vmem:[#allocation2 + $0x8] sm:$0xff] %vm843, %v2143
      %2167 = vst.msk [vmem:[#allocation2 + $0x18] sm:$0xff] %vm843, %v2145
      %2168 = vst.msk [vmem:[#allocation2 + $0x28] sm:$0xff] %vm843, %v2147
      %2169 = vst.msk [vmem:[#allocation2 + $0x38] sm:$0xff] %vm843, %v2149
      %2170 = vst.msk [vmem:[#allocation2 + $0x48] sm:$0xff] %vm843, %v2151
      %2171 = vst.msk [vmem:[#allocation2 + $0x58] sm:$0xff] %vm843, %v2153
      %2172 = vst.msk [vmem:[#allocation2 + $0x68] sm:$0xff] %vm843, %v2155
      %2173 = vst.msk [vmem:[#allocation2 + $0x78] sm:$0xff] %vm843, %v2157
      %v2175 = vrot.slane %v2025, 1
      %v2176 = vrot.slane %v2026, 1
      %v2177 = vsel %vm766, %v2175, %v2176
      %v2178 = vrot.slane %v2027, 1
      %v2179 = vsel %vm766, %v2176, %v2178
      %v2180 = vrot.slane %v2028, 1
      %v2181 = vsel %vm766, %v2178, %v2180
      %v2182 = vrot.slane %v2029, 1
      %v2183 = vsel %vm766, %v2180, %v2182
      %v2184 = vrot.slane %v2030, 1
      %v2185 = vsel %vm766, %v2182, %v2184
      %v2186 = vrot.slane %v2031, 1
      %v2187 = vsel %vm766, %v2184, %v2186
      %v2188 = vrot.slane %v2032, 1
      %v2189 = vsel %vm766, %v2186, %v2188
      %v2190 = vrot.slane %v2073, 1
      %v2191 = vsel %vm766, %v2188, %v2190
      %2192 = vrot.lane.b32.xlu0 %v2177, 32
      %v2193 = vpop.permute.xlu0 %2192
      %2194 = vrot.lane.b32.xlu0 %v2179, 32
      %v2195 = vpop.permute.xlu0 %2194
      %2196 = vrot.lane.b32.xlu0 %v2181, 32
      %v2197 = vpop.permute.xlu0 %2196
      %2198 = vrot.lane.b32.xlu0 %v2183, 32
      %v2199 = vpop.permute.xlu0 %2198
      %2200 = vrot.lane.b32.xlu0 %v2185, 32
      %v2201 = vpop.permute.xlu0 %2200
      %2202 = vrot.lane.b32.xlu0 %v2187, 32
      %v2203 = vpop.permute.xlu0 %2202
      %2204 = vrot.lane.b32.xlu0 %v2189, 32
      %v2205 = vpop.permute.xlu0 %2204
      %2206 = vrot.lane.b32.xlu0 %v2191, 32
      %v2207 = vpop.permute.xlu0 %2206
      %2216 = vst.msk [vmem:[#allocation2 + $0x8] sm:$0xff] %vm890, %v2193
      %2217 = vst.msk [vmem:[#allocation2 + $0x18] sm:$0xff] %vm890, %v2195
      %2218 = vst.msk [vmem:[#allocation2 + $0x28] sm:$0xff] %vm890, %v2197
      %2219 = vst.msk [vmem:[#allocation2 + $0x38] sm:$0xff] %vm890, %v2199
      %2220 = vst.msk [vmem:[#allocation2 + $0x48] sm:$0xff] %vm890, %v2201
      %2221 = vst.msk [vmem:[#allocation2 + $0x58] sm:$0xff] %vm890, %v2203
      %2222 = vst.msk [vmem:[#allocation2 + $0x68] sm:$0xff] %vm890, %v2205
      %2223 = vst.msk [vmem:[#allocation2 + $0x78] sm:$0xff] %vm890, %v2207
      %v2224 = vpack.c.bf16 %v2021, %v2020
      %2226 = vrot.lane.b32.xlu0 %v2026, 40
      %v2227 = vpop.permute.xlu0 %2226
      %2228 = vrot.lane.b32.xlu0 %v2027, 40
      %v2229 = vpop.permute.xlu0 %2228
      %2230 = vrot.lane.b32.xlu0 %v2028, 40
      %v2231 = vpop.permute.xlu0 %2230
      %2232 = vrot.lane.b32.xlu0 %v2029, 40
      %v2233 = vpop.permute.xlu0 %2232
      %2234 = vrot.lane.b32.xlu0 %v2030, 40
      %v2235 = vpop.permute.xlu0 %2234
      %2236 = vrot.lane.b32.xlu0 %v2031, 40
      %v2237 = vpop.permute.xlu0 %2236
      %2238 = vrot.lane.b32.xlu0 %v2032, 40
      %v2239 = vpop.permute.xlu0 %2238
      %2240 = vrot.lane.b32.xlu0 %v2224, 40
      %v2241 = vpop.permute.xlu0 %2240
      %2250 = vst.msk [vmem:[#allocation2 + $0x8] sm:$0xff] %vm928, %v2227
      %2251 = vst.msk [vmem:[#allocation2 + $0x18] sm:$0xff] %vm928, %v2229
      %2252 = vst.msk [vmem:[#allocation2 + $0x28] sm:$0xff] %vm928, %v2231
      %2253 = vst.msk [vmem:[#allocation2 + $0x38] sm:$0xff] %vm928, %v2233
      %2254 = vst.msk [vmem:[#allocation2 + $0x48] sm:$0xff] %vm928, %v2235
      %2255 = vst.msk [vmem:[#allocation2 + $0x58] sm:$0xff] %vm928, %v2237
      %2256 = vst.msk [vmem:[#allocation2 + $0x68] sm:$0xff] %vm928, %v2239
      %2257 = vst.msk [vmem:[#allocation2 + $0x78] sm:$0xff] %vm928, %v2241
      %v2258 = vpack.c.bf16 %v2022, %v2022
      %v2260 = vshll.u32 %v2224, 16
      %v2262 = vrot.slane %v2260, 1
      %v2263 = vsel %vm655, %v2136, %v2262
      %v2264 = vshrl.u32 %v2224, 16
      %v2266 = vor.u32 %v2264, %v2262
      %v2268 = vshll.u32 %v2258, 16
      %v2270 = vrot.slane %v2268, 1
      %v2271 = vsel %vm655, %v2266, %v2270
      %2272 = vrot.lane.b32.xlu0 %v2093, 48
      %v2273 = vpop.permute.xlu0 %2272
      %2274 = vrot.lane.b32.xlu0 %v2101, 48
      %v2275 = vpop.permute.xlu0 %2274
      %2276 = vrot.lane.b32.xlu0 %v2109, 48
      %v2277 = vpop.permute.xlu0 %2276
      %2278 = vrot.lane.b32.xlu0 %v2117, 48
      %v2279 = vpop.permute.xlu0 %2278
      %2280 = vrot.lane.b32.xlu0 %v2125, 48
      %v2281 = vpop.permute.xlu0 %2280
      %2282 = vrot.lane.b32.xlu0 %v2133, 48
      %v2283 = vpop.permute.xlu0 %2282
      %2284 = vrot.lane.b32.xlu0 %v2263, 48
      %v2285 = vpop.permute.xlu0 %2284
      %2286 = vrot.lane.b32.xlu0 %v2271, 48
      %v2287 = vpop.permute.xlu0 %2286
      %2296 = vst.msk [vmem:[#allocation2 + $0x8] sm:$0xff] %vm963, %v2273
      %2297 = vst.msk [vmem:[#allocation2 + $0x18] sm:$0xff] %vm963, %v2275
      %2298 = vst.msk [vmem:[#allocation2 + $0x28] sm:$0xff] %vm963, %v2277
      %2299 = vst.msk [vmem:[#allocation2 + $0x38] sm:$0xff] %vm963, %v2279
      %2300 = vst.msk [vmem:[#allocation2 + $0x48] sm:$0xff] %vm963, %v2281
      %2301 = vst.msk [vmem:[#allocation2 + $0x58] sm:$0xff] %vm963, %v2283
      %2302 = vst.msk [vmem:[#allocation2 + $0x68] sm:$0xff] %vm963, %v2285
      %2303 = vst.msk [vmem:[#allocation2 + $0x78] sm:$0xff] %vm963, %v2287
      %v2305 = vrot.slane %v2224, 1
      %v2306 = vsel %vm766, %v2188, %v2305
      %v2307 = vrot.slane %v2258, 1
      %v2308 = vsel %vm766, %v2305, %v2307
      %2309 = vrot.lane.b32.xlu0 %v2179, 56
      %v2310 = vpop.permute.xlu0 %2309
      %2311 = vrot.lane.b32.xlu0 %v2181, 56
      %v2312 = vpop.permute.xlu0 %2311
      %2313 = vrot.lane.b32.xlu0 %v2183, 56
      %v2314 = vpop.permute.xlu0 %2313
      %2315 = vrot.lane.b32.xlu0 %v2185, 56
      %v2316 = vpop.permute.xlu0 %2315
      %2317 = vrot.lane.b32.xlu0 %v2187, 56
      %v2318 = vpop.permute.xlu0 %2317
      %2319 = vrot.lane.b32.xlu0 %v2189, 56
      %v2320 = vpop.permute.xlu0 %2319
      %2321 = vrot.lane.b32.xlu0 %v2306, 56
      %v2322 = vpop.permute.xlu0 %2321
      %2323 = vrot.lane.b32.xlu0 %v2308, 56
      %v2324 = vpop.permute.xlu0 %2323
      %2333 = vst.msk [vmem:[#allocation2 + $0x8] sm:$0xff] %vm1010, %v2310
      %2334 = vst.msk [vmem:[#allocation2 + $0x18] sm:$0xff] %vm1010, %v2312
      %2335 = vst.msk [vmem:[#allocation2 + $0x28] sm:$0xff] %vm1010, %v2314
      %2336 = vst.msk [vmem:[#allocation2 + $0x38] sm:$0xff] %vm1010, %v2316
      %2337 = vst.msk [vmem:[#allocation2 + $0x48] sm:$0xff] %vm1010, %v2318
      %2338 = vst.msk [vmem:[#allocation2 + $0x58] sm:$0xff] %vm1010, %v2320
      %2339 = vst.msk [vmem:[#allocation2 + $0x68] sm:$0xff] %vm1010, %v2322
      %2340 = vst.msk [vmem:[#allocation2 + $0x78] sm:$0xff] %vm1010, %v2324
      %v2341 = vpack.c.bf16 %v2023, %v2022
      %2343 = vrot.lane.b32.xlu0 %v2027, 64
      %v2344 = vpop.permute.xlu0 %2343
      %2345 = vrot.lane.b32.xlu0 %v2028, 64
      %v2346 = vpop.permute.xlu0 %2345
      %2347 = vrot.lane.b32.xlu0 %v2029, 64
      %v2348 = vpop.permute.xlu0 %2347
      %2349 = vrot.lane.b32.xlu0 %v2030, 64
      %v2350 = vpop.permute.xlu0 %2349
      %2351 = vrot.lane.b32.xlu0 %v2031, 64
      %v2352 = vpop.permute.xlu0 %2351
      %2353 = vrot.lane.b32.xlu0 %v2032, 64
      %v2354 = vpop.permute.xlu0 %2353
      %2355 = vrot.lane.b32.xlu0 %v2224, 64
      %v2356 = vpop.permute.xlu0 %2355
      %2357 = vrot.lane.b32.xlu0 %v2341, 64
      %v2358 = vpop.permute.xlu0 %2357
      %2367 = vst.msk [vmem:[#allocation2 + $0x8] sm:$0xff] %vm1048, %v2344
      %2368 = vst.msk [vmem:[#allocation2 + $0x18] sm:$0xff] %vm1048, %v2346
      %2369 = vst.msk [vmem:[#allocation2 + $0x28] sm:$0xff] %vm1048, %v2348
      %2370 = vst.msk [vmem:[#allocation2 + $0x38] sm:$0xff] %vm1048, %v2350
      %2371 = vst.msk [vmem:[#allocation2 + $0x48] sm:$0xff] %vm1048, %v2352
      %2372 = vst.msk [vmem:[#allocation2 + $0x58] sm:$0xff] %vm1048, %v2354
      %2373 = vst.msk [vmem:[#allocation2 + $0x68] sm:$0xff] %vm1048, %v2356
      %2374 = vst.msk [vmem:[#allocation2 + $0x78] sm:$0xff] %vm1048, %v2358
      %v2375 = vpack.c.bf16 %v2024, %v2024
      %v2377 = vshll.u32 %v2341, 16
      %v2379 = vrot.slane %v2377, 1
      %v2380 = vsel %vm655, %v2266, %v2379
      %v2381 = vshrl.u32 %v2341, 16
      %v2383 = vor.u32 %v2381, %v2379
      %v2385 = vshll.u32 %v2375, 16
      %v2387 = vrot.slane %v2385, 1
      %v2388 = vsel %vm655, %v2383, %v2387
      %2389 = vrot.lane.b32.xlu0 %v2101, 72
      %v2390 = vpop.permute.xlu0 %2389
      %2391 = vrot.lane.b32.xlu0 %v2109, 72
      %v2392 = vpop.permute.xlu0 %2391
      %2393 = vrot.lane.b32.xlu0 %v2117, 72
      %v2394 = vpop.permute.xlu0 %2393
      %2395 = vrot.lane.b32.xlu0 %v2125, 72
      %v2396 = vpop.permute.xlu0 %2395
      %2397 = vrot.lane.b32.xlu0 %v2133, 72
      %v2398 = vpop.permute.xlu0 %2397
      %2399 = vrot.lane.b32.xlu0 %v2263, 72
      %v2400 = vpop.permute.xlu0 %2399
      %2401 = vrot.lane.b32.xlu0 %v2380, 72
      %v2402 = vpop.permute.xlu0 %2401
      %2403 = vrot.lane.b32.xlu0 %v2388, 72
      %v2404 = vpop.permute.xlu0 %2403
      %2413 = vst.msk [vmem:[#allocation2 + $0x8] sm:$0xff] %vm1369, %v2390
      %2414 = vst.msk [vmem:[#allocation2 + $0x18] sm:$0xff] %vm1369, %v2392
      %2415 = vst.msk [vmem:[#allocation2 + $0x28] sm:$0xff] %vm1369, %v2394
      %2416 = vst.msk [vmem:[#allocation2 + $0x38] sm:$0xff] %vm1369, %v2396
      %2417 = vst.msk [vmem:[#allocation2 + $0x48] sm:$0xff] %vm1369, %v2398
      %2418 = vst.msk [vmem:[#allocation2 + $0x58] sm:$0xff] %vm1369, %v2400
      %2419 = vst.msk [vmem:[#allocation2 + $0x68] sm:$0xff] %vm1369, %v2402
      %2420 = vst.msk [vmem:[#allocation2 + $0x78] sm:$0xff] %vm1369, %v2404
      %v2422 = vrot.slane %v2341, 1
      %v2423 = vsel %vm766, %v2305, %v2422
      %v2424 = vrot.slane %v2375, 1
      %v2425 = vsel %vm766, %v2422, %v2424
      %2426 = vrot.lane.b32.xlu0 %v2181, 80
      %v2427 = vpop.permute.xlu0 %2426
      %2428 = vrot.lane.b32.xlu0 %v2183, 80
      %v2429 = vpop.permute.xlu0 %2428
      %2430 = vrot.lane.b32.xlu0 %v2185, 80
      %v2431 = vpop.permute.xlu0 %2430
      %2432 = vrot.lane.b32.xlu0 %v2187, 80
      %v2433 = vpop.permute.xlu0 %2432
      %2434 = vrot.lane.b32.xlu0 %v2189, 80
      %v2435 = vpop.permute.xlu0 %2434
      %2436 = vrot.lane.b32.xlu0 %v2306, 80
      %v2437 = vpop.permute.xlu0 %2436
      %2438 = vrot.lane.b32.xlu0 %v2423, 80
      %v2439 = vpop.permute.xlu0 %2438
      %2440 = vrot.lane.b32.xlu0 %v2425, 80
      %v2441 = vpop.permute.xlu0 %2440
      %2450 = vst.msk [vmem:[#allocation2 + $0x8] sm:$0xff] %vm1471, %v2427
      %2451 = vst.msk [vmem:[#allocation2 + $0x18] sm:$0xff] %vm1471, %v2429
      %2452 = vst.msk [vmem:[#allocation2 + $0x28] sm:$0xff] %vm1471, %v2431
      %2453 = vst.msk [vmem:[#allocation2 + $0x38] sm:$0xff] %vm1471, %v2433
      %2454 = vst.msk [vmem:[#allocation2 + $0x48] sm:$0xff] %vm1471, %v2435
      %2455 = vst.msk [vmem:[#allocation2 + $0x58] sm:$0xff] %vm1471, %v2437
      %2456 = vst.msk [vmem:[#allocation2 + $0x68] sm:$0xff] %vm1471, %v2439
      %2457 = vst.msk [vmem:[#allocation2 + $0x78] sm:$0xff] %vm1471, %v2441
      %v2458 = vld [vmem:[#allocation2] sm:$0xff]
      %v2459 = vld [vmem:[#allocation2 + $0x8] sm:$0xff]
      %v2460 = vld [vmem:[#allocation2 + $0x10] sm:$0xff]
      %v2461 = vld [vmem:[#allocation2 + $0x18] sm:$0xff]
      %v2462 = vld [vmem:[#allocation2 + $0x20] sm:$0xff]
      %v2463 = vld [vmem:[#allocation2 + $0x28] sm:$0xff]
      %v2464 = vld [vmem:[#allocation2 + $0x30] sm:$0xff]
      %v2465 = vld [vmem:[#allocation2 + $0x38] sm:$0xff]
      %v2466 = vld [vmem:[#allocation2 + $0x40] sm:$0xff]
      %v2467 = vld [vmem:[#allocation2 + $0x48] sm:$0xff]
      %v2468 = vld [vmem:[#allocation2 + $0x50] sm:$0xff]
      %v2469 = vld [vmem:[#allocation2 + $0x58] sm:$0xff]
      %v2470 = vld [vmem:[#allocation2 + $0x60] sm:$0xff]
      %v2471 = vld [vmem:[#allocation2 + $0x68] sm:$0xff]
      %v2472 = vld [vmem:[#allocation2 + $0x70] sm:$0xff]
      %v2473 = vld [vmem:[#allocation2 + $0x78] sm:$0xff]
      %v2474 = vld [vmem:[%s1] sm:$0xf]
      %v2475 = vld [vmem:[%s1 + $0x4] sm:$0xf]
      %v2476 = vld [vmem:[%s1 + $0x8] sm:$0xf]
      %v2477 = vld [vmem:[%s1 + $0xc] sm:$0xf]
      %v2478 = vld [vmem:[%s1 + $0x10] sm:$0xf]
      %v2479 = vld [vmem:[%s1 + $0x14] sm:$0xf]
      %v2480 = vld [vmem:[%s1 + $0x18] sm:$0xf]
      %v2481 = vld [vmem:[%s1 + $0x1c] sm:$0xf]
      %v2482 = vld [vmem:[%s1 + $0x20] sm:$0xf]
      %v2483 = vld [vmem:[%s1 + $0x24] sm:$0xf]
      %v2484 = vld [vmem:[%s1 + $0x28] sm:$0xf]
      %v2485 = vld [vmem:[%s1 + $0x2c] sm:$0xf]
      %v2486 = vld [vmem:[%s1 + $0x30] sm:$0xf]
      %v2487 = vld [vmem:[%s1 + $0x34] sm:$0xf]
      %v2488 = vld [vmem:[%s1 + $0x38] sm:$0xf]
      %v2489 = vld [vmem:[%s1 + $0x3c] sm:$0xf]
      %v2490 = vld [vmem:[%s1 + $0x40] sm:$0xf]
      %v2491 = vld [vmem:[%s1 + $0x44] sm:$0xf]
      %v2492 = vld [vmem:[%s1 + $0x48] sm:$0xf]
      %v2493 = vld [vmem:[%s1 + $0x4c] sm:$0xf]
      %v2494 = vld [vmem:[%s1 + $0x50] sm:$0xf]
      %v2495 = vld [vmem:[%s1 + $0x54] sm:$0xf]
      %v2496 = vld [vmem:[%s1 + $0x58] sm:$0xf]
      %v2497 = vld [vmem:[%s1 + $0x5c] sm:$0xf]
      %v2498 = vld [vmem:[%s1 + $0x60] sm:$0xf]
      %v2499 = vld [vmem:[%s1 + $0x64] sm:$0xf]
      %v2500 = vld [vmem:[%s1 + $0x68] sm:$0xf]
      %v2528 = vunpack.c.l.b16 %v2474
      %v2529 = vunpack.c.l.b16 %v2475
      %v2530 = vunpack.c.l.b16 %v2476
      %v2531 = vunpack.c.l.b16 %v2477
      %v2532 = vunpack.c.l.b16 %v2478
      %v2533 = vunpack.c.l.b16 %v2479
      %v2534 = vunpack.c.l.b16 %v2480
      %v2535 = vunpack.c.l.b16 %v2481
      %v2536 = vunpack.c.l.b16 %v2482
      %v2537 = vunpack.c.l.b16 %v2483
      %v2538 = vunpack.c.l.b16 %v2484
      %v2539 = vunpack.c.l.b16 %v2485
      %v2540 = vunpack.c.l.b16 %v2486
      %v2541 = vunpack.c.l.b16 %v2487
      %v2542 = vunpack.c.l.b16 %v2488
      %v2543 = vunpack.c.l.b16 %v2489
      %v2544 = vunpack.c.l.b16 %v2490
      %v2545 = vunpack.c.l.b16 %v2491
      %v2546 = vunpack.c.l.b16 %v2492
      %v2547 = vunpack.c.l.b16 %v2493
      %v2548 = vunpack.c.l.b16 %v2494
      %v2549 = vunpack.c.l.b16 %v2495
      %v2550 = vunpack.c.l.b16 %v2496
      %v2551 = vunpack.c.l.b16 %v2497
      %v2552 = vunpack.c.l.b16 %v2498
      %v2553 = vunpack.c.l.b16 %v2499
      %v2554 = vunpack.c.l.b16 %v2500
      %v2555 = vpack.c.b16 %v2529, %v2528
      %v2556 = vpack.c.b16 %v2531, %v2530
      %v2557 = vpack.c.b16 %v2533, %v2532
      %v2558 = vpack.c.b16 %v2535, %v2534
      %v2559 = vpack.c.b16 %v2537, %v2536
      %v2560 = vpack.c.b16 %v2539, %v2538
      %v2561 = vpack.c.b16 %v2541, %v2540
      %v2562 = vpack.c.b16 %v2543, %v2542
      %v2563 = vpack.c.b16 %v2545, %v2544
      %v2564 = vpack.c.b16 %v2547, %v2546
      %v2565 = vpack.c.b16 %v2549, %v2548
      %v2566 = vpack.c.b16 %v2551, %v2550
      %v2567 = vpack.c.b16 %v2553, %v2552
      %v2568 = vpack.c.b16 %v2554, %v2554
      %vm2582 = vcmask 719872
      %v2584 = vsel %vm2582, %v2459, 0
      %v2587 = vsel %vm2582, %v2461, 0
      %v2590 = vsel %vm2582, %v2463, 0
      %v2593 = vsel %vm2582, %v2465, 0
      %v2596 = vsel %vm2582, %v2467, 0
      %v2599 = vsel %vm2582, %v2469, 0
      %v2602 = vsel %vm2582, %v2471, 0
      %v2605 = vsel %vm2582, %v2473, 0
      %vm2607 = vcmask 1043456
      %v2609 = vsel %vm2607, %v2568, 0
      %2611 = vmatprep.subr.bf16.mxu0 0
      %2612 = vmatpush1.bf16.msra.mxu0 %v2555
      %2613 = vmatprep.subr.bf16.mxu0 0
      %2614 = vmatpush1.bf16.msra.mxu0 %v2556
      %2615 = vmatprep.subr.bf16.mxu0 0
      %2616 = vmatpush1.bf16.msra.mxu0 %v2557
      %2617 = vmatprep.subr.bf16.mxu0 0
      %2618 = vmatpush1.bf16.msra.mxu0 %v2558
      %2619 = vmatprep.subr.bf16.mxu0 0
      %2620 = vmatpush1.bf16.msra.mxu0 %v2559
      %2621 = vmatprep.subr.bf16.mxu0 0
      %2622 = vmatpush1.bf16.msra.mxu0 %v2560
      %2623 = vmatprep.subr.bf16.mxu0 0
      %2624 = vmatpush1.bf16.msra.mxu0 %v2561
      %2625 = vmatprep.subr.bf16.mxu0 0
      %2626 = vmatpush1.bf16.msra.mxu0 %v2562
      %2627 = vmatprep.subr.bf16.mxu0 0
      %2628 = vmatpush1.bf16.msra.mxu0 %v2563
      %2629 = vmatprep.subr.bf16.mxu0 0
      %2630 = vmatpush1.bf16.msra.mxu0 %v2564
      %2631 = vmatprep.subr.bf16.mxu0 0
      %2632 = vmatpush1.bf16.msra.mxu0 %v2565
      %2633 = vmatprep.subr.bf16.mxu0 0
      %2634 = vmatpush1.bf16.msra.mxu0 %v2566
      %2635 = vmatprep.subr.bf16.mxu0 0
      %2636 = vmatpush1.bf16.msra.mxu0 %v2567
      %2637 = vmatprep.subr.bf16.mxu0 0
      %2638 = vmatpush1.bf16.msra.mxu0 %v2609
      %2639 = vmatprep.subr.bf16.mxu0 0
      %2640 = vmatpush1.bf16.msra.mxu0 0
      %2641 = vmatprep.subr.bf16.mxu0 0
      %2642 = vmatpush1.bf16.msra.mxu0 0
      %2643 = vmatprep.mubr.bf16.mxu0 %v2584
      %2644 = vmatmul.mubr.bf16.gmra.mrb[0].mxu0 %v2458
      %v2645 = vpop.f32.mrb[0].mxu0
      %v2646 = vadd.f32 0.0, %v2645
      %v2647 = vpop.f32.mrb[0].mxu0
      %v2648 = vpop.f32.mrb[0].mxu0
      %v2649 = vadd.f32 0.0, %v2648
      %v2650 = vpop.f32.mrb[0].mxu0
      %2651 = vmatprep.mubr.bf16.mxu0 %v2587
      %2652 = vmatmul.mubr.bf16.gmra.mrb[0].mxu0 %v2460
      %v2653 = vpop.f32.mrb[0].mxu0
      %v2654 = vadd.f32 0.0, %v2653
      %v2655 = vpop.f32.mrb[0].mxu0
      %v2656 = vpop.f32.mrb[0].mxu0
      %v2657 = vadd.f32 0.0, %v2656
      %v2658 = vpop.f32.mrb[0].mxu0
      %2659 = vmatprep.mubr.bf16.mxu0 %v2590
      %2660 = vmatmul.mubr.bf16.gmra.mrb[0].mxu0 %v2462
      %v2661 = vpop.f32.mrb[0].mxu0
      %v2662 = vadd.f32 0.0, %v2661
      %v2663 = vpop.f32.mrb[0].mxu0
      %v2664 = vpop.f32.mrb[0].mxu0
      %v2665 = vadd.f32 0.0, %v2664
      %v2666 = vpop.f32.mrb[0].mxu0
      %2667 = vmatprep.mubr.bf16.mxu0 %v2593
      %2668 = vmatmul.mubr.bf16.gmra.mrb[0].mxu0 %v2464
      %v2669 = vpop.f32.mrb[0].mxu0
      %v2670 = vadd.f32 0.0, %v2669
      %v2671 = vpop.f32.mrb[0].mxu0
      %v2672 = vpop.f32.mrb[0].mxu0
      %v2673 = vadd.f32 0.0, %v2672
      %v2674 = vpop.f32.mrb[0].mxu0
      %2675 = vmatprep.mubr.bf16.mxu0 %v2596
      %2676 = vmatmul.mubr.bf16.gmra.mrb[0].mxu0 %v2466
      %v2677 = vpop.f32.mrb[0].mxu0
      %v2678 = vadd.f32 0.0, %v2677
      %v2679 = vpop.f32.mrb[0].mxu0
      %v2680 = vpop.f32.mrb[0].mxu0
      %v2681 = vadd.f32 0.0, %v2680
      %v2682 = vpop.f32.mrb[0].mxu0
      %2683 = vmatprep.mubr.bf16.mxu0 %v2599
      %2684 = vmatmul.mubr.bf16.gmra.mrb[0].mxu0 %v2468
      %v2685 = vpop.f32.mrb[0].mxu0
      %v2686 = vadd.f32 0.0, %v2685
      %v2687 = vpop.f32.mrb[0].mxu0
      %v2688 = vpop.f32.mrb[0].mxu0
      %v2689 = vadd.f32 0.0, %v2688
      %v2690 = vpop.f32.mrb[0].mxu0
      %2691 = vmatprep.mubr.bf16.mxu0 %v2602
      %2692 = vmatmul.mubr.bf16.gmra.mrb[0].mxu0 %v2470
      %v2693 = vpop.f32.mrb[0].mxu0
      %v2694 = vadd.f32 0.0, %v2693
      %v2695 = vpop.f32.mrb[0].mxu0
      %v2696 = vpop.f32.mrb[0].mxu0
      %v2697 = vadd.f32 0.0, %v2696
      %v2698 = vpop.f32.mrb[0].mxu0
      %2699 = vmatprep.mubr.bf16.mxu0 %v2605
      %2700 = vmatmul.mubr.bf16.gmra.mrb[0].mxu0 %v2472
      %v2701 = vpop.f32.mrb[0].mxu0
      %v2702 = vadd.f32 0.0, %v2701
      %v2703 = vpop.f32.mrb[0].mxu0
      %v2704 = vpop.f32.mrb[0].mxu0
      %v2705 = vadd.f32 0.0, %v2704
      %v2706 = vpop.f32.mrb[0].mxu0
      %2707 = vdwg.mxu0
      %2708 = vst.msk [vmem:[%s350] sm:$0xff] %vm645, %v2646
      %2709 = vst.msk [vmem:[%s350 + $0x8] sm:$0xff] %vm645, %v2649
      %2710 = vst.msk [vmem:[%s350 + $0x10] sm:$0xff] %vm645, %v2654
      %2711 = vst.msk [vmem:[%s350 + $0x18] sm:$0xff] %vm645, %v2657
      %2712 = vst.msk [vmem:[%s350 + $0x20] sm:$0xff] %vm645, %v2662
      %2713 = vst.msk [vmem:[%s350 + $0x28] sm:$0xff] %vm645, %v2665
      %2714 = vst.msk [vmem:[%s350 + $0x30] sm:$0xff] %vm645, %v2670
      %2715 = vst.msk [vmem:[%s350 + $0x38] sm:$0xff] %vm645, %v2673
      %2716 = vst.msk [vmem:[%s350 + $0x40] sm:$0xff] %vm645, %v2678
      %2717 = vst.msk [vmem:[%s350 + $0x48] sm:$0xff] %vm645, %v2681
      %2718 = vst.msk [vmem:[%s350 + $0x50] sm:$0xff] %vm645, %v2686
      %2719 = vst.msk [vmem:[%s350 + $0x58] sm:$0xff] %vm645, %v2689
      %2720 = vst.msk [vmem:[%s350 + $0x60] sm:$0xff] %vm645, %v2694
      %2721 = vst.msk [vmem:[%s350 + $0x68] sm:$0xff] %vm645, %v2697
      %2722 = vst.msk [vmem:[%s350 + $0x70] sm:$0xff] %vm645, %v2702
      %2723 = vst.msk [vmem:[%s350 + $0x78] sm:$0xff] %vm645, %v2705
      %v2724 = vld [vmem:[%s5] sm:$0xff]
      %v2725 = vld [vmem:[%s5 + $0x8] sm:$0xff]
      %v2726 = vld [vmem:[%s5 + $0x10] sm:$0xff]
      %v2727 = vld [vmem:[%s5 + $0x18] sm:$0xff]
      %v2728 = vld [vmem:[%s5 + $0x20] sm:$0xff]
      %v2729 = vld [vmem:[%s5 + $0x28] sm:$0xff]
      %v2730 = vld [vmem:[%s5 + $0x30] sm:$0xff]
      %v2731 = vld [vmem:[%s5 + $0x38] sm:$0xff]
      %v2732 = vld [vmem:[%s5 + $0x40] sm:$0xff]
      %v2733 = vld [vmem:[%s5 + $0x48] sm:$0xff]
      %v2734 = vld [vmem:[%s5 + $0x50] sm:$0xff]
      %v2735 = vld [vmem:[%s5 + $0x58] sm:$0xff]
      %v2736 = vld [vmem:[%s5 + $0x60] sm:$0xff]
      %v2737 = vld [vmem:[%s5 + $0x68] sm:$0xff]
      %v2738 = vld [vmem:[%s5 + $0x70] sm:$0xff]
      %v2739 = vld [vmem:[%s5 + $0x78] sm:$0xff]
      %2741 = vset.pattern.permute.xlu0 0
      %2742 = vperm.xlu0 %2741, %v2724
      %v2743 = vpop.permute.xlu0 %2742
      %2746 = vset.pattern.permute.xlu0 0
      %2747 = vperm.xlu0 %2746, %v2725
      %v2748 = vpop.permute.xlu0 %2747
      %2751 = vset.pattern.permute.xlu0 0
      %2752 = vperm.xlu0 %2751, %v2726
      %v2753 = vpop.permute.xlu0 %2752
      %2756 = vset.pattern.permute.xlu0 0
      %2757 = vperm.xlu0 %2756, %v2727
      %v2758 = vpop.permute.xlu0 %2757
      %2761 = vset.pattern.permute.xlu0 0
      %2762 = vperm.xlu0 %2761, %v2728
      %v2763 = vpop.permute.xlu0 %2762
      %2766 = vset.pattern.permute.xlu0 0
      %2767 = vperm.xlu0 %2766, %v2729
      %v2768 = vpop.permute.xlu0 %2767
      %2771 = vset.pattern.permute.xlu0 0
      %2772 = vperm.xlu0 %2771, %v2730
      %v2773 = vpop.permute.xlu0 %2772
      %2776 = vset.pattern.permute.xlu0 0
      %2777 = vperm.xlu0 %2776, %v2731
      %v2778 = vpop.permute.xlu0 %2777
      %2781 = vset.pattern.permute.xlu0 0
      %2782 = vperm.xlu0 %2781, %v2732
      %v2783 = vpop.permute.xlu0 %2782
      %2786 = vset.pattern.permute.xlu0 0
      %2787 = vperm.xlu0 %2786, %v2733
      %v2788 = vpop.permute.xlu0 %2787
      %2791 = vset.pattern.permute.xlu0 0
      %2792 = vperm.xlu0 %2791, %v2734
      %v2793 = vpop.permute.xlu0 %2792
      %2796 = vset.pattern.permute.xlu0 0
      %2797 = vperm.xlu0 %2796, %v2735
      %v2798 = vpop.permute.xlu0 %2797
      %2801 = vset.pattern.permute.xlu0 0
      %2802 = vperm.xlu0 %2801, %v2736
      %v2803 = vpop.permute.xlu0 %2802
      %2806 = vset.pattern.permute.xlu0 0
      %2807 = vperm.xlu0 %2806, %v2737
      %v2808 = vpop.permute.xlu0 %2807
      %2811 = vset.pattern.permute.xlu0 0
      %2812 = vperm.xlu0 %2811, %v2738
      %v2813 = vpop.permute.xlu0 %2812
      %2816 = vset.pattern.permute.xlu0 0
      %2817 = vperm.xlu0 %2816, %v2739
      %v2818 = vpop.permute.xlu0 %2817
      %v2820 = vmul.f32 %v2646, %v2743
      %v2821 = vmul.f32 %v2649, %v2748
      %v2822 = vmul.f32 %v2654, %v2753
      %v2823 = vmul.f32 %v2657, %v2758
      %v2824 = vmul.f32 %v2662, %v2763
      %v2825 = vmul.f32 %v2665, %v2768
      %v2826 = vmul.f32 %v2670, %v2773
      %v2827 = vmul.f32 %v2673, %v2778
      %v2828 = vmul.f32 %v2678, %v2783
      %v2829 = vmul.f32 %v2681, %v2788
      %v2830 = vmul.f32 %v2686, %v2793
      %v2831 = vmul.f32 %v2689, %v2798
      %v2832 = vmul.f32 %v2694, %v2803
      %v2833 = vmul.f32 %v2697, %v2808
      %v2834 = vmul.f32 %v2702, %v2813
      %v2835 = vmul.f32 %v2705, %v2818
      %v2836 = vsel %vm645, %v2820, 0.0
      %v2837 = vsel %vm645, %v2821, 0.0
      %v2838 = vadd.f32 %v2836, %v2837
      %v2839 = vsel %vm645, %v2822, 0.0
      %v2840 = vadd.f32 %v2838, %v2839
      %v2841 = vsel %vm645, %v2823, 0.0
      %v2842 = vadd.f32 %v2840, %v2841
      %v2843 = vsel %vm645, %v2824, 0.0
      %v2844 = vadd.f32 %v2842, %v2843
      %v2845 = vsel %vm645, %v2825, 0.0
      %v2846 = vadd.f32 %v2844, %v2845
      %v2847 = vsel %vm645, %v2826, 0.0
      %v2848 = vadd.f32 %v2846, %v2847
      %v2849 = vsel %vm645, %v2827, 0.0
      %v2850 = vadd.f32 %v2848, %v2849
      %v2851 = vsel %vm645, %v2828, 0.0
      %v2852 = vadd.f32 %v2850, %v2851
      %v2853 = vsel %vm645, %v2829, 0.0
      %v2854 = vadd.f32 %v2852, %v2853
      %v2855 = vsel %vm645, %v2830, 0.0
      %v2856 = vadd.f32 %v2854, %v2855
      %v2857 = vsel %vm645, %v2831, 0.0
      %v2858 = vadd.f32 %v2856, %v2857
      %v2859 = vsel %vm645, %v2832, 0.0
      %v2860 = vadd.f32 %v2858, %v2859
      %v2861 = vsel %vm645, %v2833, 0.0
      %v2862 = vadd.f32 %v2860, %v2861
      %v2863 = vsel %vm645, %v2834, 0.0
      %v2864 = vadd.f32 %v2862, %v2863
      %v2865 = vsel %vm645, %v2835, 0.0
      %v2866 = vadd.f32 %v2864, %v2865
      %v2867 = vrot.slane %v2866, 4
      %v2868 = vadd.f32 %v2866, %v2867
      %v2869 = vrot.slane %v2868, 2
      %v2870 = vadd.f32 %v2868, %v2869
      %v2871 = vrot.slane %v2870, 1
      %v2872 = vadd.f32 %v2870, %v2871
      %vm2873 = vcmask 57344
      %2874 = vst.msk [vmem:[%s357] sm:$0x1] %vm2873, %v2872
      %v2875 = vmul.f32 %v2820, %v2820
      %v2876 = vmul.f32 %v2821, %v2821
      %v2877 = vmul.f32 %v2822, %v2822
      %v2878 = vmul.f32 %v2823, %v2823
      %v2879 = vmul.f32 %v2824, %v2824
      %v2880 = vmul.f32 %v2825, %v2825
      %v2881 = vmul.f32 %v2826, %v2826
      %v2882 = vmul.f32 %v2827, %v2827
      %v2883 = vmul.f32 %v2828, %v2828
      %v2884 = vmul.f32 %v2829, %v2829
      %v2885 = vmul.f32 %v2830, %v2830
      %v2886 = vmul.f32 %v2831, %v2831
      %v2887 = vmul.f32 %v2832, %v2832
      %v2888 = vmul.f32 %v2833, %v2833
      %v2889 = vmul.f32 %v2834, %v2834
      %v2890 = vmul.f32 %v2835, %v2835
      %v2891 = vsel %vm645, %v2875, 0.0
      %v2892 = vsel %vm645, %v2876, 0.0
      %v2893 = vadd.f32 %v2891, %v2892
      %v2894 = vsel %vm645, %v2877, 0.0
      %v2895 = vadd.f32 %v2893, %v2894
      %v2896 = vsel %vm645, %v2878, 0.0
      %v2897 = vadd.f32 %v2895, %v2896
      %v2898 = vsel %vm645, %v2879, 0.0
      %v2899 = vadd.f32 %v2897, %v2898
      %v2900 = vsel %vm645, %v2880, 0.0
      %v2901 = vadd.f32 %v2899, %v2900
      %v2902 = vsel %vm645, %v2881, 0.0
      %v2903 = vadd.f32 %v2901, %v2902
      %v2904 = vsel %vm645, %v2882, 0.0
      %v2905 = vadd.f32 %v2903, %v2904
      %v2906 = vsel %vm645, %v2883, 0.0
      %v2907 = vadd.f32 %v2905, %v2906
      %v2908 = vsel %vm645, %v2884, 0.0
      %v2909 = vadd.f32 %v2907, %v2908
      %v2910 = vsel %vm645, %v2885, 0.0
      %v2911 = vadd.f32 %v2909, %v2910
      %v2912 = vsel %vm645, %v2886, 0.0
      %v2913 = vadd.f32 %v2911, %v2912
      %v2914 = vsel %vm645, %v2887, 0.0
      %v2915 = vadd.f32 %v2913, %v2914
      %v2916 = vsel %vm645, %v2888, 0.0
      %v2917 = vadd.f32 %v2915, %v2916
      %v2918 = vsel %vm645, %v2889, 0.0
      %v2919 = vadd.f32 %v2917, %v2918
      %v2920 = vsel %vm645, %v2890, 0.0
      %v2921 = vadd.f32 %v2919, %v2920
      %v2922 = vrot.slane %v2921, 4
      %v2923 = vadd.f32 %v2921, %v2922
      %v2924 = vrot.slane %v2923, 2
      %v2925 = vadd.f32 %v2923, %v2924
      %v2926 = vrot.slane %v2925, 1
      %v2927 = vadd.f32 %v2925, %v2926
      %2928 = vst.msk [vmem:[%s364] sm:$0x1] %vm2873, %v2927
      %p2929 = scmp.lt.s32.totalorder %s24, 1
      %s2930 = scalar_select %p2929, %s24, 1
      %p2931 = scmp.lt.s32.totalorder %s25, 7
      %s2932 = scalar_select %p2931, %s25, 7
      %s2933 = smul.addr %s2932, 16
      %s2934 = smul.addr %s2930, 128
      %s2935 = sadd.s32 %s2933, %s2934
      %s2936 = smul.addr %s2935, 8
      %s2937 = scalar_lea.vmem %s6, %s2936
      %p2938 = scmp.lt.s32.totalorder %s24, 1
      %s2939 = scalar_select %p2938, %s24, 1
      %p2940 = scmp.lt.s32.totalorder %s25, 7
      %s2941 = scalar_select %p2940, %s25, 7
      %s2942 = smul.addr %s2939, 8
      %s2943 = sadd.s32 %s2941, %s2942
      %s2944 = scalar_lea.vmem %s7, %s2943
      %p2945 = scmp.lt.s32.totalorder %s24, 1
      %s2946 = scalar_select %p2945, %s24, 1
      %p2947 = scmp.lt.s32.totalorder %s25, 7
      %s2948 = scalar_select %p2947, %s25, 7
      %s2949 = smul.addr %s2946, 8
      %s2950 = sadd.s32 %s2948, %s2949
      %s2951 = scalar_lea.vmem %s8, %s2950
      // Predicated region
      $region45: #{residual_block3d_forward.5} parent=43 // pred_check
        %p2952 = pneg %p183
      $region46: #{residual_block3d_forward.5} parent=43 // pred_check_branch
        %2954 = sbr.rel (%p2952) target = $region48
      $region47: #{residual_block3d_forward.5} parent=43 // pred_region
        _
      $region48: #{residual_block3d_forward.5} parent=43 // pred_fallthru
        _
      // Predicated region
      $region49: #{residual_block3d_forward.5} parent=43 // pred_check
        %p2955 = pneg %p211
      $region50: #{residual_block3d_forward.5} parent=43 // pred_check_branch
        %2957 = sbr.rel (%p2955) target = $region52
      $region51: #{residual_block3d_forward.5} parent=43 // pred_region
        _
      $region52: #{residual_block3d_forward.5} parent=43 // pred_fallthru
        _
      // Predicated region
      $region53: #{residual_block3d_forward.5} parent=43 // pred_check
        %p2958 = pneg %p239
      $region54: #{residual_block3d_forward.5} parent=43 // pred_check_branch
        %2960 = sbr.rel (%p2958) target = $region56
      $region55: #{residual_block3d_forward.5} parent=43 // pred_region
        _
      $region56: #{residual_block3d_forward.5} parent=43 // pred_fallthru
        _
    $region44: #{residual_block3d_forward.5} parent=5 // pred_fallthru
      _
    %p2961 = scmp.le.s32.totalorder 2, %s15
    // Predicated region
    $region57: #{residual_block3d_forward.5} parent=5 // pred_check
      %p2962 = pneg %p2961
    $region58: #{residual_block3d_forward.5} parent=5 // pred_check_branch
      %2964 = sbr.rel (%p2962) target = $region60
    $region59: #{residual_block3d_forward.5} parent=5 // pred_region
      %s2965 = ssub.s32 %s15, 2
      // Predicated region
      $region61: #{residual_block3d_forward.5} parent=59 // pred_check
        %p2966 = pneg %p189
      $region62: #{residual_block3d_forward.5} parent=59 // pred_check_branch
        %2968 = sbr.rel (%p2966) target = $region64
      $region63: #{residual_block3d_forward.5} parent=59 // pred_region
        %p2969 = scmp.lt.s32.totalorder %s26, 1
        %s2970 = scalar_select %p2969, %s26, 1
        %p2971 = scmp.lt.s32.totalorder %s27, 7
        %s2972 = scalar_select %p2971, %s27, 7
        %s2973 = smul.addr %s2972, 16
        %s2974 = smul.addr %s2970, 128
        %s2975 = sadd.s32 %s2973, %s2974
        %s2976 = smul.addr %s2975, 8
        %s2977 = scalar_lea.vmem %s6, %s2976
      $region64: #{residual_block3d_forward.5} parent=59 // pred_fallthru
        _
      // Predicated region
      $region65: #{residual_block3d_forward.5} parent=59 // pred_check
        %p2978 = pneg %p217
      $region66: #{residual_block3d_forward.5} parent=59 // pred_check_branch
        %2980 = sbr.rel (%p2978) target = $region68
      $region67: #{residual_block3d_forward.5} parent=59 // pred_region
        %p2981 = scmp.lt.s32.totalorder %s26, 1
        %s2982 = scalar_select %p2981, %s26, 1
        %p2983 = scmp.lt.s32.totalorder %s27, 7
        %s2984 = scalar_select %p2983, %s27, 7
        %s2985 = smul.addr %s2982, 8
        %s2986 = sadd.s32 %s2984, %s2985
        %s2987 = scalar_lea.vmem %s7, %s2986
      $region68: #{residual_block3d_forward.5} parent=59 // pred_fallthru
        _
      // Predicated region
      $region69: #{residual_block3d_forward.5} parent=59 // pred_check
        %p2988 = pneg %p245
      $region70: #{residual_block3d_forward.5} parent=59 // pred_check_branch
        %2990 = sbr.rel (%p2988) target = $region72
      $region71: #{residual_block3d_forward.5} parent=59 // pred_region
        %p2991 = scmp.lt.s32.totalorder %s26, 1
        %s2992 = scalar_select %p2991, %s26, 1
        %p2993 = scmp.lt.s32.totalorder %s27, 7
        %s2994 = scalar_select %p2993, %s27, 7
        %s2995 = smul.addr %s2992, 8
        %s2996 = sadd.s32 %s2994, %s2995
        %s2997 = scalar_lea.vmem %s8, %s2996
      $region72: #{residual_block3d_forward.5} parent=59 // pred_fallthru
        _
    $region60: #{residual_block3d_forward.5} parent=5 // pred_fallthru
      _
  $region6: #{residual_block3d_forward.5} parent=0 // loop_footer
    %s19 = sadd.s32 1, %s15
  $region7: #{residual_block3d_forward.5} parent=0 // loop_footer_branch
    %14 = sbr.rel target = $region3
  $region8: #{residual_block3d_forward.5} parent=0 // loop_exit
    _

</llo_original>
